<compile_context>
chip_gen: v7x
topology: tpu7x:2x2x1
jax: 0.10.0
libtpu: 0.0.40
codegen_flags: <defaults>
</compile_context>

<pallas_src>
import jax
import jax.numpy as jnp
import numpy as np
from jax.experimental import pallas as pl
from jax.experimental.pallas import tpu as pltpu


def _round_up(n, m):
    return ((n + m - 1) // m) * m


# ---------------------------------------------------------------------------
# Fused Pallas kernel: one grid step == TILE_B samples, every layer is one
# lane-dense (TILE_B, K) @ (K, N) matmul + bias + PReLU.
# ---------------------------------------------------------------------------
def _cnn_fused_kernel(alpha_ref, x_ref,
                      q1_ref, b1_ref, q2_ref, b2_ref, q3_ref, b3_ref,
                      w4_ref, b4_ref, w5_ref, b5_ref,
                      wp_ref, bp_ref, o_ref):
    f32 = jnp.float32

    def dense_prelu(h, w_ref, b_ref, alpha):
        y = jnp.dot(h, w_ref[...], preferred_element_type=f32) + b_ref[...]
        return jnp.where(y > 0, y, alpha * y)            # shared-alpha PReLU

    h = x_ref[...]                                        # (TILE_B, 784)
    h = dense_prelu(h, q1_ref, b1_ref, alpha_ref[0])      # conv1 -> (TILE_B, 1664)
    h = dense_prelu(h, q2_ref, b2_ref, alpha_ref[1])      # conv2 -> (TILE_B, 896)
    h = dense_prelu(h, q3_ref, b3_ref, alpha_ref[2])      # conv3 -> (TILE_B, 896)
    h = dense_prelu(h, w4_ref, b4_ref, alpha_ref[3])      # fc1   -> (TILE_B, 256)
    h = dense_prelu(h, w5_ref, b5_ref, alpha_ref[4])      # fc2   -> (TILE_B, 256)

    # Projection + log-softmax.  Padded logit columns got a -1e30 bias so they
    # never win the max and contribute exp(...) == 0 to the sum.
    z = jnp.dot(h, wp_ref[...], preferred_element_type=f32) + bp_ref[...]
    m = jnp.max(z, axis=-1, keepdims=True)
    e = jnp.exp(z - m)
    o_ref[...] = z - m - jnp.log(jnp.sum(e, axis=-1, keepdims=True))


def cnn_forward_pallas(x_nchw, prep, *, n_classes, tile_b=128):
    B = x_nchw.shape[0]
    x_flat = x_nchw.reshape(B, -1).astype(jnp.float32)    # PyTorch NCHW flatten
    k_in = x_flat.shape[1]

    # Batch tile: multiple of 8 (sublane tile), capped at the padded batch.
    tile_b = max(8, min(_round_up(tile_b, 8), _round_up(B, 8)))
    b_pad = _round_up(B, tile_b)
    if b_pad != B:
        x_flat = jnp.pad(x_flat, ((0, b_pad - B), (0, 0)))
    grid = (b_pad // tile_b,)

    weight_names = ["q1", "b1", "q2", "b2", "q3", "b3",
                    "fc1_w", "fc1_b", "fc2_w", "fc2_b", "proj_w", "proj_b"]
    weights = [prep[n] for n in weight_names]
    ncls_pad = prep["proj_w"].shape[1]                    # n_classes padded to 128

    def _const_spec(arr):                                 # weights: fetched once
        nd = arr.ndim
        return pl.BlockSpec(arr.shape, lambda i, _nd=nd: (0,) * _nd)

    out = pl.pallas_call(
        _cnn_fused_kernel,
        out_shape=jax.ShapeDtypeStruct((b_pad, ncls_pad), jnp.float32),
        grid=grid,
        in_specs=[pl.BlockSpec(memory_space=pltpu.MemorySpace.SMEM),   # alphas
                  pl.BlockSpec((tile_b, k_in), lambda i: (i, 0))]      # images
                 + [_const_spec(w) for w in weights],
        out_specs=pl.BlockSpec((tile_b, ncls_pad), lambda i: (i, 0)),
        compiler_params=pltpu.CompilerParams(
            # "parallel" lets v7x split batch tiles across its 2 TensorCores
            # when grid > 1; harmless on single-core v5e/v6e.
            dimension_semantics=("parallel",),
            # Dense folded weights ~16 MiB f32 (<=2x if double-buffered) plus
            # activation tiles; explicit limit also covers v5e's 16 MiB default.
            vmem_limit_bytes=56 * 1024 * 1024),
    )(prep["alphas"], x_flat, *weights)
    return out[:B, :n_classes]


# ---------------------------------------------------------------------------
# One-time host-side parameter preparation: BN folding, dense conv operators
# (full im2col folded into one matrix per conv layer), lane padding to 128.
# ---------------------------------------------------------------------------
def _bn_fold(p):
    s = np.asarray(p["gamma"], np.float32) / np.sqrt(
        np.asarray(p["var"], np.float32) + 1e-5)
    t = (np.asarray(p["b"], np.float32) - np.asarray(p["mean"], np.float32)) * s \
        + np.asarray(p["beta"], np.float32)
    return s, t


def _dense_conv_matrix(p, hin, win, stride, pad):
    """Dense (Cin*Hin*Win, Cout*OH*OW) matrix == conv (+ folded BN scale).

    Both sides use PyTorch's NCHW flatten order, so conv3's output flatten is
    exactly what fc1 expects and no activation permutation is ever needed.
    """
    w = np.asarray(p["w"], np.float32)                    # (Cout, Cin, k, k)
    cout, cin, k, _ = w.shape
    scale, shift = _bn_fold(p)
    wsc = w * scale[:, None, None, None]                  # fold BN scale
    oh = (hin + 2 * pad - k) // stride + 1
    ow = (win + 2 * pad - k) // stride + 1

    q = np.zeros((cin * hin * win, cout * oh * ow), np.float32)
    ci_idx = np.arange(cin)
    co_idx = np.arange(cout)
    for kh in range(k):
        for kw in range(k):
            tap = wsc[:, :, kh, kw].T                     # (Cin, Cout)
            for o in range(oh):
                ih = stride * o + kh - pad
                if not (0 <= ih < hin):
                    continue
                for qw in range(ow):
                    iw = stride * qw + kw - pad
                    if not (0 <= iw < win):
                        continue
                    rows = (ci_idx * hin + ih) * win + iw
                    cols = (co_idx * oh + o) * ow + qw
                    q[np.ix_(rows, cols)] += tap
    bias = np.repeat(shift, oh * ow)[None, :].astype(np.float32)
    return q, bias, oh, ow, cout


def _pad_to(a, rows, cols):
    return np.pad(np.asarray(a, np.float32),
                  ((0, rows - a.shape[0]), (0, cols - a.shape[1])))


def prepare_pallas_params(params, height=28, width_px=28):
    pad = 1
    q1, b1, oh1, ow1, c1 = _dense_conv_matrix(params["conv1"], height, width_px, 2, pad)
    q2, b2, oh2, ow2, c2 = _dense_conv_matrix(params["conv2"], oh1, ow1, 2, pad)
    q3, b3, oh3, ow3, c3 = _dense_conv_matrix(params["conv3"], oh2, ow2, 1, pad)

    n_in = q1.shape[0]                                    # 784 (NCHW flatten)
    n1 = _round_up(q1.shape[1], 128)                      # 1568 -> 1664
    n2 = _round_up(q2.shape[1], 128)                      # 784  -> 896
    n3 = _round_up(q3.shape[1], 128)                      # 784  -> 896

    # fc1/fc2: fold BN scale into weight columns, BN shift stays as the bias.
    s4, t4 = _bn_fold(params["fc1"])
    fc1_w = np.asarray(params["fc1"]["w"], np.float32) * s4[None, :]   # (784, 256)
    s5, t5 = _bn_fold(params["fc2"])
    fc2_w = np.asarray(params["fc2"]["w"], np.float32) * s5[None, :]   # (256, 256)

    proj_w = np.asarray(params["proj"]["w"], np.float32)
    proj_b = np.asarray(params["proj"]["b"], np.float32)
    n_classes = proj_w.shape[1]
    ncls_pad = _round_up(n_classes, 128)
    proj_w_p = _pad_to(proj_w, proj_w.shape[0], ncls_pad)
    proj_b_p = np.full((1, ncls_pad), -1e30, np.float32)  # kill padded logits
    proj_b_p[0, :n_classes] = proj_b

    alphas = np.array([float(params[n]["alpha"]) for n in
                       ("conv1", "conv2", "conv3", "fc1", "fc2")], np.float32)

    prep = dict(
        alphas=alphas,
        q1=_pad_to(q1, n_in, n1), b1=_pad_to(b1, 1, n1),
        q2=_pad_to(q2, n1, n2),   b2=_pad_to(b2, 1, n2),
        q3=_pad_to(q3, n2, n3),   b3=_pad_to(b3, 1, n3),
        fc1_w=_pad_to(fc1_w, n3, 256), fc1_b=t4[None, :],
        fc2_w=fc2_w,                   fc2_b=t5[None, :],
        proj_w=proj_w_p,               proj_b=proj_b_p,
    )
    return {k: jnp.asarray(v) for k, v in prep.items()}


# ---------------------------------------------------------------------------
# Pure-JAX reference (eval-mode PyTorch semantics) for correctness checking
# ---------------------------------------------------------------------------
def cnn_forward_ref(x_nchw, params):
    def im2col(x_nhwc, k, stride, pad):
        B, H, W, C = x_nhwc.shape
        xp = jnp.pad(x_nhwc, ((0, 0), (pad, pad), (pad, pad), (0, 0)))
        OH = (H + 2 * pad - k) // stride + 1
        OW = (W + 2 * pad - k) // stride + 1
        cols = []
        for kh in range(k):
            for kw in range(k):
                cols.append(xp[:, kh:kh + stride * OH:stride,
                               kw:kw + stride * OW:stride, :])
        return jnp.concatenate(cols, -1).reshape(B * OH * OW, k * k * C), OH, OW

    def bn_fuse(p):
        s = p["gamma"] / jnp.sqrt(p["var"] + 1e-5)
        t = (p["b"] - p["mean"]) * s + p["beta"]
        return s[None, :], t[None, :]

    def conv_block(x_nhwc, p, k, stride, pad):
        B, _, _, C = x_nhwc.shape
        patches, OH, OW = im2col(x_nhwc, k, stride, pad)
        wmat = jnp.transpose(p["w"], (2, 3, 1, 0)).reshape(k * k * C, -1)
        s, t = bn_fuse(p)
        z = jnp.dot(patches, wmat, preferred_element_type=jnp.float32) * s + t
        y = jnp.where(z > 0, z, p["alpha"] * z)
        return y.reshape(B, OH, OW, wmat.shape[1])

    def fc_block(x, p):
        s, t = bn_fuse(p)
        z = jnp.dot(x, p["w"], preferred_element_type=jnp.float32) * s + t
        return jnp.where(z > 0, z, p["alpha"] * z)

    x = jnp.transpose(x_nchw, (0, 2, 3, 1))
    x = conv_block(x, params["conv1"], 3, 2, 1)       # 28 -> 14
    x = conv_block(x, params["conv2"], 3, 2, 1)       # 14 -> 7
    x = conv_block(x, params["conv3"], 3, 1, 1)       # 7  -> 7
    B = x.shape[0]
    x = jnp.transpose(x, (0, 3, 1, 2)).reshape(B, -1)  # NCHW-order flatten
    x = fc_block(x, params["fc1"])
    x = fc_block(x, params["fc2"])
    z = jnp.dot(x, params["proj"]["w"], preferred_element_type=jnp.float32) \
        + params["proj"]["b"][None, :]
    return jax.nn.log_softmax(z, axis=-1)


# ---------------------------------------------------------------------------
# Deterministic synthetic parameters
# ---------------------------------------------------------------------------
def init_params(key, width=8, n_classes=10, kernel=3, input_dim=1):
    keys = jax.random.split(key, 8)

    def norm_block(k, w_shape, b_dim, w_scale):
        ks = jax.random.split(k, 6)
        return dict(
            w=w_scale * jax.random.normal(ks[0], w_shape, jnp.float32),
            b=w_scale * jax.random.normal(ks[1], (b_dim,), jnp.float32),
            gamma=1.0 + 0.1 * jax.random.normal(ks[2], (b_dim,), jnp.float32),
            beta=0.1 * jax.random.normal(ks[3], (b_dim,), jnp.float32),
            mean=0.1 * jax.random.normal(ks[4], (b_dim,), jnp.float32),
            var=jax.random.uniform(ks[5], (b_dim,), jnp.float32, 0.5, 1.5),
            alpha=jnp.float32(0.25),
        )

    flat_dim = 7 * 7 * (2 * width)
    params = dict(
        conv1=norm_block(keys[0], (width, input_dim, kernel, kernel), width, 0.1),
        conv2=norm_block(keys[1], (2 * width, width, kernel, kernel), 2 * width, 0.1),
        conv3=norm_block(keys[2], (2 * width, 2 * width, kernel, kernel), 2 * width, 0.1),
        fc1=norm_block(keys[3], (flat_dim, 256), 256, 0.05),
        fc2=norm_block(keys[4], (256, 256), 256, 0.05),
        proj=dict(
            w=0.05 * jax.random.normal(keys[5], (256, n_classes), jnp.float32),
            b=0.05 * jax.random.normal(keys[6], (n_classes,), jnp.float32),
        ),
    )
    return params, keys[7]


if __name__ == "__main__":
    key = jax.random.PRNGKey(0)
    params, kx = init_params(key, width=8, n_classes=10)
    x = jax.random.normal(kx, (2, 1, 28, 28), jnp.float32)   # NCHW, MNIST-like

    prep = prepare_pallas_params(params)                     # one-time folding
    fwd = jax.jit(cnn_forward_pallas, static_argnames=("n_classes", "tile_b"))

    out = jax.block_until_ready(fwd(x, prep, n_classes=10))
    ref = jax.block_until_ready(cnn_forward_ref(x, params))

    assert out.shape == (2, 10)
    np.testing.assert_allclose(np.asarray(out), np.asarray(ref), rtol=2e-4, atol=2e-4)
    assert np.allclose(np.exp(np.asarray(out)).sum(axis=1), 1.0, atol=1e-4)
    print("KERNEL_OK")
</pallas_src>

<mosaic_0001>
module attributes {stable_mosaic.version = 11 : i64} {
  func.func @_cnn_fused_kernel(%arg0: i32, %arg1: memref<5xf32, #tpu.memory_space<smem>>, %arg2: memref<8x784xf32, #tpu.memory_space<vmem>>, %arg3: memref<784x1664xf32, #tpu.memory_space<vmem>>, %arg4: memref<1x1664xf32, #tpu.memory_space<vmem>>, %arg5: memref<1664x896xf32, #tpu.memory_space<vmem>>, %arg6: memref<1x896xf32, #tpu.memory_space<vmem>>, %arg7: memref<896x896xf32, #tpu.memory_space<vmem>>, %arg8: memref<1x896xf32, #tpu.memory_space<vmem>>, %arg9: memref<896x256xf32, #tpu.memory_space<vmem>>, %arg10: memref<1x256xf32, #tpu.memory_space<vmem>>, %arg11: memref<256x256xf32, #tpu.memory_space<vmem>>, %arg12: memref<1x256xf32, #tpu.memory_space<vmem>>, %arg13: memref<256x128xf32, #tpu.memory_space<vmem>>, %arg14: memref<1x128xf32, #tpu.memory_space<vmem>>, %arg15: memref<8x128xf32, #tpu.memory_space<vmem>>) attributes {dimension_semantics = [#tpu.dimension_semantics<parallel>], iteration_bounds = array<i64: 1>, scalar_prefetch = 0 : i64, scratch_operands = 0 : i64, tpu.core_type = #tpu.core_type<tc>, window_params = [{transform_indices = @transform_0, window_bounds = array<i64: 5>}, {transform_indices = @transform_1, window_bounds = array<i64: 8, 784>}, {pipeline_mode = #tpu.pipeline_mode<synchronous>, transform_indices = @transform_2, window_bounds = array<i64: 784, 1664>}, {pipeline_mode = #tpu.pipeline_mode<synchronous>, transform_indices = @transform_3, window_bounds = array<i64: 1, 1664>}, {pipeline_mode = #tpu.pipeline_mode<synchronous>, transform_indices = @transform_4, window_bounds = array<i64: 1664, 896>}, {pipeline_mode = #tpu.pipeline_mode<synchronous>, transform_indices = @transform_5, window_bounds = array<i64: 1, 896>}, {pipeline_mode = #tpu.pipeline_mode<synchronous>, transform_indices = @transform_6, window_bounds = array<i64: 896, 896>}, {pipeline_mode = #tpu.pipeline_mode<synchronous>, transform_indices = @transform_7, window_bounds = array<i64: 1, 896>}, {pipeline_mode = #tpu.pipeline_mode<synchronous>, transform_indices = @transform_8, window_bounds = array<i64: 896, 256>}, {pipeline_mode = #tpu.pipeline_mode<synchronous>, transform_indices = @transform_9, window_bounds = array<i64: 1, 256>}, {pipeline_mode = #tpu.pipeline_mode<synchronous>, transform_indices = @transform_10, window_bounds = array<i64: 256, 256>}, {pipeline_mode = #tpu.pipeline_mode<synchronous>, transform_indices = @transform_11, window_bounds = array<i64: 1, 256>}, {pipeline_mode = #tpu.pipeline_mode<synchronous>, transform_indices = @transform_12, window_bounds = array<i64: 256, 128>}, {pipeline_mode = #tpu.pipeline_mode<synchronous>, transform_indices = @transform_13, window_bounds = array<i64: 1, 128>}, {transform_indices = @transform_14, window_bounds = array<i64: 8, 128>}]} {
    %c0 = arith.constant 0 : index
    %c0_0 = arith.constant 0 : index
    %0 = vector.load %arg2[%c0, %c0_0] : memref<8x784xf32, #tpu.memory_space<vmem>>, vector<8x784xf32>
    %c0_1 = arith.constant 0 : index
    %1 = memref.load %arg1[%c0_1] : memref<5xf32, #tpu.memory_space<smem>>
    %c0_2 = arith.constant 0 : index
    %c0_3 = arith.constant 0 : index
    %2 = vector.load %arg3[%c0_2, %c0_3] : memref<784x1664xf32, #tpu.memory_space<vmem>>, vector<784x1664xf32>
    %cst = arith.constant dense<0.000000e+00> : vector<8x1664xf32>
    %3 = tpu.matmul %0, %2, %cst {dimension_numbers = #tpu.dot_dimension_numbers<[1], [0], [0], [1], [0, 0, 1, 1], [], []>} : vector<8x784xf32>, vector<784x1664xf32>, vector<8x1664xf32> -> vector<8x1664xf32>
    %c0_4 = arith.constant 0 : index
    %c0_5 = arith.constant 0 : index
    %4 = vector.load %arg4[%c0_4, %c0_5] : memref<1x1664xf32, #tpu.memory_space<vmem>>, vector<1x1664xf32>
    %5 = vector.broadcast %4 : vector<1x1664xf32> to vector<8x1664xf32>
    %6 = arith.addf %3, %5 : vector<8x1664xf32>
    %cst_6 = arith.constant 0.000000e+00 : f32
    %7 = vector.broadcast %cst_6 : f32 to vector<8x1664xf32>
    %8 = arith.cmpf ogt, %6, %7 : vector<8x1664xf32>
    %9 = vector.broadcast %1 : f32 to vector<8x1664xf32>
    %10 = arith.mulf %9, %6 : vector<8x1664xf32>
    %11 = arith.select %8, %6, %10 : vector<8x1664xi1>, vector<8x1664xf32>
    %c1 = arith.constant 1 : index
    %12 = memref.load %arg1[%c1] : memref<5xf32, #tpu.memory_space<smem>>
    %c0_7 = arith.constant 0 : index
    %c0_8 = arith.constant 0 : index
    %13 = vector.load %arg5[%c0_7, %c0_8] : memref<1664x896xf32, #tpu.memory_space<vmem>>, vector<1664x896xf32>
    %cst_9 = arith.constant dense<0.000000e+00> : vector<8x896xf32>
    %14 = tpu.matmul %11, %13, %cst_9 {dimension_numbers = #tpu.dot_dimension_numbers<[1], [0], [0], [1], [0, 0, 1, 1], [], []>} : vector<8x1664xf32>, vector<1664x896xf32>, vector<8x896xf32> -> vector<8x896xf32>
    %c0_10 = arith.constant 0 : index
    %c0_11 = arith.constant 0 : index
    %15 = vector.load %arg6[%c0_10, %c0_11] : memref<1x896xf32, #tpu.memory_space<vmem>>, vector<1x896xf32>
    %16 = vector.broadcast %15 : vector<1x896xf32> to vector<8x896xf32>
    %17 = arith.addf %14, %16 : vector<8x896xf32>
    %cst_12 = arith.constant 0.000000e+00 : f32
    %18 = vector.broadcast %cst_12 : f32 to vector<8x896xf32>
    %19 = arith.cmpf ogt, %17, %18 : vector<8x896xf32>
    %20 = vector.broadcast %12 : f32 to vector<8x896xf32>
    %21 = arith.mulf %20, %17 : vector<8x896xf32>
    %22 = arith.select %19, %17, %21 : vector<8x896xi1>, vector<8x896xf32>
    %c2 = arith.constant 2 : index
    %23 = memref.load %arg1[%c2] : memref<5xf32, #tpu.memory_space<smem>>
    %c0_13 = arith.constant 0 : index
    %c0_14 = arith.constant 0 : index
    %24 = vector.load %arg7[%c0_13, %c0_14] : memref<896x896xf32, #tpu.memory_space<vmem>>, vector<896x896xf32>
    %cst_15 = arith.constant dense<0.000000e+00> : vector<8x896xf32>
    %25 = tpu.matmul %22, %24, %cst_15 {dimension_numbers = #tpu.dot_dimension_numbers<[1], [0], [0], [1], [0, 0, 1, 1], [], []>} : vector<8x896xf32>, vector<896x896xf32>, vector<8x896xf32> -> vector<8x896xf32>
    %c0_16 = arith.constant 0 : index
    %c0_17 = arith.constant 0 : index
    %26 = vector.load %arg8[%c0_16, %c0_17] : memref<1x896xf32, #tpu.memory_space<vmem>>, vector<1x896xf32>
    %27 = vector.broadcast %26 : vector<1x896xf32> to vector<8x896xf32>
    %28 = arith.addf %25, %27 : vector<8x896xf32>
    %cst_18 = arith.constant 0.000000e+00 : f32
    %29 = vector.broadcast %cst_18 : f32 to vector<8x896xf32>
    %30 = arith.cmpf ogt, %28, %29 : vector<8x896xf32>
    %31 = vector.broadcast %23 : f32 to vector<8x896xf32>
    %32 = arith.mulf %31, %28 : vector<8x896xf32>
    %33 = arith.select %30, %28, %32 : vector<8x896xi1>, vector<8x896xf32>
    %c3 = arith.constant 3 : index
    %34 = memref.load %arg1[%c3] : memref<5xf32, #tpu.memory_space<smem>>
    %c0_19 = arith.constant 0 : index
    %c0_20 = arith.constant 0 : index
    %35 = vector.load %arg9[%c0_19, %c0_20] : memref<896x256xf32, #tpu.memory_space<vmem>>, vector<896x256xf32>
    %cst_21 = arith.constant dense<0.000000e+00> : vector<8x256xf32>
    %36 = tpu.matmul %33, %35, %cst_21 {dimension_numbers = #tpu.dot_dimension_numbers<[1], [0], [0], [1], [0, 0, 1, 1], [], []>} : vector<8x896xf32>, vector<896x256xf32>, vector<8x256xf32> -> vector<8x256xf32>
    %c0_22 = arith.constant 0 : index
    %c0_23 = arith.constant 0 : index
    %37 = vector.load %arg10[%c0_22, %c0_23] : memref<1x256xf32, #tpu.memory_space<vmem>>, vector<1x256xf32>
    %38 = vector.broadcast %37 : vector<1x256xf32> to vector<8x256xf32>
    %39 = arith.addf %36, %38 : vector<8x256xf32>
    %cst_24 = arith.constant 0.000000e+00 : f32
    %40 = vector.broadcast %cst_24 : f32 to vector<8x256xf32>
    %41 = arith.cmpf ogt, %39, %40 : vector<8x256xf32>
    %42 = vector.broadcast %34 : f32 to vector<8x256xf32>
    %43 = arith.mulf %42, %39 : vector<8x256xf32>
    %44 = arith.select %41, %39, %43 : vector<8x256xi1>, vector<8x256xf32>
    %c4 = arith.constant 4 : index
    %45 = memref.load %arg1[%c4] : memref<5xf32, #tpu.memory_space<smem>>
    %c0_25 = arith.constant 0 : index
    %c0_26 = arith.constant 0 : index
    %46 = vector.load %arg11[%c0_25, %c0_26] : memref<256x256xf32, #tpu.memory_space<vmem>>, vector<256x256xf32>
    %cst_27 = arith.constant dense<0.000000e+00> : vector<8x256xf32>
    %47 = tpu.matmul %44, %46, %cst_27 {dimension_numbers = #tpu.dot_dimension_numbers<[1], [0], [0], [1], [0, 0, 1, 1], [], []>} : vector<8x256xf32>, vector<256x256xf32>, vector<8x256xf32> -> vector<8x256xf32>
    %c0_28 = arith.constant 0 : index
    %c0_29 = arith.constant 0 : index
    %48 = vector.load %arg12[%c0_28, %c0_29] : memref<1x256xf32, #tpu.memory_space<vmem>>, vector<1x256xf32>
    %49 = vector.broadcast %48 : vector<1x256xf32> to vector<8x256xf32>
    %50 = arith.addf %47, %49 : vector<8x256xf32>
    %cst_30 = arith.constant 0.000000e+00 : f32
    %51 = vector.broadcast %cst_30 : f32 to vector<8x256xf32>
    %52 = arith.cmpf ogt, %50, %51 : vector<8x256xf32>
    %53 = vector.broadcast %45 : f32 to vector<8x256xf32>
    %54 = arith.mulf %53, %50 : vector<8x256xf32>
    %55 = arith.select %52, %50, %54 : vector<8x256xi1>, vector<8x256xf32>
    %c0_31 = arith.constant 0 : index
    %c0_32 = arith.constant 0 : index
    %56 = vector.load %arg13[%c0_31, %c0_32] : memref<256x128xf32, #tpu.memory_space<vmem>>, vector<256x128xf32>
    %cst_33 = arith.constant dense<0.000000e+00> : vector<8x128xf32>
    %57 = tpu.matmul %55, %56, %cst_33 {dimension_numbers = #tpu.dot_dimension_numbers<[1], [0], [0], [1], [0, 0, 1, 1], [], []>} : vector<8x256xf32>, vector<256x128xf32>, vector<8x128xf32> -> vector<8x128xf32>
    %c0_34 = arith.constant 0 : index
    %c0_35 = arith.constant 0 : index
    %58 = vector.load %arg14[%c0_34, %c0_35] : memref<1x128xf32, #tpu.memory_space<vmem>>, vector<1x128xf32>
    %59 = vector.broadcast %58 : vector<1x128xf32> to vector<8x128xf32>
    %60 = arith.addf %57, %59 : vector<8x128xf32>
    %cst_36 = arith.constant dense<0xFF800000> : vector<8xf32>
    %61 = vector.multi_reduction <maximumf>, %60, %cst_36 [1] : vector<8x128xf32> to vector<8xf32>
    %62 = vector.shape_cast %61 : vector<8xf32> to vector<8x1xf32>
    %63 = vector.broadcast %62 : vector<8x1xf32> to vector<8x128xf32>
    %64 = arith.subf %60, %63 : vector<8x128xf32>
    %65 = math.exp %64 : vector<8x128xf32>
    %66 = vector.broadcast %62 : vector<8x1xf32> to vector<8x128xf32>
    %67 = arith.subf %60, %66 : vector<8x128xf32>
    %cst_37 = arith.constant dense<0.000000e+00> : vector<8xf32>
    %68 = vector.multi_reduction <add>, %65, %cst_37 [1] : vector<8x128xf32> to vector<8xf32>
    %69 = vector.shape_cast %68 : vector<8xf32> to vector<8x1xf32>
    %70 = math.log %69 : vector<8x1xf32>
    %71 = vector.broadcast %70 : vector<8x1xf32> to vector<8x128xf32>
    %72 = arith.subf %67, %71 : vector<8x128xf32>
    %c0_38 = arith.constant 0 : index
    %c0_39 = arith.constant 0 : index
    %73 = vector.load %arg15[%c0_38, %c0_39] : memref<8x128xf32, #tpu.memory_space<vmem>>, vector<8x128xf32>
    tpu.vector_store %arg15[%c0_38, %c0_39], %72 {strides = array<i32>} : memref<8x128xf32, #tpu.memory_space<vmem>>, vector<8x128xf32>,
    return
  }
  func.func @transform_0(%arg0: i32) -> i32 {
    %c0_i32 = arith.constant 0 : i32
    %c0_i32_0 = arith.constant 0 : i32
    return %c0_i32 : i32
  }
  func.func @transform_1(%arg0: i32) -> (i32, i32) {
    %c0_i32 = arith.constant 0 : i32
    %c0_i32_0 = arith.constant 0 : i32
    return %arg0, %c0_i32 : i32, i32
  }
  func.func @transform_2(%arg0: i32) -> (i32, i32) {
    %c0_i32 = arith.constant 0 : i32
    %c0_i32_0 = arith.constant 0 : i32
    %c0_i32_1 = arith.constant 0 : i32
    return %c0_i32, %c0_i32_0 : i32, i32
  }
  func.func @transform_3(%arg0: i32) -> (i32, i32) {
    %c0_i32 = arith.constant 0 : i32
    %c0_i32_0 = arith.constant 0 : i32
    %c0_i32_1 = arith.constant 0 : i32
    return %c0_i32, %c0_i32_0 : i32, i32
  }
  func.func @transform_4(%arg0: i32) -> (i32, i32) {
    %c0_i32 = arith.constant 0 : i32
    %c0_i32_0 = arith.constant 0 : i32
    %c0_i32_1 = arith.constant 0 : i32
    return %c0_i32, %c0_i32_0 : i32, i32
  }
  func.func @transform_5(%arg0: i32) -> (i32, i32) {
    %c0_i32 = arith.constant 0 : i32
    %c0_i32_0 = arith.constant 0 : i32
    %c0_i32_1 = arith.constant 0 : i32
    return %c0_i32, %c0_i32_0 : i32, i32
  }
  func.func @transform_6(%arg0: i32) -> (i32, i32) {
    %c0_i32 = arith.constant 0 : i32
    %c0_i32_0 = arith.constant 0 : i32
    %c0_i32_1 = arith.constant 0 : i32
    return %c0_i32, %c0_i32_0 : i32, i32
  }
  func.func @transform_7(%arg0: i32) -> (i32, i32) {
    %c0_i32 = arith.constant 0 : i32
    %c0_i32_0 = arith.constant 0 : i32
    %c0_i32_1 = arith.constant 0 : i32
    return %c0_i32, %c0_i32_0 : i32, i32
  }
  func.func @transform_8(%arg0: i32) -> (i32, i32) {
    %c0_i32 = arith.constant 0 : i32
    %c0_i32_0 = arith.constant 0 : i32
    %c0_i32_1 = arith.constant 0 : i32
    return %c0_i32, %c0_i32_0 : i32, i32
  }
  func.func @transform_9(%arg0: i32) -> (i32, i32) {
    %c0_i32 = arith.constant 0 : i32
    %c0_i32_0 = arith.constant 0 : i32
    %c0_i32_1 = arith.constant 0 : i32
    return %c0_i32, %c0_i32_0 : i32, i32
  }
  func.func @transform_10(%arg0: i32) -> (i32, i32) {
    %c0_i32 = arith.constant 0 : i32
    %c0_i32_0 = arith.constant 0 : i32
    %c0_i32_1 = arith.constant 0 : i32
    return %c0_i32, %c0_i32_0 : i32, i32
  }
  func.func @transform_11(%arg0: i32) -> (i32, i32) {
    %c0_i32 = arith.constant 0 : i32
    %c0_i32_0 = arith.constant 0 : i32
    %c0_i32_1 = arith.constant 0 : i32
    return %c0_i32, %c0_i32_0 : i32, i32
  }
  func.func @transform_12(%arg0: i32) -> (i32, i32) {
    %c0_i32 = arith.constant 0 : i32
    %c0_i32_0 = arith.constant 0 : i32
    %c0_i32_1 = arith.constant 0 : i32
    return %c0_i32, %c0_i32_0 : i32, i32
  }
  func.func @transform_13(%arg0: i32) -> (i32, i32) {
    %c0_i32 = arith.constant 0 : i32
    %c0_i32_0 = arith.constant 0 : i32
    %c0_i32_1 = arith.constant 0 : i32
    return %c0_i32, %c0_i32_0 : i32, i32
  }
  func.func @transform_14(%arg0: i32) -> (i32, i32) {
    %c0_i32 = arith.constant 0 : i32
    %c0_i32_0 = arith.constant 0 : i32
    return %arg0, %c0_i32 : i32, i32
  }
}

</mosaic_0001>

<llo_original>
// kernel: cnn_forward_pallas.1
$region0: #{cnn_forward_pallas.1}
  #allocation0 [shape = 'u32[]', space=smem, size = 0x4, offset = 0x4, fixed_abs, tag = 'smem constant byte address 0x4 - core index']
  #allocation1 [shape = 'u32[144,128]{1,0:T(1,128)}', space=vmem, size = 0x12000, scoped, tag = 'internal scratch']
  %s0 = inlined_call_operand.hbm [shape: f32[5], index: 0, kind: input, shape index: {}]
  %s1 = inlined_call_operand.vmem [shape: f32[8,784], index: 1, kind: input, shape index: {}]
  %s2 = inlined_call_operand.hbm [shape: f32[784,1664], index: 2, kind: input, shape index: {}]
  %s3 = inlined_call_operand.hbm [shape: f32[1,1664], index: 3, kind: input, shape index: {}]
  %s4 = inlined_call_operand.hbm [shape: f32[1664,896], index: 4, kind: input, shape index: {}]
  %s5 = inlined_call_operand.hbm [shape: f32[1,896], index: 5, kind: input, shape index: {}]
  %s6 = inlined_call_operand.hbm [shape: f32[896,896], index: 6, kind: input, shape index: {}]
  %s7 = inlined_call_operand.hbm [shape: f32[1,896], index: 7, kind: input, shape index: {}]
  %s8 = inlined_call_operand.hbm [shape: f32[896,256], index: 8, kind: input, shape index: {}]
  %s9 = inlined_call_operand.hbm [shape: f32[1,256], index: 9, kind: input, shape index: {}]
  %s10 = inlined_call_operand.hbm [shape: f32[256,256], index: 10, kind: input, shape index: {}]
  %s11 = inlined_call_operand.hbm [shape: f32[1,256], index: 11, kind: input, shape index: {}]
  %s12 = inlined_call_operand.hbm [shape: f32[256,128], index: 12, kind: input, shape index: {}]
  %s13 = inlined_call_operand.hbm [shape: f32[1,128], index: 13, kind: input, shape index: {}]
  %s14 = inlined_call_operand.vmem [shape: f32[8,128], index: 14, kind: output, shape index: {}]
  %s15 = sld [smem:[#allocation0]]
  $region118: #{cnn_forward_pallas.1} parent=0
    _
  %s17 = ssub.s32 1, %s15
  %s18 = scalar_select 0, %s17, %s15
  $region1: #{cnn_forward_pallas.1} parent=0
    #allocation2 [shape = 'u8[512]{0}', space=smem, size = 0x200, scoped, tag = 'input window, operand 0, single buffered']
    #allocation3 [shape = 's32[1]{0}', space=sflag, size = 0x4, scoped, tag = 'scoped memory for cnn_forward_pallas.1']
    #allocation4 [shape = 's32[1]{0}', space=sflag, size = 0x4, scoped, tag = 'scoped memory for cnn_forward_pallas.1']
    #allocation5 [shape = 'u8[5218304]{0}', space=vmem, size = 0x4fa000, scoped, tag = 'input window, operand 2, single buffered']
    #allocation6 [shape = 'u8[6656]{0}', space=vmem, size = 0x1c00, scoped, tag = 'input window, operand 3, single buffered']
    #allocation7 [shape = 's32[1]{0}', space=sflag, size = 0x4, scoped, tag = 'scoped memory for cnn_forward_pallas.1']
    #allocation8 [shape = 'u8[5963776]{0}', space=vmem, size = 0x5b0000, scoped, tag = 'input window, operand 4, single buffered']
    #allocation9 [shape = 'u8[3584]{0}', space=vmem, size = 0x1000, scoped, tag = 'input window, operand 5, single buffered']
    #allocation10 [shape = 's32[1]{0}', space=sflag, size = 0x4, scoped, tag = 'scoped memory for cnn_forward_pallas.1']
    #allocation11 [shape = 'u8[3211264]{0}', space=vmem, size = 0x310000, scoped, tag = 'input window, operand 6, single buffered']
    #allocation12 [shape = 'u8[3584]{0}', space=vmem, size = 0x1000, scoped, tag = 'input window, operand 7, single buffered']
    #allocation13 [shape = 's32[1]{0}', space=sflag, size = 0x4, scoped, tag = 'scoped memory for cnn_forward_pallas.1']
    #allocation14 [shape = 'u8[917504]{0}', space=vmem, size = 0xe0000, scoped, tag = 'input window, operand 8, single buffered']
    #allocation15 [shape = 'u8[1024]{0}', space=vmem, size = 0x400, scoped, tag = 'input window, operand 9, single buffered']
    #allocation16 [shape = 's32[1]{0}', space=sflag, size = 0x4, scoped, tag = 'scoped memory for cnn_forward_pallas.1']
    #allocation17 [shape = 'u8[262144]{0}', space=vmem, size = 0x40000, scoped, tag = 'input window, operand 10, single buffered']
    #allocation18 [shape = 'u8[1024]{0}', space=vmem, size = 0x400, scoped, tag = 'input window, operand 11, single buffered']
    #allocation19 [shape = 's32[1]{0}', space=sflag, size = 0x4, scoped, tag = 'scoped memory for cnn_forward_pallas.1']
    #allocation20 [shape = 'u8[131072]{0}', space=vmem, size = 0x20000, scoped, tag = 'input window, operand 12, single buffered']
    #allocation21 [shape = 'u8[512]{0}', space=vmem, size = 0x400, scoped, tag = 'input window, operand 13, single buffered']
    #allocation22 [shape = 's32[1]{0}', space=sflag, size = 0x4, scoped, tag = 'scoped memory for cnn_forward_pallas.1']
    %19 = vsyncpa [#allocation4], 0
    %20 = vsyncpa [#allocation3], 0
    %21 = vsyncpa [#allocation7], 0
    %22 = vsyncpa [#allocation10], 0
    %23 = vsyncpa [#allocation13], 0
    %24 = vsyncpa [#allocation16], 0
    %25 = vsyncpa [#allocation19], 0
    %26 = vsyncpa [#allocation22], 0
    // Predicated region
    $region2: #{cnn_forward_pallas.1} parent=1 // pred_check
      _
    $region3: #{cnn_forward_pallas.1} parent=1 // pred_check_branch
      %28 = sbr.rel (0) target = $region5
    $region4: #{cnn_forward_pallas.1} parent=1 // pred_region
      %s30 = ssub.s32 16, 16
      %31 = vsyncadd [#allocation4], %s30
      %34 = dma.hbm_to_smem %s0, 16, [#allocation2], [#allocation4]
    $region5: #{cnn_forward_pallas.1} parent=1 // pred_fallthru
      _
    // Predicated region
    $region6: #{cnn_forward_pallas.1} parent=1 // pred_check
      _
    $region7: #{cnn_forward_pallas.1} parent=1 // pred_check_branch
      %36 = sbr.rel (0) target = $region9
    $region8: #{cnn_forward_pallas.1} parent=1 // pred_region
      _
    $region9: #{cnn_forward_pallas.1} parent=1 // pred_fallthru
      _
    // Predicated region
    $region10: #{cnn_forward_pallas.1} parent=1 // pred_check
      _
    $region11: #{cnn_forward_pallas.1} parent=1 // pred_check_branch
      %38 = sbr.rel (0) target = $region13
    $region12: #{cnn_forward_pallas.1} parent=1 // pred_region
      %s40 = ssub.s32 163072, 163072
      %41 = vsyncadd [#allocation3], %s40
      %s42 = sshll.u32 [#allocation5], 4
      %s43 = int_to_ptr.vmem [resolvable:$true] %s42
      %48 = dma.hbm_to_vmem [thread:$0]  %s2, 163072, %s43, [#allocation3], 1664, 1664, 104
    $region13: #{cnn_forward_pallas.1} parent=1 // pred_fallthru
      _
    // Predicated region
    $region14: #{cnn_forward_pallas.1} parent=1 // pred_check
      _
    $region15: #{cnn_forward_pallas.1} parent=1 // pred_check_branch
      %50 = sbr.rel (0) target = $region17
    $region16: #{cnn_forward_pallas.1} parent=1 // pred_region
      %s52 = ssub.s32 208, 208
      %53 = vsyncadd [#allocation7], %s52
      %s55 = sshll.u32 [#allocation6], 4
      %s56 = int_to_ptr.vmem [resolvable:$true] %s55
      %58 = dma.hbm_to_vmem [thread:$0]  %s3, 208, %s56, [#allocation7]
    $region17: #{cnn_forward_pallas.1} parent=1 // pred_fallthru
      _
    // Predicated region
    $region18: #{cnn_forward_pallas.1} parent=1 // pred_check
      _
    $region19: #{cnn_forward_pallas.1} parent=1 // pred_check_branch
      %60 = sbr.rel (0) target = $region21
    $region20: #{cnn_forward_pallas.1} parent=1 // pred_region
      %s62 = ssub.s32 186368, 186368
      %63 = vsyncadd [#allocation7], %s62
      %s64 = sshll.u32 [#allocation8], 4
      %s65 = int_to_ptr.vmem [resolvable:$true] %s64
      %70 = dma.hbm_to_vmem [thread:$0]  %s4, 186368, %s65, [#allocation7], 896, 896, 56
    $region21: #{cnn_forward_pallas.1} parent=1 // pred_fallthru
      _
    // Predicated region
    $region22: #{cnn_forward_pallas.1} parent=1 // pred_check
      _
    $region23: #{cnn_forward_pallas.1} parent=1 // pred_check_branch
      %72 = sbr.rel (0) target = $region25
    $region24: #{cnn_forward_pallas.1} parent=1 // pred_region
      %s74 = ssub.s32 112, 112
      %75 = vsyncadd [#allocation10], %s74
      %s77 = sshll.u32 [#allocation9], 4
      %s78 = int_to_ptr.vmem [resolvable:$true] %s77
      %80 = dma.hbm_to_vmem [thread:$0]  %s5, 112, %s78, [#allocation10]
    $region25: #{cnn_forward_pallas.1} parent=1 // pred_fallthru
      _
    // Predicated region
    $region26: #{cnn_forward_pallas.1} parent=1 // pred_check
      _
    $region27: #{cnn_forward_pallas.1} parent=1 // pred_check_branch
      %82 = sbr.rel (0) target = $region29
    $region28: #{cnn_forward_pallas.1} parent=1 // pred_region
      %s84 = ssub.s32 100352, 100352
      %85 = vsyncadd [#allocation10], %s84
      %s86 = sshll.u32 [#allocation11], 4
      %s87 = int_to_ptr.vmem [resolvable:$true] %s86
      %92 = dma.hbm_to_vmem [thread:$0]  %s6, 100352, %s87, [#allocation10], 896, 896, 56
    $region29: #{cnn_forward_pallas.1} parent=1 // pred_fallthru
      _
    // Predicated region
    $region30: #{cnn_forward_pallas.1} parent=1 // pred_check
      _
    $region31: #{cnn_forward_pallas.1} parent=1 // pred_check_branch
      %94 = sbr.rel (0) target = $region33
    $region32: #{cnn_forward_pallas.1} parent=1 // pred_region
      %s96 = ssub.s32 112, 112
      %97 = vsyncadd [#allocation13], %s96
      %s99 = sshll.u32 [#allocation12], 4
      %s100 = int_to_ptr.vmem [resolvable:$true] %s99
      %102 = dma.hbm_to_vmem [thread:$0]  %s7, 112, %s100, [#allocation13]
    $region33: #{cnn_forward_pallas.1} parent=1 // pred_fallthru
      _
    // Predicated region
    $region34: #{cnn_forward_pallas.1} parent=1 // pred_check
      _
    $region35: #{cnn_forward_pallas.1} parent=1 // pred_check_branch
      %104 = sbr.rel (0) target = $region37
    $region36: #{cnn_forward_pallas.1} parent=1 // pred_region
      %s106 = ssub.s32 28672, 28672
      %107 = vsyncadd [#allocation13], %s106
      %s108 = sshll.u32 [#allocation14], 4
      %s109 = int_to_ptr.vmem [resolvable:$true] %s108
      %114 = dma.hbm_to_vmem [thread:$0]  %s8, 28672, %s109, [#allocation13], 256, 256, 16
    $region37: #{cnn_forward_pallas.1} parent=1 // pred_fallthru
      _
    // Predicated region
    $region38: #{cnn_forward_pallas.1} parent=1 // pred_check
      _
    $region39: #{cnn_forward_pallas.1} parent=1 // pred_check_branch
      %116 = sbr.rel (0) target = $region41
    $region40: #{cnn_forward_pallas.1} parent=1 // pred_region
      %s118 = ssub.s32 32, 32
      %119 = vsyncadd [#allocation16], %s118
      %s121 = sshll.u32 [#allocation15], 4
      %s122 = int_to_ptr.vmem [resolvable:$true] %s121
      %124 = dma.hbm_to_vmem [thread:$0]  %s9, 32, %s122, [#allocation16]
    $region41: #{cnn_forward_pallas.1} parent=1 // pred_fallthru
      _
    // Predicated region
    $region42: #{cnn_forward_pallas.1} parent=1 // pred_check
      _
    $region43: #{cnn_forward_pallas.1} parent=1 // pred_check_branch
      %126 = sbr.rel (0) target = $region45
    $region44: #{cnn_forward_pallas.1} parent=1 // pred_region
      %s128 = ssub.s32 8192, 8192
      %129 = vsyncadd [#allocation16], %s128
      %s130 = sshll.u32 [#allocation17], 4
      %s131 = int_to_ptr.vmem [resolvable:$true] %s130
      %136 = dma.hbm_to_vmem [thread:$0]  %s10, 8192, %s131, [#allocation16], 256, 256, 16
    $region45: #{cnn_forward_pallas.1} parent=1 // pred_fallthru
      _
    // Predicated region
    $region46: #{cnn_forward_pallas.1} parent=1 // pred_check
      _
    $region47: #{cnn_forward_pallas.1} parent=1 // pred_check_branch
      %138 = sbr.rel (0) target = $region49
    $region48: #{cnn_forward_pallas.1} parent=1 // pred_region
      %s140 = ssub.s32 32, 32
      %141 = vsyncadd [#allocation19], %s140
      %s143 = sshll.u32 [#allocation18], 4
      %s144 = int_to_ptr.vmem [resolvable:$true] %s143
      %146 = dma.hbm_to_vmem [thread:$0]  %s11, 32, %s144, [#allocation19]
    $region49: #{cnn_forward_pallas.1} parent=1 // pred_fallthru
      _
    // Predicated region
    $region50: #{cnn_forward_pallas.1} parent=1 // pred_check
      _
    $region51: #{cnn_forward_pallas.1} parent=1 // pred_check_branch
      %148 = sbr.rel (0) target = $region53
    $region52: #{cnn_forward_pallas.1} parent=1 // pred_region
      %s150 = ssub.s32 4096, 4096
      %151 = vsyncadd [#allocation19], %s150
      %s152 = sshll.u32 [#allocation20], 4
      %s153 = int_to_ptr.vmem [resolvable:$true] %s152
      %158 = dma.hbm_to_vmem [thread:$0]  %s12, 4096, %s153, [#allocation19], 128, 128, 8
    $region53: #{cnn_forward_pallas.1} parent=1 // pred_fallthru
      _
    // Predicated region
    $region54: #{cnn_forward_pallas.1} parent=1 // pred_check
      _
    $region55: #{cnn_forward_pallas.1} parent=1 // pred_check_branch
      %160 = sbr.rel (0) target = $region57
    $region56: #{cnn_forward_pallas.1} parent=1 // pred_region
      %s162 = ssub.s32 16, 16
      %163 = vsyncadd [#allocation22], %s162
      %s165 = sshll.u32 [#allocation21], 4
      %s166 = int_to_ptr.vmem [resolvable:$true] %s165
      %168 = dma.hbm_to_vmem [thread:$0]  %s13, 16, %s166, [#allocation22]
    $region57: #{cnn_forward_pallas.1} parent=1 // pred_fallthru
      _
    // Predicated region
    $region58: #{cnn_forward_pallas.1} parent=1 // pred_check
      _
    $region59: #{cnn_forward_pallas.1} parent=1 // pred_check_branch
      %170 = sbr.rel (0) target = $region61
    $region60: #{cnn_forward_pallas.1} parent=1 // pred_region
      %171 = dma.done [#allocation4], 16
    $region61: #{cnn_forward_pallas.1} parent=1 // pred_fallthru
      _
    // Predicated region
    $region62: #{cnn_forward_pallas.1} parent=1 // pred_check
      _
    $region63: #{cnn_forward_pallas.1} parent=1 // pred_check_branch
      %173 = sbr.rel (0) target = $region65
    $region64: #{cnn_forward_pallas.1} parent=1 // pred_region
      %174 = dma.done [#allocation3], 163072
    $region65: #{cnn_forward_pallas.1} parent=1 // pred_fallthru
      _
    // Predicated region
    $region66: #{cnn_forward_pallas.1} parent=1 // pred_check
      _
    $region67: #{cnn_forward_pallas.1} parent=1 // pred_check_branch
      %176 = sbr.rel (0) target = $region69
    $region68: #{cnn_forward_pallas.1} parent=1 // pred_region
      %177 = dma.done [#allocation7], 208
    $region69: #{cnn_forward_pallas.1} parent=1 // pred_fallthru
      _
    // Predicated region
    $region70: #{cnn_forward_pallas.1} parent=1 // pred_check
      _
    $region71: #{cnn_forward_pallas.1} parent=1 // pred_check_branch
      %179 = sbr.rel (0) target = $region73
    $region72: #{cnn_forward_pallas.1} parent=1 // pred_region
      %180 = dma.done [#allocation7], 186368
    $region73: #{cnn_forward_pallas.1} parent=1 // pred_fallthru
      _
    // Predicated region
    $region74: #{cnn_forward_pallas.1} parent=1 // pred_check
      _
    $region75: #{cnn_forward_pallas.1} parent=1 // pred_check_branch
      %182 = sbr.rel (0) target = $region77
    $region76: #{cnn_forward_pallas.1} parent=1 // pred_region
      %183 = dma.done [#allocation10], 112
    $region77: #{cnn_forward_pallas.1} parent=1 // pred_fallthru
      _
    // Predicated region
    $region78: #{cnn_forward_pallas.1} parent=1 // pred_check
      _
    $region79: #{cnn_forward_pallas.1} parent=1 // pred_check_branch
      %185 = sbr.rel (0) target = $region81
    $region80: #{cnn_forward_pallas.1} parent=1 // pred_region
      %186 = dma.done [#allocation10], 100352
    $region81: #{cnn_forward_pallas.1} parent=1 // pred_fallthru
      _
    // Predicated region
    $region82: #{cnn_forward_pallas.1} parent=1 // pred_check
      _
    $region83: #{cnn_forward_pallas.1} parent=1 // pred_check_branch
      %188 = sbr.rel (0) target = $region85
    $region84: #{cnn_forward_pallas.1} parent=1 // pred_region
      %189 = dma.done [#allocation13], 112
    $region85: #{cnn_forward_pallas.1} parent=1 // pred_fallthru
      _
    // Predicated region
    $region86: #{cnn_forward_pallas.1} parent=1 // pred_check
      _
    $region87: #{cnn_forward_pallas.1} parent=1 // pred_check_branch
      %191 = sbr.rel (0) target = $region89
    $region88: #{cnn_forward_pallas.1} parent=1 // pred_region
      %192 = dma.done [#allocation13], 28672
    $region89: #{cnn_forward_pallas.1} parent=1 // pred_fallthru
      _
    // Predicated region
    $region90: #{cnn_forward_pallas.1} parent=1 // pred_check
      _
    $region91: #{cnn_forward_pallas.1} parent=1 // pred_check_branch
      %194 = sbr.rel (0) target = $region93
    $region92: #{cnn_forward_pallas.1} parent=1 // pred_region
      %195 = dma.done [#allocation16], 32
    $region93: #{cnn_forward_pallas.1} parent=1 // pred_fallthru
      _
    // Predicated region
    $region94: #{cnn_forward_pallas.1} parent=1 // pred_check
      _
    $region95: #{cnn_forward_pallas.1} parent=1 // pred_check_branch
      %197 = sbr.rel (0) target = $region97
    $region96: #{cnn_forward_pallas.1} parent=1 // pred_region
      %198 = dma.done [#allocation16], 8192
    $region97: #{cnn_forward_pallas.1} parent=1 // pred_fallthru
      _
    // Predicated region
    $region98: #{cnn_forward_pallas.1} parent=1 // pred_check
      _
    $region99: #{cnn_forward_pallas.1} parent=1 // pred_check_branch
      %200 = sbr.rel (0) target = $region101
    $region100: #{cnn_forward_pallas.1} parent=1 // pred_region
      %201 = dma.done [#allocation19], 32
    $region101: #{cnn_forward_pallas.1} parent=1 // pred_fallthru
      _
    // Predicated region
    $region102: #{cnn_forward_pallas.1} parent=1 // pred_check
      _
    $region103: #{cnn_forward_pallas.1} parent=1 // pred_check_branch
      %203 = sbr.rel (0) target = $region105
    $region104: #{cnn_forward_pallas.1} parent=1 // pred_region
      %204 = dma.done [#allocation19], 4096
    $region105: #{cnn_forward_pallas.1} parent=1 // pred_fallthru
      _
    // Predicated region
    $region106: #{cnn_forward_pallas.1} parent=1 // pred_check
      _
    $region107: #{cnn_forward_pallas.1} parent=1 // pred_check_branch
      %206 = sbr.rel (0) target = $region109
    $region108: #{cnn_forward_pallas.1} parent=1 // pred_region
      %207 = dma.done [#allocation22], 16
    $region109: #{cnn_forward_pallas.1} parent=1 // pred_fallthru
      _
    %208 = sfence
    %v209 = vld [vmem:[%s1] sm:$0xff]
    %v210 = vld [vmem:[%s1 + $0x8] sm:$0xff]
    %v211 = vld [vmem:[%s1 + $0x10] sm:$0xff]
    %v212 = vld [vmem:[%s1 + $0x18] sm:$0xff]
    %v213 = vld [vmem:[%s1 + $0x20] sm:$0xff]
    %v214 = vld [vmem:[%s1 + $0x28] sm:$0xff]
    %v215 = vld [vmem:[%s1 + $0x30] sm:$0xff]
    %s216 = sld [smem:[#allocation2]]
    %v217 = vld [vmem:[#allocation5] sm:$0xff]
    %v218 = vld [vmem:[#allocation5 + $0x8] sm:$0xff]
    %v219 = vld [vmem:[#allocation5 + $0x10] sm:$0xff]
    %v220 = vld [vmem:[#allocation5 + $0x18] sm:$0xff]
    %v221 = vld [vmem:[#allocation5 + $0x20] sm:$0xff]
    %v222 = vld [vmem:[#allocation5 + $0x28] sm:$0xff]
    %v223 = vld [vmem:[#allocation5 + $0x30] sm:$0xff]
    %v224 = vld [vmem:[#allocation5 + $0x38] sm:$0xff]
    %v225 = vld [vmem:[#allocation5 + $0x40] sm:$0xff]
    %v226 = vld [vmem:[#allocation5 + $0x48] sm:$0xff]
    %v227 = vld [vmem:[#allocation5 + $0x50] sm:$0xff]
    %v228 = vld [vmem:[#allocation5 + $0x58] sm:$0xff]
    %v229 = vld [vmem:[#allocation5 + $0x60] sm:$0xff]
    %v230 = vld [vmem:[#allocation5 + $0x68] sm:$0xff]
    %v231 = vld [vmem:[#allocation5 + $0x70] sm:$0xff]
    %v232 = vld [vmem:[#allocation5 + $0x78] sm:$0xff]
    %v233 = vld [vmem:[#allocation5 + $0x80] sm:$0xff]
    %v234 = vld [vmem:[#allocation5 + $0x88] sm:$0xff]
    %v235 = vld [vmem:[#allocation5 + $0x90] sm:$0xff]
    %v236 = vld [vmem:[#allocation5 + $0x98] sm:$0xff]
    %v237 = vld [vmem:[#allocation5 + $0xa0] sm:$0xff]
    %v238 = vld [vmem:[#allocation5 + $0xa8] sm:$0xff]
    %v239 = vld [vmem:[#allocation5 + $0xb0] sm:$0xff]
    %v240 = vld [vmem:[#allocation5 + $0xb8] sm:$0xff]
    %v241 = vld [vmem:[#allocation5 + $0xc0] sm:$0xff]
    %v242 = vld [vmem:[#allocation5 + $0xc8] sm:$0xff]
    %v243 = vld [vmem:[#allocation5 + $0xd0] sm:$0xff]
    %v244 = vld [vmem:[#allocation5 + $0xd8] sm:$0xff]
    %v245 = vld [vmem:[#allocation5 + $0xe0] sm:$0xff]
    %v246 = vld [vmem:[#allocation5 + $0xe8] sm:$0xff]
    %v247 = vld [vmem:[#allocation5 + $0xf0] sm:$0xff]
    %v248 = vld [vmem:[#allocation5 + $0xf8] sm:$0xff]
    %v249 = vld [vmem:[#allocation5 + $0x100] sm:$0xff]
    %v250 = vld [vmem:[#allocation5 + $0x108] sm:$0xff]
    %v251 = vld [vmem:[#allocation5 + $0x110] sm:$0xff]
    %v252 = vld [vmem:[#allocation5 + $0x118] sm:$0xff]
    %v253 = vld [vmem:[#allocation5 + $0x120] sm:$0xff]
    %v254 = vld [vmem:[#allocation5 + $0x128] sm:$0xff]
    %v255 = vld [vmem:[#allocation5 + $0x130] sm:$0xff]
    %v256 = vld [vmem:[#allocation5 + $0x138] sm:$0xff]
    %v257 = vld [vmem:[#allocation5 + $0x140] sm:$0xff]
    %v258 = vld [vmem:[#allocation5 + $0x148] sm:$0xff]
    %v259 = vld [vmem:[#allocation5 + $0x150] sm:$0xff]
    %v260 = vld [vmem:[#allocation5 + $0x158] sm:$0xff]
    %v261 = vld [vmem:[#allocation5 + $0x160] sm:$0xff]
    %v262 = vld [vmem:[#allocation5 + $0x168] sm:$0xff]
    %v263 = vld [vmem:[#allocation5 + $0x170] sm:$0xff]
    %v264 = vld [vmem:[#allocation5 + $0x178] sm:$0xff]
    %v265 = vld [vmem:[#allocation5 + $0x180] sm:$0xff]
    %v266 = vld [vmem:[#allocation5 + $0x188] sm:$0xff]
    %v267 = vld [vmem:[#allocation5 + $0x190] sm:$0xff]
    %v268 = vld [vmem:[#allocation5 + $0x198] sm:$0xff]
    %v269 = vld [vmem:[#allocation5 + $0x1a0] sm:$0xff]
    %v270 = vld [vmem:[#allocation5 + $0x1a8] sm:$0xff]
    %v271 = vld [vmem:[#allocation5 + $0x1b0] sm:$0xff]
    %v272 = vld [vmem:[#allocation5 + $0x1b8] sm:$0xff]
    %v273 = vld [vmem:[#allocation5 + $0x1c0] sm:$0xff]
    %v274 = vld [vmem:[#allocation5 + $0x1c8] sm:$0xff]
    %v275 = vld [vmem:[#allocation5 + $0x1d0] sm:$0xff]
    %v276 = vld [vmem:[#allocation5 + $0x1d8] sm:$0xff]
    %v277 = vld [vmem:[#allocation5 + $0x1e0] sm:$0xff]
    %v278 = vld [vmem:[#allocation5 + $0x1e8] sm:$0xff]
    %v279 = vld [vmem:[#allocation5 + $0x1f0] sm:$0xff]
    %v280 = vld [vmem:[#allocation5 + $0x1f8] sm:$0xff]
    %v281 = vld [vmem:[#allocation5 + $0x200] sm:$0xff]
    %v282 = vld [vmem:[#allocation5 + $0x208] sm:$0xff]
    %v283 = vld [vmem:[#allocation5 + $0x210] sm:$0xff]
    %v284 = vld [vmem:[#allocation5 + $0x218] sm:$0xff]
    %v285 = vld [vmem:[#allocation5 + $0x220] sm:$0xff]
    %v286 = vld [vmem:[#allocation5 + $0x228] sm:$0xff]
    %v287 = vld [vmem:[#allocation5 + $0x230] sm:$0xff]
    %v288 = vld [vmem:[#allocation5 + $0x238] sm:$0xff]
    %v289 = vld [vmem:[#allocation5 + $0x240] sm:$0xff]
    %v290 = vld [vmem:[#allocation5 + $0x248] sm:$0xff]
    %v291 = vld [vmem:[#allocation5 + $0x250] sm:$0xff]
    %v292 = vld [vmem:[#allocation5 + $0x258] sm:$0xff]
    %v293 = vld [vmem:[#allocation5 + $0x260] sm:$0xff]
    %v294 = vld [vmem:[#allocation5 + $0x268] sm:$0xff]
    %v295 = vld [vmem:[#allocation5 + $0x270] sm:$0xff]
    %v296 = vld [vmem:[#allocation5 + $0x278] sm:$0xff]
    %v297 = vld [vmem:[#allocation5 + $0x280] sm:$0xff]
    %v298 = vld [vmem:[#allocation5 + $0x288] sm:$0xff]
    %v299 = vld [vmem:[#allocation5 + $0x290] sm:$0xff]
    %v300 = vld [vmem:[#allocation5 + $0x298] sm:$0xff]
    %v301 = vld [vmem:[#allocation5 + $0x2a0] sm:$0xff]
    %v302 = vld [vmem:[#allocation5 + $0x2a8] sm:$0xff]
    %v303 = vld [vmem:[#allocation5 + $0x2b0] sm:$0xff]
    %v304 = vld [vmem:[#allocation5 + $0x2b8] sm:$0xff]
    %v305 = vld [vmem:[#allocation5 + $0x2c0] sm:$0xff]
    %v306 = vld [vmem:[#allocation5 + $0x2c8] sm:$0xff]
    %v307 = vld [vmem:[#allocation5 + $0x2d0] sm:$0xff]
    %v308 = vld [vmem:[#allocation5 + $0x2d8] sm:$0xff]
    %v309 = vld [vmem:[#allocation5 + $0x2e0] sm:$0xff]
    %v310 = vld [vmem:[#allocation5 + $0x2e8] sm:$0xff]
    %v311 = vld [vmem:[#allocation5 + $0x2f0] sm:$0xff]
    %v312 = vld [vmem:[#allocation5 + $0x2f8] sm:$0xff]
    %v313 = vld [vmem:[#allocation5 + $0x300] sm:$0xff]
    %v314 = vld [vmem:[#allocation5 + $0x308] sm:$0xff]
    %v315 = vld [vmem:[#allocation5 + $0x310] sm:$0xff]
    %v316 = vld [vmem:[#allocation5 + $0x318] sm:$0xff]
    %v317 = vld [vmem:[#allocation5 + $0x320] sm:$0xff]
    %v318 = vld [vmem:[#allocation5 + $0x328] sm:$0xff]
    %v319 = vld [vmem:[#allocation5 + $0x330] sm:$0xff]
    %v320 = vld [vmem:[#allocation5 + $0x338] sm:$0xff]
    %v321 = vld [vmem:[#allocation5 + $0x340] sm:$0xff]
    %v322 = vld [vmem:[#allocation5 + $0x348] sm:$0xff]
    %v323 = vld [vmem:[#allocation5 + $0x350] sm:$0xff]
    %v324 = vld [vmem:[#allocation5 + $0x358] sm:$0xff]
    %v325 = vld [vmem:[#allocation5 + $0x360] sm:$0xff]
    %v326 = vld [vmem:[#allocation5 + $0x368] sm:$0xff]
    %v327 = vld [vmem:[#allocation5 + $0x370] sm:$0xff]
    %v328 = vld [vmem:[#allocation5 + $0x378] sm:$0xff]
    %v329 = vld [vmem:[#allocation5 + $0x380] sm:$0xff]
    %v330 = vld [vmem:[#allocation5 + $0x388] sm:$0xff]
    %v331 = vld [vmem:[#allocation5 + $0x390] sm:$0xff]
    %v332 = vld [vmem:[#allocation5 + $0x398] sm:$0xff]
    %v333 = vld [vmem:[#allocation5 + $0x3a0] sm:$0xff]
    %v334 = vld [vmem:[#allocation5 + $0x3a8] sm:$0xff]
    %v335 = vld [vmem:[#allocation5 + $0x3b0] sm:$0xff]
    %v336 = vld [vmem:[#allocation5 + $0x3b8] sm:$0xff]
    %v337 = vld [vmem:[#allocation5 + $0x3c0] sm:$0xff]
    %v338 = vld [vmem:[#allocation5 + $0x3c8] sm:$0xff]
    %v339 = vld [vmem:[#allocation5 + $0x3d0] sm:$0xff]
    %v340 = vld [vmem:[#allocation5 + $0x3d8] sm:$0xff]
    %v341 = vld [vmem:[#allocation5 + $0x3e0] sm:$0xff]
    %v342 = vld [vmem:[#allocation5 + $0x3e8] sm:$0xff]
    %v343 = vld [vmem:[#allocation5 + $0x3f0] sm:$0xff]
    %v344 = vld [vmem:[#allocation5 + $0x3f8] sm:$0xff]
    %v345 = vld [vmem:[#allocation5 + $0x400] sm:$0xff]
    %v346 = vld [vmem:[#allocation5 + $0x408] sm:$0xff]
    %v347 = vld [vmem:[#allocation5 + $0x410] sm:$0xff]
    %v348 = vld [vmem:[#allocation5 + $0x418] sm:$0xff]
    %v349 = vld [vmem:[#allocation5 + $0x420] sm:$0xff]
    %v350 = vld [vmem:[#allocation5 + $0x428] sm:$0xff]
    %v351 = vld [vmem:[#allocation5 + $0x430] sm:$0xff]
    %v352 = vld [vmem:[#allocation5 + $0x438] sm:$0xff]
    %v353 = vld [vmem:[#allocation5 + $0x440] sm:$0xff]
    %v354 = vld [vmem:[#allocation5 + $0x448] sm:$0xff]
    %v355 = vld [vmem:[#allocation5 + $0x450] sm:$0xff]
    %v356 = vld [vmem:[#allocation5 + $0x458] sm:$0xff]
    %v357 = vld [vmem:[#allocation5 + $0x460] sm:$0xff]
    %v358 = vld [vmem:[#allocation5 + $0x468] sm:$0xff]
    %v359 = vld [vmem:[#allocation5 + $0x470] sm:$0xff]
    %v360 = vld [vmem:[#allocation5 + $0x478] sm:$0xff]
    %v361 = vld [vmem:[#allocation5 + $0x480] sm:$0xff]
    %v362 = vld [vmem:[#allocation5 + $0x488] sm:$0xff]
    %v363 = vld [vmem:[#allocation5 + $0x490] sm:$0xff]
    %v364 = vld [vmem:[#allocation5 + $0x498] sm:$0xff]
    %v365 = vld [vmem:[#allocation5 + $0x4a0] sm:$0xff]
    %v366 = vld [vmem:[#allocation5 + $0x4a8] sm:$0xff]
    %v367 = vld [vmem:[#allocation5 + $0x4b0] sm:$0xff]
    %v368 = vld [vmem:[#allocation5 + $0x4b8] sm:$0xff]
    %v369 = vld [vmem:[#allocation5 + $0x4c0] sm:$0xff]
    %v370 = vld [vmem:[#allocation5 + $0x4c8] sm:$0xff]
    %v371 = vld [vmem:[#allocation5 + $0x4d0] sm:$0xff]
    %v372 = vld [vmem:[#allocation5 + $0x4d8] sm:$0xff]
    %v373 = vld [vmem:[#allocation5 + $0x4e0] sm:$0xff]
    %v374 = vld [vmem:[#allocation5 + $0x4e8] sm:$0xff]
    %v375 = vld [vmem:[#allocation5 + $0x4f0] sm:$0xff]
    %v376 = vld [vmem:[#allocation5 + $0x4f8] sm:$0xff]
    %v377 = vld [vmem:[#allocation5 + $0x500] sm:$0xff]
    %v378 = vld [vmem:[#allocation5 + $0x508] sm:$0xff]
    %v379 = vld [vmem:[#allocation5 + $0x510] sm:$0xff]
    %v380 = vld [vmem:[#allocation5 + $0x518] sm:$0xff]
    %v381 = vld [vmem:[#allocation5 + $0x520] sm:$0xff]
    %v382 = vld [vmem:[#allocation5 + $0x528] sm:$0xff]
    %v383 = vld [vmem:[#allocation5 + $0x530] sm:$0xff]
    %v384 = vld [vmem:[#allocation5 + $0x538] sm:$0xff]
    %v385 = vld [vmem:[#allocation5 + $0x540] sm:$0xff]
    %v386 = vld [vmem:[#allocation5 + $0x548] sm:$0xff]
    %v387 = vld [vmem:[#allocation5 + $0x550] sm:$0xff]
    %v388 = vld [vmem:[#allocation5 + $0x558] sm:$0xff]
    %v389 = vld [vmem:[#allocation5 + $0x560] sm:$0xff]
    %v390 = vld [vmem:[#allocation5 + $0x568] sm:$0xff]
    %v391 = vld [vmem:[#allocation5 + $0x570] sm:$0xff]
    %v392 = vld [vmem:[#allocation5 + $0x578] sm:$0xff]
    %v393 = vld [vmem:[#allocation5 + $0x580] sm:$0xff]
    %v394 = vld [vmem:[#allocation5 + $0x588] sm:$0xff]
    %v395 = vld [vmem:[#allocation5 + $0x590] sm:$0xff]
    %v396 = vld [vmem:[#allocation5 + $0x598] sm:$0xff]
    %v397 = vld [vmem:[#allocation5 + $0x5a0] sm:$0xff]
    %v398 = vld [vmem:[#allocation5 + $0x5a8] sm:$0xff]
    %v399 = vld [vmem:[#allocation5 + $0x5b0] sm:$0xff]
    %v400 = vld [vmem:[#allocation5 + $0x5b8] sm:$0xff]
    %v401 = vld [vmem:[#allocation5 + $0x5c0] sm:$0xff]
    %v402 = vld [vmem:[#allocation5 + $0x5c8] sm:$0xff]
    %v403 = vld [vmem:[#allocation5 + $0x5d0] sm:$0xff]
    %v404 = vld [vmem:[#allocation5 + $0x5d8] sm:$0xff]
    %v405 = vld [vmem:[#allocation5 + $0x5e0] sm:$0xff]
    %v406 = vld [vmem:[#allocation5 + $0x5e8] sm:$0xff]
    %v407 = vld [vmem:[#allocation5 + $0x5f0] sm:$0xff]
    %v408 = vld [vmem:[#allocation5 + $0x5f8] sm:$0xff]
    %v409 = vld [vmem:[#allocation5 + $0x600] sm:$0xff]
    %v410 = vld [vmem:[#allocation5 + $0x608] sm:$0xff]
    %v411 = vld [vmem:[#allocation5 + $0x610] sm:$0xff]
    %v412 = vld [vmem:[#allocation5 + $0x618] sm:$0xff]
    %v413 = vld [vmem:[#allocation5 + $0x620] sm:$0xff]
    %v414 = vld [vmem:[#allocation5 + $0x628] sm:$0xff]
    %v415 = vld [vmem:[#allocation5 + $0x630] sm:$0xff]
    %v416 = vld [vmem:[#allocation5 + $0x638] sm:$0xff]
    %v417 = vld [vmem:[#allocation5 + $0x640] sm:$0xff]
    %v418 = vld [vmem:[#allocation5 + $0x648] sm:$0xff]
    %v419 = vld [vmem:[#allocation5 + $0x650] sm:$0xff]
    %v420 = vld [vmem:[#allocation5 + $0x658] sm:$0xff]
    %v421 = vld [vmem:[#allocation5 + $0x660] sm:$0xff]
    %v422 = vld [vmem:[#allocation5 + $0x668] sm:$0xff]
    %v423 = vld [vmem:[#allocation5 + $0x670] sm:$0xff]
    %v424 = vld [vmem:[#allocation5 + $0x678] sm:$0xff]
    %v425 = vld [vmem:[#allocation5 + $0x680] sm:$0xff]
    %v426 = vld [vmem:[#allocation5 + $0x688] sm:$0xff]
    %v427 = vld [vmem:[#allocation5 + $0x690] sm:$0xff]
    %v428 = vld [vmem:[#allocation5 + $0x698] sm:$0xff]
    %v429 = vld [vmem:[#allocation5 + $0x6a0] sm:$0xff]
    %v430 = vld [vmem:[#allocation5 + $0x6a8] sm:$0xff]
    %v431 = vld [vmem:[#allocation5 + $0x6b0] sm:$0xff]
    %v432 = vld [vmem:[#allocation5 + $0x6b8] sm:$0xff]
    %v433 = vld [vmem:[#allocation5 + $0x6c0] sm:$0xff]
    %v434 = vld [vmem:[#allocation5 + $0x6c8] sm:$0xff]
    %v435 = vld [vmem:[#allocation5 + $0x6d0] sm:$0xff]
    %v436 = vld [vmem:[#allocation5 + $0x6d8] sm:$0xff]
    %v437 = vld [vmem:[#allocation5 + $0x6e0] sm:$0xff]
    %v438 = vld [vmem:[#allocation5 + $0x6e8] sm:$0xff]
    %v439 = vld [vmem:[#allocation5 + $0x6f0] sm:$0xff]
    %v440 = vld [vmem:[#allocation5 + $0x6f8] sm:$0xff]
    %v441 = vld [vmem:[#allocation5 + $0x700] sm:$0xff]
    %v442 = vld [vmem:[#allocation5 + $0x708] sm:$0xff]
    %v443 = vld [vmem:[#allocation5 + $0x710] sm:$0xff]
    %v444 = vld [vmem:[#allocation5 + $0x718] sm:$0xff]
    %v445 = vld [vmem:[#allocation5 + $0x720] sm:$0xff]
    %v446 = vld [vmem:[#allocation5 + $0x728] sm:$0xff]
    %v447 = vld [vmem:[#allocation5 + $0x730] sm:$0xff]
    %v448 = vld [vmem:[#allocation5 + $0x738] sm:$0xff]
    %v449 = vld [vmem:[#allocation5 + $0x740] sm:$0xff]
    %v450 = vld [vmem:[#allocation5 + $0x748] sm:$0xff]
    %v451 = vld [vmem:[#allocation5 + $0x750] sm:$0xff]
    %v452 = vld [vmem:[#allocation5 + $0x758] sm:$0xff]
    %v453 = vld [vmem:[#allocation5 + $0x760] sm:$0xff]
    %v454 = vld [vmem:[#allocation5 + $0x768] sm:$0xff]
    %v455 = vld [vmem:[#allocation5 + $0x770] sm:$0xff]
    %v456 = vld [vmem:[#allocation5 + $0x778] sm:$0xff]
    %v457 = vld [vmem:[#allocation5 + $0x780] sm:$0xff]
    %v458 = vld [vmem:[#allocation5 + $0x788] sm:$0xff]
    %v459 = vld [vmem:[#allocation5 + $0x790] sm:$0xff]
    %v460 = vld [vmem:[#allocation5 + $0x798] sm:$0xff]
    %v461 = vld [vmem:[#allocation5 + $0x7a0] sm:$0xff]
    %v462 = vld [vmem:[#allocation5 + $0x7a8] sm:$0xff]
    %v463 = vld [vmem:[#allocation5 + $0x7b0] sm:$0xff]
    %v464 = vld [vmem:[#allocation5 + $0x7b8] sm:$0xff]
    %v465 = vld [vmem:[#allocation5 + $0x7c0] sm:$0xff]
    %v466 = vld [vmem:[#allocation5 + $0x7c8] sm:$0xff]
    %v467 = vld [vmem:[#allocation5 + $0x7d0] sm:$0xff]
    %v468 = vld [vmem:[#allocation5 + $0x7d8] sm:$0xff]
    %v469 = vld [vmem:[#allocation5 + $0x7e0] sm:$0xff]
    %v470 = vld [vmem:[#allocation5 + $0x7e8] sm:$0xff]
    %v471 = vld [vmem:[#allocation5 + $0x7f0] sm:$0xff]
    %v472 = vld [vmem:[#allocation5 + $0x7f8] sm:$0xff]
    %v473 = vld [vmem:[#allocation5 + $0x800] sm:$0xff]
    %v474 = vld [vmem:[#allocation5 + $0x808] sm:$0xff]
    %v475 = vld [vmem:[#allocation5 + $0x810] sm:$0xff]
    %v476 = vld [vmem:[#allocation5 + $0x818] sm:$0xff]
    %v477 = vld [vmem:[#allocation5 + $0x820] sm:$0xff]
    %v478 = vld [vmem:[#allocation5 + $0x828] sm:$0xff]
    %v479 = vld [vmem:[#allocation5 + $0x830] sm:$0xff]
    %v480 = vld [vmem:[#allocation5 + $0x838] sm:$0xff]
    %v481 = vld [vmem:[#allocation5 + $0x840] sm:$0xff]
    %v482 = vld [vmem:[#allocation5 + $0x848] sm:$0xff]
    %v483 = vld [vmem:[#allocation5 + $0x850] sm:$0xff]
    %v484 = vld [vmem:[#allocation5 + $0x858] sm:$0xff]
    %v485 = vld [vmem:[#allocation5 + $0x860] sm:$0xff]
    %v486 = vld [vmem:[#allocation5 + $0x868] sm:$0xff]
    %v487 = vld [vmem:[#allocation5 + $0x870] sm:$0xff]
    %v488 = vld [vmem:[#allocation5 + $0x878] sm:$0xff]
    %v489 = vld [vmem:[#allocation5 + $0x880] sm:$0xff]
    %v490 = vld [vmem:[#allocation5 + $0x888] sm:$0xff]
    %v491 = vld [vmem:[#allocation5 + $0x890] sm:$0xff]
    %v492 = vld [vmem:[#allocation5 + $0x898] sm:$0xff]
    %v493 = vld [vmem:[#allocation5 + $0x8a0] sm:$0xff]
    %v494 = vld [vmem:[#allocation5 + $0x8a8] sm:$0xff]
    %v495 = vld [vmem:[#allocation5 + $0x8b0] sm:$0xff]
    %v496 = vld [vmem:[#allocation5 + $0x8b8] sm:$0xff]
    %v497 = vld [vmem:[#allocation5 + $0x8c0] sm:$0xff]
    %v498 = vld [vmem:[#allocation5 + $0x8c8] sm:$0xff]
    %v499 = vld [vmem:[#allocation5 + $0x8d0] sm:$0xff]
    %v500 = vld [vmem:[#allocation5 + $0x8d8] sm:$0xff]
    %v501 = vld [vmem:[#allocation5 + $0x8e0] sm:$0xff]
    %v502 = vld [vmem:[#allocation5 + $0x8e8] sm:$0xff]
    %v503 = vld [vmem:[#allocation5 + $0x8f0] sm:$0xff]
    %v504 = vld [vmem:[#allocation5 + $0x8f8] sm:$0xff]
    %v505 = vld [vmem:[#allocation5 + $0x900] sm:$0xff]
    %v506 = vld [vmem:[#allocation5 + $0x908] sm:$0xff]
    %v507 = vld [vmem:[#allocation5 + $0x910] sm:$0xff]
    %v508 = vld [vmem:[#allocation5 + $0x918] sm:$0xff]
    %v509 = vld [vmem:[#allocation5 + $0x920] sm:$0xff]
    %v510 = vld [vmem:[#allocation5 + $0x928] sm:$0xff]
    %v511 = vld [vmem:[#allocation5 + $0x930] sm:$0xff]
    %v512 = vld [vmem:[#allocation5 + $0x938] sm:$0xff]
    %v513 = vld [vmem:[#allocation5 + $0x940] sm:$0xff]
    %v514 = vld [vmem:[#allocation5 + $0x948] sm:$0xff]
    %v515 = vld [vmem:[#allocation5 + $0x950] sm:$0xff]
    %v516 = vld [vmem:[#allocation5 + $0x958] sm:$0xff]
    %v517 = vld [vmem:[#allocation5 + $0x960] sm:$0xff]
    %v518 = vld [vmem:[#allocation5 + $0x968] sm:$0xff]
    %v519 = vld [vmem:[#allocation5 + $0x970] sm:$0xff]
    %v520 = vld [vmem:[#allocation5 + $0x978] sm:$0xff]
    %v521 = vld [vmem:[#allocation5 + $0x980] sm:$0xff]
    %v522 = vld [vmem:[#allocation5 + $0x988] sm:$0xff]
    %v523 = vld [vmem:[#allocation5 + $0x990] sm:$0xff]
    %v524 = vld [vmem:[#allocation5 + $0x998] sm:$0xff]
    %v525 = vld [vmem:[#allocation5 + $0x9a0] sm:$0xff]
    %v526 = vld [vmem:[#allocation5 + $0x9a8] sm:$0xff]
    %v527 = vld [vmem:[#allocation5 + $0x9b0] sm:$0xff]
    %v528 = vld [vmem:[#allocation5 + $0x9b8] sm:$0xff]
    %v529 = vld [vmem:[#allocation5 + $0x9c0] sm:$0xff]
    %v530 = vld [vmem:[#allocation5 + $0x9c8] sm:$0xff]
    %v531 = vld [vmem:[#allocation5 + $0x9d0] sm:$0xff]
    %v532 = vld [vmem:[#allocation5 + $0x9d8] sm:$0xff]
    %v533 = vld [vmem:[#allocation5 + $0x9e0] sm:$0xff]
    %v534 = vld [vmem:[#allocation5 + $0x9e8] sm:$0xff]
    %v535 = vld [vmem:[#allocation5 + $0x9f0] sm:$0xff]
    %v536 = vld [vmem:[#allocation5 + $0x9f8] sm:$0xff]
    %v537 = vld [vmem:[#allocation5 + $0xa00] sm:$0xff]
    %v538 = vld [vmem:[#allocation5 + $0xa08] sm:$0xff]
    %v539 = vld [vmem:[#allocation5 + $0xa10] sm:$0xff]
    %v540 = vld [vmem:[#allocation5 + $0xa18] sm:$0xff]
    %v541 = vld [vmem:[#allocation5 + $0xa20] sm:$0xff]
    %v542 = vld [vmem:[#allocation5 + $0xa28] sm:$0xff]
    %v543 = vld [vmem:[#allocation5 + $0xa30] sm:$0xff]
    %v544 = vld [vmem:[#allocation5 + $0xa38] sm:$0xff]
    %v545 = vld [vmem:[#allocation5 + $0xa40] sm:$0xff]
    %v546 = vld [vmem:[#allocation5 + $0xa48] sm:$0xff]
    %v547 = vld [vmem:[#allocation5 + $0xa50] sm:$0xff]
    %v548 = vld [vmem:[#allocation5 + $0xa58] sm:$0xff]
    %v549 = vld [vmem:[#allocation5 + $0xa60] sm:$0xff]
    %v550 = vld [vmem:[#allocation5 + $0xa68] sm:$0xff]
    %v551 = vld [vmem:[#allocation5 + $0xa70] sm:$0xff]
    %v552 = vld [vmem:[#allocation5 + $0xa78] sm:$0xff]
    %v553 = vld [vmem:[#allocation5 + $0xa80] sm:$0xff]
    %v554 = vld [vmem:[#allocation5 + $0xa88] sm:$0xff]
    %v555 = vld [vmem:[#allocation5 + $0xa90] sm:$0xff]
    %v556 = vld [vmem:[#allocation5 + $0xa98] sm:$0xff]
    %v557 = vld [vmem:[#allocation5 + $0xaa0] sm:$0xff]
    %v558 = vld [vmem:[#allocation5 + $0xaa8] sm:$0xff]
    %v559 = vld [vmem:[#allocation5 + $0xab0] sm:$0xff]
    %v560 = vld [vmem:[#allocation5 + $0xab8] sm:$0xff]
    %v561 = vld [vmem:[#allocation5 + $0xac0] sm:$0xff]
    %v562 = vld [vmem:[#allocation5 + $0xac8] sm:$0xff]
    %v563 = vld [vmem:[#allocation5 + $0xad0] sm:$0xff]
    %v564 = vld [vmem:[#allocation5 + $0xad8] sm:$0xff]
    %v565 = vld [vmem:[#allocation5 + $0xae0] sm:$0xff]
    %v566 = vld [vmem:[#allocation5 + $0xae8] sm:$0xff]
    %v567 = vld [vmem:[#allocation5 + $0xaf0] sm:$0xff]
    %v568 = vld [vmem:[#allocation5 + $0xaf8] sm:$0xff]
    %v569 = vld [vmem:[#allocation5 + $0xb00] sm:$0xff]
    %v570 = vld [vmem:[#allocation5 + $0xb08] sm:$0xff]
    %v571 = vld [vmem:[#allocation5 + $0xb10] sm:$0xff]
    %v572 = vld [vmem:[#allocation5 + $0xb18] sm:$0xff]
    %v573 = vld [vmem:[#allocation5 + $0xb20] sm:$0xff]
    %v574 = vld [vmem:[#allocation5 + $0xb28] sm:$0xff]
    %v575 = vld [vmem:[#allocation5 + $0xb30] sm:$0xff]
    %v576 = vld [vmem:[#allocation5 + $0xb38] sm:$0xff]
    %v577 = vld [vmem:[#allocation5 + $0xb40] sm:$0xff]
    %v578 = vld [vmem:[#allocation5 + $0xb48] sm:$0xff]
    %v579 = vld [vmem:[#allocation5 + $0xb50] sm:$0xff]
    %v580 = vld [vmem:[#allocation5 + $0xb58] sm:$0xff]
    %v581 = vld [vmem:[#allocation5 + $0xb60] sm:$0xff]
    %v582 = vld [vmem:[#allocation5 + $0xb68] sm:$0xff]
    %v583 = vld [vmem:[#allocation5 + $0xb70] sm:$0xff]
    %v584 = vld [vmem:[#allocation5 + $0xb78] sm:$0xff]
    %v585 = vld [vmem:[#allocation5 + $0xb80] sm:$0xff]
    %v586 = vld [vmem:[#allocation5 + $0xb88] sm:$0xff]
    %v587 = vld [vmem:[#allocation5 + $0xb90] sm:$0xff]
    %v588 = vld [vmem:[#allocation5 + $0xb98] sm:$0xff]
    %v589 = vld [vmem:[#allocation5 + $0xba0] sm:$0xff]
    %v590 = vld [vmem:[#allocation5 + $0xba8] sm:$0xff]
    %v591 = vld [vmem:[#allocation5 + $0xbb0] sm:$0xff]
    %v592 = vld [vmem:[#allocation5 + $0xbb8] sm:$0xff]
    %v593 = vld [vmem:[#allocation5 + $0xbc0] sm:$0xff]
    %v594 = vld [vmem:[#allocation5 + $0xbc8] sm:$0xff]
    %v595 = vld [vmem:[#allocation5 + $0xbd0] sm:$0xff]
    %v596 = vld [vmem:[#allocation5 + $0xbd8] sm:$0xff]
    %v597 = vld [vmem:[#allocation5 + $0xbe0] sm:$0xff]
    %v598 = vld [vmem:[#allocation5 + $0xbe8] sm:$0xff]
    %v599 = vld [vmem:[#allocation5 + $0xbf0] sm:$0xff]
    %v600 = vld [vmem:[#allocation5 + $0xbf8] sm:$0xff]
    %v601 = vld [vmem:[#allocation5 + $0xc00] sm:$0xff]
    %v602 = vld [vmem:[#allocation5 + $0xc08] sm:$0xff]
    %v603 = vld [vmem:[#allocation5 + $0xc10] sm:$0xff]
    %v604 = vld [vmem:[#allocation5 + $0xc18] sm:$0xff]
    %v605 = vld [vmem:[#allocation5 + $0xc20] sm:$0xff]
    %v606 = vld [vmem:[#allocation5 + $0xc28] sm:$0xff]
    %v607 = vld [vmem:[#allocation5 + $0xc30] sm:$0xff]
    %v608 = vld [vmem:[#allocation5 + $0xc38] sm:$0xff]
    %v609 = vld [vmem:[#allocation5 + $0xc40] sm:$0xff]
    %v610 = vld [vmem:[#allocation5 + $0xc48] sm:$0xff]
    %v611 = vld [vmem:[#allocation5 + $0xc50] sm:$0xff]
    %v612 = vld [vmem:[#allocation5 + $0xc58] sm:$0xff]
    %v613 = vld [vmem:[#allocation5 + $0xc60] sm:$0xff]
    %v614 = vld [vmem:[#allocation5 + $0xc68] sm:$0xff]
    %v615 = vld [vmem:[#allocation5 + $0xc70] sm:$0xff]
    %v616 = vld [vmem:[#allocation5 + $0xc78] sm:$0xff]
    %v617 = vld [vmem:[#allocation5 + $0xc80] sm:$0xff]
    %v618 = vld [vmem:[#allocation5 + $0xc88] sm:$0xff]
    %v619 = vld [vmem:[#allocation5 + $0xc90] sm:$0xff]
    %v620 = vld [vmem:[#allocation5 + $0xc98] sm:$0xff]
    %v621 = vld [vmem:[#allocation5 + $0xca0] sm:$0xff]
    %v622 = vld [vmem:[#allocation5 + $0xca8] sm:$0xff]
    %v623 = vld [vmem:[#allocation5 + $0xcb0] sm:$0xff]
    %v624 = vld [vmem:[#allocation5 + $0xcb8] sm:$0xff]
    %v625 = vld [vmem:[#allocation5 + $0xcc0] sm:$0xff]
    %v626 = vld [vmem:[#allocation5 + $0xcc8] sm:$0xff]
    %v627 = vld [vmem:[#allocation5 + $0xcd0] sm:$0xff]
    %v628 = vld [vmem:[#allocation5 + $0xcd8] sm:$0xff]
    %v629 = vld [vmem:[#allocation5 + $0xce0] sm:$0xff]
    %v630 = vld [vmem:[#allocation5 + $0xce8] sm:$0xff]
    %v631 = vld [vmem:[#allocation5 + $0xcf0] sm:$0xff]
    %v632 = vld [vmem:[#allocation5 + $0xcf8] sm:$0xff]
    %v633 = vld [vmem:[#allocation5 + $0xd00] sm:$0xff]
    %v634 = vld [vmem:[#allocation5 + $0xd08] sm:$0xff]
    %v635 = vld [vmem:[#allocation5 + $0xd10] sm:$0xff]
    %v636 = vld [vmem:[#allocation5 + $0xd18] sm:$0xff]
    %v637 = vld [vmem:[#allocation5 + $0xd20] sm:$0xff]
    %v638 = vld [vmem:[#allocation5 + $0xd28] sm:$0xff]
    %v639 = vld [vmem:[#allocation5 + $0xd30] sm:$0xff]
    %v640 = vld [vmem:[#allocation5 + $0xd38] sm:$0xff]
    %v641 = vld [vmem:[#allocation5 + $0xd40] sm:$0xff]
    %v642 = vld [vmem:[#allocation5 + $0xd48] sm:$0xff]
    %v643 = vld [vmem:[#allocation5 + $0xd50] sm:$0xff]
    %v644 = vld [vmem:[#allocation5 + $0xd58] sm:$0xff]
    %v645 = vld [vmem:[#allocation5 + $0xd60] sm:$0xff]
    %v646 = vld [vmem:[#allocation5 + $0xd68] sm:$0xff]
    %v647 = vld [vmem:[#allocation5 + $0xd70] sm:$0xff]
    %v648 = vld [vmem:[#allocation5 + $0xd78] sm:$0xff]
    %v649 = vld [vmem:[#allocation5 + $0xd80] sm:$0xff]
    %v650 = vld [vmem:[#allocation5 + $0xd88] sm:$0xff]
    %v651 = vld [vmem:[#allocation5 + $0xd90] sm:$0xff]
    %v652 = vld [vmem:[#allocation5 + $0xd98] sm:$0xff]
    %v653 = vld [vmem:[#allocation5 + $0xda0] sm:$0xff]
    %v654 = vld [vmem:[#allocation5 + $0xda8] sm:$0xff]
    %v655 = vld [vmem:[#allocation5 + $0xdb0] sm:$0xff]
    %v656 = vld [vmem:[#allocation5 + $0xdb8] sm:$0xff]
    %v657 = vld [vmem:[#allocation5 + $0xdc0] sm:$0xff]
    %v658 = vld [vmem:[#allocation5 + $0xdc8] sm:$0xff]
    %v659 = vld [vmem:[#allocation5 + $0xdd0] sm:$0xff]
    %v660 = vld [vmem:[#allocation5 + $0xdd8] sm:$0xff]
    %v661 = vld [vmem:[#allocation5 + $0xde0] sm:$0xff]
    %v662 = vld [vmem:[#allocation5 + $0xde8] sm:$0xff]
    %v663 = vld [vmem:[#allocation5 + $0xdf0] sm:$0xff]
    %v664 = vld [vmem:[#allocation5 + $0xdf8] sm:$0xff]
    %v665 = vld [vmem:[#allocation5 + $0xe00] sm:$0xff]
    %v666 = vld [vmem:[#allocation5 + $0xe08] sm:$0xff]
    %v667 = vld [vmem:[#allocation5 + $0xe10] sm:$0xff]
    %v668 = vld [vmem:[#allocation5 + $0xe18] sm:$0xff]
    %v669 = vld [vmem:[#allocation5 + $0xe20] sm:$0xff]
    %v670 = vld [vmem:[#allocation5 + $0xe28] sm:$0xff]
    %v671 = vld [vmem:[#allocation5 + $0xe30] sm:$0xff]
    %v672 = vld [vmem:[#allocation5 + $0xe38] sm:$0xff]
    %v673 = vld [vmem:[#allocation5 + $0xe40] sm:$0xff]
    %v674 = vld [vmem:[#allocation5 + $0xe48] sm:$0xff]
    %v675 = vld [vmem:[#allocation5 + $0xe50] sm:$0xff]
    %v676 = vld [vmem:[#allocation5 + $0xe58] sm:$0xff]
    %v677 = vld [vmem:[#allocation5 + $0xe60] sm:$0xff]
    %v678 = vld [vmem:[#allocation5 + $0xe68] sm:$0xff]
    %v679 = vld [vmem:[#allocation5 + $0xe70] sm:$0xff]
    %v680 = vld [vmem:[#allocation5 + $0xe78] sm:$0xff]
    %v681 = vld [vmem:[#allocation5 + $0xe80] sm:$0xff]
    %v682 = vld [vmem:[#allocation5 + $0xe88] sm:$0xff]
    %v683 = vld [vmem:[#allocation5 + $0xe90] sm:$0xff]
    %v684 = vld [vmem:[#allocation5 + $0xe98] sm:$0xff]
    %v685 = vld [vmem:[#allocation5 + $0xea0] sm:$0xff]
    %v686 = vld [vmem:[#allocation5 + $0xea8] sm:$0xff]
    %v687 = vld [vmem:[#allocation5 + $0xeb0] sm:$0xff]
    %v688 = vld [vmem:[#allocation5 + $0xeb8] sm:$0xff]
    %v689 = vld [vmem:[#allocation5 + $0xec0] sm:$0xff]
    %v690 = vld [vmem:[#allocation5 + $0xec8] sm:$0xff]
    %v691 = vld [vmem:[#allocation5 + $0xed0] sm:$0xff]
    %v692 = vld [vmem:[#allocation5 + $0xed8] sm:$0xff]
    %v693 = vld [vmem:[#allocation5 + $0xee0] sm:$0xff]
    %v694 = vld [vmem:[#allocation5 + $0xee8] sm:$0xff]
    %v695 = vld [vmem:[#allocation5 + $0xef0] sm:$0xff]
    %v696 = vld [vmem:[#allocation5 + $0xef8] sm:$0xff]
    %v697 = vld [vmem:[#allocation5 + $0xf00] sm:$0xff]
    %v698 = vld [vmem:[#allocation5 + $0xf08] sm:$0xff]
    %v699 = vld [vmem:[#allocation5 + $0xf10] sm:$0xff]
    %v700 = vld [vmem:[#allocation5 + $0xf18] sm:$0xff]
    %v701 = vld [vmem:[#allocation5 + $0xf20] sm:$0xff]
    %v702 = vld [vmem:[#allocation5 + $0xf28] sm:$0xff]
    %v703 = vld [vmem:[#allocation5 + $0xf30] sm:$0xff]
    %v704 = vld [vmem:[#allocation5 + $0xf38] sm:$0xff]
    %v705 = vld [vmem:[#allocation5 + $0xf40] sm:$0xff]
    %v706 = vld [vmem:[#allocation5 + $0xf48] sm:$0xff]
    %v707 = vld [vmem:[#allocation5 + $0xf50] sm:$0xff]
    %v708 = vld [vmem:[#allocation5 + $0xf58] sm:$0xff]
    %v709 = vld [vmem:[#allocation5 + $0xf60] sm:$0xff]
    %v710 = vld [vmem:[#allocation5 + $0xf68] sm:$0xff]
    %v711 = vld [vmem:[#allocation5 + $0xf70] sm:$0xff]
    %v712 = vld [vmem:[#allocation5 + $0xf78] sm:$0xff]
    %v713 = vld [vmem:[#allocation5 + $0xf80] sm:$0xff]
    %v714 = vld [vmem:[#allocation5 + $0xf88] sm:$0xff]
    %v715 = vld [vmem:[#allocation5 + $0xf90] sm:$0xff]
    %v716 = vld [vmem:[#allocation5 + $0xf98] sm:$0xff]
    %v717 = vld [vmem:[#allocation5 + $0xfa0] sm:$0xff]
    %v718 = vld [vmem:[#allocation5 + $0xfa8] sm:$0xff]
    %v719 = vld [vmem:[#allocation5 + $0xfb0] sm:$0xff]
    %v720 = vld [vmem:[#allocation5 + $0xfb8] sm:$0xff]
    %v721 = vld [vmem:[#allocation5 + $0xfc0] sm:$0xff]
    %v722 = vld [vmem:[#allocation5 + $0xfc8] sm:$0xff]
    %v723 = vld [vmem:[#allocation5 + $0xfd0] sm:$0xff]
    %v724 = vld [vmem:[#allocation5 + $0xfd8] sm:$0xff]
    %v725 = vld [vmem:[#allocation5 + $0xfe0] sm:$0xff]
    %v726 = vld [vmem:[#allocation5 + $0xfe8] sm:$0xff]
    %v727 = vld [vmem:[#allocation5 + $0xff0] sm:$0xff]
    %v728 = vld [vmem:[#allocation5 + $0xff8] sm:$0xff]
    %v729 = vld [vmem:[#allocation5 + $0x1000] sm:$0xff]
    %v730 = vld [vmem:[#allocation5 + $0x1008] sm:$0xff]
    %v731 = vld [vmem:[#allocation5 + $0x1010] sm:$0xff]
    %v732 = vld [vmem:[#allocation5 + $0x1018] sm:$0xff]
    %v733 = vld [vmem:[#allocation5 + $0x1020] sm:$0xff]
    %v734 = vld [vmem:[#allocation5 + $0x1028] sm:$0xff]
    %v735 = vld [vmem:[#allocation5 + $0x1030] sm:$0xff]
    %v736 = vld [vmem:[#allocation5 + $0x1038] sm:$0xff]
    %v737 = vld [vmem:[#allocation5 + $0x1040] sm:$0xff]
    %v738 = vld [vmem:[#allocation5 + $0x1048] sm:$0xff]
    %v739 = vld [vmem:[#allocation5 + $0x1050] sm:$0xff]
    %v740 = vld [vmem:[#allocation5 + $0x1058] sm:$0xff]
    %v741 = vld [vmem:[#allocation5 + $0x1060] sm:$0xff]
    %v742 = vld [vmem:[#allocation5 + $0x1068] sm:$0xff]
    %v743 = vld [vmem:[#allocation5 + $0x1070] sm:$0xff]
    %v744 = vld [vmem:[#allocation5 + $0x1078] sm:$0xff]
    %v745 = vld [vmem:[#allocation5 + $0x1080] sm:$0xff]
    %v746 = vld [vmem:[#allocation5 + $0x1088] sm:$0xff]
    %v747 = vld [vmem:[#allocation5 + $0x1090] sm:$0xff]
    %v748 = vld [vmem:[#allocation5 + $0x1098] sm:$0xff]
    %v749 = vld [vmem:[#allocation5 + $0x10a0] sm:$0xff]
    %v750 = vld [vmem:[#allocation5 + $0x10a8] sm:$0xff]
    %v751 = vld [vmem:[#allocation5 + $0x10b0] sm:$0xff]
    %v752 = vld [vmem:[#allocation5 + $0x10b8] sm:$0xff]
    %v753 = vld [vmem:[#allocation5 + $0x10c0] sm:$0xff]
    %v754 = vld [vmem:[#allocation5 + $0x10c8] sm:$0xff]
    %v755 = vld [vmem:[#allocation5 + $0x10d0] sm:$0xff]
    %v756 = vld [vmem:[#allocation5 + $0x10d8] sm:$0xff]
    %v757 = vld [vmem:[#allocation5 + $0x10e0] sm:$0xff]
    %v758 = vld [vmem:[#allocation5 + $0x10e8] sm:$0xff]
    %v759 = vld [vmem:[#allocation5 + $0x10f0] sm:$0xff]
    %v760 = vld [vmem:[#allocation5 + $0x10f8] sm:$0xff]
    %v761 = vld [vmem:[#allocation5 + $0x1100] sm:$0xff]
    %v762 = vld [vmem:[#allocation5 + $0x1108] sm:$0xff]
    %v763 = vld [vmem:[#allocation5 + $0x1110] sm:$0xff]
    %v764 = vld [vmem:[#allocation5 + $0x1118] sm:$0xff]
    %v765 = vld [vmem:[#allocation5 + $0x1120] sm:$0xff]
    %v766 = vld [vmem:[#allocation5 + $0x1128] sm:$0xff]
    %v767 = vld [vmem:[#allocation5 + $0x1130] sm:$0xff]
    %v768 = vld [vmem:[#allocation5 + $0x1138] sm:$0xff]
    %v769 = vld [vmem:[#allocation5 + $0x1140] sm:$0xff]
    %v770 = vld [vmem:[#allocation5 + $0x1148] sm:$0xff]
    %v771 = vld [vmem:[#allocation5 + $0x1150] sm:$0xff]
    %v772 = vld [vmem:[#allocation5 + $0x1158] sm:$0xff]
    %v773 = vld [vmem:[#allocation5 + $0x1160] sm:$0xff]
    %v774 = vld [vmem:[#allocation5 + $0x1168] sm:$0xff]
    %v775 = vld [vmem:[#allocation5 + $0x1170] sm:$0xff]
    %v776 = vld [vmem:[#allocation5 + $0x1178] sm:$0xff]
    %v777 = vld [vmem:[#allocation5 + $0x1180] sm:$0xff]
    %v778 = vld [vmem:[#allocation5 + $0x1188] sm:$0xff]
    %v779 = vld [vmem:[#allocation5 + $0x1190] sm:$0xff]
    %v780 = vld [vmem:[#allocation5 + $0x1198] sm:$0xff]
    %v781 = vld [vmem:[#allocation5 + $0x11a0] sm:$0xff]
    %v782 = vld [vmem:[#allocation5 + $0x11a8] sm:$0xff]
    %v783 = vld [vmem:[#allocation5 + $0x11b0] sm:$0xff]
    %v784 = vld [vmem:[#allocation5 + $0x11b8] sm:$0xff]
    %v785 = vld [vmem:[#allocation5 + $0x11c0] sm:$0xff]
    %v786 = vld [vmem:[#allocation5 + $0x11c8] sm:$0xff]
    %v787 = vld [vmem:[#allocation5 + $0x11d0] sm:$0xff]
    %v788 = vld [vmem:[#allocation5 + $0x11d8] sm:$0xff]
    %v789 = vld [vmem:[#allocation5 + $0x11e0] sm:$0xff]
    %v790 = vld [vmem:[#allocation5 + $0x11e8] sm:$0xff]
    %v791 = vld [vmem:[#allocation5 + $0x11f0] sm:$0xff]
    %v792 = vld [vmem:[#allocation5 + $0x11f8] sm:$0xff]
    %v793 = vld [vmem:[#allocation5 + $0x1200] sm:$0xff]
    %v794 = vld [vmem:[#allocation5 + $0x1208] sm:$0xff]
    %v795 = vld [vmem:[#allocation5 + $0x1210] sm:$0xff]
    %v796 = vld [vmem:[#allocation5 + $0x1218] sm:$0xff]
    %v797 = vld [vmem:[#allocation5 + $0x1220] sm:$0xff]
    %v798 = vld [vmem:[#allocation5 + $0x1228] sm:$0xff]
    %v799 = vld [vmem:[#allocation5 + $0x1230] sm:$0xff]
    %v800 = vld [vmem:[#allocation5 + $0x1238] sm:$0xff]
    %v801 = vld [vmem:[#allocation5 + $0x1240] sm:$0xff]
    %v802 = vld [vmem:[#allocation5 + $0x1248] sm:$0xff]
    %v803 = vld [vmem:[#allocation5 + $0x1250] sm:$0xff]
    %v804 = vld [vmem:[#allocation5 + $0x1258] sm:$0xff]
    %v805 = vld [vmem:[#allocation5 + $0x1260] sm:$0xff]
    %v806 = vld [vmem:[#allocation5 + $0x1268] sm:$0xff]
    %v807 = vld [vmem:[#allocation5 + $0x1270] sm:$0xff]
    %v808 = vld [vmem:[#allocation5 + $0x1278] sm:$0xff]
    %v809 = vld [vmem:[#allocation5 + $0x1280] sm:$0xff]
    %v810 = vld [vmem:[#allocation5 + $0x1288] sm:$0xff]
    %v811 = vld [vmem:[#allocation5 + $0x1290] sm:$0xff]
    %v812 = vld [vmem:[#allocation5 + $0x1298] sm:$0xff]
    %v813 = vld [vmem:[#allocation5 + $0x12a0] sm:$0xff]
    %v814 = vld [vmem:[#allocation5 + $0x12a8] sm:$0xff]
    %v815 = vld [vmem:[#allocation5 + $0x12b0] sm:$0xff]
    %v816 = vld [vmem:[#allocation5 + $0x12b8] sm:$0xff]
    %v817 = vld [vmem:[#allocation5 + $0x12c0] sm:$0xff]
    %v818 = vld [vmem:[#allocation5 + $0x12c8] sm:$0xff]
    %v819 = vld [vmem:[#allocation5 + $0x12d0] sm:$0xff]
    %v820 = vld [vmem:[#allocation5 + $0x12d8] sm:$0xff]
    %v821 = vld [vmem:[#allocation5 + $0x12e0] sm:$0xff]
    %v822 = vld [vmem:[#allocation5 + $0x12e8] sm:$0xff]
    %v823 = vld [vmem:[#allocation5 + $0x12f0] sm:$0xff]
    %v824 = vld [vmem:[#allocation5 + $0x12f8] sm:$0xff]
    %v825 = vld [vmem:[#allocation5 + $0x1300] sm:$0xff]
    %v826 = vld [vmem:[#allocation5 + $0x1308] sm:$0xff]
    %v827 = vld [vmem:[#allocation5 + $0x1310] sm:$0xff]
    %v828 = vld [vmem:[#allocation5 + $0x1318] sm:$0xff]
    %v829 = vld [vmem:[#allocation5 + $0x1320] sm:$0xff]
    %v830 = vld [vmem:[#allocation5 + $0x1328] sm:$0xff]
    %v831 = vld [vmem:[#allocation5 + $0x1330] sm:$0xff]
    %v832 = vld [vmem:[#allocation5 + $0x1338] sm:$0xff]
    %v833 = vld [vmem:[#allocation5 + $0x1340] sm:$0xff]
    %v834 = vld [vmem:[#allocation5 + $0x1348] sm:$0xff]
    %v835 = vld [vmem:[#allocation5 + $0x1350] sm:$0xff]
    %v836 = vld [vmem:[#allocation5 + $0x1358] sm:$0xff]
    %v837 = vld [vmem:[#allocation5 + $0x1360] sm:$0xff]
    %v838 = vld [vmem:[#allocation5 + $0x1368] sm:$0xff]
    %v839 = vld [vmem:[#allocation5 + $0x1370] sm:$0xff]
    %v840 = vld [vmem:[#allocation5 + $0x1378] sm:$0xff]
    %v841 = vld [vmem:[#allocation5 + $0x1380] sm:$0xff]
    %v842 = vld [vmem:[#allocation5 + $0x1388] sm:$0xff]
    %v843 = vld [vmem:[#allocation5 + $0x1390] sm:$0xff]
    %v844 = vld [vmem:[#allocation5 + $0x1398] sm:$0xff]
    %v845 = vld [vmem:[#allocation5 + $0x13a0] sm:$0xff]
    %v846 = vld [vmem:[#allocation5 + $0x13a8] sm:$0xff]
    %v847 = vld [vmem:[#allocation5 + $0x13b0] sm:$0xff]
    %v848 = vld [vmem:[#allocation5 + $0x13b8] sm:$0xff]
    %v849 = vld [vmem:[#allocation5 + $0x13c0] sm:$0xff]
    %v850 = vld [vmem:[#allocation5 + $0x13c8] sm:$0xff]
    %v851 = vld [vmem:[#allocation5 + $0x13d0] sm:$0xff]
    %v852 = vld [vmem:[#allocation5 + $0x13d8] sm:$0xff]
    %v853 = vld [vmem:[#allocation5 + $0x13e0] sm:$0xff]
    %v854 = vld [vmem:[#allocation5 + $0x13e8] sm:$0xff]
    %v855 = vld [vmem:[#allocation5 + $0x13f0] sm:$0xff]
    %v856 = vld [vmem:[#allocation5 + $0x13f8] sm:$0xff]
    %v857 = vld [vmem:[#allocation5 + $0x1400] sm:$0xff]
    %v858 = vld [vmem:[#allocation5 + $0x1408] sm:$0xff]
    %v859 = vld [vmem:[#allocation5 + $0x1410] sm:$0xff]
    %v860 = vld [vmem:[#allocation5 + $0x1418] sm:$0xff]
    %v861 = vld [vmem:[#allocation5 + $0x1420] sm:$0xff]
    %v862 = vld [vmem:[#allocation5 + $0x1428] sm:$0xff]
    %v863 = vld [vmem:[#allocation5 + $0x1430] sm:$0xff]
    %v864 = vld [vmem:[#allocation5 + $0x1438] sm:$0xff]
    %v865 = vld [vmem:[#allocation5 + $0x1440] sm:$0xff]
    %v866 = vld [vmem:[#allocation5 + $0x1448] sm:$0xff]
    %v867 = vld [vmem:[#allocation5 + $0x1450] sm:$0xff]
    %v868 = vld [vmem:[#allocation5 + $0x1458] sm:$0xff]
    %v869 = vld [vmem:[#allocation5 + $0x1460] sm:$0xff]
    %v870 = vld [vmem:[#allocation5 + $0x1468] sm:$0xff]
    %v871 = vld [vmem:[#allocation5 + $0x1470] sm:$0xff]
    %v872 = vld [vmem:[#allocation5 + $0x1478] sm:$0xff]
    %v873 = vld [vmem:[#allocation5 + $0x1480] sm:$0xff]
    %v874 = vld [vmem:[#allocation5 + $0x1488] sm:$0xff]
    %v875 = vld [vmem:[#allocation5 + $0x1490] sm:$0xff]
    %v876 = vld [vmem:[#allocation5 + $0x1498] sm:$0xff]
    %v877 = vld [vmem:[#allocation5 + $0x14a0] sm:$0xff]
    %v878 = vld [vmem:[#allocation5 + $0x14a8] sm:$0xff]
    %v879 = vld [vmem:[#allocation5 + $0x14b0] sm:$0xff]
    %v880 = vld [vmem:[#allocation5 + $0x14b8] sm:$0xff]
    %v881 = vld [vmem:[#allocation5 + $0x14c0] sm:$0xff]
    %v882 = vld [vmem:[#allocation5 + $0x14c8] sm:$0xff]
    %v883 = vld [vmem:[#allocation5 + $0x14d0] sm:$0xff]
    %v884 = vld [vmem:[#allocation5 + $0x14d8] sm:$0xff]
    %v885 = vld [vmem:[#allocation5 + $0x14e0] sm:$0xff]
    %v886 = vld [vmem:[#allocation5 + $0x14e8] sm:$0xff]
    %v887 = vld [vmem:[#allocation5 + $0x14f0] sm:$0xff]
    %v888 = vld [vmem:[#allocation5 + $0x14f8] sm:$0xff]
    %v889 = vld [vmem:[#allocation5 + $0x1500] sm:$0xff]
    %v890 = vld [vmem:[#allocation5 + $0x1508] sm:$0xff]
    %v891 = vld [vmem:[#allocation5 + $0x1510] sm:$0xff]
    %v892 = vld [vmem:[#allocation5 + $0x1518] sm:$0xff]
    %v893 = vld [vmem:[#allocation5 + $0x1520] sm:$0xff]
    %v894 = vld [vmem:[#allocation5 + $0x1528] sm:$0xff]
    %v895 = vld [vmem:[#allocation5 + $0x1530] sm:$0xff]
    %v896 = vld [vmem:[#allocation5 + $0x1538] sm:$0xff]
    %v897 = vld [vmem:[#allocation5 + $0x1540] sm:$0xff]
    %v898 = vld [vmem:[#allocation5 + $0x1548] sm:$0xff]
    %v899 = vld [vmem:[#allocation5 + $0x1550] sm:$0xff]
    %v900 = vld [vmem:[#allocation5 + $0x1558] sm:$0xff]
    %v901 = vld [vmem:[#allocation5 + $0x1560] sm:$0xff]
    %v902 = vld [vmem:[#allocation5 + $0x1568] sm:$0xff]
    %v903 = vld [vmem:[#allocation5 + $0x1570] sm:$0xff]
    %v904 = vld [vmem:[#allocation5 + $0x1578] sm:$0xff]
    %v905 = vld [vmem:[#allocation5 + $0x1580] sm:$0xff]
    %v906 = vld [vmem:[#allocation5 + $0x1588] sm:$0xff]
    %v907 = vld [vmem:[#allocation5 + $0x1590] sm:$0xff]
    %v908 = vld [vmem:[#allocation5 + $0x1598] sm:$0xff]
    %v909 = vld [vmem:[#allocation5 + $0x15a0] sm:$0xff]
    %v910 = vld [vmem:[#allocation5 + $0x15a8] sm:$0xff]
    %v911 = vld [vmem:[#allocation5 + $0x15b0] sm:$0xff]
    %v912 = vld [vmem:[#allocation5 + $0x15b8] sm:$0xff]
    %v913 = vld [vmem:[#allocation5 + $0x15c0] sm:$0xff]
    %v914 = vld [vmem:[#allocation5 + $0x15c8] sm:$0xff]
    %v915 = vld [vmem:[#allocation5 + $0x15d0] sm:$0xff]
    %v916 = vld [vmem:[#allocation5 + $0x15d8] sm:$0xff]
    %v917 = vld [vmem:[#allocation5 + $0x15e0] sm:$0xff]
    %v918 = vld [vmem:[#allocation5 + $0x15e8] sm:$0xff]
    %v919 = vld [vmem:[#allocation5 + $0x15f0] sm:$0xff]
    %v920 = vld [vmem:[#allocation5 + $0x15f8] sm:$0xff]
    %v921 = vld [vmem:[#allocation5 + $0x1600] sm:$0xff]
    %v922 = vld [vmem:[#allocation5 + $0x1608] sm:$0xff]
    %v923 = vld [vmem:[#allocation5 + $0x1610] sm:$0xff]
    %v924 = vld [vmem:[#allocation5 + $0x1618] sm:$0xff]
    %v925 = vld [vmem:[#allocation5 + $0x1620] sm:$0xff]
    %v926 = vld [vmem:[#allocation5 + $0x1628] sm:$0xff]
    %v927 = vld [vmem:[#allocation5 + $0x1630] sm:$0xff]
    %v928 = vld [vmem:[#allocation5 + $0x1638] sm:$0xff]
    %v929 = vld [vmem:[#allocation5 + $0x1640] sm:$0xff]
    %v930 = vld [vmem:[#allocation5 + $0x1648] sm:$0xff]
    %v931 = vld [vmem:[#allocation5 + $0x1650] sm:$0xff]
    %v932 = vld [vmem:[#allocation5 + $0x1658] sm:$0xff]
    %v933 = vld [vmem:[#allocation5 + $0x1660] sm:$0xff]
    %v934 = vld [vmem:[#allocation5 + $0x1668] sm:$0xff]
    %v935 = vld [vmem:[#allocation5 + $0x1670] sm:$0xff]
    %v936 = vld [vmem:[#allocation5 + $0x1678] sm:$0xff]
    %v937 = vld [vmem:[#allocation5 + $0x1680] sm:$0xff]
    %v938 = vld [vmem:[#allocation5 + $0x1688] sm:$0xff]
    %v939 = vld [vmem:[#allocation5 + $0x1690] sm:$0xff]
    %v940 = vld [vmem:[#allocation5 + $0x1698] sm:$0xff]
    %v941 = vld [vmem:[#allocation5 + $0x16a0] sm:$0xff]
    %v942 = vld [vmem:[#allocation5 + $0x16a8] sm:$0xff]
    %v943 = vld [vmem:[#allocation5 + $0x16b0] sm:$0xff]
    %v944 = vld [vmem:[#allocation5 + $0x16b8] sm:$0xff]
    %v945 = vld [vmem:[#allocation5 + $0x16c0] sm:$0xff]
    %v946 = vld [vmem:[#allocation5 + $0x16c8] sm:$0xff]
    %v947 = vld [vmem:[#allocation5 + $0x16d0] sm:$0xff]
    %v948 = vld [vmem:[#allocation5 + $0x16d8] sm:$0xff]
    %v949 = vld [vmem:[#allocation5 + $0x16e0] sm:$0xff]
    %v950 = vld [vmem:[#allocation5 + $0x16e8] sm:$0xff]
    %v951 = vld [vmem:[#allocation5 + $0x16f0] sm:$0xff]
    %v952 = vld [vmem:[#allocation5 + $0x16f8] sm:$0xff]
    %v953 = vld [vmem:[#allocation5 + $0x1700] sm:$0xff]
    %v954 = vld [vmem:[#allocation5 + $0x1708] sm:$0xff]
    %v955 = vld [vmem:[#allocation5 + $0x1710] sm:$0xff]
    %v956 = vld [vmem:[#allocation5 + $0x1718] sm:$0xff]
    %v957 = vld [vmem:[#allocation5 + $0x1720] sm:$0xff]
    %v958 = vld [vmem:[#allocation5 + $0x1728] sm:$0xff]
    %v959 = vld [vmem:[#allocation5 + $0x1730] sm:$0xff]
    %v960 = vld [vmem:[#allocation5 + $0x1738] sm:$0xff]
    %v961 = vld [vmem:[#allocation5 + $0x1740] sm:$0xff]
    %v962 = vld [vmem:[#allocation5 + $0x1748] sm:$0xff]
    %v963 = vld [vmem:[#allocation5 + $0x1750] sm:$0xff]
    %v964 = vld [vmem:[#allocation5 + $0x1758] sm:$0xff]
    %v965 = vld [vmem:[#allocation5 + $0x1760] sm:$0xff]
    %v966 = vld [vmem:[#allocation5 + $0x1768] sm:$0xff]
    %v967 = vld [vmem:[#allocation5 + $0x1770] sm:$0xff]
    %v968 = vld [vmem:[#allocation5 + $0x1778] sm:$0xff]
    %v969 = vld [vmem:[#allocation5 + $0x1780] sm:$0xff]
    %v970 = vld [vmem:[#allocation5 + $0x1788] sm:$0xff]
    %v971 = vld [vmem:[#allocation5 + $0x1790] sm:$0xff]
    %v972 = vld [vmem:[#allocation5 + $0x1798] sm:$0xff]
    %v973 = vld [vmem:[#allocation5 + $0x17a0] sm:$0xff]
    %v974 = vld [vmem:[#allocation5 + $0x17a8] sm:$0xff]
    %v975 = vld [vmem:[#allocation5 + $0x17b0] sm:$0xff]
    %v976 = vld [vmem:[#allocation5 + $0x17b8] sm:$0xff]
    %v977 = vld [vmem:[#allocation5 + $0x17c0] sm:$0xff]
    %v978 = vld [vmem:[#allocation5 + $0x17c8] sm:$0xff]
    %v979 = vld [vmem:[#allocation5 + $0x17d0] sm:$0xff]
    %v980 = vld [vmem:[#allocation5 + $0x17d8] sm:$0xff]
    %v981 = vld [vmem:[#allocation5 + $0x17e0] sm:$0xff]
    %v982 = vld [vmem:[#allocation5 + $0x17e8] sm:$0xff]
    %v983 = vld [vmem:[#allocation5 + $0x17f0] sm:$0xff]
    %v984 = vld [vmem:[#allocation5 + $0x17f8] sm:$0xff]
    %v985 = vld [vmem:[#allocation5 + $0x1800] sm:$0xff]
    %v986 = vld [vmem:[#allocation5 + $0x1808] sm:$0xff]
    %v987 = vld [vmem:[#allocation5 + $0x1810] sm:$0xff]
    %v988 = vld [vmem:[#allocation5 + $0x1818] sm:$0xff]
    %v989 = vld [vmem:[#allocation5 + $0x1820] sm:$0xff]
    %v990 = vld [vmem:[#allocation5 + $0x1828] sm:$0xff]
    %v991 = vld [vmem:[#allocation5 + $0x1830] sm:$0xff]
    %v992 = vld [vmem:[#allocation5 + $0x1838] sm:$0xff]
    %v993 = vld [vmem:[#allocation5 + $0x1840] sm:$0xff]
    %v994 = vld [vmem:[#allocation5 + $0x1848] sm:$0xff]
    %v995 = vld [vmem:[#allocation5 + $0x1850] sm:$0xff]
    %v996 = vld [vmem:[#allocation5 + $0x1858] sm:$0xff]
    %v997 = vld [vmem:[#allocation5 + $0x1860] sm:$0xff]
    %v998 = vld [vmem:[#allocation5 + $0x1868] sm:$0xff]
    %v999 = vld [vmem:[#allocation5 + $0x1870] sm:$0xff]
    %v1000 = vld [vmem:[#allocation5 + $0x1878] sm:$0xff]
    %v1001 = vld [vmem:[#allocation5 + $0x1880] sm:$0xff]
    %v1002 = vld [vmem:[#allocation5 + $0x1888] sm:$0xff]
    %v1003 = vld [vmem:[#allocation5 + $0x1890] sm:$0xff]
    %v1004 = vld [vmem:[#allocation5 + $0x1898] sm:$0xff]
    %v1005 = vld [vmem:[#allocation5 + $0x18a0] sm:$0xff]
    %v1006 = vld [vmem:[#allocation5 + $0x18a8] sm:$0xff]
    %v1007 = vld [vmem:[#allocation5 + $0x18b0] sm:$0xff]
    %v1008 = vld [vmem:[#allocation5 + $0x18b8] sm:$0xff]
    %v1009 = vld [vmem:[#allocation5 + $0x18c0] sm:$0xff]
    %v1010 = vld [vmem:[#allocation5 + $0x18c8] sm:$0xff]
    %v1011 = vld [vmem:[#allocation5 + $0x18d0] sm:$0xff]
    %v1012 = vld [vmem:[#allocation5 + $0x18d8] sm:$0xff]
    %v1013 = vld [vmem:[#allocation5 + $0x18e0] sm:$0xff]
    %v1014 = vld [vmem:[#allocation5 + $0x18e8] sm:$0xff]
    %v1015 = vld [vmem:[#allocation5 + $0x18f0] sm:$0xff]
    %v1016 = vld [vmem:[#allocation5 + $0x18f8] sm:$0xff]
    %v1017 = vld [vmem:[#allocation5 + $0x1900] sm:$0xff]
    %v1018 = vld [vmem:[#allocation5 + $0x1908] sm:$0xff]
    %v1019 = vld [vmem:[#allocation5 + $0x1910] sm:$0xff]
    %v1020 = vld [vmem:[#allocation5 + $0x1918] sm:$0xff]
    %v1021 = vld [vmem:[#allocation5 + $0x1920] sm:$0xff]
    %v1022 = vld [vmem:[#allocation5 + $0x1928] sm:$0xff]
    %v1023 = vld [vmem:[#allocation5 + $0x1930] sm:$0xff]
    %v1024 = vld [vmem:[#allocation5 + $0x1938] sm:$0xff]
    %v1025 = vld [vmem:[#allocation5 + $0x1940] sm:$0xff]
    %v1026 = vld [vmem:[#allocation5 + $0x1948] sm:$0xff]
    %v1027 = vld [vmem:[#allocation5 + $0x1950] sm:$0xff]
    %v1028 = vld [vmem:[#allocation5 + $0x1958] sm:$0xff]
    %v1029 = vld [vmem:[#allocation5 + $0x1960] sm:$0xff]
    %v1030 = vld [vmem:[#allocation5 + $0x1968] sm:$0xff]
    %v1031 = vld [vmem:[#allocation5 + $0x1970] sm:$0xff]
    %v1032 = vld [vmem:[#allocation5 + $0x1978] sm:$0xff]
    %v1033 = vld [vmem:[#allocation5 + $0x1980] sm:$0xff]
    %v1034 = vld [vmem:[#allocation5 + $0x1988] sm:$0xff]
    %v1035 = vld [vmem:[#allocation5 + $0x1990] sm:$0xff]
    %v1036 = vld [vmem:[#allocation5 + $0x1998] sm:$0xff]
    %v1037 = vld [vmem:[#allocation5 + $0x19a0] sm:$0xff]
    %v1038 = vld [vmem:[#allocation5 + $0x19a8] sm:$0xff]
    %v1039 = vld [vmem:[#allocation5 + $0x19b0] sm:$0xff]
    %v1040 = vld [vmem:[#allocation5 + $0x19b8] sm:$0xff]
    %v1041 = vld [vmem:[#allocation5 + $0x19c0] sm:$0xff]
    %v1042 = vld [vmem:[#allocation5 + $0x19c8] sm:$0xff]
    %v1043 = vld [vmem:[#allocation5 + $0x19d0] sm:$0xff]
    %v1044 = vld [vmem:[#allocation5 + $0x19d8] sm:$0xff]
    %v1045 = vld [vmem:[#allocation5 + $0x19e0] sm:$0xff]
    %v1046 = vld [vmem:[#allocation5 + $0x19e8] sm:$0xff]
    %v1047 = vld [vmem:[#allocation5 + $0x19f0] sm:$0xff]
    %v1048 = vld [vmem:[#allocation5 + $0x19f8] sm:$0xff]
    %v1049 = vld [vmem:[#allocation5 + $0x1a00] sm:$0xff]
    %v1050 = vld [vmem:[#allocation5 + $0x1a08] sm:$0xff]
    %v1051 = vld [vmem:[#allocation5 + $0x1a10] sm:$0xff]
    %v1052 = vld [vmem:[#allocation5 + $0x1a18] sm:$0xff]
    %v1053 = vld [vmem:[#allocation5 + $0x1a20] sm:$0xff]
    %v1054 = vld [vmem:[#allocation5 + $0x1a28] sm:$0xff]
    %v1055 = vld [vmem:[#allocation5 + $0x1a30] sm:$0xff]
    %v1056 = vld [vmem:[#allocation5 + $0x1a38] sm:$0xff]
    %v1057 = vld [vmem:[#allocation5 + $0x1a40] sm:$0xff]
    %v1058 = vld [vmem:[#allocation5 + $0x1a48] sm:$0xff]
    %v1059 = vld [vmem:[#allocation5 + $0x1a50] sm:$0xff]
    %v1060 = vld [vmem:[#allocation5 + $0x1a58] sm:$0xff]
    %v1061 = vld [vmem:[#allocation5 + $0x1a60] sm:$0xff]
    %v1062 = vld [vmem:[#allocation5 + $0x1a68] sm:$0xff]
    %v1063 = vld [vmem:[#allocation5 + $0x1a70] sm:$0xff]
    %v1064 = vld [vmem:[#allocation5 + $0x1a78] sm:$0xff]
    %v1065 = vld [vmem:[#allocation5 + $0x1a80] sm:$0xff]
    %v1066 = vld [vmem:[#allocation5 + $0x1a88] sm:$0xff]
    %v1067 = vld [vmem:[#allocation5 + $0x1a90] sm:$0xff]
    %v1068 = vld [vmem:[#allocation5 + $0x1a98] sm:$0xff]
    %v1069 = vld [vmem:[#allocation5 + $0x1aa0] sm:$0xff]
    %v1070 = vld [vmem:[#allocation5 + $0x1aa8] sm:$0xff]
    %v1071 = vld [vmem:[#allocation5 + $0x1ab0] sm:$0xff]
    %v1072 = vld [vmem:[#allocation5 + $0x1ab8] sm:$0xff]
    %v1073 = vld [vmem:[#allocation5 + $0x1ac0] sm:$0xff]
    %v1074 = vld [vmem:[#allocation5 + $0x1ac8] sm:$0xff]
    %v1075 = vld [vmem:[#allocation5 + $0x1ad0] sm:$0xff]
    %v1076 = vld [vmem:[#allocation5 + $0x1ad8] sm:$0xff]
    %v1077 = vld [vmem:[#allocation5 + $0x1ae0] sm:$0xff]
    %v1078 = vld [vmem:[#allocation5 + $0x1ae8] sm:$0xff]
    %v1079 = vld [vmem:[#allocation5 + $0x1af0] sm:$0xff]
    %v1080 = vld [vmem:[#allocation5 + $0x1af8] sm:$0xff]
    %v1081 = vld [vmem:[#allocation5 + $0x1b00] sm:$0xff]
    %v1082 = vld [vmem:[#allocation5 + $0x1b08] sm:$0xff]
    %v1083 = vld [vmem:[#allocation5 + $0x1b10] sm:$0xff]
    %v1084 = vld [vmem:[#allocation5 + $0x1b18] sm:$0xff]
    %v1085 = vld [vmem:[#allocation5 + $0x1b20] sm:$0xff]
    %v1086 = vld [vmem:[#allocation5 + $0x1b28] sm:$0xff]
    %v1087 = vld [vmem:[#allocation5 + $0x1b30] sm:$0xff]
    %v1088 = vld [vmem:[#allocation5 + $0x1b38] sm:$0xff]
    %v1089 = vld [vmem:[#allocation5 + $0x1b40] sm:$0xff]
    %v1090 = vld [vmem:[#allocation5 + $0x1b48] sm:$0xff]
    %v1091 = vld [vmem:[#allocation5 + $0x1b50] sm:$0xff]
    %v1092 = vld [vmem:[#allocation5 + $0x1b58] sm:$0xff]
    %v1093 = vld [vmem:[#allocation5 + $0x1b60] sm:$0xff]
    %v1094 = vld [vmem:[#allocation5 + $0x1b68] sm:$0xff]
    %v1095 = vld [vmem:[#allocation5 + $0x1b70] sm:$0xff]
    %v1096 = vld [vmem:[#allocation5 + $0x1b78] sm:$0xff]
    %v1097 = vld [vmem:[#allocation5 + $0x1b80] sm:$0xff]
    %v1098 = vld [vmem:[#allocation5 + $0x1b88] sm:$0xff]
    %v1099 = vld [vmem:[#allocation5 + $0x1b90] sm:$0xff]
    %v1100 = vld [vmem:[#allocation5 + $0x1b98] sm:$0xff]
    %v1101 = vld [vmem:[#allocation5 + $0x1ba0] sm:$0xff]
    %v1102 = vld [vmem:[#allocation5 + $0x1ba8] sm:$0xff]
    %v1103 = vld [vmem:[#allocation5 + $0x1bb0] sm:$0xff]
    %v1104 = vld [vmem:[#allocation5 + $0x1bb8] sm:$0xff]
    %v1105 = vld [vmem:[#allocation5 + $0x1bc0] sm:$0xff]
    %v1106 = vld [vmem:[#allocation5 + $0x1bc8] sm:$0xff]
    %v1107 = vld [vmem:[#allocation5 + $0x1bd0] sm:$0xff]
    %v1108 = vld [vmem:[#allocation5 + $0x1bd8] sm:$0xff]
    %v1109 = vld [vmem:[#allocation5 + $0x1be0] sm:$0xff]
    %v1110 = vld [vmem:[#allocation5 + $0x1be8] sm:$0xff]
    %v1111 = vld [vmem:[#allocation5 + $0x1bf0] sm:$0xff]
    %v1112 = vld [vmem:[#allocation5 + $0x1bf8] sm:$0xff]
    %v1113 = vld [vmem:[#allocation5 + $0x1c00] sm:$0xff]
    %v1114 = vld [vmem:[#allocation5 + $0x1c08] sm:$0xff]
    %v1115 = vld [vmem:[#allocation5 + $0x1c10] sm:$0xff]
    %v1116 = vld [vmem:[#allocation5 + $0x1c18] sm:$0xff]
    %v1117 = vld [vmem:[#allocation5 + $0x1c20] sm:$0xff]
    %v1118 = vld [vmem:[#allocation5 + $0x1c28] sm:$0xff]
    %v1119 = vld [vmem:[#allocation5 + $0x1c30] sm:$0xff]
    %v1120 = vld [vmem:[#allocation5 + $0x1c38] sm:$0xff]
    %v1121 = vld [vmem:[#allocation5 + $0x1c40] sm:$0xff]
    %v1122 = vld [vmem:[#allocation5 + $0x1c48] sm:$0xff]
    %v1123 = vld [vmem:[#allocation5 + $0x1c50] sm:$0xff]
    %v1124 = vld [vmem:[#allocation5 + $0x1c58] sm:$0xff]
    %v1125 = vld [vmem:[#allocation5 + $0x1c60] sm:$0xff]
    %v1126 = vld [vmem:[#allocation5 + $0x1c68] sm:$0xff]
    %v1127 = vld [vmem:[#allocation5 + $0x1c70] sm:$0xff]
    %v1128 = vld [vmem:[#allocation5 + $0x1c78] sm:$0xff]
    %v1129 = vld [vmem:[#allocation5 + $0x1c80] sm:$0xff]
    %v1130 = vld [vmem:[#allocation5 + $0x1c88] sm:$0xff]
    %v1131 = vld [vmem:[#allocation5 + $0x1c90] sm:$0xff]
    %v1132 = vld [vmem:[#allocation5 + $0x1c98] sm:$0xff]
    %v1133 = vld [vmem:[#allocation5 + $0x1ca0] sm:$0xff]
    %v1134 = vld [vmem:[#allocation5 + $0x1ca8] sm:$0xff]
    %v1135 = vld [vmem:[#allocation5 + $0x1cb0] sm:$0xff]
    %v1136 = vld [vmem:[#allocation5 + $0x1cb8] sm:$0xff]
    %v1137 = vld [vmem:[#allocation5 + $0x1cc0] sm:$0xff]
    %v1138 = vld [vmem:[#allocation5 + $0x1cc8] sm:$0xff]
    %v1139 = vld [vmem:[#allocation5 + $0x1cd0] sm:$0xff]
    %v1140 = vld [vmem:[#allocation5 + $0x1cd8] sm:$0xff]
    %v1141 = vld [vmem:[#allocation5 + $0x1ce0] sm:$0xff]
    %v1142 = vld [vmem:[#allocation5 + $0x1ce8] sm:$0xff]
    %v1143 = vld [vmem:[#allocation5 + $0x1cf0] sm:$0xff]
    %v1144 = vld [vmem:[#allocation5 + $0x1cf8] sm:$0xff]
    %v1145 = vld [vmem:[#allocation5 + $0x1d00] sm:$0xff]
    %v1146 = vld [vmem:[#allocation5 + $0x1d08] sm:$0xff]
    %v1147 = vld [vmem:[#allocation5 + $0x1d10] sm:$0xff]
    %v1148 = vld [vmem:[#allocation5 + $0x1d18] sm:$0xff]
    %v1149 = vld [vmem:[#allocation5 + $0x1d20] sm:$0xff]
    %v1150 = vld [vmem:[#allocation5 + $0x1d28] sm:$0xff]
    %v1151 = vld [vmem:[#allocation5 + $0x1d30] sm:$0xff]
    %v1152 = vld [vmem:[#allocation5 + $0x1d38] sm:$0xff]
    %v1153 = vld [vmem:[#allocation5 + $0x1d40] sm:$0xff]
    %v1154 = vld [vmem:[#allocation5 + $0x1d48] sm:$0xff]
    %v1155 = vld [vmem:[#allocation5 + $0x1d50] sm:$0xff]
    %v1156 = vld [vmem:[#allocation5 + $0x1d58] sm:$0xff]
    %v1157 = vld [vmem:[#allocation5 + $0x1d60] sm:$0xff]
    %v1158 = vld [vmem:[#allocation5 + $0x1d68] sm:$0xff]
    %v1159 = vld [vmem:[#allocation5 + $0x1d70] sm:$0xff]
    %v1160 = vld [vmem:[#allocation5 + $0x1d78] sm:$0xff]
    %v1161 = vld [vmem:[#allocation5 + $0x1d80] sm:$0xff]
    %v1162 = vld [vmem:[#allocation5 + $0x1d88] sm:$0xff]
    %v1163 = vld [vmem:[#allocation5 + $0x1d90] sm:$0xff]
    %v1164 = vld [vmem:[#allocation5 + $0x1d98] sm:$0xff]
    %v1165 = vld [vmem:[#allocation5 + $0x1da0] sm:$0xff]
    %v1166 = vld [vmem:[#allocation5 + $0x1da8] sm:$0xff]
    %v1167 = vld [vmem:[#allocation5 + $0x1db0] sm:$0xff]
    %v1168 = vld [vmem:[#allocation5 + $0x1db8] sm:$0xff]
    %v1169 = vld [vmem:[#allocation5 + $0x1dc0] sm:$0xff]
    %v1170 = vld [vmem:[#allocation5 + $0x1dc8] sm:$0xff]
    %v1171 = vld [vmem:[#allocation5 + $0x1dd0] sm:$0xff]
    %v1172 = vld [vmem:[#allocation5 + $0x1dd8] sm:$0xff]
    %v1173 = vld [vmem:[#allocation5 + $0x1de0] sm:$0xff]
    %v1174 = vld [vmem:[#allocation5 + $0x1de8] sm:$0xff]
    %v1175 = vld [vmem:[#allocation5 + $0x1df0] sm:$0xff]
    %v1176 = vld [vmem:[#allocation5 + $0x1df8] sm:$0xff]
    %v1177 = vld [vmem:[#allocation5 + $0x1e00] sm:$0xff]
    %v1178 = vld [vmem:[#allocation5 + $0x1e08] sm:$0xff]
    %v1179 = vld [vmem:[#allocation5 + $0x1e10] sm:$0xff]
    %v1180 = vld [vmem:[#allocation5 + $0x1e18] sm:$0xff]
    %v1181 = vld [vmem:[#allocation5 + $0x1e20] sm:$0xff]
    %v1182 = vld [vmem:[#allocation5 + $0x1e28] sm:$0xff]
    %v1183 = vld [vmem:[#allocation5 + $0x1e30] sm:$0xff]
    %v1184 = vld [vmem:[#allocation5 + $0x1e38] sm:$0xff]
    %v1185 = vld [vmem:[#allocation5 + $0x1e40] sm:$0xff]
    %v1186 = vld [vmem:[#allocation5 + $0x1e48] sm:$0xff]
    %v1187 = vld [vmem:[#allocation5 + $0x1e50] sm:$0xff]
    %v1188 = vld [vmem:[#allocation5 + $0x1e58] sm:$0xff]
    %v1189 = vld [vmem:[#allocation5 + $0x1e60] sm:$0xff]
    %v1190 = vld [vmem:[#allocation5 + $0x1e68] sm:$0xff]
    %v1191 = vld [vmem:[#allocation5 + $0x1e70] sm:$0xff]
    %v1192 = vld [vmem:[#allocation5 + $0x1e78] sm:$0xff]
    %v1193 = vld [vmem:[#allocation5 + $0x1e80] sm:$0xff]
    %v1194 = vld [vmem:[#allocation5 + $0x1e88] sm:$0xff]
    %v1195 = vld [vmem:[#allocation5 + $0x1e90] sm:$0xff]
    %v1196 = vld [vmem:[#allocation5 + $0x1e98] sm:$0xff]
    %v1197 = vld [vmem:[#allocation5 + $0x1ea0] sm:$0xff]
    %v1198 = vld [vmem:[#allocation5 + $0x1ea8] sm:$0xff]
    %v1199 = vld [vmem:[#allocation5 + $0x1eb0] sm:$0xff]
    %v1200 = vld [vmem:[#allocation5 + $0x1eb8] sm:$0xff]
    %v1201 = vld [vmem:[#allocation5 + $0x1ec0] sm:$0xff]
    %v1202 = vld [vmem:[#allocation5 + $0x1ec8] sm:$0xff]
    %v1203 = vld [vmem:[#allocation5 + $0x1ed0] sm:$0xff]
    %v1204 = vld [vmem:[#allocation5 + $0x1ed8] sm:$0xff]
    %v1205 = vld [vmem:[#allocation5 + $0x1ee0] sm:$0xff]
    %v1206 = vld [vmem:[#allocation5 + $0x1ee8] sm:$0xff]
    %v1207 = vld [vmem:[#allocation5 + $0x1ef0] sm:$0xff]
    %v1208 = vld [vmem:[#allocation5 + $0x1ef8] sm:$0xff]
    %v1209 = vld [vmem:[#allocation5 + $0x1f00] sm:$0xff]
    %v1210 = vld [vmem:[#allocation5 + $0x1f08] sm:$0xff]
    %v1211 = vld [vmem:[#allocation5 + $0x1f10] sm:$0xff]
    %v1212 = vld [vmem:[#allocation5 + $0x1f18] sm:$0xff]
    %v1213 = vld [vmem:[#allocation5 + $0x1f20] sm:$0xff]
    %v1214 = vld [vmem:[#allocation5 + $0x1f28] sm:$0xff]
    %v1215 = vld [vmem:[#allocation5 + $0x1f30] sm:$0xff]
    %v1216 = vld [vmem:[#allocation5 + $0x1f38] sm:$0xff]
    %v1217 = vld [vmem:[#allocation5 + $0x1f40] sm:$0xff]
    %v1218 = vld [vmem:[#allocation5 + $0x1f48] sm:$0xff]
    %v1219 = vld [vmem:[#allocation5 + $0x1f50] sm:$0xff]
    %v1220 = vld [vmem:[#allocation5 + $0x1f58] sm:$0xff]
    %v1221 = vld [vmem:[#allocation5 + $0x1f60] sm:$0xff]
    %v1222 = vld [vmem:[#allocation5 + $0x1f68] sm:$0xff]
    %v1223 = vld [vmem:[#allocation5 + $0x1f70] sm:$0xff]
    %v1224 = vld [vmem:[#allocation5 + $0x1f78] sm:$0xff]
    %v1225 = vld [vmem:[#allocation5 + $0x1f80] sm:$0xff]
    %v1226 = vld [vmem:[#allocation5 + $0x1f88] sm:$0xff]
    %v1227 = vld [vmem:[#allocation5 + $0x1f90] sm:$0xff]
    %v1228 = vld [vmem:[#allocation5 + $0x1f98] sm:$0xff]
    %v1229 = vld [vmem:[#allocation5 + $0x1fa0] sm:$0xff]
    %v1230 = vld [vmem:[#allocation5 + $0x1fa8] sm:$0xff]
    %v1231 = vld [vmem:[#allocation5 + $0x1fb0] sm:$0xff]
    %v1232 = vld [vmem:[#allocation5 + $0x1fb8] sm:$0xff]
    %v1233 = vld [vmem:[#allocation5 + $0x1fc0] sm:$0xff]
    %v1234 = vld [vmem:[#allocation5 + $0x1fc8] sm:$0xff]
    %v1235 = vld [vmem:[#allocation5 + $0x1fd0] sm:$0xff]
    %v1236 = vld [vmem:[#allocation5 + $0x1fd8] sm:$0xff]
    %v1237 = vld [vmem:[#allocation5 + $0x1fe0] sm:$0xff]
    %v1238 = vld [vmem:[#allocation5 + $0x1fe8] sm:$0xff]
    %v1239 = vld [vmem:[#allocation5 + $0x1ff0] sm:$0xff]
    %v1240 = vld [vmem:[#allocation5 + $0x1ff8] sm:$0xff]
    %v1241 = vld [vmem:[#allocation5 + $0x2000] sm:$0xff]
    %v1242 = vld [vmem:[#allocation5 + $0x2008] sm:$0xff]
    %v1243 = vld [vmem:[#allocation5 + $0x2010] sm:$0xff]
    %v1244 = vld [vmem:[#allocation5 + $0x2018] sm:$0xff]
    %v1245 = vld [vmem:[#allocation5 + $0x2020] sm:$0xff]
    %v1246 = vld [vmem:[#allocation5 + $0x2028] sm:$0xff]
    %v1247 = vld [vmem:[#allocation5 + $0x2030] sm:$0xff]
    %v1248 = vld [vmem:[#allocation5 + $0x2038] sm:$0xff]
    %v1249 = vld [vmem:[#allocation5 + $0x2040] sm:$0xff]
    %v1250 = vld [vmem:[#allocation5 + $0x2048] sm:$0xff]
    %v1251 = vld [vmem:[#allocation5 + $0x2050] sm:$0xff]
    %v1252 = vld [vmem:[#allocation5 + $0x2058] sm:$0xff]
    %v1253 = vld [vmem:[#allocation5 + $0x2060] sm:$0xff]
    %v1254 = vld [vmem:[#allocation5 + $0x2068] sm:$0xff]
    %v1255 = vld [vmem:[#allocation5 + $0x2070] sm:$0xff]
    %v1256 = vld [vmem:[#allocation5 + $0x2078] sm:$0xff]
    %v1257 = vld [vmem:[#allocation5 + $0x2080] sm:$0xff]
    %v1258 = vld [vmem:[#allocation5 + $0x2088] sm:$0xff]
    %v1259 = vld [vmem:[#allocation5 + $0x2090] sm:$0xff]
    %v1260 = vld [vmem:[#allocation5 + $0x2098] sm:$0xff]
    %v1261 = vld [vmem:[#allocation5 + $0x20a0] sm:$0xff]
    %v1262 = vld [vmem:[#allocation5 + $0x20a8] sm:$0xff]
    %v1263 = vld [vmem:[#allocation5 + $0x20b0] sm:$0xff]
    %v1264 = vld [vmem:[#allocation5 + $0x20b8] sm:$0xff]
    %v1265 = vld [vmem:[#allocation5 + $0x20c0] sm:$0xff]
    %v1266 = vld [vmem:[#allocation5 + $0x20c8] sm:$0xff]
    %v1267 = vld [vmem:[#allocation5 + $0x20d0] sm:$0xff]
    %v1268 = vld [vmem:[#allocation5 + $0x20d8] sm:$0xff]
    %v1269 = vld [vmem:[#allocation5 + $0x20e0] sm:$0xff]
    %v1270 = vld [vmem:[#allocation5 + $0x20e8] sm:$0xff]
    %v1271 = vld [vmem:[#allocation5 + $0x20f0] sm:$0xff]
    %v1272 = vld [vmem:[#allocation5 + $0x20f8] sm:$0xff]
    %v1273 = vld [vmem:[#allocation5 + $0x2100] sm:$0xff]
    %v1274 = vld [vmem:[#allocation5 + $0x2108] sm:$0xff]
    %v1275 = vld [vmem:[#allocation5 + $0x2110] sm:$0xff]
    %v1276 = vld [vmem:[#allocation5 + $0x2118] sm:$0xff]
    %v1277 = vld [vmem:[#allocation5 + $0x2120] sm:$0xff]
    %v1278 = vld [vmem:[#allocation5 + $0x2128] sm:$0xff]
    %v1279 = vld [vmem:[#allocation5 + $0x2130] sm:$0xff]
    %v1280 = vld [vmem:[#allocation5 + $0x2138] sm:$0xff]
    %v1281 = vld [vmem:[#allocation5 + $0x2140] sm:$0xff]
    %v1282 = vld [vmem:[#allocation5 + $0x2148] sm:$0xff]
    %v1283 = vld [vmem:[#allocation5 + $0x2150] sm:$0xff]
    %v1284 = vld [vmem:[#allocation5 + $0x2158] sm:$0xff]
    %v1285 = vld [vmem:[#allocation5 + $0x2160] sm:$0xff]
    %v1286 = vld [vmem:[#allocation5 + $0x2168] sm:$0xff]
    %v1287 = vld [vmem:[#allocation5 + $0x2170] sm:$0xff]
    %v1288 = vld [vmem:[#allocation5 + $0x2178] sm:$0xff]
    %v1289 = vld [vmem:[#allocation5 + $0x2180] sm:$0xff]
    %v1290 = vld [vmem:[#allocation5 + $0x2188] sm:$0xff]
    %v1291 = vld [vmem:[#allocation5 + $0x2190] sm:$0xff]
    %v1292 = vld [vmem:[#allocation5 + $0x2198] sm:$0xff]
    %v1293 = vld [vmem:[#allocation5 + $0x21a0] sm:$0xff]
    %v1294 = vld [vmem:[#allocation5 + $0x21a8] sm:$0xff]
    %v1295 = vld [vmem:[#allocation5 + $0x21b0] sm:$0xff]
    %v1296 = vld [vmem:[#allocation5 + $0x21b8] sm:$0xff]
    %v1297 = vld [vmem:[#allocation5 + $0x21c0] sm:$0xff]
    %v1298 = vld [vmem:[#allocation5 + $0x21c8] sm:$0xff]
    %v1299 = vld [vmem:[#allocation5 + $0x21d0] sm:$0xff]
    %v1300 = vld [vmem:[#allocation5 + $0x21d8] sm:$0xff]
    %v1301 = vld [vmem:[#allocation5 + $0x21e0] sm:$0xff]
    %v1302 = vld [vmem:[#allocation5 + $0x21e8] sm:$0xff]
    %v1303 = vld [vmem:[#allocation5 + $0x21f0] sm:$0xff]
    %v1304 = vld [vmem:[#allocation5 + $0x21f8] sm:$0xff]
    %v1305 = vld [vmem:[#allocation5 + $0x2200] sm:$0xff]
    %v1306 = vld [vmem:[#allocation5 + $0x2208] sm:$0xff]
    %v1307 = vld [vmem:[#allocation5 + $0x2210] sm:$0xff]
    %v1308 = vld [vmem:[#allocation5 + $0x2218] sm:$0xff]
    %v1309 = vld [vmem:[#allocation5 + $0x2220] sm:$0xff]
    %v1310 = vld [vmem:[#allocation5 + $0x2228] sm:$0xff]
    %v1311 = vld [vmem:[#allocation5 + $0x2230] sm:$0xff]
    %v1312 = vld [vmem:[#allocation5 + $0x2238] sm:$0xff]
    %v1313 = vld [vmem:[#allocation5 + $0x2240] sm:$0xff]
    %v1314 = vld [vmem:[#allocation5 + $0x2248] sm:$0xff]
    %v1315 = vld [vmem:[#allocation5 + $0x2250] sm:$0xff]
    %v1316 = vld [vmem:[#allocation5 + $0x2258] sm:$0xff]
    %v1317 = vld [vmem:[#allocation5 + $0x2260] sm:$0xff]
    %v1318 = vld [vmem:[#allocation5 + $0x2268] sm:$0xff]
    %v1319 = vld [vmem:[#allocation5 + $0x2270] sm:$0xff]
    %v1320 = vld [vmem:[#allocation5 + $0x2278] sm:$0xff]
    %v1321 = vld [vmem:[#allocation5 + $0x2280] sm:$0xff]
    %v1322 = vld [vmem:[#allocation5 + $0x2288] sm:$0xff]
    %v1323 = vld [vmem:[#allocation5 + $0x2290] sm:$0xff]
    %v1324 = vld [vmem:[#allocation5 + $0x2298] sm:$0xff]
    %v1325 = vld [vmem:[#allocation5 + $0x22a0] sm:$0xff]
    %v1326 = vld [vmem:[#allocation5 + $0x22a8] sm:$0xff]
    %v1327 = vld [vmem:[#allocation5 + $0x22b0] sm:$0xff]
    %v1328 = vld [vmem:[#allocation5 + $0x22b8] sm:$0xff]
    %v1329 = vld [vmem:[#allocation5 + $0x22c0] sm:$0xff]
    %v1330 = vld [vmem:[#allocation5 + $0x22c8] sm:$0xff]
    %v1331 = vld [vmem:[#allocation5 + $0x22d0] sm:$0xff]
    %v1332 = vld [vmem:[#allocation5 + $0x22d8] sm:$0xff]
    %v1333 = vld [vmem:[#allocation5 + $0x22e0] sm:$0xff]
    %v1334 = vld [vmem:[#allocation5 + $0x22e8] sm:$0xff]
    %v1335 = vld [vmem:[#allocation5 + $0x22f0] sm:$0xff]
    %v1336 = vld [vmem:[#allocation5 + $0x22f8] sm:$0xff]
    %v1337 = vld [vmem:[#allocation5 + $0x2300] sm:$0xff]
    %v1338 = vld [vmem:[#allocation5 + $0x2308] sm:$0xff]
    %v1339 = vld [vmem:[#allocation5 + $0x2310] sm:$0xff]
    %v1340 = vld [vmem:[#allocation5 + $0x2318] sm:$0xff]
    %v1341 = vld [vmem:[#allocation5 + $0x2320] sm:$0xff]
    %v1342 = vld [vmem:[#allocation5 + $0x2328] sm:$0xff]
    %v1343 = vld [vmem:[#allocation5 + $0x2330] sm:$0xff]
    %v1344 = vld [vmem:[#allocation5 + $0x2338] sm:$0xff]
    %v1345 = vld [vmem:[#allocation5 + $0x2340] sm:$0xff]
    %v1346 = vld [vmem:[#allocation5 + $0x2348] sm:$0xff]
    %v1347 = vld [vmem:[#allocation5 + $0x2350] sm:$0xff]
    %v1348 = vld [vmem:[#allocation5 + $0x2358] sm:$0xff]
    %v1349 = vld [vmem:[#allocation5 + $0x2360] sm:$0xff]
    %v1350 = vld [vmem:[#allocation5 + $0x2368] sm:$0xff]
    %v1351 = vld [vmem:[#allocation5 + $0x2370] sm:$0xff]
    %v1352 = vld [vmem:[#allocation5 + $0x2378] sm:$0xff]
    %v1353 = vld [vmem:[#allocation5 + $0x2380] sm:$0xff]
    %v1354 = vld [vmem:[#allocation5 + $0x2388] sm:$0xff]
    %v1355 = vld [vmem:[#allocation5 + $0x2390] sm:$0xff]
    %v1356 = vld [vmem:[#allocation5 + $0x2398] sm:$0xff]
    %v1357 = vld [vmem:[#allocation5 + $0x23a0] sm:$0xff]
    %v1358 = vld [vmem:[#allocation5 + $0x23a8] sm:$0xff]
    %v1359 = vld [vmem:[#allocation5 + $0x23b0] sm:$0xff]
    %v1360 = vld [vmem:[#allocation5 + $0x23b8] sm:$0xff]
    %v1361 = vld [vmem:[#allocation5 + $0x23c0] sm:$0xff]
    %v1362 = vld [vmem:[#allocation5 + $0x23c8] sm:$0xff]
    %v1363 = vld [vmem:[#allocation5 + $0x23d0] sm:$0xff]
    %v1364 = vld [vmem:[#allocation5 + $0x23d8] sm:$0xff]
    %v1365 = vld [vmem:[#allocation5 + $0x23e0] sm:$0xff]
    %v1366 = vld [vmem:[#allocation5 + $0x23e8] sm:$0xff]
    %v1367 = vld [vmem:[#allocation5 + $0x23f0] sm:$0xff]
    %v1368 = vld [vmem:[#allocation5 + $0x23f8] sm:$0xff]
    %v1369 = vld [vmem:[#allocation5 + $0x2400] sm:$0xff]
    %v1370 = vld [vmem:[#allocation5 + $0x2408] sm:$0xff]
    %v1371 = vld [vmem:[#allocation5 + $0x2410] sm:$0xff]
    %v1372 = vld [vmem:[#allocation5 + $0x2418] sm:$0xff]
    %v1373 = vld [vmem:[#allocation5 + $0x2420] sm:$0xff]
    %v1374 = vld [vmem:[#allocation5 + $0x2428] sm:$0xff]
    %v1375 = vld [vmem:[#allocation5 + $0x2430] sm:$0xff]
    %v1376 = vld [vmem:[#allocation5 + $0x2438] sm:$0xff]
    %v1377 = vld [vmem:[#allocation5 + $0x2440] sm:$0xff]
    %v1378 = vld [vmem:[#allocation5 + $0x2448] sm:$0xff]
    %v1379 = vld [vmem:[#allocation5 + $0x2450] sm:$0xff]
    %v1380 = vld [vmem:[#allocation5 + $0x2458] sm:$0xff]
    %v1381 = vld [vmem:[#allocation5 + $0x2460] sm:$0xff]
    %v1382 = vld [vmem:[#allocation5 + $0x2468] sm:$0xff]
    %v1383 = vld [vmem:[#allocation5 + $0x2470] sm:$0xff]
    %v1384 = vld [vmem:[#allocation5 + $0x2478] sm:$0xff]
    %v1385 = vld [vmem:[#allocation5 + $0x2480] sm:$0xff]
    %v1386 = vld [vmem:[#allocation5 + $0x2488] sm:$0xff]
    %v1387 = vld [vmem:[#allocation5 + $0x2490] sm:$0xff]
    %v1388 = vld [vmem:[#allocation5 + $0x2498] sm:$0xff]
    %v1389 = vld [vmem:[#allocation5 + $0x24a0] sm:$0xff]
    %v1390 = vld [vmem:[#allocation5 + $0x24a8] sm:$0xff]
    %v1391 = vld [vmem:[#allocation5 + $0x24b0] sm:$0xff]
    %v1392 = vld [vmem:[#allocation5 + $0x24b8] sm:$0xff]
    %v1393 = vld [vmem:[#allocation5 + $0x24c0] sm:$0xff]
    %v1394 = vld [vmem:[#allocation5 + $0x24c8] sm:$0xff]
    %v1395 = vld [vmem:[#allocation5 + $0x24d0] sm:$0xff]
    %v1396 = vld [vmem:[#allocation5 + $0x24d8] sm:$0xff]
    %v1397 = vld [vmem:[#allocation5 + $0x24e0] sm:$0xff]
    %v1398 = vld [vmem:[#allocation5 + $0x24e8] sm:$0xff]
    %v1399 = vld [vmem:[#allocation5 + $0x24f0] sm:$0xff]
    %v1400 = vld [vmem:[#allocation5 + $0x24f8] sm:$0xff]
    %v1401 = vld [vmem:[#allocation5 + $0x2500] sm:$0xff]
    %v1402 = vld [vmem:[#allocation5 + $0x2508] sm:$0xff]
    %v1403 = vld [vmem:[#allocation5 + $0x2510] sm:$0xff]
    %v1404 = vld [vmem:[#allocation5 + $0x2518] sm:$0xff]
    %v1405 = vld [vmem:[#allocation5 + $0x2520] sm:$0xff]
    %v1406 = vld [vmem:[#allocation5 + $0x2528] sm:$0xff]
    %v1407 = vld [vmem:[#allocation5 + $0x2530] sm:$0xff]
    %v1408 = vld [vmem:[#allocation5 + $0x2538] sm:$0xff]
    %v1409 = vld [vmem:[#allocation5 + $0x2540] sm:$0xff]
    %v1410 = vld [vmem:[#allocation5 + $0x2548] sm:$0xff]
    %v1411 = vld [vmem:[#allocation5 + $0x2550] sm:$0xff]
    %v1412 = vld [vmem:[#allocation5 + $0x2558] sm:$0xff]
    %v1413 = vld [vmem:[#allocation5 + $0x2560] sm:$0xff]
    %v1414 = vld [vmem:[#allocation5 + $0x2568] sm:$0xff]
    %v1415 = vld [vmem:[#allocation5 + $0x2570] sm:$0xff]
    %v1416 = vld [vmem:[#allocation5 + $0x2578] sm:$0xff]
    %v1417 = vld [vmem:[#allocation5 + $0x2580] sm:$0xff]
    %v1418 = vld [vmem:[#allocation5 + $0x2588] sm:$0xff]
    %v1419 = vld [vmem:[#allocation5 + $0x2590] sm:$0xff]
    %v1420 = vld [vmem:[#allocation5 + $0x2598] sm:$0xff]
    %v1421 = vld [vmem:[#allocation5 + $0x25a0] sm:$0xff]
    %v1422 = vld [vmem:[#allocation5 + $0x25a8] sm:$0xff]
    %v1423 = vld [vmem:[#allocation5 + $0x25b0] sm:$0xff]
    %v1424 = vld [vmem:[#allocation5 + $0x25b8] sm:$0xff]
    %v1425 = vld [vmem:[#allocation5 + $0x25c0] sm:$0xff]
    %v1426 = vld [vmem:[#allocation5 + $0x25c8] sm:$0xff]
    %v1427 = vld [vmem:[#allocation5 + $0x25d0] sm:$0xff]
    %v1428 = vld [vmem:[#allocation5 + $0x25d8] sm:$0xff]
    %v1429 = vld [vmem:[#allocation5 + $0x25e0] sm:$0xff]
    %v1430 = vld [vmem:[#allocation5 + $0x25e8] sm:$0xff]
    %v1431 = vld [vmem:[#allocation5 + $0x25f0] sm:$0xff]
    %v1432 = vld [vmem:[#allocation5 + $0x25f8] sm:$0xff]
    %v1433 = vld [vmem:[#allocation5 + $0x2600] sm:$0xff]
    %v1434 = vld [vmem:[#allocation5 + $0x2608] sm:$0xff]
    %v1435 = vld [vmem:[#allocation5 + $0x2610] sm:$0xff]
    %v1436 = vld [vmem:[#allocation5 + $0x2618] sm:$0xff]
    %v1437 = vld [vmem:[#allocation5 + $0x2620] sm:$0xff]
    %v1438 = vld [vmem:[#allocation5 + $0x2628] sm:$0xff]
    %v1439 = vld [vmem:[#allocation5 + $0x2630] sm:$0xff]
    %v1440 = vld [vmem:[#allocation5 + $0x2638] sm:$0xff]
    %v1441 = vld [vmem:[#allocation5 + $0x2640] sm:$0xff]
    %v1442 = vld [vmem:[#allocation5 + $0x2648] sm:$0xff]
    %v1443 = vld [vmem:[#allocation5 + $0x2650] sm:$0xff]
    %v1444 = vld [vmem:[#allocation5 + $0x2658] sm:$0xff]
    %v1445 = vld [vmem:[#allocation5 + $0x2660] sm:$0xff]
    %v1446 = vld [vmem:[#allocation5 + $0x2668] sm:$0xff]
    %v1447 = vld [vmem:[#allocation5 + $0x2670] sm:$0xff]
    %v1448 = vld [vmem:[#allocation5 + $0x2678] sm:$0xff]
    %v1449 = vld [vmem:[#allocation5 + $0x2680] sm:$0xff]
    %v1450 = vld [vmem:[#allocation5 + $0x2688] sm:$0xff]
    %v1451 = vld [vmem:[#allocation5 + $0x2690] sm:$0xff]
    %v1452 = vld [vmem:[#allocation5 + $0x2698] sm:$0xff]
    %v1453 = vld [vmem:[#allocation5 + $0x26a0] sm:$0xff]
    %v1454 = vld [vmem:[#allocation5 + $0x26a8] sm:$0xff]
    %v1455 = vld [vmem:[#allocation5 + $0x26b0] sm:$0xff]
    %v1456 = vld [vmem:[#allocation5 + $0x26b8] sm:$0xff]
    %v1457 = vld [vmem:[#allocation5 + $0x26c0] sm:$0xff]
    %v1458 = vld [vmem:[#allocation5 + $0x26c8] sm:$0xff]
    %v1459 = vld [vmem:[#allocation5 + $0x26d0] sm:$0xff]
    %v1460 = vld [vmem:[#allocation5 + $0x26d8] sm:$0xff]
    %v1461 = vld [vmem:[#allocation5 + $0x26e0] sm:$0xff]
    %v1462 = vld [vmem:[#allocation5 + $0x26e8] sm:$0xff]
    %v1463 = vld [vmem:[#allocation5 + $0x26f0] sm:$0xff]
    %v1464 = vld [vmem:[#allocation5 + $0x26f8] sm:$0xff]
    %v1465 = vld [vmem:[#allocation5 + $0x2700] sm:$0xff]
    %v1466 = vld [vmem:[#allocation5 + $0x2708] sm:$0xff]
    %v1467 = vld [vmem:[#allocation5 + $0x2710] sm:$0xff]
    %v1468 = vld [vmem:[#allocation5 + $0x2718] sm:$0xff]
    %v1469 = vld [vmem:[#allocation5 + $0x2720] sm:$0xff]
    %v1470 = vld [vmem:[#allocation5 + $0x2728] sm:$0xff]
    %v1471 = vld [vmem:[#allocation5 + $0x2730] sm:$0xff]
    %v1472 = vld [vmem:[#allocation5 + $0x2738] sm:$0xff]
    %v1473 = vld [vmem:[#allocation5 + $0x2740] sm:$0xff]
    %v1474 = vld [vmem:[#allocation5 + $0x2748] sm:$0xff]
    %v1475 = vld [vmem:[#allocation5 + $0x2750] sm:$0xff]
    %v1476 = vld [vmem:[#allocation5 + $0x2758] sm:$0xff]
    %v1477 = vld [vmem:[#allocation5 + $0x2760] sm:$0xff]
    %v1478 = vld [vmem:[#allocation5 + $0x2768] sm:$0xff]
    %v1479 = vld [vmem:[#allocation5 + $0x2770] sm:$0xff]
    %v1480 = vld [vmem:[#allocation5 + $0x2778] sm:$0xff]
    %v1481 = vld [vmem:[#allocation5 + $0x2780] sm:$0xff]
    %v1482 = vld [vmem:[#allocation5 + $0x2788] sm:$0xff]
    %v1483 = vld [vmem:[#allocation5 + $0x2790] sm:$0xff]
    %v1484 = vld [vmem:[#allocation5 + $0x2798] sm:$0xff]
    %v1485 = vld [vmem:[#allocation5 + $0x27a0] sm:$0xff]
    %v1486 = vld [vmem:[#allocation5 + $0x27a8] sm:$0xff]
    %v1487 = vld [vmem:[#allocation5 + $0x27b0] sm:$0xff]
    %v1488 = vld [vmem:[#allocation5 + $0x27b8] sm:$0xff]
    %v1489 = vld [vmem:[#allocation5 + $0x27c0] sm:$0xff]
    %v1490 = vld [vmem:[#allocation5 + $0x27c8] sm:$0xff]
    %v1491 = vld [vmem:[#allocation6] sm:$0xff]
    %v1492 = vld [vmem:[#allocation6 + $0x8] sm:$0x1f]
    %v1495 = vlaneseq
    %v1496 = vshrl.u32 %v1495, 7
    %v1497 = vsub.s32 0, %v1496
    %v1498 = vrot.slane %v1491, %v1497
    %v1499 = vlaneseq
    %v1500 = vshrl.u32 %v1499, 7
    %v1501 = vsub.s32 1, %v1500
    %v1502 = vrot.slane %v1491, %v1501
    %v1503 = vlaneseq
    %v1504 = vshrl.u32 %v1503, 7
    %v1505 = vsub.s32 2, %v1504
    %v1506 = vrot.slane %v1491, %v1505
    %v1507 = vlaneseq
    %v1508 = vshrl.u32 %v1507, 7
    %v1509 = vsub.s32 3, %v1508
    %v1510 = vrot.slane %v1491, %v1509
    %v1511 = vlaneseq
    %v1512 = vshrl.u32 %v1511, 7
    %v1513 = vsub.s32 4, %v1512
    %v1514 = vrot.slane %v1491, %v1513
    %v1515 = vlaneseq
    %v1516 = vshrl.u32 %v1515, 7
    %v1517 = vsub.s32 5, %v1516
    %v1518 = vrot.slane %v1491, %v1517
    %v1519 = vlaneseq
    %v1520 = vshrl.u32 %v1519, 7
    %v1521 = vsub.s32 6, %v1520
    %v1522 = vrot.slane %v1491, %v1521
    %v1523 = vlaneseq
    %v1524 = vshrl.u32 %v1523, 7
    %v1525 = vsub.s32 7, %v1524
    %v1526 = vrot.slane %v1491, %v1525
    %v1527 = vlaneseq
    %v1528 = vshrl.u32 %v1527, 7
    %v1529 = vsub.s32 0, %v1528
    %v1530 = vrot.slane %v1492, %v1529
    %v1531 = vlaneseq
    %v1532 = vshrl.u32 %v1531, 7
    %v1533 = vsub.s32 1, %v1532
    %v1534 = vrot.slane %v1492, %v1533
    %v1535 = vlaneseq
    %v1536 = vshrl.u32 %v1535, 7
    %v1537 = vsub.s32 2, %v1536
    %v1538 = vrot.slane %v1492, %v1537
    %v1539 = vlaneseq
    %v1540 = vshrl.u32 %v1539, 7
    %v1541 = vsub.s32 3, %v1540
    %v1542 = vrot.slane %v1492, %v1541
    %v1543 = vlaneseq
    %v1544 = vshrl.u32 %v1543, 7
    %v1545 = vsub.s32 4, %v1544
    %v1546 = vrot.slane %v1492, %v1545
    %vm1560 = vcmask 130048
    %v1562 = vsel %vm1560, %v215, 0
    %1564 = vmatprep.subr.mxu0 %v218
    %1565 = vmatpush1.msra.mxu0 %v217
    %1566 = vmatprep.subr.mxu0 %v231
    %1567 = vmatpush1.msra.mxu0 %v230
    %1568 = vmatprep.subr.mxu0 %v244
    %1569 = vmatpush1.msra.mxu0 %v243
    %1570 = vmatprep.subr.mxu0 %v257
    %1571 = vmatpush1.msra.mxu0 %v256
    %1572 = vmatprep.subr.mxu0 %v270
    %1573 = vmatpush1.msra.mxu0 %v269
    %1574 = vmatprep.subr.mxu0 %v283
    %1575 = vmatpush1.msra.mxu0 %v282
    %1576 = vmatprep.subr.mxu0 %v296
    %1577 = vmatpush1.msra.mxu0 %v295
    %1578 = vmatprep.subr.mxu0 %v309
    %1579 = vmatpush1.msra.mxu0 %v308
    %1580 = vmatprep.subr.mxu0 %v322
    %1581 = vmatpush1.msra.mxu0 %v321
    %1582 = vmatprep.subr.mxu0 %v335
    %1583 = vmatpush1.msra.mxu0 %v334
    %1584 = vmatprep.subr.mxu0 %v348
    %1585 = vmatpush1.msra.mxu0 %v347
    %1586 = vmatprep.subr.mxu0 %v361
    %1587 = vmatpush1.msra.mxu0 %v360
    %1588 = vmatprep.subr.mxu0 %v374
    %1589 = vmatpush1.msra.mxu0 %v373
    %1590 = vmatprep.subr.mxu0 %v387
    %1591 = vmatpush1.msra.mxu0 %v386
    %1592 = vmatprep.subr.mxu0 %v400
    %1593 = vmatpush1.msra.mxu0 %v399
    %1594 = vmatprep.subr.mxu0 %v413
    %1595 = vmatpush1.msra.mxu0 %v412
    %1596 = vmatprep.subr.mxu0 %v426
    %1597 = vmatpush1.msra.mxu0 %v425
    %1598 = vmatprep.subr.mxu0 %v439
    %1599 = vmatpush1.msra.mxu0 %v438
    %1600 = vmatprep.subr.mxu0 %v452
    %1601 = vmatpush1.msra.mxu0 %v451
    %1602 = vmatprep.subr.mxu0 %v465
    %1603 = vmatpush1.msra.mxu0 %v464
    %1604 = vmatprep.subr.mxu0 %v478
    %1605 = vmatpush1.msra.mxu0 %v477
    %1606 = vmatprep.subr.mxu0 %v491
    %1607 = vmatpush1.msra.mxu0 %v490
    %1608 = vmatprep.subr.mxu0 %v504
    %1609 = vmatpush1.msra.mxu0 %v503
    %1610 = vmatprep.subr.mxu0 %v517
    %1611 = vmatpush1.msra.mxu0 %v516
    %1612 = vmatprep.subr.mxu0 %v530
    %1613 = vmatpush1.msra.mxu0 %v529
    %1614 = vmatprep.subr.mxu0 %v543
    %1615 = vmatpush1.msra.mxu0 %v542
    %1616 = vmatprep.subr.mxu0 %v556
    %1617 = vmatpush1.msra.mxu0 %v555
    %1618 = vmatprep.subr.mxu0 %v569
    %1619 = vmatpush1.msra.mxu0 %v568
    %1620 = vmatprep.subr.mxu0 %v582
    %1621 = vmatpush1.msra.mxu0 %v581
    %1622 = vmatprep.subr.mxu0 %v595
    %1623 = vmatpush1.msra.mxu0 %v594
    %1624 = vmatprep.subr.mxu0 %v608
    %1625 = vmatpush1.msra.mxu0 %v607
    %1626 = vmatprep.subr.mxu0 %v621
    %1627 = vmatpush1.msra.mxu0 %v620
    %1628 = vmatprep.mubr.f32.mxu0 %v210
    %1629 = vmatmul.mubr.f32.gmra.mrb[0].mxu0 %v209
    %v1630 = vpop.f32.mrb[0].mxu0
    %v1631 = vadd.f32 %v1498, %v1630
    %v1632 = vpop.f32.mrb[0].mxu0
    %v1633 = vadd.f32 %v1502, %v1632
    %1634 = vdwg.mxu0
    %1635 = vmatprep.subr.mxu0 %v634
    %1636 = vmatpush1.msra.mxu0 %v633
    %1637 = vmatprep.subr.mxu0 %v647
    %1638 = vmatpush1.msra.mxu0 %v646
    %1639 = vmatprep.subr.mxu0 %v660
    %1640 = vmatpush1.msra.mxu0 %v659
    %1641 = vmatprep.subr.mxu0 %v673
    %1642 = vmatpush1.msra.mxu0 %v672
    %1643 = vmatprep.subr.mxu0 %v686
    %1644 = vmatpush1.msra.mxu0 %v685
    %1645 = vmatprep.subr.mxu0 %v699
    %1646 = vmatpush1.msra.mxu0 %v698
    %1647 = vmatprep.subr.mxu0 %v712
    %1648 = vmatpush1.msra.mxu0 %v711
    %1649 = vmatprep.subr.mxu0 %v725
    %1650 = vmatpush1.msra.mxu0 %v724
    %1651 = vmatprep.subr.mxu0 %v738
    %1652 = vmatpush1.msra.mxu0 %v737
    %1653 = vmatprep.subr.mxu0 %v751
    %1654 = vmatpush1.msra.mxu0 %v750
    %1655 = vmatprep.subr.mxu0 %v764
    %1656 = vmatpush1.msra.mxu0 %v763
    %1657 = vmatprep.subr.mxu0 %v777
    %1658 = vmatpush1.msra.mxu0 %v776
    %1659 = vmatprep.subr.mxu0 %v790
    %1660 = vmatpush1.msra.mxu0 %v789
    %1661 = vmatprep.subr.mxu0 %v803
    %1662 = vmatpush1.msra.mxu0 %v802
    %1663 = vmatprep.subr.mxu0 %v816
    %1664 = vmatpush1.msra.mxu0 %v815
    %1665 = vmatprep.subr.mxu0 %v829
    %1666 = vmatpush1.msra.mxu0 %v828
    %1667 = vmatprep.subr.mxu0 %v842
    %1668 = vmatpush1.msra.mxu0 %v841
    %1669 = vmatprep.subr.mxu0 %v855
    %1670 = vmatpush1.msra.mxu0 %v854
    %1671 = vmatprep.subr.mxu0 %v868
    %1672 = vmatpush1.msra.mxu0 %v867
    %1673 = vmatprep.subr.mxu0 %v881
    %1674 = vmatpush1.msra.mxu0 %v880
    %1675 = vmatprep.subr.mxu0 %v894
    %1676 = vmatpush1.msra.mxu0 %v893
    %1677 = vmatprep.subr.mxu0 %v907
    %1678 = vmatpush1.msra.mxu0 %v906
    %1679 = vmatprep.subr.mxu0 %v920
    %1680 = vmatpush1.msra.mxu0 %v919
    %1681 = vmatprep.subr.mxu0 %v933
    %1682 = vmatpush1.msra.mxu0 %v932
    %1683 = vmatprep.subr.mxu0 %v946
    %1684 = vmatpush1.msra.mxu0 %v945
    %1685 = vmatprep.subr.mxu0 %v959
    %1686 = vmatpush1.msra.mxu0 %v958
    %1687 = vmatprep.subr.mxu0 %v972
    %1688 = vmatpush1.msra.mxu0 %v971
    %1689 = vmatprep.subr.mxu0 %v985
    %1690 = vmatpush1.msra.mxu0 %v984
    %1691 = vmatprep.subr.mxu0 %v998
    %1692 = vmatpush1.msra.mxu0 %v997
    %1693 = vmatprep.subr.mxu0 %v1011
    %1694 = vmatpush1.msra.mxu0 %v1010
    %1695 = vmatprep.subr.mxu0 %v1024
    %1696 = vmatpush1.msra.mxu0 %v1023
    %1697 = vmatprep.subr.mxu0 %v1037
    %1698 = vmatpush1.msra.mxu0 %v1036
    %1699 = vmatprep.mubr.f32.mxu0 %v212
    %1700 = vmatmul.mubr.f32.gmra.mrb[0].mxu0 %v211
    %v1701 = vpop.f32.mrb[0].mxu0
    %v1702 = vadd.f32 %v1631, %v1701
    %v1703 = vpop.f32.mrb[0].mxu0
    %v1704 = vadd.f32 %v1633, %v1703
    %1705 = vdwg.mxu0
    %1706 = vmatprep.subr.mxu0 %v1050
    %1707 = vmatpush1.msra.mxu0 %v1049
    %1708 = vmatprep.subr.mxu0 %v1063
    %1709 = vmatpush1.msra.mxu0 %v1062
    %1710 = vmatprep.subr.mxu0 %v1076
    %1711 = vmatpush1.msra.mxu0 %v1075
    %1712 = vmatprep.subr.mxu0 %v1089
    %1713 = vmatpush1.msra.mxu0 %v1088
    %1714 = vmatprep.subr.mxu0 %v1102
    %1715 = vmatpush1.msra.mxu0 %v1101
    %1716 = vmatprep.subr.mxu0 %v1115
    %1717 = vmatpush1.msra.mxu0 %v1114
    %1718 = vmatprep.subr.mxu0 %v1128
    %1719 = vmatpush1.msra.mxu0 %v1127
    %1720 = vmatprep.subr.mxu0 %v1141
    %1721 = vmatpush1.msra.mxu0 %v1140
    %1722 = vmatprep.subr.mxu0 %v1154
    %1723 = vmatpush1.msra.mxu0 %v1153
    %1724 = vmatprep.subr.mxu0 %v1167
    %1725 = vmatpush1.msra.mxu0 %v1166
    %1726 = vmatprep.subr.mxu0 %v1180
    %1727 = vmatpush1.msra.mxu0 %v1179
    %1728 = vmatprep.subr.mxu0 %v1193
    %1729 = vmatpush1.msra.mxu0 %v1192
    %1730 = vmatprep.subr.mxu0 %v1206
    %1731 = vmatpush1.msra.mxu0 %v1205
    %1732 = vmatprep.subr.mxu0 %v1219
    %1733 = vmatpush1.msra.mxu0 %v1218
    %1734 = vmatprep.subr.mxu0 %v1232
    %1735 = vmatpush1.msra.mxu0 %v1231
    %1736 = vmatprep.subr.mxu0 %v1245
    %1737 = vmatpush1.msra.mxu0 %v1244
    %1738 = vmatprep.subr.mxu0 %v1258
    %1739 = vmatpush1.msra.mxu0 %v1257
    %1740 = vmatprep.subr.mxu0 %v1271
    %1741 = vmatpush1.msra.mxu0 %v1270
    %1742 = vmatprep.subr.mxu0 %v1284
    %1743 = vmatpush1.msra.mxu0 %v1283
    %1744 = vmatprep.subr.mxu0 %v1297
    %1745 = vmatpush1.msra.mxu0 %v1296
    %1746 = vmatprep.subr.mxu0 %v1310
    %1747 = vmatpush1.msra.mxu0 %v1309
    %1748 = vmatprep.subr.mxu0 %v1323
    %1749 = vmatpush1.msra.mxu0 %v1322
    %1750 = vmatprep.subr.mxu0 %v1336
    %1751 = vmatpush1.msra.mxu0 %v1335
    %1752 = vmatprep.subr.mxu0 %v1349
    %1753 = vmatpush1.msra.mxu0 %v1348
    %1754 = vmatprep.subr.mxu0 %v1362
    %1755 = vmatpush1.msra.mxu0 %v1361
    %1756 = vmatprep.subr.mxu0 %v1375
    %1757 = vmatpush1.msra.mxu0 %v1374
    %1758 = vmatprep.subr.mxu0 %v1388
    %1759 = vmatpush1.msra.mxu0 %v1387
    %1760 = vmatprep.subr.mxu0 %v1401
    %1761 = vmatpush1.msra.mxu0 %v1400
    %1762 = vmatprep.subr.mxu0 %v1414
    %1763 = vmatpush1.msra.mxu0 %v1413
    %1764 = vmatprep.subr.mxu0 %v1427
    %1765 = vmatpush1.msra.mxu0 %v1426
    %1766 = vmatprep.subr.mxu0 %v1440
    %1767 = vmatpush1.msra.mxu0 %v1439
    %1768 = vmatprep.subr.mxu0 %v1453
    %1769 = vmatpush1.msra.mxu0 %v1452
    %1770 = vmatprep.mubr.f32.mxu0 %v214
    %1771 = vmatmul.mubr.f32.gmra.mrb[0].mxu0 %v213
    %v1772 = vpop.f32.mrb[0].mxu0
    %v1773 = vadd.f32 %v1702, %v1772
    %v1774 = vpop.f32.mrb[0].mxu0
    %v1775 = vadd.f32 %v1704, %v1774
    %1776 = vdwg.mxu0
    %1777 = vmatprep.subr.mxu0 %v1466
    %1778 = vmatpush1.msra.mxu0 %v1465
    %1779 = vmatprep.subr.mxu0 %v1479
    %1780 = vmatpush1.msra.mxu0 %v1478
    %1781 = vmatprep.subr.mxu0 0.0
    %1782 = vmatpush1.msra.mxu0 0.0
    %1783 = vmatprep.subr.mxu0 0.0
    %1784 = vmatpush1.msra.mxu0 0.0
    %1785 = vmatprep.subr.mxu0 0.0
    %1786 = vmatpush1.msra.mxu0 0.0
    %1787 = vmatprep.subr.mxu0 0.0
    %1788 = vmatpush1.msra.mxu0 0.0
    %1789 = vmatprep.subr.mxu0 0.0
    %1790 = vmatpush1.msra.mxu0 0.0
    %1791 = vmatprep.subr.mxu0 0.0
    %1792 = vmatpush1.msra.mxu0 0.0
    %1793 = vmatprep.subr.mxu0 0.0
    %1794 = vmatpush1.msra.mxu0 0.0
    %1795 = vmatprep.subr.mxu0 0.0
    %1796 = vmatpush1.msra.mxu0 0.0
    %1797 = vmatprep.subr.mxu0 0.0
    %1798 = vmatpush1.msra.mxu0 0.0
    %1799 = vmatprep.subr.mxu0 0.0
    %1800 = vmatpush1.msra.mxu0 0.0
    %1801 = vmatprep.subr.mxu0 0.0
    %1802 = vmatpush1.msra.mxu0 0.0
    %1803 = vmatprep.subr.mxu0 0.0
    %1804 = vmatpush1.msra.mxu0 0.0
    %1805 = vmatprep.subr.mxu0 0.0
    %1806 = vmatpush1.msra.mxu0 0.0
    %1807 = vmatprep.subr.mxu0 0.0
    %1808 = vmatpush1.msra.mxu0 0.0
    %1809 = vmatprep.subr.mxu0 0.0
    %1810 = vmatpush1.msra.mxu0 0.0
    %1811 = vmatprep.subr.mxu0 0.0
    %1812 = vmatpush1.msra.mxu0 0.0
    %1813 = vmatprep.subr.mxu0 0.0
    %1814 = vmatpush1.msra.mxu0 0.0
    %1815 = vmatprep.subr.mxu0 0.0
    %1816 = vmatpush1.msra.mxu0 0.0
    %1817 = vmatprep.subr.mxu0 0.0
    %1818 = vmatpush1.msra.mxu0 0.0
    %1819 = vmatprep.subr.mxu0 0.0
    %1820 = vmatpush1.msra.mxu0 0.0
    %1821 = vmatprep.subr.mxu0 0.0
    %1822 = vmatpush1.msra.mxu0 0.0
    %1823 = vmatprep.subr.mxu0 0.0
    %1824 = vmatpush1.msra.mxu0 0.0
    %1825 = vmatprep.subr.mxu0 0.0
    %1826 = vmatpush1.msra.mxu0 0.0
    %1827 = vmatprep.subr.mxu0 0.0
    %1828 = vmatpush1.msra.mxu0 0.0
    %1829 = vmatprep.subr.mxu0 0.0
    %1830 = vmatpush1.msra.mxu0 0.0
    %1831 = vmatprep.subr.mxu0 0.0
    %1832 = vmatpush1.msra.mxu0 0.0
    %1833 = vmatprep.subr.mxu0 0.0
    %1834 = vmatpush1.msra.mxu0 0.0
    %1835 = vmatprep.subr.mxu0 0.0
    %1836 = vmatpush1.msra.mxu0 0.0
    %1837 = vmatprep.subr.mxu0 0.0
    %1838 = vmatpush1.msra.mxu0 0.0
    %1839 = vmatprep.subr.mxu0 0.0
    %1840 = vmatpush1.msra.mxu0 0.0
    %1841 = vmatprep.mubr.f32.mxu0 0.0
    %1842 = vmatmul.mubr.f32.gmra.mrb[0].mxu0 %v1562
    %v1843 = vpop.f32.mrb[0].mxu0
    %v1844 = vadd.f32 %v1773, %v1843
    %v1845 = vpop.f32.mrb[0].mxu0
    %v1846 = vadd.f32 %v1775, %v1845
    %1847 = vdwg.mxu0
    %1848 = vmatprep.subr.mxu0 %v220
    %1849 = vmatpush1.msra.mxu0 %v219
    %1850 = vmatprep.subr.mxu0 %v233
    %1851 = vmatpush1.msra.mxu0 %v232
    %1852 = vmatprep.subr.mxu0 %v246
    %1853 = vmatpush1.msra.mxu0 %v245
    %1854 = vmatprep.subr.mxu0 %v259
    %1855 = vmatpush1.msra.mxu0 %v258
    %1856 = vmatprep.subr.mxu0 %v272
    %1857 = vmatpush1.msra.mxu0 %v271
    %1858 = vmatprep.subr.mxu0 %v285
    %1859 = vmatpush1.msra.mxu0 %v284
    %1860 = vmatprep.subr.mxu0 %v298
    %1861 = vmatpush1.msra.mxu0 %v297
    %1862 = vmatprep.subr.mxu0 %v311
    %1863 = vmatpush1.msra.mxu0 %v310
    %1864 = vmatprep.subr.mxu0 %v324
    %1865 = vmatpush1.msra.mxu0 %v323
    %1866 = vmatprep.subr.mxu0 %v337
    %1867 = vmatpush1.msra.mxu0 %v336
    %1868 = vmatprep.subr.mxu0 %v350
    %1869 = vmatpush1.msra.mxu0 %v349
    %1870 = vmatprep.subr.mxu0 %v363
    %1871 = vmatpush1.msra.mxu0 %v362
    %1872 = vmatprep.subr.mxu0 %v376
    %1873 = vmatpush1.msra.mxu0 %v375
    %1874 = vmatprep.subr.mxu0 %v389
    %1875 = vmatpush1.msra.mxu0 %v388
    %1876 = vmatprep.subr.mxu0 %v402
    %1877 = vmatpush1.msra.mxu0 %v401
    %1878 = vmatprep.subr.mxu0 %v415
    %1879 = vmatpush1.msra.mxu0 %v414
    %1880 = vmatprep.subr.mxu0 %v428
    %1881 = vmatpush1.msra.mxu0 %v427
    %1882 = vmatprep.subr.mxu0 %v441
    %1883 = vmatpush1.msra.mxu0 %v440
    %1884 = vmatprep.subr.mxu0 %v454
    %1885 = vmatpush1.msra.mxu0 %v453
    %1886 = vmatprep.subr.mxu0 %v467
    %1887 = vmatpush1.msra.mxu0 %v466
    %1888 = vmatprep.subr.mxu0 %v480
    %1889 = vmatpush1.msra.mxu0 %v479
    %1890 = vmatprep.subr.mxu0 %v493
    %1891 = vmatpush1.msra.mxu0 %v492
    %1892 = vmatprep.subr.mxu0 %v506
    %1893 = vmatpush1.msra.mxu0 %v505
    %1894 = vmatprep.subr.mxu0 %v519
    %1895 = vmatpush1.msra.mxu0 %v518
    %1896 = vmatprep.subr.mxu0 %v532
    %1897 = vmatpush1.msra.mxu0 %v531
    %1898 = vmatprep.subr.mxu0 %v545
    %1899 = vmatpush1.msra.mxu0 %v544
    %1900 = vmatprep.subr.mxu0 %v558
    %1901 = vmatpush1.msra.mxu0 %v557
    %1902 = vmatprep.subr.mxu0 %v571
    %1903 = vmatpush1.msra.mxu0 %v570
    %1904 = vmatprep.subr.mxu0 %v584
    %1905 = vmatpush1.msra.mxu0 %v583
    %1906 = vmatprep.subr.mxu0 %v597
    %1907 = vmatpush1.msra.mxu0 %v596
    %1908 = vmatprep.subr.mxu0 %v610
    %1909 = vmatpush1.msra.mxu0 %v609
    %1910 = vmatprep.subr.mxu0 %v623
    %1911 = vmatpush1.msra.mxu0 %v622
    %1912 = vmatprep.mubr.f32.mxu0 %v210
    %1913 = vmatmul.mubr.f32.gmra.mrb[0].mxu0 %v209
    %v1914 = vpop.f32.mrb[0].mxu0
    %v1915 = vadd.f32 %v1506, %v1914
    %v1916 = vpop.f32.mrb[0].mxu0
    %v1917 = vadd.f32 %v1510, %v1916
    %1918 = vdwg.mxu0
    %1919 = vmatprep.subr.mxu0 %v636
    %1920 = vmatpush1.msra.mxu0 %v635
    %1921 = vmatprep.subr.mxu0 %v649
    %1922 = vmatpush1.msra.mxu0 %v648
    %1923 = vmatprep.subr.mxu0 %v662
    %1924 = vmatpush1.msra.mxu0 %v661
    %1925 = vmatprep.subr.mxu0 %v675
    %1926 = vmatpush1.msra.mxu0 %v674
    %1927 = vmatprep.subr.mxu0 %v688
    %1928 = vmatpush1.msra.mxu0 %v687
    %1929 = vmatprep.subr.mxu0 %v701
    %1930 = vmatpush1.msra.mxu0 %v700
    %1931 = vmatprep.subr.mxu0 %v714
    %1932 = vmatpush1.msra.mxu0 %v713
    %1933 = vmatprep.subr.mxu0 %v727
    %1934 = vmatpush1.msra.mxu0 %v726
    %1935 = vmatprep.subr.mxu0 %v740
    %1936 = vmatpush1.msra.mxu0 %v739
    %1937 = vmatprep.subr.mxu0 %v753
    %1938 = vmatpush1.msra.mxu0 %v752
    %1939 = vmatprep.subr.mxu0 %v766
    %1940 = vmatpush1.msra.mxu0 %v765
    %1941 = vmatprep.subr.mxu0 %v779
    %1942 = vmatpush1.msra.mxu0 %v778
    %1943 = vmatprep.subr.mxu0 %v792
    %1944 = vmatpush1.msra.mxu0 %v791
    %1945 = vmatprep.subr.mxu0 %v805
    %1946 = vmatpush1.msra.mxu0 %v804
    %1947 = vmatprep.subr.mxu0 %v818
    %1948 = vmatpush1.msra.mxu0 %v817
    %1949 = vmatprep.subr.mxu0 %v831
    %1950 = vmatpush1.msra.mxu0 %v830
    %1951 = vmatprep.subr.mxu0 %v844
    %1952 = vmatpush1.msra.mxu0 %v843
    %1953 = vmatprep.subr.mxu0 %v857
    %1954 = vmatpush1.msra.mxu0 %v856
    %1955 = vmatprep.subr.mxu0 %v870
    %1956 = vmatpush1.msra.mxu0 %v869
    %1957 = vmatprep.subr.mxu0 %v883
    %1958 = vmatpush1.msra.mxu0 %v882
    %1959 = vmatprep.subr.mxu0 %v896
    %1960 = vmatpush1.msra.mxu0 %v895
    %1961 = vmatprep.subr.mxu0 %v909
    %1962 = vmatpush1.msra.mxu0 %v908
    %1963 = vmatprep.subr.mxu0 %v922
    %1964 = vmatpush1.msra.mxu0 %v921
    %1965 = vmatprep.subr.mxu0 %v935
    %1966 = vmatpush1.msra.mxu0 %v934
    %1967 = vmatprep.subr.mxu0 %v948
    %1968 = vmatpush1.msra.mxu0 %v947
    %1969 = vmatprep.subr.mxu0 %v961
    %1970 = vmatpush1.msra.mxu0 %v960
    %1971 = vmatprep.subr.mxu0 %v974
    %1972 = vmatpush1.msra.mxu0 %v973
    %1973 = vmatprep.subr.mxu0 %v987
    %1974 = vmatpush1.msra.mxu0 %v986
    %1975 = vmatprep.subr.mxu0 %v1000
    %1976 = vmatpush1.msra.mxu0 %v999
    %1977 = vmatprep.subr.mxu0 %v1013
    %1978 = vmatpush1.msra.mxu0 %v1012
    %1979 = vmatprep.subr.mxu0 %v1026
    %1980 = vmatpush1.msra.mxu0 %v1025
    %1981 = vmatprep.subr.mxu0 %v1039
    %1982 = vmatpush1.msra.mxu0 %v1038
    %1983 = vmatprep.mubr.f32.mxu0 %v212
    %1984 = vmatmul.mubr.f32.gmra.mrb[0].mxu0 %v211
    %v1985 = vpop.f32.mrb[0].mxu0
    %v1986 = vadd.f32 %v1915, %v1985
    %v1987 = vpop.f32.mrb[0].mxu0
    %v1988 = vadd.f32 %v1917, %v1987
    %1989 = vdwg.mxu0
    %1990 = vmatprep.subr.mxu0 %v1052
    %1991 = vmatpush1.msra.mxu0 %v1051
    %1992 = vmatprep.subr.mxu0 %v1065
    %1993 = vmatpush1.msra.mxu0 %v1064
    %1994 = vmatprep.subr.mxu0 %v1078
    %1995 = vmatpush1.msra.mxu0 %v1077
    %1996 = vmatprep.subr.mxu0 %v1091
    %1997 = vmatpush1.msra.mxu0 %v1090
    %1998 = vmatprep.subr.mxu0 %v1104
    %1999 = vmatpush1.msra.mxu0 %v1103
    %2000 = vmatprep.subr.mxu0 %v1117
    %2001 = vmatpush1.msra.mxu0 %v1116
    %2002 = vmatprep.subr.mxu0 %v1130
    %2003 = vmatpush1.msra.mxu0 %v1129
    %2004 = vmatprep.subr.mxu0 %v1143
    %2005 = vmatpush1.msra.mxu0 %v1142
    %2006 = vmatprep.subr.mxu0 %v1156
    %2007 = vmatpush1.msra.mxu0 %v1155
    %2008 = vmatprep.subr.mxu0 %v1169
    %2009 = vmatpush1.msra.mxu0 %v1168
    %2010 = vmatprep.subr.mxu0 %v1182
    %2011 = vmatpush1.msra.mxu0 %v1181
    %2012 = vmatprep.subr.mxu0 %v1195
    %2013 = vmatpush1.msra.mxu0 %v1194
    %2014 = vmatprep.subr.mxu0 %v1208
    %2015 = vmatpush1.msra.mxu0 %v1207
    %2016 = vmatprep.subr.mxu0 %v1221
    %2017 = vmatpush1.msra.mxu0 %v1220
    %2018 = vmatprep.subr.mxu0 %v1234
    %2019 = vmatpush1.msra.mxu0 %v1233
    %2020 = vmatprep.subr.mxu0 %v1247
    %2021 = vmatpush1.msra.mxu0 %v1246
    %2022 = vmatprep.subr.mxu0 %v1260
    %2023 = vmatpush1.msra.mxu0 %v1259
    %2024 = vmatprep.subr.mxu0 %v1273
    %2025 = vmatpush1.msra.mxu0 %v1272
    %2026 = vmatprep.subr.mxu0 %v1286
    %2027 = vmatpush1.msra.mxu0 %v1285
    %2028 = vmatprep.subr.mxu0 %v1299
    %2029 = vmatpush1.msra.mxu0 %v1298
    %2030 = vmatprep.subr.mxu0 %v1312
    %2031 = vmatpush1.msra.mxu0 %v1311
    %2032 = vmatprep.subr.mxu0 %v1325
    %2033 = vmatpush1.msra.mxu0 %v1324
    %2034 = vmatprep.subr.mxu0 %v1338
    %2035 = vmatpush1.msra.mxu0 %v1337
    %2036 = vmatprep.subr.mxu0 %v1351
    %2037 = vmatpush1.msra.mxu0 %v1350
    %2038 = vmatprep.subr.mxu0 %v1364
    %2039 = vmatpush1.msra.mxu0 %v1363
    %2040 = vmatprep.subr.mxu0 %v1377
    %2041 = vmatpush1.msra.mxu0 %v1376
    %2042 = vmatprep.subr.mxu0 %v1390
    %2043 = vmatpush1.msra.mxu0 %v1389
    %2044 = vmatprep.subr.mxu0 %v1403
    %2045 = vmatpush1.msra.mxu0 %v1402
    %2046 = vmatprep.subr.mxu0 %v1416
    %2047 = vmatpush1.msra.mxu0 %v1415
    %2048 = vmatprep.subr.mxu0 %v1429
    %2049 = vmatpush1.msra.mxu0 %v1428
    %2050 = vmatprep.subr.mxu0 %v1442
    %2051 = vmatpush1.msra.mxu0 %v1441
    %2052 = vmatprep.subr.mxu0 %v1455
    %2053 = vmatpush1.msra.mxu0 %v1454
    %2054 = vmatprep.mubr.f32.mxu0 %v214
    %2055 = vmatmul.mubr.f32.gmra.mrb[0].mxu0 %v213
    %v2056 = vpop.f32.mrb[0].mxu0
    %v2057 = vadd.f32 %v1986, %v2056
    %v2058 = vpop.f32.mrb[0].mxu0
    %v2059 = vadd.f32 %v1988, %v2058
    %2060 = vdwg.mxu0
    %2061 = vmatprep.subr.mxu0 %v1468
    %2062 = vmatpush1.msra.mxu0 %v1467
    %2063 = vmatprep.subr.mxu0 %v1481
    %2064 = vmatpush1.msra.mxu0 %v1480
    %2065 = vmatprep.subr.mxu0 0.0
    %2066 = vmatpush1.msra.mxu0 0.0
    %2067 = vmatprep.subr.mxu0 0.0
    %2068 = vmatpush1.msra.mxu0 0.0
    %2069 = vmatprep.subr.mxu0 0.0
    %2070 = vmatpush1.msra.mxu0 0.0
    %2071 = vmatprep.subr.mxu0 0.0
    %2072 = vmatpush1.msra.mxu0 0.0
    %2073 = vmatprep.subr.mxu0 0.0
    %2074 = vmatpush1.msra.mxu0 0.0
    %2075 = vmatprep.subr.mxu0 0.0
    %2076 = vmatpush1.msra.mxu0 0.0
    %2077 = vmatprep.subr.mxu0 0.0
    %2078 = vmatpush1.msra.mxu0 0.0
    %2079 = vmatprep.subr.mxu0 0.0
    %2080 = vmatpush1.msra.mxu0 0.0
    %2081 = vmatprep.subr.mxu0 0.0
    %2082 = vmatpush1.msra.mxu0 0.0
    %2083 = vmatprep.subr.mxu0 0.0
    %2084 = vmatpush1.msra.mxu0 0.0
    %2085 = vmatprep.subr.mxu0 0.0
    %2086 = vmatpush1.msra.mxu0 0.0
    %2087 = vmatprep.subr.mxu0 0.0
    %2088 = vmatpush1.msra.mxu0 0.0
    %2089 = vmatprep.subr.mxu0 0.0
    %2090 = vmatpush1.msra.mxu0 0.0
    %2091 = vmatprep.subr.mxu0 0.0
    %2092 = vmatpush1.msra.mxu0 0.0
    %2093 = vmatprep.subr.mxu0 0.0
    %2094 = vmatpush1.msra.mxu0 0.0
    %2095 = vmatprep.subr.mxu0 0.0
    %2096 = vmatpush1.msra.mxu0 0.0
    %2097 = vmatprep.subr.mxu0 0.0
    %2098 = vmatpush1.msra.mxu0 0.0
    %2099 = vmatprep.subr.mxu0 0.0
    %2100 = vmatpush1.msra.mxu0 0.0
    %2101 = vmatprep.subr.mxu0 0.0
    %2102 = vmatpush1.msra.mxu0 0.0
    %2103 = vmatprep.subr.mxu0 0.0
    %2104 = vmatpush1.msra.mxu0 0.0
    %2105 = vmatprep.subr.mxu0 0.0
    %2106 = vmatpush1.msra.mxu0 0.0
    %2107 = vmatprep.subr.mxu0 0.0
    %2108 = vmatpush1.msra.mxu0 0.0
    %2109 = vmatprep.subr.mxu0 0.0
    %2110 = vmatpush1.msra.mxu0 0.0
    %2111 = vmatprep.subr.mxu0 0.0
    %2112 = vmatpush1.msra.mxu0 0.0
    %2113 = vmatprep.subr.mxu0 0.0
    %2114 = vmatpush1.msra.mxu0 0.0
    %2115 = vmatprep.subr.mxu0 0.0
    %2116 = vmatpush1.msra.mxu0 0.0
    %2117 = vmatprep.subr.mxu0 0.0
    %2118 = vmatpush1.msra.mxu0 0.0
    %2119 = vmatprep.subr.mxu0 0.0
    %2120 = vmatpush1.msra.mxu0 0.0
    %2121 = vmatprep.subr.mxu0 0.0
    %2122 = vmatpush1.msra.mxu0 0.0
    %2123 = vmatprep.subr.mxu0 0.0
    %2124 = vmatpush1.msra.mxu0 0.0
    %2125 = vmatprep.mubr.f32.mxu0 0.0
    %2126 = vmatmul.mubr.f32.gmra.mrb[0].mxu0 %v1562
    %v2127 = vpop.f32.mrb[0].mxu0
    %v2128 = vadd.f32 %v2057, %v2127
    %v2129 = vpop.f32.mrb[0].mxu0
    %v2130 = vadd.f32 %v2059, %v2129
    %2131 = vdwg.mxu0
    %2132 = vmatprep.subr.mxu0 %v222
    %2133 = vmatpush1.msra.mxu0 %v221
    %2134 = vmatprep.subr.mxu0 %v235
    %2135 = vmatpush1.msra.mxu0 %v234
    %2136 = vmatprep.subr.mxu0 %v248
    %2137 = vmatpush1.msra.mxu0 %v247
    %2138 = vmatprep.subr.mxu0 %v261
    %2139 = vmatpush1.msra.mxu0 %v260
    %2140 = vmatprep.subr.mxu0 %v274
    %2141 = vmatpush1.msra.mxu0 %v273
    %2142 = vmatprep.subr.mxu0 %v287
    %2143 = vmatpush1.msra.mxu0 %v286
    %2144 = vmatprep.subr.mxu0 %v300
    %2145 = vmatpush1.msra.mxu0 %v299
    %2146 = vmatprep.subr.mxu0 %v313
    %2147 = vmatpush1.msra.mxu0 %v312
    %2148 = vmatprep.subr.mxu0 %v326
    %2149 = vmatpush1.msra.mxu0 %v325
    %2150 = vmatprep.subr.mxu0 %v339
    %2151 = vmatpush1.msra.mxu0 %v338
    %2152 = vmatprep.subr.mxu0 %v352
    %2153 = vmatpush1.msra.mxu0 %v351
    %2154 = vmatprep.subr.mxu0 %v365
    %2155 = vmatpush1.msra.mxu0 %v364
    %2156 = vmatprep.subr.mxu0 %v378
    %2157 = vmatpush1.msra.mxu0 %v377
    %2158 = vmatprep.subr.mxu0 %v391
    %2159 = vmatpush1.msra.mxu0 %v390
    %2160 = vmatprep.subr.mxu0 %v404
    %2161 = vmatpush1.msra.mxu0 %v403
    %2162 = vmatprep.subr.mxu0 %v417
    %2163 = vmatpush1.msra.mxu0 %v416
    %2164 = vmatprep.subr.mxu0 %v430
    %2165 = vmatpush1.msra.mxu0 %v429
    %2166 = vmatprep.subr.mxu0 %v443
    %2167 = vmatpush1.msra.mxu0 %v442
    %2168 = vmatprep.subr.mxu0 %v456
    %2169 = vmatpush1.msra.mxu0 %v455
    %2170 = vmatprep.subr.mxu0 %v469
    %2171 = vmatpush1.msra.mxu0 %v468
    %2172 = vmatprep.subr.mxu0 %v482
    %2173 = vmatpush1.msra.mxu0 %v481
    %2174 = vmatprep.subr.mxu0 %v495
    %2175 = vmatpush1.msra.mxu0 %v494
    %2176 = vmatprep.subr.mxu0 %v508
    %2177 = vmatpush1.msra.mxu0 %v507
    %2178 = vmatprep.subr.mxu0 %v521
    %2179 = vmatpush1.msra.mxu0 %v520
    %2180 = vmatprep.subr.mxu0 %v534
    %2181 = vmatpush1.msra.mxu0 %v533
    %2182 = vmatprep.subr.mxu0 %v547
    %2183 = vmatpush1.msra.mxu0 %v546
    %2184 = vmatprep.subr.mxu0 %v560
    %2185 = vmatpush1.msra.mxu0 %v559
    %2186 = vmatprep.subr.mxu0 %v573
    %2187 = vmatpush1.msra.mxu0 %v572
    %2188 = vmatprep.subr.mxu0 %v586
    %2189 = vmatpush1.msra.mxu0 %v585
    %2190 = vmatprep.subr.mxu0 %v599
    %2191 = vmatpush1.msra.mxu0 %v598
    %2192 = vmatprep.subr.mxu0 %v612
    %2193 = vmatpush1.msra.mxu0 %v611
    %2194 = vmatprep.subr.mxu0 %v625
    %2195 = vmatpush1.msra.mxu0 %v624
    %2196 = vmatprep.mubr.f32.mxu0 %v210
    %2197 = vmatmul.mubr.f32.gmra.mrb[0].mxu0 %v209
    %v2198 = vpop.f32.mrb[0].mxu0
    %v2199 = vadd.f32 %v1514, %v2198
    %v2200 = vpop.f32.mrb[0].mxu0
    %v2201 = vadd.f32 %v1518, %v2200
    %2202 = vdwg.mxu0
    %2203 = vmatprep.subr.mxu0 %v638
    %2204 = vmatpush1.msra.mxu0 %v637
    %2205 = vmatprep.subr.mxu0 %v651
    %2206 = vmatpush1.msra.mxu0 %v650
    %2207 = vmatprep.subr.mxu0 %v664
    %2208 = vmatpush1.msra.mxu0 %v663
    %2209 = vmatprep.subr.mxu0 %v677
    %2210 = vmatpush1.msra.mxu0 %v676
    %2211 = vmatprep.subr.mxu0 %v690
    %2212 = vmatpush1.msra.mxu0 %v689
    %2213 = vmatprep.subr.mxu0 %v703
    %2214 = vmatpush1.msra.mxu0 %v702
    %2215 = vmatprep.subr.mxu0 %v716
    %2216 = vmatpush1.msra.mxu0 %v715
    %2217 = vmatprep.subr.mxu0 %v729
    %2218 = vmatpush1.msra.mxu0 %v728
    %2219 = vmatprep.subr.mxu0 %v742
    %2220 = vmatpush1.msra.mxu0 %v741
    %2221 = vmatprep.subr.mxu0 %v755
    %2222 = vmatpush1.msra.mxu0 %v754
    %2223 = vmatprep.subr.mxu0 %v768
    %2224 = vmatpush1.msra.mxu0 %v767
    %2225 = vmatprep.subr.mxu0 %v781
    %2226 = vmatpush1.msra.mxu0 %v780
    %2227 = vmatprep.subr.mxu0 %v794
    %2228 = vmatpush1.msra.mxu0 %v793
    %2229 = vmatprep.subr.mxu0 %v807
    %2230 = vmatpush1.msra.mxu0 %v806
    %2231 = vmatprep.subr.mxu0 %v820
    %2232 = vmatpush1.msra.mxu0 %v819
    %2233 = vmatprep.subr.mxu0 %v833
    %2234 = vmatpush1.msra.mxu0 %v832
    %2235 = vmatprep.subr.mxu0 %v846
    %2236 = vmatpush1.msra.mxu0 %v845
    %2237 = vmatprep.subr.mxu0 %v859
    %2238 = vmatpush1.msra.mxu0 %v858
    %2239 = vmatprep.subr.mxu0 %v872
    %2240 = vmatpush1.msra.mxu0 %v871
    %2241 = vmatprep.subr.mxu0 %v885
    %2242 = vmatpush1.msra.mxu0 %v884
    %2243 = vmatprep.subr.mxu0 %v898
    %2244 = vmatpush1.msra.mxu0 %v897
    %2245 = vmatprep.subr.mxu0 %v911
    %2246 = vmatpush1.msra.mxu0 %v910
    %2247 = vmatprep.subr.mxu0 %v924
    %2248 = vmatpush1.msra.mxu0 %v923
    %2249 = vmatprep.subr.mxu0 %v937
    %2250 = vmatpush1.msra.mxu0 %v936
    %2251 = vmatprep.subr.mxu0 %v950
    %2252 = vmatpush1.msra.mxu0 %v949
    %2253 = vmatprep.subr.mxu0 %v963
    %2254 = vmatpush1.msra.mxu0 %v962
    %2255 = vmatprep.subr.mxu0 %v976
    %2256 = vmatpush1.msra.mxu0 %v975
    %2257 = vmatprep.subr.mxu0 %v989
    %2258 = vmatpush1.msra.mxu0 %v988
    %2259 = vmatprep.subr.mxu0 %v1002
    %2260 = vmatpush1.msra.mxu0 %v1001
    %2261 = vmatprep.subr.mxu0 %v1015
    %2262 = vmatpush1.msra.mxu0 %v1014
    %2263 = vmatprep.subr.mxu0 %v1028
    %2264 = vmatpush1.msra.mxu0 %v1027
    %2265 = vmatprep.subr.mxu0 %v1041
    %2266 = vmatpush1.msra.mxu0 %v1040
    %2267 = vmatprep.mubr.f32.mxu0 %v212
    %2268 = vmatmul.mubr.f32.gmra.mrb[0].mxu0 %v211
    %v2269 = vpop.f32.mrb[0].mxu0
    %v2270 = vadd.f32 %v2199, %v2269
    %v2271 = vpop.f32.mrb[0].mxu0
    %v2272 = vadd.f32 %v2201, %v2271
    %2273 = vdwg.mxu0
    %2274 = vmatprep.subr.mxu0 %v1054
    %2275 = vmatpush1.msra.mxu0 %v1053
    %2276 = vmatprep.subr.mxu0 %v1067
    %2277 = vmatpush1.msra.mxu0 %v1066
    %2278 = vmatprep.subr.mxu0 %v1080
    %2279 = vmatpush1.msra.mxu0 %v1079
    %2280 = vmatprep.subr.mxu0 %v1093
    %2281 = vmatpush1.msra.mxu0 %v1092
    %2282 = vmatprep.subr.mxu0 %v1106
    %2283 = vmatpush1.msra.mxu0 %v1105
    %2284 = vmatprep.subr.mxu0 %v1119
    %2285 = vmatpush1.msra.mxu0 %v1118
    %2286 = vmatprep.subr.mxu0 %v1132
    %2287 = vmatpush1.msra.mxu0 %v1131
    %2288 = vmatprep.subr.mxu0 %v1145
    %2289 = vmatpush1.msra.mxu0 %v1144
    %2290 = vmatprep.subr.mxu0 %v1158
    %2291 = vmatpush1.msra.mxu0 %v1157
    %2292 = vmatprep.subr.mxu0 %v1171
    %2293 = vmatpush1.msra.mxu0 %v1170
    %2294 = vmatprep.subr.mxu0 %v1184
    %2295 = vmatpush1.msra.mxu0 %v1183
    %2296 = vmatprep.subr.mxu0 %v1197
    %2297 = vmatpush1.msra.mxu0 %v1196
    %2298 = vmatprep.subr.mxu0 %v1210
    %2299 = vmatpush1.msra.mxu0 %v1209
    %2300 = vmatprep.subr.mxu0 %v1223
    %2301 = vmatpush1.msra.mxu0 %v1222
    %2302 = vmatprep.subr.mxu0 %v1236
    %2303 = vmatpush1.msra.mxu0 %v1235
    %2304 = vmatprep.subr.mxu0 %v1249
    %2305 = vmatpush1.msra.mxu0 %v1248
    %2306 = vmatprep.subr.mxu0 %v1262
    %2307 = vmatpush1.msra.mxu0 %v1261
    %2308 = vmatprep.subr.mxu0 %v1275
    %2309 = vmatpush1.msra.mxu0 %v1274
    %2310 = vmatprep.subr.mxu0 %v1288
    %2311 = vmatpush1.msra.mxu0 %v1287
    %2312 = vmatprep.subr.mxu0 %v1301
    %2313 = vmatpush1.msra.mxu0 %v1300
    %2314 = vmatprep.subr.mxu0 %v1314
    %2315 = vmatpush1.msra.mxu0 %v1313
    %2316 = vmatprep.subr.mxu0 %v1327
    %2317 = vmatpush1.msra.mxu0 %v1326
    %2318 = vmatprep.subr.mxu0 %v1340
    %2319 = vmatpush1.msra.mxu0 %v1339
    %2320 = vmatprep.subr.mxu0 %v1353
    %2321 = vmatpush1.msra.mxu0 %v1352
    %2322 = vmatprep.subr.mxu0 %v1366
    %2323 = vmatpush1.msra.mxu0 %v1365
    %2324 = vmatprep.subr.mxu0 %v1379
    %2325 = vmatpush1.msra.mxu0 %v1378
    %2326 = vmatprep.subr.mxu0 %v1392
    %2327 = vmatpush1.msra.mxu0 %v1391
    %2328 = vmatprep.subr.mxu0 %v1405
    %2329 = vmatpush1.msra.mxu0 %v1404
    %2330 = vmatprep.subr.mxu0 %v1418
    %2331 = vmatpush1.msra.mxu0 %v1417
    %2332 = vmatprep.subr.mxu0 %v1431
    %2333 = vmatpush1.msra.mxu0 %v1430
    %2334 = vmatprep.subr.mxu0 %v1444
    %2335 = vmatpush1.msra.mxu0 %v1443
    %2336 = vmatprep.subr.mxu0 %v1457
    %2337 = vmatpush1.msra.mxu0 %v1456
    %2338 = vmatprep.mubr.f32.mxu0 %v214
    %2339 = vmatmul.mubr.f32.gmra.mrb[0].mxu0 %v213
    %v2340 = vpop.f32.mrb[0].mxu0
    %v2341 = vadd.f32 %v2270, %v2340
    %v2342 = vpop.f32.mrb[0].mxu0
    %v2343 = vadd.f32 %v2272, %v2342
    %2344 = vdwg.mxu0
    %2345 = vmatprep.subr.mxu0 %v1470
    %2346 = vmatpush1.msra.mxu0 %v1469
    %2347 = vmatprep.subr.mxu0 %v1483
    %2348 = vmatpush1.msra.mxu0 %v1482
    %2349 = vmatprep.subr.mxu0 0.0
    %2350 = vmatpush1.msra.mxu0 0.0
    %2351 = vmatprep.subr.mxu0 0.0
    %2352 = vmatpush1.msra.mxu0 0.0
    %2353 = vmatprep.subr.mxu0 0.0
    %2354 = vmatpush1.msra.mxu0 0.0
    %2355 = vmatprep.subr.mxu0 0.0
    %2356 = vmatpush1.msra.mxu0 0.0
    %2357 = vmatprep.subr.mxu0 0.0
    %2358 = vmatpush1.msra.mxu0 0.0
    %2359 = vmatprep.subr.mxu0 0.0
    %2360 = vmatpush1.msra.mxu0 0.0
    %2361 = vmatprep.subr.mxu0 0.0
    %2362 = vmatpush1.msra.mxu0 0.0
    %2363 = vmatprep.subr.mxu0 0.0
    %2364 = vmatpush1.msra.mxu0 0.0
    %2365 = vmatprep.subr.mxu0 0.0
    %2366 = vmatpush1.msra.mxu0 0.0
    %2367 = vmatprep.subr.mxu0 0.0
    %2368 = vmatpush1.msra.mxu0 0.0
    %2369 = vmatprep.subr.mxu0 0.0
    %2370 = vmatpush1.msra.mxu0 0.0
    %2371 = vmatprep.subr.mxu0 0.0
    %2372 = vmatpush1.msra.mxu0 0.0
    %2373 = vmatprep.subr.mxu0 0.0
    %2374 = vmatpush1.msra.mxu0 0.0
    %2375 = vmatprep.subr.mxu0 0.0
    %2376 = vmatpush1.msra.mxu0 0.0
    %2377 = vmatprep.subr.mxu0 0.0
    %2378 = vmatpush1.msra.mxu0 0.0
    %2379 = vmatprep.subr.mxu0 0.0
    %2380 = vmatpush1.msra.mxu0 0.0
    %2381 = vmatprep.subr.mxu0 0.0
    %2382 = vmatpush1.msra.mxu0 0.0
    %2383 = vmatprep.subr.mxu0 0.0
    %2384 = vmatpush1.msra.mxu0 0.0
    %2385 = vmatprep.subr.mxu0 0.0
    %2386 = vmatpush1.msra.mxu0 0.0
    %2387 = vmatprep.subr.mxu0 0.0
    %2388 = vmatpush1.msra.mxu0 0.0
    %2389 = vmatprep.subr.mxu0 0.0
    %2390 = vmatpush1.msra.mxu0 0.0
    %2391 = vmatprep.subr.mxu0 0.0
    %2392 = vmatpush1.msra.mxu0 0.0
    %2393 = vmatprep.subr.mxu0 0.0
    %2394 = vmatpush1.msra.mxu0 0.0
    %2395 = vmatprep.subr.mxu0 0.0
    %2396 = vmatpush1.msra.mxu0 0.0
    %2397 = vmatprep.subr.mxu0 0.0
    %2398 = vmatpush1.msra.mxu0 0.0
    %2399 = vmatprep.subr.mxu0 0.0
    %2400 = vmatpush1.msra.mxu0 0.0
    %2401 = vmatprep.subr.mxu0 0.0
    %2402 = vmatpush1.msra.mxu0 0.0
    %2403 = vmatprep.subr.mxu0 0.0
    %2404 = vmatpush1.msra.mxu0 0.0
    %2405 = vmatprep.subr.mxu0 0.0
    %2406 = vmatpush1.msra.mxu0 0.0
    %2407 = vmatprep.subr.mxu0 0.0
    %2408 = vmatpush1.msra.mxu0 0.0
    %2409 = vmatprep.mubr.f32.mxu0 0.0
    %2410 = vmatmul.mubr.f32.gmra.mrb[0].mxu0 %v1562
    %v2411 = vpop.f32.mrb[0].mxu0
    %v2412 = vadd.f32 %v2341, %v2411
    %v2413 = vpop.f32.mrb[0].mxu0
    %v2414 = vadd.f32 %v2343, %v2413
    %2415 = vdwg.mxu0
    %2416 = vmatprep.subr.mxu0 %v224
    %2417 = vmatpush1.msra.mxu0 %v223
    %2418 = vmatprep.subr.mxu0 %v237
    %2419 = vmatpush1.msra.mxu0 %v236
    %2420 = vmatprep.subr.mxu0 %v250
    %2421 = vmatpush1.msra.mxu0 %v249
    %2422 = vmatprep.subr.mxu0 %v263
    %2423 = vmatpush1.msra.mxu0 %v262
    %2424 = vmatprep.subr.mxu0 %v276
    %2425 = vmatpush1.msra.mxu0 %v275
    %2426 = vmatprep.subr.mxu0 %v289
    %2427 = vmatpush1.msra.mxu0 %v288
    %2428 = vmatprep.subr.mxu0 %v302
    %2429 = vmatpush1.msra.mxu0 %v301
    %2430 = vmatprep.subr.mxu0 %v315
    %2431 = vmatpush1.msra.mxu0 %v314
    %2432 = vmatprep.subr.mxu0 %v328
    %2433 = vmatpush1.msra.mxu0 %v327
    %2434 = vmatprep.subr.mxu0 %v341
    %2435 = vmatpush1.msra.mxu0 %v340
    %2436 = vmatprep.subr.mxu0 %v354
    %2437 = vmatpush1.msra.mxu0 %v353
    %2438 = vmatprep.subr.mxu0 %v367
    %2439 = vmatpush1.msra.mxu0 %v366
    %2440 = vmatprep.subr.mxu0 %v380
    %2441 = vmatpush1.msra.mxu0 %v379
    %2442 = vmatprep.subr.mxu0 %v393
    %2443 = vmatpush1.msra.mxu0 %v392
    %2444 = vmatprep.subr.mxu0 %v406
    %2445 = vmatpush1.msra.mxu0 %v405
    %2446 = vmatprep.subr.mxu0 %v419
    %2447 = vmatpush1.msra.mxu0 %v418
    %2448 = vmatprep.subr.mxu0 %v432
    %2449 = vmatpush1.msra.mxu0 %v431
    %2450 = vmatprep.subr.mxu0 %v445
    %2451 = vmatpush1.msra.mxu0 %v444
    %2452 = vmatprep.subr.mxu0 %v458
    %2453 = vmatpush1.msra.mxu0 %v457
    %2454 = vmatprep.subr.mxu0 %v471
    %2455 = vmatpush1.msra.mxu0 %v470
    %2456 = vmatprep.subr.mxu0 %v484
    %2457 = vmatpush1.msra.mxu0 %v483
    %2458 = vmatprep.subr.mxu0 %v497
    %2459 = vmatpush1.msra.mxu0 %v496
    %2460 = vmatprep.subr.mxu0 %v510
    %2461 = vmatpush1.msra.mxu0 %v509
    %2462 = vmatprep.subr.mxu0 %v523
    %2463 = vmatpush1.msra.mxu0 %v522
    %2464 = vmatprep.subr.mxu0 %v536
    %2465 = vmatpush1.msra.mxu0 %v535
    %2466 = vmatprep.subr.mxu0 %v549
    %2467 = vmatpush1.msra.mxu0 %v548
    %2468 = vmatprep.subr.mxu0 %v562
    %2469 = vmatpush1.msra.mxu0 %v561
    %2470 = vmatprep.subr.mxu0 %v575
    %2471 = vmatpush1.msra.mxu0 %v574
    %2472 = vmatprep.subr.mxu0 %v588
    %2473 = vmatpush1.msra.mxu0 %v587
    %2474 = vmatprep.subr.mxu0 %v601
    %2475 = vmatpush1.msra.mxu0 %v600
    %2476 = vmatprep.subr.mxu0 %v614
    %2477 = vmatpush1.msra.mxu0 %v613
    %2478 = vmatprep.subr.mxu0 %v627
    %2479 = vmatpush1.msra.mxu0 %v626
    %2480 = vmatprep.mubr.f32.mxu0 %v210
    %2481 = vmatmul.mubr.f32.gmra.mrb[0].mxu0 %v209
    %v2482 = vpop.f32.mrb[0].mxu0
    %v2483 = vadd.f32 %v1522, %v2482
    %v2484 = vpop.f32.mrb[0].mxu0
    %v2485 = vadd.f32 %v1526, %v2484
    %2486 = vdwg.mxu0
    %2487 = vmatprep.subr.mxu0 %v640
    %2488 = vmatpush1.msra.mxu0 %v639
    %2489 = vmatprep.subr.mxu0 %v653
    %2490 = vmatpush1.msra.mxu0 %v652
    %2491 = vmatprep.subr.mxu0 %v666
    %2492 = vmatpush1.msra.mxu0 %v665
    %2493 = vmatprep.subr.mxu0 %v679
    %2494 = vmatpush1.msra.mxu0 %v678
    %2495 = vmatprep.subr.mxu0 %v692
    %2496 = vmatpush1.msra.mxu0 %v691
    %2497 = vmatprep.subr.mxu0 %v705
    %2498 = vmatpush1.msra.mxu0 %v704
    %2499 = vmatprep.subr.mxu0 %v718
    %2500 = vmatpush1.msra.mxu0 %v717
    %2501 = vmatprep.subr.mxu0 %v731
    %2502 = vmatpush1.msra.mxu0 %v730
    %2503 = vmatprep.subr.mxu0 %v744
    %2504 = vmatpush1.msra.mxu0 %v743
    %2505 = vmatprep.subr.mxu0 %v757
    %2506 = vmatpush1.msra.mxu0 %v756
    %2507 = vmatprep.subr.mxu0 %v770
    %2508 = vmatpush1.msra.mxu0 %v769
    %2509 = vmatprep.subr.mxu0 %v783
    %2510 = vmatpush1.msra.mxu0 %v782
    %2511 = vmatprep.subr.mxu0 %v796
    %2512 = vmatpush1.msra.mxu0 %v795
    %2513 = vmatprep.subr.mxu0 %v809
    %2514 = vmatpush1.msra.mxu0 %v808
    %2515 = vmatprep.subr.mxu0 %v822
    %2516 = vmatpush1.msra.mxu0 %v821
    %2517 = vmatprep.subr.mxu0 %v835
    %2518 = vmatpush1.msra.mxu0 %v834
    %2519 = vmatprep.subr.mxu0 %v848
    %2520 = vmatpush1.msra.mxu0 %v847
    %2521 = vmatprep.subr.mxu0 %v861
    %2522 = vmatpush1.msra.mxu0 %v860
    %2523 = vmatprep.subr.mxu0 %v874
    %2524 = vmatpush1.msra.mxu0 %v873
    %2525 = vmatprep.subr.mxu0 %v887
    %2526 = vmatpush1.msra.mxu0 %v886
    %2527 = vmatprep.subr.mxu0 %v900
    %2528 = vmatpush1.msra.mxu0 %v899
    %2529 = vmatprep.subr.mxu0 %v913
    %2530 = vmatpush1.msra.mxu0 %v912
    %2531 = vmatprep.subr.mxu0 %v926
    %2532 = vmatpush1.msra.mxu0 %v925
    %2533 = vmatprep.subr.mxu0 %v939
    %2534 = vmatpush1.msra.mxu0 %v938
    %2535 = vmatprep.subr.mxu0 %v952
    %2536 = vmatpush1.msra.mxu0 %v951
    %2537 = vmatprep.subr.mxu0 %v965
    %2538 = vmatpush1.msra.mxu0 %v964
    %2539 = vmatprep.subr.mxu0 %v978
    %2540 = vmatpush1.msra.mxu0 %v977
    %2541 = vmatprep.subr.mxu0 %v991
    %2542 = vmatpush1.msra.mxu0 %v990
    %2543 = vmatprep.subr.mxu0 %v1004
    %2544 = vmatpush1.msra.mxu0 %v1003
    %2545 = vmatprep.subr.mxu0 %v1017
    %2546 = vmatpush1.msra.mxu0 %v1016
    %2547 = vmatprep.subr.mxu0 %v1030
    %2548 = vmatpush1.msra.mxu0 %v1029
    %2549 = vmatprep.subr.mxu0 %v1043
    %2550 = vmatpush1.msra.mxu0 %v1042
    %2551 = vmatprep.mubr.f32.mxu0 %v212
    %2552 = vmatmul.mubr.f32.gmra.mrb[0].mxu0 %v211
    %v2553 = vpop.f32.mrb[0].mxu0
    %v2554 = vadd.f32 %v2483, %v2553
    %v2555 = vpop.f32.mrb[0].mxu0
    %v2556 = vadd.f32 %v2485, %v2555
    %2557 = vdwg.mxu0
    %2558 = vmatprep.subr.mxu0 %v1056
    %2559 = vmatpush1.msra.mxu0 %v1055
    %2560 = vmatprep.subr.mxu0 %v1069
    %2561 = vmatpush1.msra.mxu0 %v1068
    %2562 = vmatprep.subr.mxu0 %v1082
    %2563 = vmatpush1.msra.mxu0 %v1081
    %2564 = vmatprep.subr.mxu0 %v1095
    %2565 = vmatpush1.msra.mxu0 %v1094
    %2566 = vmatprep.subr.mxu0 %v1108
    %2567 = vmatpush1.msra.mxu0 %v1107
    %2568 = vmatprep.subr.mxu0 %v1121
    %2569 = vmatpush1.msra.mxu0 %v1120
    %2570 = vmatprep.subr.mxu0 %v1134
    %2571 = vmatpush1.msra.mxu0 %v1133
    %2572 = vmatprep.subr.mxu0 %v1147
    %2573 = vmatpush1.msra.mxu0 %v1146
    %2574 = vmatprep.subr.mxu0 %v1160
    %2575 = vmatpush1.msra.mxu0 %v1159
    %2576 = vmatprep.subr.mxu0 %v1173
    %2577 = vmatpush1.msra.mxu0 %v1172
    %2578 = vmatprep.subr.mxu0 %v1186
    %2579 = vmatpush1.msra.mxu0 %v1185
    %2580 = vmatprep.subr.mxu0 %v1199
    %2581 = vmatpush1.msra.mxu0 %v1198
    %2582 = vmatprep.subr.mxu0 %v1212
    %2583 = vmatpush1.msra.mxu0 %v1211
    %2584 = vmatprep.subr.mxu0 %v1225
    %2585 = vmatpush1.msra.mxu0 %v1224
    %2586 = vmatprep.subr.mxu0 %v1238
    %2587 = vmatpush1.msra.mxu0 %v1237
    %2588 = vmatprep.subr.mxu0 %v1251
    %2589 = vmatpush1.msra.mxu0 %v1250
    %2590 = vmatprep.subr.mxu0 %v1264
    %2591 = vmatpush1.msra.mxu0 %v1263
    %2592 = vmatprep.subr.mxu0 %v1277
    %2593 = vmatpush1.msra.mxu0 %v1276
    %2594 = vmatprep.subr.mxu0 %v1290
    %2595 = vmatpush1.msra.mxu0 %v1289
    %2596 = vmatprep.subr.mxu0 %v1303
    %2597 = vmatpush1.msra.mxu0 %v1302
    %2598 = vmatprep.subr.mxu0 %v1316
    %2599 = vmatpush1.msra.mxu0 %v1315
    %2600 = vmatprep.subr.mxu0 %v1329
    %2601 = vmatpush1.msra.mxu0 %v1328
    %2602 = vmatprep.subr.mxu0 %v1342
    %2603 = vmatpush1.msra.mxu0 %v1341
    %2604 = vmatprep.subr.mxu0 %v1355
    %2605 = vmatpush1.msra.mxu0 %v1354
    %2606 = vmatprep.subr.mxu0 %v1368
    %2607 = vmatpush1.msra.mxu0 %v1367
    %2608 = vmatprep.subr.mxu0 %v1381
    %2609 = vmatpush1.msra.mxu0 %v1380
    %2610 = vmatprep.subr.mxu0 %v1394
    %2611 = vmatpush1.msra.mxu0 %v1393
    %2612 = vmatprep.subr.mxu0 %v1407
    %2613 = vmatpush1.msra.mxu0 %v1406
    %2614 = vmatprep.subr.mxu0 %v1420
    %2615 = vmatpush1.msra.mxu0 %v1419
    %2616 = vmatprep.subr.mxu0 %v1433
    %2617 = vmatpush1.msra.mxu0 %v1432
    %2618 = vmatprep.subr.mxu0 %v1446
    %2619 = vmatpush1.msra.mxu0 %v1445
    %2620 = vmatprep.subr.mxu0 %v1459
    %2621 = vmatpush1.msra.mxu0 %v1458
    %2622 = vmatprep.mubr.f32.mxu0 %v214
    %2623 = vmatmul.mubr.f32.gmra.mrb[0].mxu0 %v213
    %v2624 = vpop.f32.mrb[0].mxu0
    %v2625 = vadd.f32 %v2554, %v2624
    %v2626 = vpop.f32.mrb[0].mxu0
    %v2627 = vadd.f32 %v2556, %v2626
    %2628 = vdwg.mxu0
    %2629 = vmatprep.subr.mxu0 %v1472
    %2630 = vmatpush1.msra.mxu0 %v1471
    %2631 = vmatprep.subr.mxu0 %v1485
    %2632 = vmatpush1.msra.mxu0 %v1484
    %2633 = vmatprep.subr.mxu0 0.0
    %2634 = vmatpush1.msra.mxu0 0.0
    %2635 = vmatprep.subr.mxu0 0.0
    %2636 = vmatpush1.msra.mxu0 0.0
    %2637 = vmatprep.subr.mxu0 0.0
    %2638 = vmatpush1.msra.mxu0 0.0
    %2639 = vmatprep.subr.mxu0 0.0
    %2640 = vmatpush1.msra.mxu0 0.0
    %2641 = vmatprep.subr.mxu0 0.0
    %2642 = vmatpush1.msra.mxu0 0.0
    %2643 = vmatprep.subr.mxu0 0.0
    %2644 = vmatpush1.msra.mxu0 0.0
    %2645 = vmatprep.subr.mxu0 0.0
    %2646 = vmatpush1.msra.mxu0 0.0
    %2647 = vmatprep.subr.mxu0 0.0
    %2648 = vmatpush1.msra.mxu0 0.0
    %2649 = vmatprep.subr.mxu0 0.0
    %2650 = vmatpush1.msra.mxu0 0.0
    %2651 = vmatprep.subr.mxu0 0.0
    %2652 = vmatpush1.msra.mxu0 0.0
    %2653 = vmatprep.subr.mxu0 0.0
    %2654 = vmatpush1.msra.mxu0 0.0
    %2655 = vmatprep.subr.mxu0 0.0
    %2656 = vmatpush1.msra.mxu0 0.0
    %2657 = vmatprep.subr.mxu0 0.0
    %2658 = vmatpush1.msra.mxu0 0.0
    %2659 = vmatprep.subr.mxu0 0.0
    %2660 = vmatpush1.msra.mxu0 0.0
    %2661 = vmatprep.subr.mxu0 0.0
    %2662 = vmatpush1.msra.mxu0 0.0
    %2663 = vmatprep.subr.mxu0 0.0
    %2664 = vmatpush1.msra.mxu0 0.0
    %2665 = vmatprep.subr.mxu0 0.0
    %2666 = vmatpush1.msra.mxu0 0.0
    %2667 = vmatprep.subr.mxu0 0.0
    %2668 = vmatpush1.msra.mxu0 0.0
    %2669 = vmatprep.subr.mxu0 0.0
    %2670 = vmatpush1.msra.mxu0 0.0
    %2671 = vmatprep.subr.mxu0 0.0
    %2672 = vmatpush1.msra.mxu0 0.0
    %2673 = vmatprep.subr.mxu0 0.0
    %2674 = vmatpush1.msra.mxu0 0.0
    %2675 = vmatprep.subr.mxu0 0.0
    %2676 = vmatpush1.msra.mxu0 0.0
    %2677 = vmatprep.subr.mxu0 0.0
    %2678 = vmatpush1.msra.mxu0 0.0
    %2679 = vmatprep.subr.mxu0 0.0
    %2680 = vmatpush1.msra.mxu0 0.0
    %2681 = vmatprep.subr.mxu0 0.0
    %2682 = vmatpush1.msra.mxu0 0.0
    %2683 = vmatprep.subr.mxu0 0.0
    %2684 = vmatpush1.msra.mxu0 0.0
    %2685 = vmatprep.subr.mxu0 0.0
    %2686 = vmatpush1.msra.mxu0 0.0
    %2687 = vmatprep.subr.mxu0 0.0
    %2688 = vmatpush1.msra.mxu0 0.0
    %2689 = vmatprep.subr.mxu0 0.0
    %2690 = vmatpush1.msra.mxu0 0.0
    %2691 = vmatprep.subr.mxu0 0.0
    %2692 = vmatpush1.msra.mxu0 0.0
    %2693 = vmatprep.mubr.f32.mxu0 0.0
    %2694 = vmatmul.mubr.f32.gmra.mrb[0].mxu0 %v1562
    %v2695 = vpop.f32.mrb[0].mxu0
    %v2696 = vadd.f32 %v2625, %v2695
    %v2697 = vpop.f32.mrb[0].mxu0
    %v2698 = vadd.f32 %v2627, %v2697
    %2699 = vdwg.mxu0
    %2700 = vmatprep.subr.mxu0 %v226
    %2701 = vmatpush1.msra.mxu0 %v225
    %2702 = vmatprep.subr.mxu0 %v239
    %2703 = vmatpush1.msra.mxu0 %v238
    %2704 = vmatprep.subr.mxu0 %v252
    %2705 = vmatpush1.msra.mxu0 %v251
    %2706 = vmatprep.subr.mxu0 %v265
    %2707 = vmatpush1.msra.mxu0 %v264
    %2708 = vmatprep.subr.mxu0 %v278
    %2709 = vmatpush1.msra.mxu0 %v277
    %2710 = vmatprep.subr.mxu0 %v291
    %2711 = vmatpush1.msra.mxu0 %v290
    %2712 = vmatprep.subr.mxu0 %v304
    %2713 = vmatpush1.msra.mxu0 %v303
    %2714 = vmatprep.subr.mxu0 %v317
    %2715 = vmatpush1.msra.mxu0 %v316
    %2716 = vmatprep.subr.mxu0 %v330
    %2717 = vmatpush1.msra.mxu0 %v329
    %2718 = vmatprep.subr.mxu0 %v343
    %2719 = vmatpush1.msra.mxu0 %v342
    %2720 = vmatprep.subr.mxu0 %v356
    %2721 = vmatpush1.msra.mxu0 %v355
    %2722 = vmatprep.subr.mxu0 %v369
    %2723 = vmatpush1.msra.mxu0 %v368
    %2724 = vmatprep.subr.mxu0 %v382
    %2725 = vmatpush1.msra.mxu0 %v381
    %2726 = vmatprep.subr.mxu0 %v395
    %2727 = vmatpush1.msra.mxu0 %v394
    %2728 = vmatprep.subr.mxu0 %v408
    %2729 = vmatpush1.msra.mxu0 %v407
    %2730 = vmatprep.subr.mxu0 %v421
    %2731 = vmatpush1.msra.mxu0 %v420
    %2732 = vmatprep.subr.mxu0 %v434
    %2733 = vmatpush1.msra.mxu0 %v433
    %2734 = vmatprep.subr.mxu0 %v447
    %2735 = vmatpush1.msra.mxu0 %v446
    %2736 = vmatprep.subr.mxu0 %v460
    %2737 = vmatpush1.msra.mxu0 %v459
    %2738 = vmatprep.subr.mxu0 %v473
    %2739 = vmatpush1.msra.mxu0 %v472
    %2740 = vmatprep.subr.mxu0 %v486
    %2741 = vmatpush1.msra.mxu0 %v485
    %2742 = vmatprep.subr.mxu0 %v499
    %2743 = vmatpush1.msra.mxu0 %v498
    %2744 = vmatprep.subr.mxu0 %v512
    %2745 = vmatpush1.msra.mxu0 %v511
    %2746 = vmatprep.subr.mxu0 %v525
    %2747 = vmatpush1.msra.mxu0 %v524
    %2748 = vmatprep.subr.mxu0 %v538
    %2749 = vmatpush1.msra.mxu0 %v537
    %2750 = vmatprep.subr.mxu0 %v551
    %2751 = vmatpush1.msra.mxu0 %v550
    %2752 = vmatprep.subr.mxu0 %v564
    %2753 = vmatpush1.msra.mxu0 %v563
    %2754 = vmatprep.subr.mxu0 %v577
    %2755 = vmatpush1.msra.mxu0 %v576
    %2756 = vmatprep.subr.mxu0 %v590
    %2757 = vmatpush1.msra.mxu0 %v589
    %2758 = vmatprep.subr.mxu0 %v603
    %2759 = vmatpush1.msra.mxu0 %v602
    %2760 = vmatprep.subr.mxu0 %v616
    %2761 = vmatpush1.msra.mxu0 %v615
    %2762 = vmatprep.subr.mxu0 %v629
    %2763 = vmatpush1.msra.mxu0 %v628
    %2764 = vmatprep.mubr.f32.mxu0 %v210
    %2765 = vmatmul.mubr.f32.gmra.mrb[0].mxu0 %v209
    %v2766 = vpop.f32.mrb[0].mxu0
    %v2767 = vadd.f32 %v1530, %v2766
    %v2768 = vpop.f32.mrb[0].mxu0
    %v2769 = vadd.f32 %v1534, %v2768
    %2770 = vdwg.mxu0
    %2771 = vmatprep.subr.mxu0 %v642
    %2772 = vmatpush1.msra.mxu0 %v641
    %2773 = vmatprep.subr.mxu0 %v655
    %2774 = vmatpush1.msra.mxu0 %v654
    %2775 = vmatprep.subr.mxu0 %v668
    %2776 = vmatpush1.msra.mxu0 %v667
    %2777 = vmatprep.subr.mxu0 %v681
    %2778 = vmatpush1.msra.mxu0 %v680
    %2779 = vmatprep.subr.mxu0 %v694
    %2780 = vmatpush1.msra.mxu0 %v693
    %2781 = vmatprep.subr.mxu0 %v707
    %2782 = vmatpush1.msra.mxu0 %v706
    %2783 = vmatprep.subr.mxu0 %v720
    %2784 = vmatpush1.msra.mxu0 %v719
    %2785 = vmatprep.subr.mxu0 %v733
    %2786 = vmatpush1.msra.mxu0 %v732
    %2787 = vmatprep.subr.mxu0 %v746
    %2788 = vmatpush1.msra.mxu0 %v745
    %2789 = vmatprep.subr.mxu0 %v759
    %2790 = vmatpush1.msra.mxu0 %v758
    %2791 = vmatprep.subr.mxu0 %v772
    %2792 = vmatpush1.msra.mxu0 %v771
    %2793 = vmatprep.subr.mxu0 %v785
    %2794 = vmatpush1.msra.mxu0 %v784
    %2795 = vmatprep.subr.mxu0 %v798
    %2796 = vmatpush1.msra.mxu0 %v797
    %2797 = vmatprep.subr.mxu0 %v811
    %2798 = vmatpush1.msra.mxu0 %v810
    %2799 = vmatprep.subr.mxu0 %v824
    %2800 = vmatpush1.msra.mxu0 %v823
    %2801 = vmatprep.subr.mxu0 %v837
    %2802 = vmatpush1.msra.mxu0 %v836
    %2803 = vmatprep.subr.mxu0 %v850
    %2804 = vmatpush1.msra.mxu0 %v849
    %2805 = vmatprep.subr.mxu0 %v863
    %2806 = vmatpush1.msra.mxu0 %v862
    %2807 = vmatprep.subr.mxu0 %v876
    %2808 = vmatpush1.msra.mxu0 %v875
    %2809 = vmatprep.subr.mxu0 %v889
    %2810 = vmatpush1.msra.mxu0 %v888
    %2811 = vmatprep.subr.mxu0 %v902
    %2812 = vmatpush1.msra.mxu0 %v901
    %2813 = vmatprep.subr.mxu0 %v915
    %2814 = vmatpush1.msra.mxu0 %v914
    %2815 = vmatprep.subr.mxu0 %v928
    %2816 = vmatpush1.msra.mxu0 %v927
    %2817 = vmatprep.subr.mxu0 %v941
    %2818 = vmatpush1.msra.mxu0 %v940
    %2819 = vmatprep.subr.mxu0 %v954
    %2820 = vmatpush1.msra.mxu0 %v953
    %2821 = vmatprep.subr.mxu0 %v967
    %2822 = vmatpush1.msra.mxu0 %v966
    %2823 = vmatprep.subr.mxu0 %v980
    %2824 = vmatpush1.msra.mxu0 %v979
    %2825 = vmatprep.subr.mxu0 %v993
    %2826 = vmatpush1.msra.mxu0 %v992
    %2827 = vmatprep.subr.mxu0 %v1006
    %2828 = vmatpush1.msra.mxu0 %v1005
    %2829 = vmatprep.subr.mxu0 %v1019
    %2830 = vmatpush1.msra.mxu0 %v1018
    %2831 = vmatprep.subr.mxu0 %v1032
    %2832 = vmatpush1.msra.mxu0 %v1031
    %2833 = vmatprep.subr.mxu0 %v1045
    %2834 = vmatpush1.msra.mxu0 %v1044
    %2835 = vmatprep.mubr.f32.mxu0 %v212
    %2836 = vmatmul.mubr.f32.gmra.mrb[0].mxu0 %v211
    %v2837 = vpop.f32.mrb[0].mxu0
    %v2838 = vadd.f32 %v2767, %v2837
    %v2839 = vpop.f32.mrb[0].mxu0
    %v2840 = vadd.f32 %v2769, %v2839
    %2841 = vdwg.mxu0
    %2842 = vmatprep.subr.mxu0 %v1058
    %2843 = vmatpush1.msra.mxu0 %v1057
    %2844 = vmatprep.subr.mxu0 %v1071
    %2845 = vmatpush1.msra.mxu0 %v1070
    %2846 = vmatprep.subr.mxu0 %v1084
    %2847 = vmatpush1.msra.mxu0 %v1083
    %2848 = vmatprep.subr.mxu0 %v1097
    %2849 = vmatpush1.msra.mxu0 %v1096
    %2850 = vmatprep.subr.mxu0 %v1110
    %2851 = vmatpush1.msra.mxu0 %v1109
    %2852 = vmatprep.subr.mxu0 %v1123
    %2853 = vmatpush1.msra.mxu0 %v1122
    %2854 = vmatprep.subr.mxu0 %v1136
    %2855 = vmatpush1.msra.mxu0 %v1135
    %2856 = vmatprep.subr.mxu0 %v1149
    %2857 = vmatpush1.msra.mxu0 %v1148
    %2858 = vmatprep.subr.mxu0 %v1162
    %2859 = vmatpush1.msra.mxu0 %v1161
    %2860 = vmatprep.subr.mxu0 %v1175
    %2861 = vmatpush1.msra.mxu0 %v1174
    %2862 = vmatprep.subr.mxu0 %v1188
    %2863 = vmatpush1.msra.mxu0 %v1187
    %2864 = vmatprep.subr.mxu0 %v1201
    %2865 = vmatpush1.msra.mxu0 %v1200
    %2866 = vmatprep.subr.mxu0 %v1214
    %2867 = vmatpush1.msra.mxu0 %v1213
    %2868 = vmatprep.subr.mxu0 %v1227
    %2869 = vmatpush1.msra.mxu0 %v1226
    %2870 = vmatprep.subr.mxu0 %v1240
    %2871 = vmatpush1.msra.mxu0 %v1239
    %2872 = vmatprep.subr.mxu0 %v1253
    %2873 = vmatpush1.msra.mxu0 %v1252
    %2874 = vmatprep.subr.mxu0 %v1266
    %2875 = vmatpush1.msra.mxu0 %v1265
    %2876 = vmatprep.subr.mxu0 %v1279
    %2877 = vmatpush1.msra.mxu0 %v1278
    %2878 = vmatprep.subr.mxu0 %v1292
    %2879 = vmatpush1.msra.mxu0 %v1291
    %2880 = vmatprep.subr.mxu0 %v1305
    %2881 = vmatpush1.msra.mxu0 %v1304
    %2882 = vmatprep.subr.mxu0 %v1318
    %2883 = vmatpush1.msra.mxu0 %v1317
    %2884 = vmatprep.subr.mxu0 %v1331
    %2885 = vmatpush1.msra.mxu0 %v1330
    %2886 = vmatprep.subr.mxu0 %v1344
    %2887 = vmatpush1.msra.mxu0 %v1343
    %2888 = vmatprep.subr.mxu0 %v1357
    %2889 = vmatpush1.msra.mxu0 %v1356
    %2890 = vmatprep.subr.mxu0 %v1370
    %2891 = vmatpush1.msra.mxu0 %v1369
    %2892 = vmatprep.subr.mxu0 %v1383
    %2893 = vmatpush1.msra.mxu0 %v1382
    %2894 = vmatprep.subr.mxu0 %v1396
    %2895 = vmatpush1.msra.mxu0 %v1395
    %2896 = vmatprep.subr.mxu0 %v1409
    %2897 = vmatpush1.msra.mxu0 %v1408
    %2898 = vmatprep.subr.mxu0 %v1422
    %2899 = vmatpush1.msra.mxu0 %v1421
    %2900 = vmatprep.subr.mxu0 %v1435
    %2901 = vmatpush1.msra.mxu0 %v1434
    %2902 = vmatprep.subr.mxu0 %v1448
    %2903 = vmatpush1.msra.mxu0 %v1447
    %2904 = vmatprep.subr.mxu0 %v1461
    %2905 = vmatpush1.msra.mxu0 %v1460
    %2906 = vmatprep.mubr.f32.mxu0 %v214
    %2907 = vmatmul.mubr.f32.gmra.mrb[0].mxu0 %v213
    %v2908 = vpop.f32.mrb[0].mxu0
    %v2909 = vadd.f32 %v2838, %v2908
    %v2910 = vpop.f32.mrb[0].mxu0
    %v2911 = vadd.f32 %v2840, %v2910
    %2912 = vdwg.mxu0
    %2913 = vmatprep.subr.mxu0 %v1474
    %2914 = vmatpush1.msra.mxu0 %v1473
    %2915 = vmatprep.subr.mxu0 %v1487
    %2916 = vmatpush1.msra.mxu0 %v1486
    %2917 = vmatprep.subr.mxu0 0.0
    %2918 = vmatpush1.msra.mxu0 0.0
    %2919 = vmatprep.subr.mxu0 0.0
    %2920 = vmatpush1.msra.mxu0 0.0
    %2921 = vmatprep.subr.mxu0 0.0
    %2922 = vmatpush1.msra.mxu0 0.0
    %2923 = vmatprep.subr.mxu0 0.0
    %2924 = vmatpush1.msra.mxu0 0.0
    %2925 = vmatprep.subr.mxu0 0.0
    %2926 = vmatpush1.msra.mxu0 0.0
    %2927 = vmatprep.subr.mxu0 0.0
    %2928 = vmatpush1.msra.mxu0 0.0
    %2929 = vmatprep.subr.mxu0 0.0
    %2930 = vmatpush1.msra.mxu0 0.0
    %2931 = vmatprep.subr.mxu0 0.0
    %2932 = vmatpush1.msra.mxu0 0.0
    %2933 = vmatprep.subr.mxu0 0.0
    %2934 = vmatpush1.msra.mxu0 0.0
    %2935 = vmatprep.subr.mxu0 0.0
    %2936 = vmatpush1.msra.mxu0 0.0
    %2937 = vmatprep.subr.mxu0 0.0
    %2938 = vmatpush1.msra.mxu0 0.0
    %2939 = vmatprep.subr.mxu0 0.0
    %2940 = vmatpush1.msra.mxu0 0.0
    %2941 = vmatprep.subr.mxu0 0.0
    %2942 = vmatpush1.msra.mxu0 0.0
    %2943 = vmatprep.subr.mxu0 0.0
    %2944 = vmatpush1.msra.mxu0 0.0
    %2945 = vmatprep.subr.mxu0 0.0
    %2946 = vmatpush1.msra.mxu0 0.0
    %2947 = vmatprep.subr.mxu0 0.0
    %2948 = vmatpush1.msra.mxu0 0.0
    %2949 = vmatprep.subr.mxu0 0.0
    %2950 = vmatpush1.msra.mxu0 0.0
    %2951 = vmatprep.subr.mxu0 0.0
    %2952 = vmatpush1.msra.mxu0 0.0
    %2953 = vmatprep.subr.mxu0 0.0
    %2954 = vmatpush1.msra.mxu0 0.0
    %2955 = vmatprep.subr.mxu0 0.0
    %2956 = vmatpush1.msra.mxu0 0.0
    %2957 = vmatprep.subr.mxu0 0.0
    %2958 = vmatpush1.msra.mxu0 0.0
    %2959 = vmatprep.subr.mxu0 0.0
    %2960 = vmatpush1.msra.mxu0 0.0
    %2961 = vmatprep.subr.mxu0 0.0
    %2962 = vmatpush1.msra.mxu0 0.0
    %2963 = vmatprep.subr.mxu0 0.0
    %2964 = vmatpush1.msra.mxu0 0.0
    %2965 = vmatprep.subr.mxu0 0.0
    %2966 = vmatpush1.msra.mxu0 0.0
    %2967 = vmatprep.subr.mxu0 0.0
    %2968 = vmatpush1.msra.mxu0 0.0
    %2969 = vmatprep.subr.mxu0 0.0
    %2970 = vmatpush1.msra.mxu0 0.0
    %2971 = vmatprep.subr.mxu0 0.0
    %2972 = vmatpush1.msra.mxu0 0.0
    %2973 = vmatprep.subr.mxu0 0.0
    %2974 = vmatpush1.msra.mxu0 0.0
    %2975 = vmatprep.subr.mxu0 0.0
    %2976 = vmatpush1.msra.mxu0 0.0
    %2977 = vmatprep.mubr.f32.mxu0 0.0
    %2978 = vmatmul.mubr.f32.gmra.mrb[0].mxu0 %v1562
    %v2979 = vpop.f32.mrb[0].mxu0
    %v2980 = vadd.f32 %v2909, %v2979
    %v2981 = vpop.f32.mrb[0].mxu0
    %v2982 = vadd.f32 %v2911, %v2981
    %2983 = vdwg.mxu0
    %2984 = vmatprep.subr.mxu0 %v228
    %2985 = vmatpush1.msra.mxu0 %v227
    %2986 = vmatprep.subr.mxu0 %v241
    %2987 = vmatpush1.msra.mxu0 %v240
    %2988 = vmatprep.subr.mxu0 %v254
    %2989 = vmatpush1.msra.mxu0 %v253
    %2990 = vmatprep.subr.mxu0 %v267
    %2991 = vmatpush1.msra.mxu0 %v266
    %2992 = vmatprep.subr.mxu0 %v280
    %2993 = vmatpush1.msra.mxu0 %v279
    %2994 = vmatprep.subr.mxu0 %v293
    %2995 = vmatpush1.msra.mxu0 %v292
    %2996 = vmatprep.subr.mxu0 %v306
    %2997 = vmatpush1.msra.mxu0 %v305
    %2998 = vmatprep.subr.mxu0 %v319
    %2999 = vmatpush1.msra.mxu0 %v318
    %3000 = vmatprep.subr.mxu0 %v332
    %3001 = vmatpush1.msra.mxu0 %v331
    %3002 = vmatprep.subr.mxu0 %v345
    %3003 = vmatpush1.msra.mxu0 %v344
    %3004 = vmatprep.subr.mxu0 %v358
    %3005 = vmatpush1.msra.mxu0 %v357
    %3006 = vmatprep.subr.mxu0 %v371
    %3007 = vmatpush1.msra.mxu0 %v370
    %3008 = vmatprep.subr.mxu0 %v384
    %3009 = vmatpush1.msra.mxu0 %v383
    %3010 = vmatprep.subr.mxu0 %v397
    %3011 = vmatpush1.msra.mxu0 %v396
    %3012 = vmatprep.subr.mxu0 %v410
    %3013 = vmatpush1.msra.mxu0 %v409
    %3014 = vmatprep.subr.mxu0 %v423
    %3015 = vmatpush1.msra.mxu0 %v422
    %3016 = vmatprep.subr.mxu0 %v436
    %3017 = vmatpush1.msra.mxu0 %v435
    %3018 = vmatprep.subr.mxu0 %v449
    %3019 = vmatpush1.msra.mxu0 %v448
    %3020 = vmatprep.subr.mxu0 %v462
    %3021 = vmatpush1.msra.mxu0 %v461
    %3022 = vmatprep.subr.mxu0 %v475
    %3023 = vmatpush1.msra.mxu0 %v474
    %3024 = vmatprep.subr.mxu0 %v488
    %3025 = vmatpush1.msra.mxu0 %v487
    %3026 = vmatprep.subr.mxu0 %v501
    %3027 = vmatpush1.msra.mxu0 %v500
    %3028 = vmatprep.subr.mxu0 %v514
    %3029 = vmatpush1.msra.mxu0 %v513
    %3030 = vmatprep.subr.mxu0 %v527
    %3031 = vmatpush1.msra.mxu0 %v526
    %3032 = vmatprep.subr.mxu0 %v540
    %3033 = vmatpush1.msra.mxu0 %v539
    %3034 = vmatprep.subr.mxu0 %v553
    %3035 = vmatpush1.msra.mxu0 %v552
    %3036 = vmatprep.subr.mxu0 %v566
    %3037 = vmatpush1.msra.mxu0 %v565
    %3038 = vmatprep.subr.mxu0 %v579
    %3039 = vmatpush1.msra.mxu0 %v578
    %3040 = vmatprep.subr.mxu0 %v592
    %3041 = vmatpush1.msra.mxu0 %v591
    %3042 = vmatprep.subr.mxu0 %v605
    %3043 = vmatpush1.msra.mxu0 %v604
    %3044 = vmatprep.subr.mxu0 %v618
    %3045 = vmatpush1.msra.mxu0 %v617
    %3046 = vmatprep.subr.mxu0 %v631
    %3047 = vmatpush1.msra.mxu0 %v630
    %3048 = vmatprep.mubr.f32.mxu0 %v210
    %3049 = vmatmul.mubr.f32.gmra.mrb[0].mxu0 %v209
    %v3050 = vpop.f32.mrb[0].mxu0
    %v3051 = vadd.f32 %v1538, %v3050
    %v3052 = vpop.f32.mrb[0].mxu0
    %v3053 = vadd.f32 %v1542, %v3052
    %3054 = vdwg.mxu0
    %3055 = vmatprep.subr.mxu0 %v644
    %3056 = vmatpush1.msra.mxu0 %v643
    %3057 = vmatprep.subr.mxu0 %v657
    %3058 = vmatpush1.msra.mxu0 %v656
    %3059 = vmatprep.subr.mxu0 %v670
    %3060 = vmatpush1.msra.mxu0 %v669
    %3061 = vmatprep.subr.mxu0 %v683
    %3062 = vmatpush1.msra.mxu0 %v682
    %3063 = vmatprep.subr.mxu0 %v696
    %3064 = vmatpush1.msra.mxu0 %v695
    %3065 = vmatprep.subr.mxu0 %v709
    %3066 = vmatpush1.msra.mxu0 %v708
    %3067 = vmatprep.subr.mxu0 %v722
    %3068 = vmatpush1.msra.mxu0 %v721
    %3069 = vmatprep.subr.mxu0 %v735
    %3070 = vmatpush1.msra.mxu0 %v734
    %3071 = vmatprep.subr.mxu0 %v748
    %3072 = vmatpush1.msra.mxu0 %v747
    %3073 = vmatprep.subr.mxu0 %v761
    %3074 = vmatpush1.msra.mxu0 %v760
    %3075 = vmatprep.subr.mxu0 %v774
    %3076 = vmatpush1.msra.mxu0 %v773
    %3077 = vmatprep.subr.mxu0 %v787
    %3078 = vmatpush1.msra.mxu0 %v786
    %3079 = vmatprep.subr.mxu0 %v800
    %3080 = vmatpush1.msra.mxu0 %v799
    %3081 = vmatprep.subr.mxu0 %v813
    %3082 = vmatpush1.msra.mxu0 %v812
    %3083 = vmatprep.subr.mxu0 %v826
    %3084 = vmatpush1.msra.mxu0 %v825
    %3085 = vmatprep.subr.mxu0 %v839
    %3086 = vmatpush1.msra.mxu0 %v838
    %3087 = vmatprep.subr.mxu0 %v852
    %3088 = vmatpush1.msra.mxu0 %v851
    %3089 = vmatprep.subr.mxu0 %v865
    %3090 = vmatpush1.msra.mxu0 %v864
    %3091 = vmatprep.subr.mxu0 %v878
    %3092 = vmatpush1.msra.mxu0 %v877
    %3093 = vmatprep.subr.mxu0 %v891
    %3094 = vmatpush1.msra.mxu0 %v890
    %3095 = vmatprep.subr.mxu0 %v904
    %3096 = vmatpush1.msra.mxu0 %v903
    %3097 = vmatprep.subr.mxu0 %v917
    %3098 = vmatpush1.msra.mxu0 %v916
    %3099 = vmatprep.subr.mxu0 %v930
    %3100 = vmatpush1.msra.mxu0 %v929
    %3101 = vmatprep.subr.mxu0 %v943
    %3102 = vmatpush1.msra.mxu0 %v942
    %3103 = vmatprep.subr.mxu0 %v956
    %3104 = vmatpush1.msra.mxu0 %v955
    %3105 = vmatprep.subr.mxu0 %v969
    %3106 = vmatpush1.msra.mxu0 %v968
    %3107 = vmatprep.subr.mxu0 %v982
    %3108 = vmatpush1.msra.mxu0 %v981
    %3109 = vmatprep.subr.mxu0 %v995
    %3110 = vmatpush1.msra.mxu0 %v994
    %3111 = vmatprep.subr.mxu0 %v1008
    %3112 = vmatpush1.msra.mxu0 %v1007
    %3113 = vmatprep.subr.mxu0 %v1021
    %3114 = vmatpush1.msra.mxu0 %v1020
    %3115 = vmatprep.subr.mxu0 %v1034
    %3116 = vmatpush1.msra.mxu0 %v1033
    %3117 = vmatprep.subr.mxu0 %v1047
    %3118 = vmatpush1.msra.mxu0 %v1046
    %3119 = vmatprep.mubr.f32.mxu0 %v212
    %3120 = vmatmul.mubr.f32.gmra.mrb[0].mxu0 %v211
    %v3121 = vpop.f32.mrb[0].mxu0
    %v3122 = vadd.f32 %v3051, %v3121
    %v3123 = vpop.f32.mrb[0].mxu0
    %v3124 = vadd.f32 %v3053, %v3123
    %3125 = vdwg.mxu0
    %3126 = vmatprep.subr.mxu0 %v1060
    %3127 = vmatpush1.msra.mxu0 %v1059
    %3128 = vmatprep.subr.mxu0 %v1073
    %3129 = vmatpush1.msra.mxu0 %v1072
    %3130 = vmatprep.subr.mxu0 %v1086
    %3131 = vmatpush1.msra.mxu0 %v1085
    %3132 = vmatprep.subr.mxu0 %v1099
    %3133 = vmatpush1.msra.mxu0 %v1098
    %3134 = vmatprep.subr.mxu0 %v1112
    %3135 = vmatpush1.msra.mxu0 %v1111
    %3136 = vmatprep.subr.mxu0 %v1125
    %3137 = vmatpush1.msra.mxu0 %v1124
    %3138 = vmatprep.subr.mxu0 %v1138
    %3139 = vmatpush1.msra.mxu0 %v1137
    %3140 = vmatprep.subr.mxu0 %v1151
    %3141 = vmatpush1.msra.mxu0 %v1150
    %3142 = vmatprep.subr.mxu0 %v1164
    %3143 = vmatpush1.msra.mxu0 %v1163
    %3144 = vmatprep.subr.mxu0 %v1177
    %3145 = vmatpush1.msra.mxu0 %v1176
    %3146 = vmatprep.subr.mxu0 %v1190
    %3147 = vmatpush1.msra.mxu0 %v1189
    %3148 = vmatprep.subr.mxu0 %v1203
    %3149 = vmatpush1.msra.mxu0 %v1202
    %3150 = vmatprep.subr.mxu0 %v1216
    %3151 = vmatpush1.msra.mxu0 %v1215
    %3152 = vmatprep.subr.mxu0 %v1229
    %3153 = vmatpush1.msra.mxu0 %v1228
    %3154 = vmatprep.subr.mxu0 %v1242
    %3155 = vmatpush1.msra.mxu0 %v1241
    %3156 = vmatprep.subr.mxu0 %v1255
    %3157 = vmatpush1.msra.mxu0 %v1254
    %3158 = vmatprep.subr.mxu0 %v1268
    %3159 = vmatpush1.msra.mxu0 %v1267
    %3160 = vmatprep.subr.mxu0 %v1281
    %3161 = vmatpush1.msra.mxu0 %v1280
    %3162 = vmatprep.subr.mxu0 %v1294
    %3163 = vmatpush1.msra.mxu0 %v1293
    %3164 = vmatprep.subr.mxu0 %v1307
    %3165 = vmatpush1.msra.mxu0 %v1306
    %3166 = vmatprep.subr.mxu0 %v1320
    %3167 = vmatpush1.msra.mxu0 %v1319
    %3168 = vmatprep.subr.mxu0 %v1333
    %3169 = vmatpush1.msra.mxu0 %v1332
    %3170 = vmatprep.subr.mxu0 %v1346
    %3171 = vmatpush1.msra.mxu0 %v1345
    %3172 = vmatprep.subr.mxu0 %v1359
    %3173 = vmatpush1.msra.mxu0 %v1358
    %3174 = vmatprep.subr.mxu0 %v1372
    %3175 = vmatpush1.msra.mxu0 %v1371
    %3176 = vmatprep.subr.mxu0 %v1385
    %3177 = vmatpush1.msra.mxu0 %v1384
    %3178 = vmatprep.subr.mxu0 %v1398
    %3179 = vmatpush1.msra.mxu0 %v1397
    %3180 = vmatprep.subr.mxu0 %v1411
    %3181 = vmatpush1.msra.mxu0 %v1410
    %3182 = vmatprep.subr.mxu0 %v1424
    %3183 = vmatpush1.msra.mxu0 %v1423
    %3184 = vmatprep.subr.mxu0 %v1437
    %3185 = vmatpush1.msra.mxu0 %v1436
    %3186 = vmatprep.subr.mxu0 %v1450
    %3187 = vmatpush1.msra.mxu0 %v1449
    %3188 = vmatprep.subr.mxu0 %v1463
    %3189 = vmatpush1.msra.mxu0 %v1462
    %3190 = vmatprep.mubr.f32.mxu0 %v214
    %3191 = vmatmul.mubr.f32.gmra.mrb[0].mxu0 %v213
    %v3192 = vpop.f32.mrb[0].mxu0
    %v3193 = vadd.f32 %v3122, %v3192
    %v3194 = vpop.f32.mrb[0].mxu0
    %v3195 = vadd.f32 %v3124, %v3194
    %3196 = vdwg.mxu0
    %3197 = vmatprep.subr.mxu0 %v1476
    %3198 = vmatpush1.msra.mxu0 %v1475
    %3199 = vmatprep.subr.mxu0 %v1489
    %3200 = vmatpush1.msra.mxu0 %v1488
    %3201 = vmatprep.subr.mxu0 0.0
    %3202 = vmatpush1.msra.mxu0 0.0
    %3203 = vmatprep.subr.mxu0 0.0
    %3204 = vmatpush1.msra.mxu0 0.0
    %3205 = vmatprep.subr.mxu0 0.0
    %3206 = vmatpush1.msra.mxu0 0.0
    %3207 = vmatprep.subr.mxu0 0.0
    %3208 = vmatpush1.msra.mxu0 0.0
    %3209 = vmatprep.subr.mxu0 0.0
    %3210 = vmatpush1.msra.mxu0 0.0
    %3211 = vmatprep.subr.mxu0 0.0
    %3212 = vmatpush1.msra.mxu0 0.0
    %3213 = vmatprep.subr.mxu0 0.0
    %3214 = vmatpush1.msra.mxu0 0.0
    %3215 = vmatprep.subr.mxu0 0.0
    %3216 = vmatpush1.msra.mxu0 0.0
    %3217 = vmatprep.subr.mxu0 0.0
    %3218 = vmatpush1.msra.mxu0 0.0
    %3219 = vmatprep.subr.mxu0 0.0
    %3220 = vmatpush1.msra.mxu0 0.0
    %3221 = vmatprep.subr.mxu0 0.0
    %3222 = vmatpush1.msra.mxu0 0.0
    %3223 = vmatprep.subr.mxu0 0.0
    %3224 = vmatpush1.msra.mxu0 0.0
    %3225 = vmatprep.subr.mxu0 0.0
    %3226 = vmatpush1.msra.mxu0 0.0
    %3227 = vmatprep.subr.mxu0 0.0
    %3228 = vmatpush1.msra.mxu0 0.0
    %3229 = vmatprep.subr.mxu0 0.0
    %3230 = vmatpush1.msra.mxu0 0.0
    %3231 = vmatprep.subr.mxu0 0.0
    %3232 = vmatpush1.msra.mxu0 0.0
    %3233 = vmatprep.subr.mxu0 0.0
    %3234 = vmatpush1.msra.mxu0 0.0
    %3235 = vmatprep.subr.mxu0 0.0
    %3236 = vmatpush1.msra.mxu0 0.0
    %3237 = vmatprep.subr.mxu0 0.0
    %3238 = vmatpush1.msra.mxu0 0.0
    %3239 = vmatprep.subr.mxu0 0.0
    %3240 = vmatpush1.msra.mxu0 0.0
    %3241 = vmatprep.subr.mxu0 0.0
    %3242 = vmatpush1.msra.mxu0 0.0
    %3243 = vmatprep.subr.mxu0 0.0
    %3244 = vmatpush1.msra.mxu0 0.0
    %3245 = vmatprep.subr.mxu0 0.0
    %3246 = vmatpush1.msra.mxu0 0.0
    %3247 = vmatprep.subr.mxu0 0.0
    %3248 = vmatpush1.msra.mxu0 0.0
    %3249 = vmatprep.subr.mxu0 0.0
    %3250 = vmatpush1.msra.mxu0 0.0
    %3251 = vmatprep.subr.mxu0 0.0
    %3252 = vmatpush1.msra.mxu0 0.0
    %3253 = vmatprep.subr.mxu0 0.0
    %3254 = vmatpush1.msra.mxu0 0.0
    %3255 = vmatprep.subr.mxu0 0.0
    %3256 = vmatpush1.msra.mxu0 0.0
    %3257 = vmatprep.subr.mxu0 0.0
    %3258 = vmatpush1.msra.mxu0 0.0
    %3259 = vmatprep.subr.mxu0 0.0
    %3260 = vmatpush1.msra.mxu0 0.0
    %3261 = vmatprep.mubr.f32.mxu0 0.0
    %3262 = vmatmul.mubr.f32.gmra.mrb[0].mxu0 %v1562
    %v3263 = vpop.f32.mrb[0].mxu0
    %v3264 = vadd.f32 %v3193, %v3263
    %v3265 = vpop.f32.mrb[0].mxu0
    %v3266 = vadd.f32 %v3195, %v3265
    %3267 = vdwg.mxu0
    %3268 = vmatprep.subr.mxu0 0.0
    %3269 = vmatpush1.msra.mxu0 %v229
    %3270 = vmatprep.subr.mxu0 0.0
    %3271 = vmatpush1.msra.mxu0 %v242
    %3272 = vmatprep.subr.mxu0 0.0
    %3273 = vmatpush1.msra.mxu0 %v255
    %3274 = vmatprep.subr.mxu0 0.0
    %3275 = vmatpush1.msra.mxu0 %v268
    %3276 = vmatprep.subr.mxu0 0.0
    %3277 = vmatpush1.msra.mxu0 %v281
    %3278 = vmatprep.subr.mxu0 0.0
    %3279 = vmatpush1.msra.mxu0 %v294
    %3280 = vmatprep.subr.mxu0 0.0
    %3281 = vmatpush1.msra.mxu0 %v307
    %3282 = vmatprep.subr.mxu0 0.0
    %3283 = vmatpush1.msra.mxu0 %v320
    %3284 = vmatprep.subr.mxu0 0.0
    %3285 = vmatpush1.msra.mxu0 %v333
    %3286 = vmatprep.subr.mxu0 0.0
    %3287 = vmatpush1.msra.mxu0 %v346
    %3288 = vmatprep.subr.mxu0 0.0
    %3289 = vmatpush1.msra.mxu0 %v359
    %3290 = vmatprep.subr.mxu0 0.0
    %3291 = vmatpush1.msra.mxu0 %v372
    %3292 = vmatprep.subr.mxu0 0.0
    %3293 = vmatpush1.msra.mxu0 %v385
    %3294 = vmatprep.subr.mxu0 0.0
    %3295 = vmatpush1.msra.mxu0 %v398
    %3296 = vmatprep.subr.mxu0 0.0
    %3297 = vmatpush1.msra.mxu0 %v411
    %3298 = vmatprep.subr.mxu0 0.0
    %3299 = vmatpush1.msra.mxu0 %v424
    %3300 = vmatprep.subr.mxu0 0.0
    %3301 = vmatpush1.msra.mxu0 %v437
    %3302 = vmatprep.subr.mxu0 0.0
    %3303 = vmatpush1.msra.mxu0 %v450
    %3304 = vmatprep.subr.mxu0 0.0
    %3305 = vmatpush1.msra.mxu0 %v463
    %3306 = vmatprep.subr.mxu0 0.0
    %3307 = vmatpush1.msra.mxu0 %v476
    %3308 = vmatprep.subr.mxu0 0.0
    %3309 = vmatpush1.msra.mxu0 %v489
    %3310 = vmatprep.subr.mxu0 0.0
    %3311 = vmatpush1.msra.mxu0 %v502
    %3312 = vmatprep.subr.mxu0 0.0
    %3313 = vmatpush1.msra.mxu0 %v515
    %3314 = vmatprep.subr.mxu0 0.0
    %3315 = vmatpush1.msra.mxu0 %v528
    %3316 = vmatprep.subr.mxu0 0.0
    %3317 = vmatpush1.msra.mxu0 %v541
    %3318 = vmatprep.subr.mxu0 0.0
    %3319 = vmatpush1.msra.mxu0 %v554
    %3320 = vmatprep.subr.mxu0 0.0
    %3321 = vmatpush1.msra.mxu0 %v567
    %3322 = vmatprep.subr.mxu0 0.0
    %3323 = vmatpush1.msra.mxu0 %v580
    %3324 = vmatprep.subr.mxu0 0.0
    %3325 = vmatpush1.msra.mxu0 %v593
    %3326 = vmatprep.subr.mxu0 0.0
    %3327 = vmatpush1.msra.mxu0 %v606
    %3328 = vmatprep.subr.mxu0 0.0
    %3329 = vmatpush1.msra.mxu0 %v619
    %3330 = vmatprep.subr.mxu0 0.0
    %3331 = vmatpush1.msra.mxu0 %v632
    %3332 = vmatprep.mubr.f32.mxu0 %v210
    %3333 = vmatmul.mubr.f32.gmra.mrb[0].mxu0 %v209
    %v3334 = vpop.f32.mrb[0].mxu0
    %v3335 = vadd.f32 %v1546, %v3334
    %v3336 = vpop.f32.mrb[0].mxu0
    %3337 = vdwg.mxu0
    %3338 = vmatprep.subr.mxu0 0.0
    %3339 = vmatpush1.msra.mxu0 %v645
    %3340 = vmatprep.subr.mxu0 0.0
    %3341 = vmatpush1.msra.mxu0 %v658
    %3342 = vmatprep.subr.mxu0 0.0
    %3343 = vmatpush1.msra.mxu0 %v671
    %3344 = vmatprep.subr.mxu0 0.0
    %3345 = vmatpush1.msra.mxu0 %v684
    %3346 = vmatprep.subr.mxu0 0.0
    %3347 = vmatpush1.msra.mxu0 %v697
    %3348 = vmatprep.subr.mxu0 0.0
    %3349 = vmatpush1.msra.mxu0 %v710
    %3350 = vmatprep.subr.mxu0 0.0
    %3351 = vmatpush1.msra.mxu0 %v723
    %3352 = vmatprep.subr.mxu0 0.0
    %3353 = vmatpush1.msra.mxu0 %v736
    %3354 = vmatprep.subr.mxu0 0.0
    %3355 = vmatpush1.msra.mxu0 %v749
    %3356 = vmatprep.subr.mxu0 0.0
    %3357 = vmatpush1.msra.mxu0 %v762
    %3358 = vmatprep.subr.mxu0 0.0
    %3359 = vmatpush1.msra.mxu0 %v775
    %3360 = vmatprep.subr.mxu0 0.0
    %3361 = vmatpush1.msra.mxu0 %v788
    %3362 = vmatprep.subr.mxu0 0.0
    %3363 = vmatpush1.msra.mxu0 %v801
    %3364 = vmatprep.subr.mxu0 0.0
    %3365 = vmatpush1.msra.mxu0 %v814
    %3366 = vmatprep.subr.mxu0 0.0
    %3367 = vmatpush1.msra.mxu0 %v827
    %3368 = vmatprep.subr.mxu0 0.0
    %3369 = vmatpush1.msra.mxu0 %v840
    %3370 = vmatprep.subr.mxu0 0.0
    %3371 = vmatpush1.msra.mxu0 %v853
    %3372 = vmatprep.subr.mxu0 0.0
    %3373 = vmatpush1.msra.mxu0 %v866
    %3374 = vmatprep.subr.mxu0 0.0
    %3375 = vmatpush1.msra.mxu0 %v879
    %3376 = vmatprep.subr.mxu0 0.0
    %3377 = vmatpush1.msra.mxu0 %v892
    %3378 = vmatprep.subr.mxu0 0.0
    %3379 = vmatpush1.msra.mxu0 %v905
    %3380 = vmatprep.subr.mxu0 0.0
    %3381 = vmatpush1.msra.mxu0 %v918
    %3382 = vmatprep.subr.mxu0 0.0
    %3383 = vmatpush1.msra.mxu0 %v931
    %3384 = vmatprep.subr.mxu0 0.0
    %3385 = vmatpush1.msra.mxu0 %v944
    %3386 = vmatprep.subr.mxu0 0.0
    %3387 = vmatpush1.msra.mxu0 %v957
    %3388 = vmatprep.subr.mxu0 0.0
    %3389 = vmatpush1.msra.mxu0 %v970
    %3390 = vmatprep.subr.mxu0 0.0
    %3391 = vmatpush1.msra.mxu0 %v983
    %3392 = vmatprep.subr.mxu0 0.0
    %3393 = vmatpush1.msra.mxu0 %v996
    %3394 = vmatprep.subr.mxu0 0.0
    %3395 = vmatpush1.msra.mxu0 %v1009
    %3396 = vmatprep.subr.mxu0 0.0
    %3397 = vmatpush1.msra.mxu0 %v1022
    %3398 = vmatprep.subr.mxu0 0.0
    %3399 = vmatpush1.msra.mxu0 %v1035
    %3400 = vmatprep.subr.mxu0 0.0
    %3401 = vmatpush1.msra.mxu0 %v1048
    %3402 = vmatprep.mubr.f32.mxu0 %v212
    %3403 = vmatmul.mubr.f32.gmra.mrb[0].mxu0 %v211
    %v3404 = vpop.f32.mrb[0].mxu0
    %v3405 = vadd.f32 %v3335, %v3404
    %v3406 = vpop.f32.mrb[0].mxu0
    %3407 = vdwg.mxu0
    %3408 = vmatprep.subr.mxu0 0.0
    %3409 = vmatpush1.msra.mxu0 %v1061
    %3410 = vmatprep.subr.mxu0 0.0
    %3411 = vmatpush1.msra.mxu0 %v1074
    %3412 = vmatprep.subr.mxu0 0.0
    %3413 = vmatpush1.msra.mxu0 %v1087
    %3414 = vmatprep.subr.mxu0 0.0
    %3415 = vmatpush1.msra.mxu0 %v1100
    %3416 = vmatprep.subr.mxu0 0.0
    %3417 = vmatpush1.msra.mxu0 %v1113
    %3418 = vmatprep.subr.mxu0 0.0
    %3419 = vmatpush1.msra.mxu0 %v1126
    %3420 = vmatprep.subr.mxu0 0.0
    %3421 = vmatpush1.msra.mxu0 %v1139
    %3422 = vmatprep.subr.mxu0 0.0
    %3423 = vmatpush1.msra.mxu0 %v1152
    %3424 = vmatprep.subr.mxu0 0.0
    %3425 = vmatpush1.msra.mxu0 %v1165
    %3426 = vmatprep.subr.mxu0 0.0
    %3427 = vmatpush1.msra.mxu0 %v1178
    %3428 = vmatprep.subr.mxu0 0.0
    %3429 = vmatpush1.msra.mxu0 %v1191
    %3430 = vmatprep.subr.mxu0 0.0
    %3431 = vmatpush1.msra.mxu0 %v1204
    %3432 = vmatprep.subr.mxu0 0.0
    %3433 = vmatpush1.msra.mxu0 %v1217
    %3434 = vmatprep.subr.mxu0 0.0
    %3435 = vmatpush1.msra.mxu0 %v1230
    %3436 = vmatprep.subr.mxu0 0.0
    %3437 = vmatpush1.msra.mxu0 %v1243
    %3438 = vmatprep.subr.mxu0 0.0
    %3439 = vmatpush1.msra.mxu0 %v1256
    %3440 = vmatprep.subr.mxu0 0.0
    %3441 = vmatpush1.msra.mxu0 %v1269
    %3442 = vmatprep.subr.mxu0 0.0
    %3443 = vmatpush1.msra.mxu0 %v1282
    %3444 = vmatprep.subr.mxu0 0.0
    %3445 = vmatpush1.msra.mxu0 %v1295
    %3446 = vmatprep.subr.mxu0 0.0
    %3447 = vmatpush1.msra.mxu0 %v1308
    %3448 = vmatprep.subr.mxu0 0.0
    %3449 = vmatpush1.msra.mxu0 %v1321
    %3450 = vmatprep.subr.mxu0 0.0
    %3451 = vmatpush1.msra.mxu0 %v1334
    %3452 = vmatprep.subr.mxu0 0.0
    %3453 = vmatpush1.msra.mxu0 %v1347
    %3454 = vmatprep.subr.mxu0 0.0
    %3455 = vmatpush1.msra.mxu0 %v1360
    %3456 = vmatprep.subr.mxu0 0.0
    %3457 = vmatpush1.msra.mxu0 %v1373
    %3458 = vmatprep.subr.mxu0 0.0
    %3459 = vmatpush1.msra.mxu0 %v1386
    %3460 = vmatprep.subr.mxu0 0.0
    %3461 = vmatpush1.msra.mxu0 %v1399
    %3462 = vmatprep.subr.mxu0 0.0
    %3463 = vmatpush1.msra.mxu0 %v1412
    %3464 = vmatprep.subr.mxu0 0.0
    %3465 = vmatpush1.msra.mxu0 %v1425
    %3466 = vmatprep.subr.mxu0 0.0
    %3467 = vmatpush1.msra.mxu0 %v1438
    %3468 = vmatprep.subr.mxu0 0.0
    %3469 = vmatpush1.msra.mxu0 %v1451
    %3470 = vmatprep.subr.mxu0 0.0
    %3471 = vmatpush1.msra.mxu0 %v1464
    %3472 = vmatprep.mubr.f32.mxu0 %v214
    %3473 = vmatmul.mubr.f32.gmra.mrb[0].mxu0 %v213
    %v3474 = vpop.f32.mrb[0].mxu0
    %v3475 = vadd.f32 %v3405, %v3474
    %v3476 = vpop.f32.mrb[0].mxu0
    %3477 = vdwg.mxu0
    %3478 = vmatprep.subr.mxu0 0.0
    %3479 = vmatpush1.msra.mxu0 %v1477
    %3480 = vmatprep.subr.mxu0 0.0
    %3481 = vmatpush1.msra.mxu0 %v1490
    %3482 = vmatprep.subr.mxu0 0.0
    %3483 = vmatpush1.msra.mxu0 0.0
    %3484 = vmatprep.subr.mxu0 0.0
    %3485 = vmatpush1.msra.mxu0 0.0
    %3486 = vmatprep.subr.mxu0 0.0
    %3487 = vmatpush1.msra.mxu0 0.0
    %3488 = vmatprep.subr.mxu0 0.0
    %3489 = vmatpush1.msra.mxu0 0.0
    %3490 = vmatprep.subr.mxu0 0.0
    %3491 = vmatpush1.msra.mxu0 0.0
    %3492 = vmatprep.subr.mxu0 0.0
    %3493 = vmatpush1.msra.mxu0 0.0
    %3494 = vmatprep.subr.mxu0 0.0
    %3495 = vmatpush1.msra.mxu0 0.0
    %3496 = vmatprep.subr.mxu0 0.0
    %3497 = vmatpush1.msra.mxu0 0.0
    %3498 = vmatprep.subr.mxu0 0.0
    %3499 = vmatpush1.msra.mxu0 0.0
    %3500 = vmatprep.subr.mxu0 0.0
    %3501 = vmatpush1.msra.mxu0 0.0
    %3502 = vmatprep.subr.mxu0 0.0
    %3503 = vmatpush1.msra.mxu0 0.0
    %3504 = vmatprep.subr.mxu0 0.0
    %3505 = vmatpush1.msra.mxu0 0.0
    %3506 = vmatprep.subr.mxu0 0.0
    %3507 = vmatpush1.msra.mxu0 0.0
    %3508 = vmatprep.subr.mxu0 0.0
    %3509 = vmatpush1.msra.mxu0 0.0
    %3510 = vmatprep.subr.mxu0 0.0
    %3511 = vmatpush1.msra.mxu0 0.0
    %3512 = vmatprep.subr.mxu0 0.0
    %3513 = vmatpush1.msra.mxu0 0.0
    %3514 = vmatprep.subr.mxu0 0.0
    %3515 = vmatpush1.msra.mxu0 0.0
    %3516 = vmatprep.subr.mxu0 0.0
    %3517 = vmatpush1.msra.mxu0 0.0
    %3518 = vmatprep.subr.mxu0 0.0
    %3519 = vmatpush1.msra.mxu0 0.0
    %3520 = vmatprep.subr.mxu0 0.0
    %3521 = vmatpush1.msra.mxu0 0.0
    %3522 = vmatprep.subr.mxu0 0.0
    %3523 = vmatpush1.msra.mxu0 0.0
    %3524 = vmatprep.subr.mxu0 0.0
    %3525 = vmatpush1.msra.mxu0 0.0
    %3526 = vmatprep.subr.mxu0 0.0
    %3527 = vmatpush1.msra.mxu0 0.0
    %3528 = vmatprep.subr.mxu0 0.0
    %3529 = vmatpush1.msra.mxu0 0.0
    %3530 = vmatprep.subr.mxu0 0.0
    %3531 = vmatpush1.msra.mxu0 0.0
    %3532 = vmatprep.subr.mxu0 0.0
    %3533 = vmatpush1.msra.mxu0 0.0
    %3534 = vmatprep.subr.mxu0 0.0
    %3535 = vmatpush1.msra.mxu0 0.0
    %3536 = vmatprep.subr.mxu0 0.0
    %3537 = vmatpush1.msra.mxu0 0.0
    %3538 = vmatprep.subr.mxu0 0.0
    %3539 = vmatpush1.msra.mxu0 0.0
    %3540 = vmatprep.subr.mxu0 0.0
    %3541 = vmatpush1.msra.mxu0 0.0
    %3542 = vmatprep.mubr.f32.mxu0 0.0
    %3543 = vmatmul.mubr.f32.gmra.mrb[0].mxu0 %v1562
    %v3544 = vpop.f32.mrb[0].mxu0
    %v3545 = vadd.f32 %v3475, %v3544
    %v3546 = vpop.f32.mrb[0].mxu0
    %3547 = vdwg.mxu0
    %vm3548 = vcmp.gt.f32.partialorder %v1844, 0.0
    %vm3549 = vcmp.gt.f32.partialorder %v1846, 0.0
    %vm3550 = vcmp.gt.f32.partialorder %v2128, 0.0
    %vm3551 = vcmp.gt.f32.partialorder %v2130, 0.0
    %vm3552 = vcmp.gt.f32.partialorder %v2412, 0.0
    %vm3553 = vcmp.gt.f32.partialorder %v2414, 0.0
    %vm3554 = vcmp.gt.f32.partialorder %v2696, 0.0
    %vm3555 = vcmp.gt.f32.partialorder %v2698, 0.0
    %vm3556 = vcmp.gt.f32.partialorder %v2980, 0.0
    %vm3557 = vcmp.gt.f32.partialorder %v2982, 0.0
    %vm3558 = vcmp.gt.f32.partialorder %v3264, 0.0
    %vm3559 = vcmp.gt.f32.partialorder %v3266, 0.0
    %vm3560 = vcmp.gt.f32.partialorder %v3545, 0.0
    %v3561 = vstv %s216
    %v3562 = vmul.f32 %v3561, %v1844
    %v3563 = vmul.f32 %v3561, %v1846
    %v3564 = vmul.f32 %v3561, %v2128
    %v3565 = vmul.f32 %v3561, %v2130
    %v3566 = vmul.f32 %v3561, %v2412
    %v3567 = vmul.f32 %v3561, %v2414
    %v3568 = vmul.f32 %v3561, %v2696
    %v3569 = vmul.f32 %v3561, %v2698
    %v3570 = vmul.f32 %v3561, %v2980
    %v3571 = vmul.f32 %v3561, %v2982
    %v3572 = vmul.f32 %v3561, %v3264
    %v3573 = vmul.f32 %v3561, %v3266
    %v3574 = vmul.f32 %v3561, %v3545
    %v3575 = vsel %vm3548, %v1844, %v3562
    %v3576 = vsel %vm3549, %v1846, %v3563
    %v3577 = vsel %vm3550, %v2128, %v3564
    %v3578 = vsel %vm3551, %v2130, %v3565
    %v3579 = vsel %vm3552, %v2412, %v3566
    %v3580 = vsel %vm3553, %v2414, %v3567
    %v3581 = vsel %vm3554, %v2696, %v3568
    %v3582 = vsel %vm3555, %v2698, %v3569
    %v3583 = vsel %vm3556, %v2980, %v3570
    %v3584 = vsel %vm3557, %v2982, %v3571
    %v3585 = vsel %vm3558, %v3264, %v3572
    %v3586 = vsel %vm3559, %v3266, %v3573
    %v3587 = vsel %vm3560, %v3545, %v3574
    %s3588 = sld [smem:[#allocation2 + $0x1]]
    %v3589 = vld [vmem:[#allocation8] sm:$0xff]
    %v3590 = vld [vmem:[#allocation8 + $0x8] sm:$0xff]
    %v3591 = vld [vmem:[#allocation8 + $0x10] sm:$0xff]
    %v3592 = vld [vmem:[#allocation8 + $0x18] sm:$0xff]
    %v3593 = vld [vmem:[#allocation8 + $0x20] sm:$0xff]
    %v3594 = vld [vmem:[#allocation8 + $0x28] sm:$0xff]
    %v3595 = vld [vmem:[#allocation8 + $0x30] sm:$0xff]
    %v3596 = vld [vmem:[#allocation8 + $0x38] sm:$0xff]
    %v3597 = vld [vmem:[#allocation8 + $0x40] sm:$0xff]
    %v3598 = vld [vmem:[#allocation8 + $0x48] sm:$0xff]
    %v3599 = vld [vmem:[#allocation8 + $0x50] sm:$0xff]
    %v3600 = vld [vmem:[#allocation8 + $0x58] sm:$0xff]
    %v3601 = vld [vmem:[#allocation8 + $0x60] sm:$0xff]
    %v3602 = vld [vmem:[#allocation8 + $0x68] sm:$0xff]
    %v3603 = vld [vmem:[#allocation8 + $0x70] sm:$0xff]
    %v3604 = vld [vmem:[#allocation8 + $0x78] sm:$0xff]
    %v3605 = vld [vmem:[#allocation8 + $0x80] sm:$0xff]
    %v3606 = vld [vmem:[#allocation8 + $0x88] sm:$0xff]
    %v3607 = vld [vmem:[#allocation8 + $0x90] sm:$0xff]
    %v3608 = vld [vmem:[#allocation8 + $0x98] sm:$0xff]
    %v3609 = vld [vmem:[#allocation8 + $0xa0] sm:$0xff]
    %v3610 = vld [vmem:[#allocation8 + $0xa8] sm:$0xff]
    %v3611 = vld [vmem:[#allocation8 + $0xb0] sm:$0xff]
    %v3612 = vld [vmem:[#allocation8 + $0xb8] sm:$0xff]
    %v3613 = vld [vmem:[#allocation8 + $0xc0] sm:$0xff]
    %v3614 = vld [vmem:[#allocation8 + $0xc8] sm:$0xff]
    %v3615 = vld [vmem:[#allocation8 + $0xd0] sm:$0xff]
    %v3616 = vld [vmem:[#allocation8 + $0xd8] sm:$0xff]
    %v3617 = vld [vmem:[#allocation8 + $0xe0] sm:$0xff]
    %v3618 = vld [vmem:[#allocation8 + $0xe8] sm:$0xff]
    %v3619 = vld [vmem:[#allocation8 + $0xf0] sm:$0xff]
    %v3620 = vld [vmem:[#allocation8 + $0xf8] sm:$0xff]
    %v3621 = vld [vmem:[#allocation8 + $0x100] sm:$0xff]
    %v3622 = vld [vmem:[#allocation8 + $0x108] sm:$0xff]
    %v3623 = vld [vmem:[#allocation8 + $0x110] sm:$0xff]
    %v3624 = vld [vmem:[#allocation8 + $0x118] sm:$0xff]
    %v3625 = vld [vmem:[#allocation8 + $0x120] sm:$0xff]
    %v3626 = vld [vmem:[#allocation8 + $0x128] sm:$0xff]
    %v3627 = vld [vmem:[#allocation8 + $0x130] sm:$0xff]
    %v3628 = vld [vmem:[#allocation8 + $0x138] sm:$0xff]
    %v3629 = vld [vmem:[#allocation8 + $0x140] sm:$0xff]
    %v3630 = vld [vmem:[#allocation8 + $0x148] sm:$0xff]
    %v3631 = vld [vmem:[#allocation8 + $0x150] sm:$0xff]
    %v3632 = vld [vmem:[#allocation8 + $0x158] sm:$0xff]
    %v3633 = vld [vmem:[#allocation8 + $0x160] sm:$0xff]
    %v3634 = vld [vmem:[#allocation8 + $0x168] sm:$0xff]
    %v3635 = vld [vmem:[#allocation8 + $0x170] sm:$0xff]
    %v3636 = vld [vmem:[#allocation8 + $0x178] sm:$0xff]
    %v3637 = vld [vmem:[#allocation8 + $0x180] sm:$0xff]
    %v3638 = vld [vmem:[#allocation8 + $0x188] sm:$0xff]
    %v3639 = vld [vmem:[#allocation8 + $0x190] sm:$0xff]
    %v3640 = vld [vmem:[#allocation8 + $0x198] sm:$0xff]
    %v3641 = vld [vmem:[#allocation8 + $0x1a0] sm:$0xff]
    %v3642 = vld [vmem:[#allocation8 + $0x1a8] sm:$0xff]
    %v3643 = vld [vmem:[#allocation8 + $0x1b0] sm:$0xff]
    %v3644 = vld [vmem:[#allocation8 + $0x1b8] sm:$0xff]
    %v3645 = vld [vmem:[#allocation8 + $0x1c0] sm:$0xff]
    %v3646 = vld [vmem:[#allocation8 + $0x1c8] sm:$0xff]
    %v3647 = vld [vmem:[#allocation8 + $0x1d0] sm:$0xff]
    %v3648 = vld [vmem:[#allocation8 + $0x1d8] sm:$0xff]
    %v3649 = vld [vmem:[#allocation8 + $0x1e0] sm:$0xff]
    %v3650 = vld [vmem:[#allocation8 + $0x1e8] sm:$0xff]
    %v3651 = vld [vmem:[#allocation8 + $0x1f0] sm:$0xff]
    %v3652 = vld [vmem:[#allocation8 + $0x1f8] sm:$0xff]
    %v3653 = vld [vmem:[#allocation8 + $0x200] sm:$0xff]
    %v3654 = vld [vmem:[#allocation8 + $0x208] sm:$0xff]
    %v3655 = vld [vmem:[#allocation8 + $0x210] sm:$0xff]
    %v3656 = vld [vmem:[#allocation8 + $0x218] sm:$0xff]
    %v3657 = vld [vmem:[#allocation8 + $0x220] sm:$0xff]
    %v3658 = vld [vmem:[#allocation8 + $0x228] sm:$0xff]
    %v3659 = vld [vmem:[#allocation8 + $0x230] sm:$0xff]
    %v3660 = vld [vmem:[#allocation8 + $0x238] sm:$0xff]
    %v3661 = vld [vmem:[#allocation8 + $0x240] sm:$0xff]
    %v3662 = vld [vmem:[#allocation8 + $0x248] sm:$0xff]
    %v3663 = vld [vmem:[#allocation8 + $0x250] sm:$0xff]
    %v3664 = vld [vmem:[#allocation8 + $0x258] sm:$0xff]
    %v3665 = vld [vmem:[#allocation8 + $0x260] sm:$0xff]
    %v3666 = vld [vmem:[#allocation8 + $0x268] sm:$0xff]
    %v3667 = vld [vmem:[#allocation8 + $0x270] sm:$0xff]
    %v3668 = vld [vmem:[#allocation8 + $0x278] sm:$0xff]
    %v3669 = vld [vmem:[#allocation8 + $0x280] sm:$0xff]
    %v3670 = vld [vmem:[#allocation8 + $0x288] sm:$0xff]
    %v3671 = vld [vmem:[#allocation8 + $0x290] sm:$0xff]
    %v3672 = vld [vmem:[#allocation8 + $0x298] sm:$0xff]
    %v3673 = vld [vmem:[#allocation8 + $0x2a0] sm:$0xff]
    %v3674 = vld [vmem:[#allocation8 + $0x2a8] sm:$0xff]
    %v3675 = vld [vmem:[#allocation8 + $0x2b0] sm:$0xff]
    %v3676 = vld [vmem:[#allocation8 + $0x2b8] sm:$0xff]
    %v3677 = vld [vmem:[#allocation8 + $0x2c0] sm:$0xff]
    %v3678 = vld [vmem:[#allocation8 + $0x2c8] sm:$0xff]
    %v3679 = vld [vmem:[#allocation8 + $0x2d0] sm:$0xff]
    %v3680 = vld [vmem:[#allocation8 + $0x2d8] sm:$0xff]
    %v3681 = vld [vmem:[#allocation8 + $0x2e0] sm:$0xff]
    %v3682 = vld [vmem:[#allocation8 + $0x2e8] sm:$0xff]
    %v3683 = vld [vmem:[#allocation8 + $0x2f0] sm:$0xff]
    %v3684 = vld [vmem:[#allocation8 + $0x2f8] sm:$0xff]
    %v3685 = vld [vmem:[#allocation8 + $0x300] sm:$0xff]
    %v3686 = vld [vmem:[#allocation8 + $0x308] sm:$0xff]
    %v3687 = vld [vmem:[#allocation8 + $0x310] sm:$0xff]
    %v3688 = vld [vmem:[#allocation8 + $0x318] sm:$0xff]
    %v3689 = vld [vmem:[#allocation8 + $0x320] sm:$0xff]
    %v3690 = vld [vmem:[#allocation8 + $0x328] sm:$0xff]
    %v3691 = vld [vmem:[#allocation8 + $0x330] sm:$0xff]
    %v3692 = vld [vmem:[#allocation8 + $0x338] sm:$0xff]
    %v3693 = vld [vmem:[#allocation8 + $0x340] sm:$0xff]
    %v3694 = vld [vmem:[#allocation8 + $0x348] sm:$0xff]
    %v3695 = vld [vmem:[#allocation8 + $0x350] sm:$0xff]
    %v3696 = vld [vmem:[#allocation8 + $0x358] sm:$0xff]
    %v3697 = vld [vmem:[#allocation8 + $0x360] sm:$0xff]
    %v3698 = vld [vmem:[#allocation8 + $0x368] sm:$0xff]
    %v3699 = vld [vmem:[#allocation8 + $0x370] sm:$0xff]
    %v3700 = vld [vmem:[#allocation8 + $0x378] sm:$0xff]
    %v3701 = vld [vmem:[#allocation8 + $0x380] sm:$0xff]
    %v3702 = vld [vmem:[#allocation8 + $0x388] sm:$0xff]
    %v3703 = vld [vmem:[#allocation8 + $0x390] sm:$0xff]
    %v3704 = vld [vmem:[#allocation8 + $0x398] sm:$0xff]
    %v3705 = vld [vmem:[#allocation8 + $0x3a0] sm:$0xff]
    %v3706 = vld [vmem:[#allocation8 + $0x3a8] sm:$0xff]
    %v3707 = vld [vmem:[#allocation8 + $0x3b0] sm:$0xff]
    %v3708 = vld [vmem:[#allocation8 + $0x3b8] sm:$0xff]
    %v3709 = vld [vmem:[#allocation8 + $0x3c0] sm:$0xff]
    %v3710 = vld [vmem:[#allocation8 + $0x3c8] sm:$0xff]
    %v3711 = vld [vmem:[#allocation8 + $0x3d0] sm:$0xff]
    %v3712 = vld [vmem:[#allocation8 + $0x3d8] sm:$0xff]
    %v3713 = vld [vmem:[#allocation8 + $0x3e0] sm:$0xff]
    %v3714 = vld [vmem:[#allocation8 + $0x3e8] sm:$0xff]
    %v3715 = vld [vmem:[#allocation8 + $0x3f0] sm:$0xff]
    %v3716 = vld [vmem:[#allocation8 + $0x3f8] sm:$0xff]
    %v3717 = vld [vmem:[#allocation8 + $0x400] sm:$0xff]
    %v3718 = vld [vmem:[#allocation8 + $0x408] sm:$0xff]
    %v3719 = vld [vmem:[#allocation8 + $0x410] sm:$0xff]
    %v3720 = vld [vmem:[#allocation8 + $0x418] sm:$0xff]
    %v3721 = vld [vmem:[#allocation8 + $0x420] sm:$0xff]
    %v3722 = vld [vmem:[#allocation8 + $0x428] sm:$0xff]
    %v3723 = vld [vmem:[#allocation8 + $0x430] sm:$0xff]
    %v3724 = vld [vmem:[#allocation8 + $0x438] sm:$0xff]
    %v3725 = vld [vmem:[#allocation8 + $0x440] sm:$0xff]
    %v3726 = vld [vmem:[#allocation8 + $0x448] sm:$0xff]
    %v3727 = vld [vmem:[#allocation8 + $0x450] sm:$0xff]
    %v3728 = vld [vmem:[#allocation8 + $0x458] sm:$0xff]
    %v3729 = vld [vmem:[#allocation8 + $0x460] sm:$0xff]
    %v3730 = vld [vmem:[#allocation8 + $0x468] sm:$0xff]
    %v3731 = vld [vmem:[#allocation8 + $0x470] sm:$0xff]
    %v3732 = vld [vmem:[#allocation8 + $0x478] sm:$0xff]
    %v3733 = vld [vmem:[#allocation8 + $0x480] sm:$0xff]
    %v3734 = vld [vmem:[#allocation8 + $0x488] sm:$0xff]
    %v3735 = vld [vmem:[#allocation8 + $0x490] sm:$0xff]
    %v3736 = vld [vmem:[#allocation8 + $0x498] sm:$0xff]
    %v3737 = vld [vmem:[#allocation8 + $0x4a0] sm:$0xff]
    %v3738 = vld [vmem:[#allocation8 + $0x4a8] sm:$0xff]
    %v3739 = vld [vmem:[#allocation8 + $0x4b0] sm:$0xff]
    %v3740 = vld [vmem:[#allocation8 + $0x4b8] sm:$0xff]
    %v3741 = vld [vmem:[#allocation8 + $0x4c0] sm:$0xff]
    %v3742 = vld [vmem:[#allocation8 + $0x4c8] sm:$0xff]
    %v3743 = vld [vmem:[#allocation8 + $0x4d0] sm:$0xff]
    %v3744 = vld [vmem:[#allocation8 + $0x4d8] sm:$0xff]
    %v3745 = vld [vmem:[#allocation8 + $0x4e0] sm:$0xff]
    %v3746 = vld [vmem:[#allocation8 + $0x4e8] sm:$0xff]
    %v3747 = vld [vmem:[#allocation8 + $0x4f0] sm:$0xff]
    %v3748 = vld [vmem:[#allocation8 + $0x4f8] sm:$0xff]
    %v3749 = vld [vmem:[#allocation8 + $0x500] sm:$0xff]
    %v3750 = vld [vmem:[#allocation8 + $0x508] sm:$0xff]
    %v3751 = vld [vmem:[#allocation8 + $0x510] sm:$0xff]
    %v3752 = vld [vmem:[#allocation8 + $0x518] sm:$0xff]
    %v3753 = vld [vmem:[#allocation8 + $0x520] sm:$0xff]
    %v3754 = vld [vmem:[#allocation8 + $0x528] sm:$0xff]
    %v3755 = vld [vmem:[#allocation8 + $0x530] sm:$0xff]
    %v3756 = vld [vmem:[#allocation8 + $0x538] sm:$0xff]
    %v3757 = vld [vmem:[#allocation8 + $0x540] sm:$0xff]
    %v3758 = vld [vmem:[#allocation8 + $0x548] sm:$0xff]
    %v3759 = vld [vmem:[#allocation8 + $0x550] sm:$0xff]
    %v3760 = vld [vmem:[#allocation8 + $0x558] sm:$0xff]
    %v3761 = vld [vmem:[#allocation8 + $0x560] sm:$0xff]
    %v3762 = vld [vmem:[#allocation8 + $0x568] sm:$0xff]
    %v3763 = vld [vmem:[#allocation8 + $0x570] sm:$0xff]
    %v3764 = vld [vmem:[#allocation8 + $0x578] sm:$0xff]
    %v3765 = vld [vmem:[#allocation8 + $0x580] sm:$0xff]
    %v3766 = vld [vmem:[#allocation8 + $0x588] sm:$0xff]
    %v3767 = vld [vmem:[#allocation8 + $0x590] sm:$0xff]
    %v3768 = vld [vmem:[#allocation8 + $0x598] sm:$0xff]
    %v3769 = vld [vmem:[#allocation8 + $0x5a0] sm:$0xff]
    %v3770 = vld [vmem:[#allocation8 + $0x5a8] sm:$0xff]
    %v3771 = vld [vmem:[#allocation8 + $0x5b0] sm:$0xff]
    %v3772 = vld [vmem:[#allocation8 + $0x5b8] sm:$0xff]
    %v3773 = vld [vmem:[#allocation8 + $0x5c0] sm:$0xff]
    %v3774 = vld [vmem:[#allocation8 + $0x5c8] sm:$0xff]
    %v3775 = vld [vmem:[#allocation8 + $0x5d0] sm:$0xff]
    %v3776 = vld [vmem:[#allocation8 + $0x5d8] sm:$0xff]
    %v3777 = vld [vmem:[#allocation8 + $0x5e0] sm:$0xff]
    %v3778 = vld [vmem:[#allocation8 + $0x5e8] sm:$0xff]
    %v3779 = vld [vmem:[#allocation8 + $0x5f0] sm:$0xff]
    %v3780 = vld [vmem:[#allocation8 + $0x5f8] sm:$0xff]
    %v3781 = vld [vmem:[#allocation8 + $0x600] sm:$0xff]
    %v3782 = vld [vmem:[#allocation8 + $0x608] sm:$0xff]
    %v3783 = vld [vmem:[#allocation8 + $0x610] sm:$0xff]
    %v3784 = vld [vmem:[#allocation8 + $0x618] sm:$0xff]
    %v3785 = vld [vmem:[#allocation8 + $0x620] sm:$0xff]
    %v3786 = vld [vmem:[#allocation8 + $0x628] sm:$0xff]
    %v3787 = vld [vmem:[#allocation8 + $0x630] sm:$0xff]
    %v3788 = vld [vmem:[#allocation8 + $0x638] sm:$0xff]
    %v3789 = vld [vmem:[#allocation8 + $0x640] sm:$0xff]
    %v3790 = vld [vmem:[#allocation8 + $0x648] sm:$0xff]
    %v3791 = vld [vmem:[#allocation8 + $0x650] sm:$0xff]
    %v3792 = vld [vmem:[#allocation8 + $0x658] sm:$0xff]
    %v3793 = vld [vmem:[#allocation8 + $0x660] sm:$0xff]
    %v3794 = vld [vmem:[#allocation8 + $0x668] sm:$0xff]
    %v3795 = vld [vmem:[#allocation8 + $0x670] sm:$0xff]
    %v3796 = vld [vmem:[#allocation8 + $0x678] sm:$0xff]
    %v3797 = vld [vmem:[#allocation8 + $0x680] sm:$0xff]
    %v3798 = vld [vmem:[#allocation8 + $0x688] sm:$0xff]
    %v3799 = vld [vmem:[#allocation8 + $0x690] sm:$0xff]
    %v3800 = vld [vmem:[#allocation8 + $0x698] sm:$0xff]
    %v3801 = vld [vmem:[#allocation8 + $0x6a0] sm:$0xff]
    %v3802 = vld [vmem:[#allocation8 + $0x6a8] sm:$0xff]
    %v3803 = vld [vmem:[#allocation8 + $0x6b0] sm:$0xff]
    %v3804 = vld [vmem:[#allocation8 + $0x6b8] sm:$0xff]
    %v3805 = vld [vmem:[#allocation8 + $0x6c0] sm:$0xff]
    %v3806 = vld [vmem:[#allocation8 + $0x6c8] sm:$0xff]
    %v3807 = vld [vmem:[#allocation8 + $0x6d0] sm:$0xff]
    %v3808 = vld [vmem:[#allocation8 + $0x6d8] sm:$0xff]
    %v3809 = vld [vmem:[#allocation8 + $0x6e0] sm:$0xff]
    %v3810 = vld [vmem:[#allocation8 + $0x6e8] sm:$0xff]
    %v3811 = vld [vmem:[#allocation8 + $0x6f0] sm:$0xff]
    %v3812 = vld [vmem:[#allocation8 + $0x6f8] sm:$0xff]
    %v3813 = vld [vmem:[#allocation8 + $0x700] sm:$0xff]
    %v3814 = vld [vmem:[#allocation8 + $0x708] sm:$0xff]
    %v3815 = vld [vmem:[#allocation8 + $0x710] sm:$0xff]
    %v3816 = vld [vmem:[#allocation8 + $0x718] sm:$0xff]
    %v3817 = vld [vmem:[#allocation8 + $0x720] sm:$0xff]
    %v3818 = vld [vmem:[#allocation8 + $0x728] sm:$0xff]
    %v3819 = vld [vmem:[#allocation8 + $0x730] sm:$0xff]
    %v3820 = vld [vmem:[#allocation8 + $0x738] sm:$0xff]
    %v3821 = vld [vmem:[#allocation8 + $0x740] sm:$0xff]
    %v3822 = vld [vmem:[#allocation8 + $0x748] sm:$0xff]
    %v3823 = vld [vmem:[#allocation8 + $0x750] sm:$0xff]
    %v3824 = vld [vmem:[#allocation8 + $0x758] sm:$0xff]
    %v3825 = vld [vmem:[#allocation8 + $0x760] sm:$0xff]
    %v3826 = vld [vmem:[#allocation8 + $0x768] sm:$0xff]
    %v3827 = vld [vmem:[#allocation8 + $0x770] sm:$0xff]
    %v3828 = vld [vmem:[#allocation8 + $0x778] sm:$0xff]
    %v3829 = vld [vmem:[#allocation8 + $0x780] sm:$0xff]
    %v3830 = vld [vmem:[#allocation8 + $0x788] sm:$0xff]
    %v3831 = vld [vmem:[#allocation8 + $0x790] sm:$0xff]
    %v3832 = vld [vmem:[#allocation8 + $0x798] sm:$0xff]
    %v3833 = vld [vmem:[#allocation8 + $0x7a0] sm:$0xff]
    %v3834 = vld [vmem:[#allocation8 + $0x7a8] sm:$0xff]
    %v3835 = vld [vmem:[#allocation8 + $0x7b0] sm:$0xff]
    %v3836 = vld [vmem:[#allocation8 + $0x7b8] sm:$0xff]
    %v3837 = vld [vmem:[#allocation8 + $0x7c0] sm:$0xff]
    %v3838 = vld [vmem:[#allocation8 + $0x7c8] sm:$0xff]
    %v3839 = vld [vmem:[#allocation8 + $0x7d0] sm:$0xff]
    %v3840 = vld [vmem:[#allocation8 + $0x7d8] sm:$0xff]
    %v3841 = vld [vmem:[#allocation8 + $0x7e0] sm:$0xff]
    %v3842 = vld [vmem:[#allocation8 + $0x7e8] sm:$0xff]
    %v3843 = vld [vmem:[#allocation8 + $0x7f0] sm:$0xff]
    %v3844 = vld [vmem:[#allocation8 + $0x7f8] sm:$0xff]
    %v3845 = vld [vmem:[#allocation8 + $0x800] sm:$0xff]
    %v3846 = vld [vmem:[#allocation8 + $0x808] sm:$0xff]
    %v3847 = vld [vmem:[#allocation8 + $0x810] sm:$0xff]
    %v3848 = vld [vmem:[#allocation8 + $0x818] sm:$0xff]
    %v3849 = vld [vmem:[#allocation8 + $0x820] sm:$0xff]
    %v3850 = vld [vmem:[#allocation8 + $0x828] sm:$0xff]
    %v3851 = vld [vmem:[#allocation8 + $0x830] sm:$0xff]
    %v3852 = vld [vmem:[#allocation8 + $0x838] sm:$0xff]
    %v3853 = vld [vmem:[#allocation8 + $0x840] sm:$0xff]
    %v3854 = vld [vmem:[#allocation8 + $0x848] sm:$0xff]
    %v3855 = vld [vmem:[#allocation8 + $0x850] sm:$0xff]
    %v3856 = vld [vmem:[#allocation8 + $0x858] sm:$0xff]
    %v3857 = vld [vmem:[#allocation8 + $0x860] sm:$0xff]
    %v3858 = vld [vmem:[#allocation8 + $0x868] sm:$0xff]
    %v3859 = vld [vmem:[#allocation8 + $0x870] sm:$0xff]
    %v3860 = vld [vmem:[#allocation8 + $0x878] sm:$0xff]
    %v3861 = vld [vmem:[#allocation8 + $0x880] sm:$0xff]
    %v3862 = vld [vmem:[#allocation8 + $0x888] sm:$0xff]
    %v3863 = vld [vmem:[#allocation8 + $0x890] sm:$0xff]
    %v3864 = vld [vmem:[#allocation8 + $0x898] sm:$0xff]
    %v3865 = vld [vmem:[#allocation8 + $0x8a0] sm:$0xff]
    %v3866 = vld [vmem:[#allocation8 + $0x8a8] sm:$0xff]
    %v3867 = vld [vmem:[#allocation8 + $0x8b0] sm:$0xff]
    %v3868 = vld [vmem:[#allocation8 + $0x8b8] sm:$0xff]
    %v3869 = vld [vmem:[#allocation8 + $0x8c0] sm:$0xff]
    %v3870 = vld [vmem:[#allocation8 + $0x8c8] sm:$0xff]
    %v3871 = vld [vmem:[#allocation8 + $0x8d0] sm:$0xff]
    %v3872 = vld [vmem:[#allocation8 + $0x8d8] sm:$0xff]
    %v3873 = vld [vmem:[#allocation8 + $0x8e0] sm:$0xff]
    %v3874 = vld [vmem:[#allocation8 + $0x8e8] sm:$0xff]
    %v3875 = vld [vmem:[#allocation8 + $0x8f0] sm:$0xff]
    %v3876 = vld [vmem:[#allocation8 + $0x8f8] sm:$0xff]
    %v3877 = vld [vmem:[#allocation8 + $0x900] sm:$0xff]
    %v3878 = vld [vmem:[#allocation8 + $0x908] sm:$0xff]
    %v3879 = vld [vmem:[#allocation8 + $0x910] sm:$0xff]
    %v3880 = vld [vmem:[#allocation8 + $0x918] sm:$0xff]
    %v3881 = vld [vmem:[#allocation8 + $0x920] sm:$0xff]
    %v3882 = vld [vmem:[#allocation8 + $0x928] sm:$0xff]
    %v3883 = vld [vmem:[#allocation8 + $0x930] sm:$0xff]
    %v3884 = vld [vmem:[#allocation8 + $0x938] sm:$0xff]
    %v3885 = vld [vmem:[#allocation8 + $0x940] sm:$0xff]
    %v3886 = vld [vmem:[#allocation8 + $0x948] sm:$0xff]
    %v3887 = vld [vmem:[#allocation8 + $0x950] sm:$0xff]
    %v3888 = vld [vmem:[#allocation8 + $0x958] sm:$0xff]
    %v3889 = vld [vmem:[#allocation8 + $0x960] sm:$0xff]
    %v3890 = vld [vmem:[#allocation8 + $0x968] sm:$0xff]
    %v3891 = vld [vmem:[#allocation8 + $0x970] sm:$0xff]
    %v3892 = vld [vmem:[#allocation8 + $0x978] sm:$0xff]
    %v3893 = vld [vmem:[#allocation8 + $0x980] sm:$0xff]
    %v3894 = vld [vmem:[#allocation8 + $0x988] sm:$0xff]
    %v3895 = vld [vmem:[#allocation8 + $0x990] sm:$0xff]
    %v3896 = vld [vmem:[#allocation8 + $0x998] sm:$0xff]
    %v3897 = vld [vmem:[#allocation8 + $0x9a0] sm:$0xff]
    %v3898 = vld [vmem:[#allocation8 + $0x9a8] sm:$0xff]
    %v3899 = vld [vmem:[#allocation8 + $0x9b0] sm:$0xff]
    %v3900 = vld [vmem:[#allocation8 + $0x9b8] sm:$0xff]
    %v3901 = vld [vmem:[#allocation8 + $0x9c0] sm:$0xff]
    %v3902 = vld [vmem:[#allocation8 + $0x9c8] sm:$0xff]
    %v3903 = vld [vmem:[#allocation8 + $0x9d0] sm:$0xff]
    %v3904 = vld [vmem:[#allocation8 + $0x9d8] sm:$0xff]
    %v3905 = vld [vmem:[#allocation8 + $0x9e0] sm:$0xff]
    %v3906 = vld [vmem:[#allocation8 + $0x9e8] sm:$0xff]
    %v3907 = vld [vmem:[#allocation8 + $0x9f0] sm:$0xff]
    %v3908 = vld [vmem:[#allocation8 + $0x9f8] sm:$0xff]
    %v3909 = vld [vmem:[#allocation8 + $0xa00] sm:$0xff]
    %v3910 = vld [vmem:[#allocation8 + $0xa08] sm:$0xff]
    %v3911 = vld [vmem:[#allocation8 + $0xa10] sm:$0xff]
    %v3912 = vld [vmem:[#allocation8 + $0xa18] sm:$0xff]
    %v3913 = vld [vmem:[#allocation8 + $0xa20] sm:$0xff]
    %v3914 = vld [vmem:[#allocation8 + $0xa28] sm:$0xff]
    %v3915 = vld [vmem:[#allocation8 + $0xa30] sm:$0xff]
    %v3916 = vld [vmem:[#allocation8 + $0xa38] sm:$0xff]
    %v3917 = vld [vmem:[#allocation8 + $0xa40] sm:$0xff]
    %v3918 = vld [vmem:[#allocation8 + $0xa48] sm:$0xff]
    %v3919 = vld [vmem:[#allocation8 + $0xa50] sm:$0xff]
    %v3920 = vld [vmem:[#allocation8 + $0xa58] sm:$0xff]
    %v3921 = vld [vmem:[#allocation8 + $0xa60] sm:$0xff]
    %v3922 = vld [vmem:[#allocation8 + $0xa68] sm:$0xff]
    %v3923 = vld [vmem:[#allocation8 + $0xa70] sm:$0xff]
    %v3924 = vld [vmem:[#allocation8 + $0xa78] sm:$0xff]
    %v3925 = vld [vmem:[#allocation8 + $0xa80] sm:$0xff]
    %v3926 = vld [vmem:[#allocation8 + $0xa88] sm:$0xff]
    %v3927 = vld [vmem:[#allocation8 + $0xa90] sm:$0xff]
    %v3928 = vld [vmem:[#allocation8 + $0xa98] sm:$0xff]
    %v3929 = vld [vmem:[#allocation8 + $0xaa0] sm:$0xff]
    %v3930 = vld [vmem:[#allocation8 + $0xaa8] sm:$0xff]
    %v3931 = vld [vmem:[#allocation8 + $0xab0] sm:$0xff]
    %v3932 = vld [vmem:[#allocation8 + $0xab8] sm:$0xff]
    %v3933 = vld [vmem:[#allocation8 + $0xac0] sm:$0xff]
    %v3934 = vld [vmem:[#allocation8 + $0xac8] sm:$0xff]
    %v3935 = vld [vmem:[#allocation8 + $0xad0] sm:$0xff]
    %v3936 = vld [vmem:[#allocation8 + $0xad8] sm:$0xff]
    %v3937 = vld [vmem:[#allocation8 + $0xae0] sm:$0xff]
    %v3938 = vld [vmem:[#allocation8 + $0xae8] sm:$0xff]
    %v3939 = vld [vmem:[#allocation8 + $0xaf0] sm:$0xff]
    %v3940 = vld [vmem:[#allocation8 + $0xaf8] sm:$0xff]
    %v3941 = vld [vmem:[#allocation8 + $0xb00] sm:$0xff]
    %v3942 = vld [vmem:[#allocation8 + $0xb08] sm:$0xff]
    %v3943 = vld [vmem:[#allocation8 + $0xb10] sm:$0xff]
    %v3944 = vld [vmem:[#allocation8 + $0xb18] sm:$0xff]
    %v3945 = vld [vmem:[#allocation8 + $0xb20] sm:$0xff]
    %v3946 = vld [vmem:[#allocation8 + $0xb28] sm:$0xff]
    %v3947 = vld [vmem:[#allocation8 + $0xb30] sm:$0xff]
    %v3948 = vld [vmem:[#allocation8 + $0xb38] sm:$0xff]
    %v3949 = vld [vmem:[#allocation8 + $0xb40] sm:$0xff]
    %v3950 = vld [vmem:[#allocation8 + $0xb48] sm:$0xff]
    %v3951 = vld [vmem:[#allocation8 + $0xb50] sm:$0xff]
    %v3952 = vld [vmem:[#allocation8 + $0xb58] sm:$0xff]
    %v3953 = vld [vmem:[#allocation8 + $0xb60] sm:$0xff]
    %v3954 = vld [vmem:[#allocation8 + $0xb68] sm:$0xff]
    %v3955 = vld [vmem:[#allocation8 + $0xb70] sm:$0xff]
    %v3956 = vld [vmem:[#allocation8 + $0xb78] sm:$0xff]
    %v3957 = vld [vmem:[#allocation8 + $0xb80] sm:$0xff]
    %v3958 = vld [vmem:[#allocation8 + $0xb88] sm:$0xff]
    %v3959 = vld [vmem:[#allocation8 + $0xb90] sm:$0xff]
    %v3960 = vld [vmem:[#allocation8 + $0xb98] sm:$0xff]
    %v3961 = vld [vmem:[#allocation8 + $0xba0] sm:$0xff]
    %v3962 = vld [vmem:[#allocation8 + $0xba8] sm:$0xff]
    %v3963 = vld [vmem:[#allocation8 + $0xbb0] sm:$0xff]
    %v3964 = vld [vmem:[#allocation8 + $0xbb8] sm:$0xff]
    %v3965 = vld [vmem:[#allocation8 + $0xbc0] sm:$0xff]
    %v3966 = vld [vmem:[#allocation8 + $0xbc8] sm:$0xff]
    %v3967 = vld [vmem:[#allocation8 + $0xbd0] sm:$0xff]
    %v3968 = vld [vmem:[#allocation8 + $0xbd8] sm:$0xff]
    %v3969 = vld [vmem:[#allocation8 + $0xbe0] sm:$0xff]
    %v3970 = vld [vmem:[#allocation8 + $0xbe8] sm:$0xff]
    %v3971 = vld [vmem:[#allocation8 + $0xbf0] sm:$0xff]
    %v3972 = vld [vmem:[#allocation8 + $0xbf8] sm:$0xff]
    %v3973 = vld [vmem:[#allocation8 + $0xc00] sm:$0xff]
    %v3974 = vld [vmem:[#allocation8 + $0xc08] sm:$0xff]
    %v3975 = vld [vmem:[#allocation8 + $0xc10] sm:$0xff]
    %v3976 = vld [vmem:[#allocation8 + $0xc18] sm:$0xff]
    %v3977 = vld [vmem:[#allocation8 + $0xc20] sm:$0xff]
    %v3978 = vld [vmem:[#allocation8 + $0xc28] sm:$0xff]
    %v3979 = vld [vmem:[#allocation8 + $0xc30] sm:$0xff]
    %v3980 = vld [vmem:[#allocation8 + $0xc38] sm:$0xff]
    %v3981 = vld [vmem:[#allocation8 + $0xc40] sm:$0xff]
    %v3982 = vld [vmem:[#allocation8 + $0xc48] sm:$0xff]
    %v3983 = vld [vmem:[#allocation8 + $0xc50] sm:$0xff]
    %v3984 = vld [vmem:[#allocation8 + $0xc58] sm:$0xff]
    %v3985 = vld [vmem:[#allocation8 + $0xc60] sm:$0xff]
    %v3986 = vld [vmem:[#allocation8 + $0xc68] sm:$0xff]
    %v3987 = vld [vmem:[#allocation8 + $0xc70] sm:$0xff]
    %v3988 = vld [vmem:[#allocation8 + $0xc78] sm:$0xff]
    %v3989 = vld [vmem:[#allocation8 + $0xc80] sm:$0xff]
    %v3990 = vld [vmem:[#allocation8 + $0xc88] sm:$0xff]
    %v3991 = vld [vmem:[#allocation8 + $0xc90] sm:$0xff]
    %v3992 = vld [vmem:[#allocation8 + $0xc98] sm:$0xff]
    %v3993 = vld [vmem:[#allocation8 + $0xca0] sm:$0xff]
    %v3994 = vld [vmem:[#allocation8 + $0xca8] sm:$0xff]
    %v3995 = vld [vmem:[#allocation8 + $0xcb0] sm:$0xff]
    %v3996 = vld [vmem:[#allocation8 + $0xcb8] sm:$0xff]
    %v3997 = vld [vmem:[#allocation8 + $0xcc0] sm:$0xff]
    %v3998 = vld [vmem:[#allocation8 + $0xcc8] sm:$0xff]
    %v3999 = vld [vmem:[#allocation8 + $0xcd0] sm:$0xff]
    %v4000 = vld [vmem:[#allocation8 + $0xcd8] sm:$0xff]
    %v4001 = vld [vmem:[#allocation8 + $0xce0] sm:$0xff]
    %v4002 = vld [vmem:[#allocation8 + $0xce8] sm:$0xff]
    %v4003 = vld [vmem:[#allocation8 + $0xcf0] sm:$0xff]
    %v4004 = vld [vmem:[#allocation8 + $0xcf8] sm:$0xff]
    %v4005 = vld [vmem:[#allocation8 + $0xd00] sm:$0xff]
    %v4006 = vld [vmem:[#allocation8 + $0xd08] sm:$0xff]
    %v4007 = vld [vmem:[#allocation8 + $0xd10] sm:$0xff]
    %v4008 = vld [vmem:[#allocation8 + $0xd18] sm:$0xff]
    %v4009 = vld [vmem:[#allocation8 + $0xd20] sm:$0xff]
    %v4010 = vld [vmem:[#allocation8 + $0xd28] sm:$0xff]
    %v4011 = vld [vmem:[#allocation8 + $0xd30] sm:$0xff]
    %v4012 = vld [vmem:[#allocation8 + $0xd38] sm:$0xff]
    %v4013 = vld [vmem:[#allocation8 + $0xd40] sm:$0xff]
    %v4014 = vld [vmem:[#allocation8 + $0xd48] sm:$0xff]
    %v4015 = vld [vmem:[#allocation8 + $0xd50] sm:$0xff]
    %v4016 = vld [vmem:[#allocation8 + $0xd58] sm:$0xff]
    %v4017 = vld [vmem:[#allocation8 + $0xd60] sm:$0xff]
    %v4018 = vld [vmem:[#allocation8 + $0xd68] sm:$0xff]
    %v4019 = vld [vmem:[#allocation8 + $0xd70] sm:$0xff]
    %v4020 = vld [vmem:[#allocation8 + $0xd78] sm:$0xff]
    %v4021 = vld [vmem:[#allocation8 + $0xd80] sm:$0xff]
    %v4022 = vld [vmem:[#allocation8 + $0xd88] sm:$0xff]
    %v4023 = vld [vmem:[#allocation8 + $0xd90] sm:$0xff]
    %v4024 = vld [vmem:[#allocation8 + $0xd98] sm:$0xff]
    %v4025 = vld [vmem:[#allocation8 + $0xda0] sm:$0xff]
    %v4026 = vld [vmem:[#allocation8 + $0xda8] sm:$0xff]
    %v4027 = vld [vmem:[#allocation8 + $0xdb0] sm:$0xff]
    %v4028 = vld [vmem:[#allocation8 + $0xdb8] sm:$0xff]
    %v4029 = vld [vmem:[#allocation8 + $0xdc0] sm:$0xff]
    %v4030 = vld [vmem:[#allocation8 + $0xdc8] sm:$0xff]
    %v4031 = vld [vmem:[#allocation8 + $0xdd0] sm:$0xff]
    %v4032 = vld [vmem:[#allocation8 + $0xdd8] sm:$0xff]
    %v4033 = vld [vmem:[#allocation8 + $0xde0] sm:$0xff]
    %v4034 = vld [vmem:[#allocation8 + $0xde8] sm:$0xff]
    %v4035 = vld [vmem:[#allocation8 + $0xdf0] sm:$0xff]
    %v4036 = vld [vmem:[#allocation8 + $0xdf8] sm:$0xff]
    %v4037 = vld [vmem:[#allocation8 + $0xe00] sm:$0xff]
    %v4038 = vld [vmem:[#allocation8 + $0xe08] sm:$0xff]
    %v4039 = vld [vmem:[#allocation8 + $0xe10] sm:$0xff]
    %v4040 = vld [vmem:[#allocation8 + $0xe18] sm:$0xff]
    %v4041 = vld [vmem:[#allocation8 + $0xe20] sm:$0xff]
    %v4042 = vld [vmem:[#allocation8 + $0xe28] sm:$0xff]
    %v4043 = vld [vmem:[#allocation8 + $0xe30] sm:$0xff]
    %v4044 = vld [vmem:[#allocation8 + $0xe38] sm:$0xff]
    %v4045 = vld [vmem:[#allocation8 + $0xe40] sm:$0xff]
    %v4046 = vld [vmem:[#allocation8 + $0xe48] sm:$0xff]
    %v4047 = vld [vmem:[#allocation8 + $0xe50] sm:$0xff]
    %v4048 = vld [vmem:[#allocation8 + $0xe58] sm:$0xff]
    %v4049 = vld [vmem:[#allocation8 + $0xe60] sm:$0xff]
    %v4050 = vld [vmem:[#allocation8 + $0xe68] sm:$0xff]
    %v4051 = vld [vmem:[#allocation8 + $0xe70] sm:$0xff]
    %v4052 = vld [vmem:[#allocation8 + $0xe78] sm:$0xff]
    %v4053 = vld [vmem:[#allocation8 + $0xe80] sm:$0xff]
    %v4054 = vld [vmem:[#allocation8 + $0xe88] sm:$0xff]
    %v4055 = vld [vmem:[#allocation8 + $0xe90] sm:$0xff]
    %v4056 = vld [vmem:[#allocation8 + $0xe98] sm:$0xff]
    %v4057 = vld [vmem:[#allocation8 + $0xea0] sm:$0xff]
    %v4058 = vld [vmem:[#allocation8 + $0xea8] sm:$0xff]
    %v4059 = vld [vmem:[#allocation8 + $0xeb0] sm:$0xff]
    %v4060 = vld [vmem:[#allocation8 + $0xeb8] sm:$0xff]
    %v4061 = vld [vmem:[#allocation8 + $0xec0] sm:$0xff]
    %v4062 = vld [vmem:[#allocation8 + $0xec8] sm:$0xff]
    %v4063 = vld [vmem:[#allocation8 + $0xed0] sm:$0xff]
    %v4064 = vld [vmem:[#allocation8 + $0xed8] sm:$0xff]
    %v4065 = vld [vmem:[#allocation8 + $0xee0] sm:$0xff]
    %v4066 = vld [vmem:[#allocation8 + $0xee8] sm:$0xff]
    %v4067 = vld [vmem:[#allocation8 + $0xef0] sm:$0xff]
    %v4068 = vld [vmem:[#allocation8 + $0xef8] sm:$0xff]
    %v4069 = vld [vmem:[#allocation8 + $0xf00] sm:$0xff]
    %v4070 = vld [vmem:[#allocation8 + $0xf08] sm:$0xff]
    %v4071 = vld [vmem:[#allocation8 + $0xf10] sm:$0xff]
    %v4072 = vld [vmem:[#allocation8 + $0xf18] sm:$0xff]
    %v4073 = vld [vmem:[#allocation8 + $0xf20] sm:$0xff]
    %v4074 = vld [vmem:[#allocation8 + $0xf28] sm:$0xff]
    %v4075 = vld [vmem:[#allocation8 + $0xf30] sm:$0xff]
    %v4076 = vld [vmem:[#allocation8 + $0xf38] sm:$0xff]
    %v4077 = vld [vmem:[#allocation8 + $0xf40] sm:$0xff]
    %v4078 = vld [vmem:[#allocation8 + $0xf48] sm:$0xff]
    %v4079 = vld [vmem:[#allocation8 + $0xf50] sm:$0xff]
    %v4080 = vld [vmem:[#allocation8 + $0xf58] sm:$0xff]
    %v4081 = vld [vmem:[#allocation8 + $0xf60] sm:$0xff]
    %v4082 = vld [vmem:[#allocation8 + $0xf68] sm:$0xff]
    %v4083 = vld [vmem:[#allocation8 + $0xf70] sm:$0xff]
    %v4084 = vld [vmem:[#allocation8 + $0xf78] sm:$0xff]
    %v4085 = vld [vmem:[#allocation8 + $0xf80] sm:$0xff]
    %v4086 = vld [vmem:[#allocation8 + $0xf88] sm:$0xff]
    %v4087 = vld [vmem:[#allocation8 + $0xf90] sm:$0xff]
    %v4088 = vld [vmem:[#allocation8 + $0xf98] sm:$0xff]
    %v4089 = vld [vmem:[#allocation8 + $0xfa0] sm:$0xff]
    %v4090 = vld [vmem:[#allocation8 + $0xfa8] sm:$0xff]
    %v4091 = vld [vmem:[#allocation8 + $0xfb0] sm:$0xff]
    %v4092 = vld [vmem:[#allocation8 + $0xfb8] sm:$0xff]
    %v4093 = vld [vmem:[#allocation8 + $0xfc0] sm:$0xff]
    %v4094 = vld [vmem:[#allocation8 + $0xfc8] sm:$0xff]
    %v4095 = vld [vmem:[#allocation8 + $0xfd0] sm:$0xff]
    %v4096 = vld [vmem:[#allocation8 + $0xfd8] sm:$0xff]
    %v4097 = vld [vmem:[#allocation8 + $0xfe0] sm:$0xff]
    %v4098 = vld [vmem:[#allocation8 + $0xfe8] sm:$0xff]
    %v4099 = vld [vmem:[#allocation8 + $0xff0] sm:$0xff]
    %v4100 = vld [vmem:[#allocation8 + $0xff8] sm:$0xff]
    %v4101 = vld [vmem:[#allocation8 + $0x1000] sm:$0xff]
    %v4102 = vld [vmem:[#allocation8 + $0x1008] sm:$0xff]
    %v4103 = vld [vmem:[#allocation8 + $0x1010] sm:$0xff]
    %v4104 = vld [vmem:[#allocation8 + $0x1018] sm:$0xff]
    %v4105 = vld [vmem:[#allocation8 + $0x1020] sm:$0xff]
    %v4106 = vld [vmem:[#allocation8 + $0x1028] sm:$0xff]
    %v4107 = vld [vmem:[#allocation8 + $0x1030] sm:$0xff]
    %v4108 = vld [vmem:[#allocation8 + $0x1038] sm:$0xff]
    %v4109 = vld [vmem:[#allocation8 + $0x1040] sm:$0xff]
    %v4110 = vld [vmem:[#allocation8 + $0x1048] sm:$0xff]
    %v4111 = vld [vmem:[#allocation8 + $0x1050] sm:$0xff]
    %v4112 = vld [vmem:[#allocation8 + $0x1058] sm:$0xff]
    %v4113 = vld [vmem:[#allocation8 + $0x1060] sm:$0xff]
    %v4114 = vld [vmem:[#allocation8 + $0x1068] sm:$0xff]
    %v4115 = vld [vmem:[#allocation8 + $0x1070] sm:$0xff]
    %v4116 = vld [vmem:[#allocation8 + $0x1078] sm:$0xff]
    %v4117 = vld [vmem:[#allocation8 + $0x1080] sm:$0xff]
    %v4118 = vld [vmem:[#allocation8 + $0x1088] sm:$0xff]
    %v4119 = vld [vmem:[#allocation8 + $0x1090] sm:$0xff]
    %v4120 = vld [vmem:[#allocation8 + $0x1098] sm:$0xff]
    %v4121 = vld [vmem:[#allocation8 + $0x10a0] sm:$0xff]
    %v4122 = vld [vmem:[#allocation8 + $0x10a8] sm:$0xff]
    %v4123 = vld [vmem:[#allocation8 + $0x10b0] sm:$0xff]
    %v4124 = vld [vmem:[#allocation8 + $0x10b8] sm:$0xff]
    %v4125 = vld [vmem:[#allocation8 + $0x10c0] sm:$0xff]
    %v4126 = vld [vmem:[#allocation8 + $0x10c8] sm:$0xff]
    %v4127 = vld [vmem:[#allocation8 + $0x10d0] sm:$0xff]
    %v4128 = vld [vmem:[#allocation8 + $0x10d8] sm:$0xff]
    %v4129 = vld [vmem:[#allocation8 + $0x10e0] sm:$0xff]
    %v4130 = vld [vmem:[#allocation8 + $0x10e8] sm:$0xff]
    %v4131 = vld [vmem:[#allocation8 + $0x10f0] sm:$0xff]
    %v4132 = vld [vmem:[#allocation8 + $0x10f8] sm:$0xff]
    %v4133 = vld [vmem:[#allocation8 + $0x1100] sm:$0xff]
    %v4134 = vld [vmem:[#allocation8 + $0x1108] sm:$0xff]
    %v4135 = vld [vmem:[#allocation8 + $0x1110] sm:$0xff]
    %v4136 = vld [vmem:[#allocation8 + $0x1118] sm:$0xff]
    %v4137 = vld [vmem:[#allocation8 + $0x1120] sm:$0xff]
    %v4138 = vld [vmem:[#allocation8 + $0x1128] sm:$0xff]
    %v4139 = vld [vmem:[#allocation8 + $0x1130] sm:$0xff]
    %v4140 = vld [vmem:[#allocation8 + $0x1138] sm:$0xff]
    %v4141 = vld [vmem:[#allocation8 + $0x1140] sm:$0xff]
    %v4142 = vld [vmem:[#allocation8 + $0x1148] sm:$0xff]
    %v4143 = vld [vmem:[#allocation8 + $0x1150] sm:$0xff]
    %v4144 = vld [vmem:[#allocation8 + $0x1158] sm:$0xff]
    %v4145 = vld [vmem:[#allocation8 + $0x1160] sm:$0xff]
    %v4146 = vld [vmem:[#allocation8 + $0x1168] sm:$0xff]
    %v4147 = vld [vmem:[#allocation8 + $0x1170] sm:$0xff]
    %v4148 = vld [vmem:[#allocation8 + $0x1178] sm:$0xff]
    %v4149 = vld [vmem:[#allocation8 + $0x1180] sm:$0xff]
    %v4150 = vld [vmem:[#allocation8 + $0x1188] sm:$0xff]
    %v4151 = vld [vmem:[#allocation8 + $0x1190] sm:$0xff]
    %v4152 = vld [vmem:[#allocation8 + $0x1198] sm:$0xff]
    %v4153 = vld [vmem:[#allocation8 + $0x11a0] sm:$0xff]
    %v4154 = vld [vmem:[#allocation8 + $0x11a8] sm:$0xff]
    %v4155 = vld [vmem:[#allocation8 + $0x11b0] sm:$0xff]
    %v4156 = vld [vmem:[#allocation8 + $0x11b8] sm:$0xff]
    %v4157 = vld [vmem:[#allocation8 + $0x11c0] sm:$0xff]
    %v4158 = vld [vmem:[#allocation8 + $0x11c8] sm:$0xff]
    %v4159 = vld [vmem:[#allocation8 + $0x11d0] sm:$0xff]
    %v4160 = vld [vmem:[#allocation8 + $0x11d8] sm:$0xff]
    %v4161 = vld [vmem:[#allocation8 + $0x11e0] sm:$0xff]
    %v4162 = vld [vmem:[#allocation8 + $0x11e8] sm:$0xff]
    %v4163 = vld [vmem:[#allocation8 + $0x11f0] sm:$0xff]
    %v4164 = vld [vmem:[#allocation8 + $0x11f8] sm:$0xff]
    %v4165 = vld [vmem:[#allocation8 + $0x1200] sm:$0xff]
    %v4166 = vld [vmem:[#allocation8 + $0x1208] sm:$0xff]
    %v4167 = vld [vmem:[#allocation8 + $0x1210] sm:$0xff]
    %v4168 = vld [vmem:[#allocation8 + $0x1218] sm:$0xff]
    %v4169 = vld [vmem:[#allocation8 + $0x1220] sm:$0xff]
    %v4170 = vld [vmem:[#allocation8 + $0x1228] sm:$0xff]
    %v4171 = vld [vmem:[#allocation8 + $0x1230] sm:$0xff]
    %v4172 = vld [vmem:[#allocation8 + $0x1238] sm:$0xff]
    %v4173 = vld [vmem:[#allocation8 + $0x1240] sm:$0xff]
    %v4174 = vld [vmem:[#allocation8 + $0x1248] sm:$0xff]
    %v4175 = vld [vmem:[#allocation8 + $0x1250] sm:$0xff]
    %v4176 = vld [vmem:[#allocation8 + $0x1258] sm:$0xff]
    %v4177 = vld [vmem:[#allocation8 + $0x1260] sm:$0xff]
    %v4178 = vld [vmem:[#allocation8 + $0x1268] sm:$0xff]
    %v4179 = vld [vmem:[#allocation8 + $0x1270] sm:$0xff]
    %v4180 = vld [vmem:[#allocation8 + $0x1278] sm:$0xff]
    %v4181 = vld [vmem:[#allocation8 + $0x1280] sm:$0xff]
    %v4182 = vld [vmem:[#allocation8 + $0x1288] sm:$0xff]
    %v4183 = vld [vmem:[#allocation8 + $0x1290] sm:$0xff]
    %v4184 = vld [vmem:[#allocation8 + $0x1298] sm:$0xff]
    %v4185 = vld [vmem:[#allocation8 + $0x12a0] sm:$0xff]
    %v4186 = vld [vmem:[#allocation8 + $0x12a8] sm:$0xff]
    %v4187 = vld [vmem:[#allocation8 + $0x12b0] sm:$0xff]
    %v4188 = vld [vmem:[#allocation8 + $0x12b8] sm:$0xff]
    %v4189 = vld [vmem:[#allocation8 + $0x12c0] sm:$0xff]
    %v4190 = vld [vmem:[#allocation8 + $0x12c8] sm:$0xff]
    %v4191 = vld [vmem:[#allocation8 + $0x12d0] sm:$0xff]
    %v4192 = vld [vmem:[#allocation8 + $0x12d8] sm:$0xff]
    %v4193 = vld [vmem:[#allocation8 + $0x12e0] sm:$0xff]
    %v4194 = vld [vmem:[#allocation8 + $0x12e8] sm:$0xff]
    %v4195 = vld [vmem:[#allocation8 + $0x12f0] sm:$0xff]
    %v4196 = vld [vmem:[#allocation8 + $0x12f8] sm:$0xff]
    %v4197 = vld [vmem:[#allocation8 + $0x1300] sm:$0xff]
    %v4198 = vld [vmem:[#allocation8 + $0x1308] sm:$0xff]
    %v4199 = vld [vmem:[#allocation8 + $0x1310] sm:$0xff]
    %v4200 = vld [vmem:[#allocation8 + $0x1318] sm:$0xff]
    %v4201 = vld [vmem:[#allocation8 + $0x1320] sm:$0xff]
    %v4202 = vld [vmem:[#allocation8 + $0x1328] sm:$0xff]
    %v4203 = vld [vmem:[#allocation8 + $0x1330] sm:$0xff]
    %v4204 = vld [vmem:[#allocation8 + $0x1338] sm:$0xff]
    %v4205 = vld [vmem:[#allocation8 + $0x1340] sm:$0xff]
    %v4206 = vld [vmem:[#allocation8 + $0x1348] sm:$0xff]
    %v4207 = vld [vmem:[#allocation8 + $0x1350] sm:$0xff]
    %v4208 = vld [vmem:[#allocation8 + $0x1358] sm:$0xff]
    %v4209 = vld [vmem:[#allocation8 + $0x1360] sm:$0xff]
    %v4210 = vld [vmem:[#allocation8 + $0x1368] sm:$0xff]
    %v4211 = vld [vmem:[#allocation8 + $0x1370] sm:$0xff]
    %v4212 = vld [vmem:[#allocation8 + $0x1378] sm:$0xff]
    %v4213 = vld [vmem:[#allocation8 + $0x1380] sm:$0xff]
    %v4214 = vld [vmem:[#allocation8 + $0x1388] sm:$0xff]
    %v4215 = vld [vmem:[#allocation8 + $0x1390] sm:$0xff]
    %v4216 = vld [vmem:[#allocation8 + $0x1398] sm:$0xff]
    %v4217 = vld [vmem:[#allocation8 + $0x13a0] sm:$0xff]
    %v4218 = vld [vmem:[#allocation8 + $0x13a8] sm:$0xff]
    %v4219 = vld [vmem:[#allocation8 + $0x13b0] sm:$0xff]
    %v4220 = vld [vmem:[#allocation8 + $0x13b8] sm:$0xff]
    %v4221 = vld [vmem:[#allocation8 + $0x13c0] sm:$0xff]
    %v4222 = vld [vmem:[#allocation8 + $0x13c8] sm:$0xff]
    %v4223 = vld [vmem:[#allocation8 + $0x13d0] sm:$0xff]
    %v4224 = vld [vmem:[#allocation8 + $0x13d8] sm:$0xff]
    %v4225 = vld [vmem:[#allocation8 + $0x13e0] sm:$0xff]
    %v4226 = vld [vmem:[#allocation8 + $0x13e8] sm:$0xff]
    %v4227 = vld [vmem:[#allocation8 + $0x13f0] sm:$0xff]
    %v4228 = vld [vmem:[#allocation8 + $0x13f8] sm:$0xff]
    %v4229 = vld [vmem:[#allocation8 + $0x1400] sm:$0xff]
    %v4230 = vld [vmem:[#allocation8 + $0x1408] sm:$0xff]
    %v4231 = vld [vmem:[#allocation8 + $0x1410] sm:$0xff]
    %v4232 = vld [vmem:[#allocation8 + $0x1418] sm:$0xff]
    %v4233 = vld [vmem:[#allocation8 + $0x1420] sm:$0xff]
    %v4234 = vld [vmem:[#allocation8 + $0x1428] sm:$0xff]
    %v4235 = vld [vmem:[#allocation8 + $0x1430] sm:$0xff]
    %v4236 = vld [vmem:[#allocation8 + $0x1438] sm:$0xff]
    %v4237 = vld [vmem:[#allocation8 + $0x1440] sm:$0xff]
    %v4238 = vld [vmem:[#allocation8 + $0x1448] sm:$0xff]
    %v4239 = vld [vmem:[#allocation8 + $0x1450] sm:$0xff]
    %v4240 = vld [vmem:[#allocation8 + $0x1458] sm:$0xff]
    %v4241 = vld [vmem:[#allocation8 + $0x1460] sm:$0xff]
    %v4242 = vld [vmem:[#allocation8 + $0x1468] sm:$0xff]
    %v4243 = vld [vmem:[#allocation8 + $0x1470] sm:$0xff]
    %v4244 = vld [vmem:[#allocation8 + $0x1478] sm:$0xff]
    %v4245 = vld [vmem:[#allocation8 + $0x1480] sm:$0xff]
    %v4246 = vld [vmem:[#allocation8 + $0x1488] sm:$0xff]
    %v4247 = vld [vmem:[#allocation8 + $0x1490] sm:$0xff]
    %v4248 = vld [vmem:[#allocation8 + $0x1498] sm:$0xff]
    %v4249 = vld [vmem:[#allocation8 + $0x14a0] sm:$0xff]
    %v4250 = vld [vmem:[#allocation8 + $0x14a8] sm:$0xff]
    %v4251 = vld [vmem:[#allocation8 + $0x14b0] sm:$0xff]
    %v4252 = vld [vmem:[#allocation8 + $0x14b8] sm:$0xff]
    %v4253 = vld [vmem:[#allocation8 + $0x14c0] sm:$0xff]
    %v4254 = vld [vmem:[#allocation8 + $0x14c8] sm:$0xff]
    %v4255 = vld [vmem:[#allocation8 + $0x14d0] sm:$0xff]
    %v4256 = vld [vmem:[#allocation8 + $0x14d8] sm:$0xff]
    %v4257 = vld [vmem:[#allocation8 + $0x14e0] sm:$0xff]
    %v4258 = vld [vmem:[#allocation8 + $0x14e8] sm:$0xff]
    %v4259 = vld [vmem:[#allocation8 + $0x14f0] sm:$0xff]
    %v4260 = vld [vmem:[#allocation8 + $0x14f8] sm:$0xff]
    %v4261 = vld [vmem:[#allocation8 + $0x1500] sm:$0xff]
    %v4262 = vld [vmem:[#allocation8 + $0x1508] sm:$0xff]
    %v4263 = vld [vmem:[#allocation8 + $0x1510] sm:$0xff]
    %v4264 = vld [vmem:[#allocation8 + $0x1518] sm:$0xff]
    %v4265 = vld [vmem:[#allocation8 + $0x1520] sm:$0xff]
    %v4266 = vld [vmem:[#allocation8 + $0x1528] sm:$0xff]
    %v4267 = vld [vmem:[#allocation8 + $0x1530] sm:$0xff]
    %v4268 = vld [vmem:[#allocation8 + $0x1538] sm:$0xff]
    %v4269 = vld [vmem:[#allocation8 + $0x1540] sm:$0xff]
    %v4270 = vld [vmem:[#allocation8 + $0x1548] sm:$0xff]
    %v4271 = vld [vmem:[#allocation8 + $0x1550] sm:$0xff]
    %v4272 = vld [vmem:[#allocation8 + $0x1558] sm:$0xff]
    %v4273 = vld [vmem:[#allocation8 + $0x1560] sm:$0xff]
    %v4274 = vld [vmem:[#allocation8 + $0x1568] sm:$0xff]
    %v4275 = vld [vmem:[#allocation8 + $0x1570] sm:$0xff]
    %v4276 = vld [vmem:[#allocation8 + $0x1578] sm:$0xff]
    %v4277 = vld [vmem:[#allocation8 + $0x1580] sm:$0xff]
    %v4278 = vld [vmem:[#allocation8 + $0x1588] sm:$0xff]
    %v4279 = vld [vmem:[#allocation8 + $0x1590] sm:$0xff]
    %v4280 = vld [vmem:[#allocation8 + $0x1598] sm:$0xff]
    %v4281 = vld [vmem:[#allocation8 + $0x15a0] sm:$0xff]
    %v4282 = vld [vmem:[#allocation8 + $0x15a8] sm:$0xff]
    %v4283 = vld [vmem:[#allocation8 + $0x15b0] sm:$0xff]
    %v4284 = vld [vmem:[#allocation8 + $0x15b8] sm:$0xff]
    %v4285 = vld [vmem:[#allocation8 + $0x15c0] sm:$0xff]
    %v4286 = vld [vmem:[#allocation8 + $0x15c8] sm:$0xff]
    %v4287 = vld [vmem:[#allocation8 + $0x15d0] sm:$0xff]
    %v4288 = vld [vmem:[#allocation8 + $0x15d8] sm:$0xff]
    %v4289 = vld [vmem:[#allocation8 + $0x15e0] sm:$0xff]
    %v4290 = vld [vmem:[#allocation8 + $0x15e8] sm:$0xff]
    %v4291 = vld [vmem:[#allocation8 + $0x15f0] sm:$0xff]
    %v4292 = vld [vmem:[#allocation8 + $0x15f8] sm:$0xff]
    %v4293 = vld [vmem:[#allocation8 + $0x1600] sm:$0xff]
    %v4294 = vld [vmem:[#allocation8 + $0x1608] sm:$0xff]
    %v4295 = vld [vmem:[#allocation8 + $0x1610] sm:$0xff]
    %v4296 = vld [vmem:[#allocation8 + $0x1618] sm:$0xff]
    %v4297 = vld [vmem:[#allocation8 + $0x1620] sm:$0xff]
    %v4298 = vld [vmem:[#allocation8 + $0x1628] sm:$0xff]
    %v4299 = vld [vmem:[#allocation8 + $0x1630] sm:$0xff]
    %v4300 = vld [vmem:[#allocation8 + $0x1638] sm:$0xff]
    %v4301 = vld [vmem:[#allocation8 + $0x1640] sm:$0xff]
    %v4302 = vld [vmem:[#allocation8 + $0x1648] sm:$0xff]
    %v4303 = vld [vmem:[#allocation8 + $0x1650] sm:$0xff]
    %v4304 = vld [vmem:[#allocation8 + $0x1658] sm:$0xff]
    %v4305 = vld [vmem:[#allocation8 + $0x1660] sm:$0xff]
    %v4306 = vld [vmem:[#allocation8 + $0x1668] sm:$0xff]
    %v4307 = vld [vmem:[#allocation8 + $0x1670] sm:$0xff]
    %v4308 = vld [vmem:[#allocation8 + $0x1678] sm:$0xff]
    %v4309 = vld [vmem:[#allocation8 + $0x1680] sm:$0xff]
    %v4310 = vld [vmem:[#allocation8 + $0x1688] sm:$0xff]
    %v4311 = vld [vmem:[#allocation8 + $0x1690] sm:$0xff]
    %v4312 = vld [vmem:[#allocation8 + $0x1698] sm:$0xff]
    %v4313 = vld [vmem:[#allocation8 + $0x16a0] sm:$0xff]
    %v4314 = vld [vmem:[#allocation8 + $0x16a8] sm:$0xff]
    %v4315 = vld [vmem:[#allocation8 + $0x16b0] sm:$0xff]
    %v4316 = vld [vmem:[#allocation8 + $0x16b8] sm:$0xff]
    %v4317 = vld [vmem:[#allocation8 + $0x16c0] sm:$0xff]
    %v4318 = vld [vmem:[#allocation8 + $0x16c8] sm:$0xff]
    %v4319 = vld [vmem:[#allocation8 + $0x16d0] sm:$0xff]
    %v4320 = vld [vmem:[#allocation8 + $0x16d8] sm:$0xff]
    %v4321 = vld [vmem:[#allocation8 + $0x16e0] sm:$0xff]
    %v4322 = vld [vmem:[#allocation8 + $0x16e8] sm:$0xff]
    %v4323 = vld [vmem:[#allocation8 + $0x16f0] sm:$0xff]
    %v4324 = vld [vmem:[#allocation8 + $0x16f8] sm:$0xff]
    %v4325 = vld [vmem:[#allocation8 + $0x1700] sm:$0xff]
    %v4326 = vld [vmem:[#allocation8 + $0x1708] sm:$0xff]
    %v4327 = vld [vmem:[#allocation8 + $0x1710] sm:$0xff]
    %v4328 = vld [vmem:[#allocation8 + $0x1718] sm:$0xff]
    %v4329 = vld [vmem:[#allocation8 + $0x1720] sm:$0xff]
    %v4330 = vld [vmem:[#allocation8 + $0x1728] sm:$0xff]
    %v4331 = vld [vmem:[#allocation8 + $0x1730] sm:$0xff]
    %v4332 = vld [vmem:[#allocation8 + $0x1738] sm:$0xff]
    %v4333 = vld [vmem:[#allocation8 + $0x1740] sm:$0xff]
    %v4334 = vld [vmem:[#allocation8 + $0x1748] sm:$0xff]
    %v4335 = vld [vmem:[#allocation8 + $0x1750] sm:$0xff]
    %v4336 = vld [vmem:[#allocation8 + $0x1758] sm:$0xff]
    %v4337 = vld [vmem:[#allocation8 + $0x1760] sm:$0xff]
    %v4338 = vld [vmem:[#allocation8 + $0x1768] sm:$0xff]
    %v4339 = vld [vmem:[#allocation8 + $0x1770] sm:$0xff]
    %v4340 = vld [vmem:[#allocation8 + $0x1778] sm:$0xff]
    %v4341 = vld [vmem:[#allocation8 + $0x1780] sm:$0xff]
    %v4342 = vld [vmem:[#allocation8 + $0x1788] sm:$0xff]
    %v4343 = vld [vmem:[#allocation8 + $0x1790] sm:$0xff]
    %v4344 = vld [vmem:[#allocation8 + $0x1798] sm:$0xff]
    %v4345 = vld [vmem:[#allocation8 + $0x17a0] sm:$0xff]
    %v4346 = vld [vmem:[#allocation8 + $0x17a8] sm:$0xff]
    %v4347 = vld [vmem:[#allocation8 + $0x17b0] sm:$0xff]
    %v4348 = vld [vmem:[#allocation8 + $0x17b8] sm:$0xff]
    %v4349 = vld [vmem:[#allocation8 + $0x17c0] sm:$0xff]
    %v4350 = vld [vmem:[#allocation8 + $0x17c8] sm:$0xff]
    %v4351 = vld [vmem:[#allocation8 + $0x17d0] sm:$0xff]
    %v4352 = vld [vmem:[#allocation8 + $0x17d8] sm:$0xff]
    %v4353 = vld [vmem:[#allocation8 + $0x17e0] sm:$0xff]
    %v4354 = vld [vmem:[#allocation8 + $0x17e8] sm:$0xff]
    %v4355 = vld [vmem:[#allocation8 + $0x17f0] sm:$0xff]
    %v4356 = vld [vmem:[#allocation8 + $0x17f8] sm:$0xff]
    %v4357 = vld [vmem:[#allocation8 + $0x1800] sm:$0xff]
    %v4358 = vld [vmem:[#allocation8 + $0x1808] sm:$0xff]
    %v4359 = vld [vmem:[#allocation8 + $0x1810] sm:$0xff]
    %v4360 = vld [vmem:[#allocation8 + $0x1818] sm:$0xff]
    %v4361 = vld [vmem:[#allocation8 + $0x1820] sm:$0xff]
    %v4362 = vld [vmem:[#allocation8 + $0x1828] sm:$0xff]
    %v4363 = vld [vmem:[#allocation8 + $0x1830] sm:$0xff]
    %v4364 = vld [vmem:[#allocation8 + $0x1838] sm:$0xff]
    %v4365 = vld [vmem:[#allocation8 + $0x1840] sm:$0xff]
    %v4366 = vld [vmem:[#allocation8 + $0x1848] sm:$0xff]
    %v4367 = vld [vmem:[#allocation8 + $0x1850] sm:$0xff]
    %v4368 = vld [vmem:[#allocation8 + $0x1858] sm:$0xff]
    %v4369 = vld [vmem:[#allocation8 + $0x1860] sm:$0xff]
    %v4370 = vld [vmem:[#allocation8 + $0x1868] sm:$0xff]
    %v4371 = vld [vmem:[#allocation8 + $0x1870] sm:$0xff]
    %v4372 = vld [vmem:[#allocation8 + $0x1878] sm:$0xff]
    %v4373 = vld [vmem:[#allocation8 + $0x1880] sm:$0xff]
    %v4374 = vld [vmem:[#allocation8 + $0x1888] sm:$0xff]
    %v4375 = vld [vmem:[#allocation8 + $0x1890] sm:$0xff]
    %v4376 = vld [vmem:[#allocation8 + $0x1898] sm:$0xff]
    %v4377 = vld [vmem:[#allocation8 + $0x18a0] sm:$0xff]
    %v4378 = vld [vmem:[#allocation8 + $0x18a8] sm:$0xff]
    %v4379 = vld [vmem:[#allocation8 + $0x18b0] sm:$0xff]
    %v4380 = vld [vmem:[#allocation8 + $0x18b8] sm:$0xff]
    %v4381 = vld [vmem:[#allocation8 + $0x18c0] sm:$0xff]
    %v4382 = vld [vmem:[#allocation8 + $0x18c8] sm:$0xff]
    %v4383 = vld [vmem:[#allocation8 + $0x18d0] sm:$0xff]
    %v4384 = vld [vmem:[#allocation8 + $0x18d8] sm:$0xff]
    %v4385 = vld [vmem:[#allocation8 + $0x18e0] sm:$0xff]
    %v4386 = vld [vmem:[#allocation8 + $0x18e8] sm:$0xff]
    %v4387 = vld [vmem:[#allocation8 + $0x18f0] sm:$0xff]
    %v4388 = vld [vmem:[#allocation8 + $0x18f8] sm:$0xff]
    %v4389 = vld [vmem:[#allocation8 + $0x1900] sm:$0xff]
    %v4390 = vld [vmem:[#allocation8 + $0x1908] sm:$0xff]
    %v4391 = vld [vmem:[#allocation8 + $0x1910] sm:$0xff]
    %v4392 = vld [vmem:[#allocation8 + $0x1918] sm:$0xff]
    %v4393 = vld [vmem:[#allocation8 + $0x1920] sm:$0xff]
    %v4394 = vld [vmem:[#allocation8 + $0x1928] sm:$0xff]
    %v4395 = vld [vmem:[#allocation8 + $0x1930] sm:$0xff]
    %v4396 = vld [vmem:[#allocation8 + $0x1938] sm:$0xff]
    %v4397 = vld [vmem:[#allocation8 + $0x1940] sm:$0xff]
    %v4398 = vld [vmem:[#allocation8 + $0x1948] sm:$0xff]
    %v4399 = vld [vmem:[#allocation8 + $0x1950] sm:$0xff]
    %v4400 = vld [vmem:[#allocation8 + $0x1958] sm:$0xff]
    %v4401 = vld [vmem:[#allocation8 + $0x1960] sm:$0xff]
    %v4402 = vld [vmem:[#allocation8 + $0x1968] sm:$0xff]
    %v4403 = vld [vmem:[#allocation8 + $0x1970] sm:$0xff]
    %v4404 = vld [vmem:[#allocation8 + $0x1978] sm:$0xff]
    %v4405 = vld [vmem:[#allocation8 + $0x1980] sm:$0xff]
    %v4406 = vld [vmem:[#allocation8 + $0x1988] sm:$0xff]
    %v4407 = vld [vmem:[#allocation8 + $0x1990] sm:$0xff]
    %v4408 = vld [vmem:[#allocation8 + $0x1998] sm:$0xff]
    %v4409 = vld [vmem:[#allocation8 + $0x19a0] sm:$0xff]
    %v4410 = vld [vmem:[#allocation8 + $0x19a8] sm:$0xff]
    %v4411 = vld [vmem:[#allocation8 + $0x19b0] sm:$0xff]
    %v4412 = vld [vmem:[#allocation8 + $0x19b8] sm:$0xff]
    %v4413 = vld [vmem:[#allocation8 + $0x19c0] sm:$0xff]
    %v4414 = vld [vmem:[#allocation8 + $0x19c8] sm:$0xff]
    %v4415 = vld [vmem:[#allocation8 + $0x19d0] sm:$0xff]
    %v4416 = vld [vmem:[#allocation8 + $0x19d8] sm:$0xff]
    %v4417 = vld [vmem:[#allocation8 + $0x19e0] sm:$0xff]
    %v4418 = vld [vmem:[#allocation8 + $0x19e8] sm:$0xff]
    %v4419 = vld [vmem:[#allocation8 + $0x19f0] sm:$0xff]
    %v4420 = vld [vmem:[#allocation8 + $0x19f8] sm:$0xff]
    %v4421 = vld [vmem:[#allocation8 + $0x1a00] sm:$0xff]
    %v4422 = vld [vmem:[#allocation8 + $0x1a08] sm:$0xff]
    %v4423 = vld [vmem:[#allocation8 + $0x1a10] sm:$0xff]
    %v4424 = vld [vmem:[#allocation8 + $0x1a18] sm:$0xff]
    %v4425 = vld [vmem:[#allocation8 + $0x1a20] sm:$0xff]
    %v4426 = vld [vmem:[#allocation8 + $0x1a28] sm:$0xff]
    %v4427 = vld [vmem:[#allocation8 + $0x1a30] sm:$0xff]
    %v4428 = vld [vmem:[#allocation8 + $0x1a38] sm:$0xff]
    %v4429 = vld [vmem:[#allocation8 + $0x1a40] sm:$0xff]
    %v4430 = vld [vmem:[#allocation8 + $0x1a48] sm:$0xff]
    %v4431 = vld [vmem:[#allocation8 + $0x1a50] sm:$0xff]
    %v4432 = vld [vmem:[#allocation8 + $0x1a58] sm:$0xff]
    %v4433 = vld [vmem:[#allocation8 + $0x1a60] sm:$0xff]
    %v4434 = vld [vmem:[#allocation8 + $0x1a68] sm:$0xff]
    %v4435 = vld [vmem:[#allocation8 + $0x1a70] sm:$0xff]
    %v4436 = vld [vmem:[#allocation8 + $0x1a78] sm:$0xff]
    %v4437 = vld [vmem:[#allocation8 + $0x1a80] sm:$0xff]
    %v4438 = vld [vmem:[#allocation8 + $0x1a88] sm:$0xff]
    %v4439 = vld [vmem:[#allocation8 + $0x1a90] sm:$0xff]
    %v4440 = vld [vmem:[#allocation8 + $0x1a98] sm:$0xff]
    %v4441 = vld [vmem:[#allocation8 + $0x1aa0] sm:$0xff]
    %v4442 = vld [vmem:[#allocation8 + $0x1aa8] sm:$0xff]
    %v4443 = vld [vmem:[#allocation8 + $0x1ab0] sm:$0xff]
    %v4444 = vld [vmem:[#allocation8 + $0x1ab8] sm:$0xff]
    %v4445 = vld [vmem:[#allocation8 + $0x1ac0] sm:$0xff]
    %v4446 = vld [vmem:[#allocation8 + $0x1ac8] sm:$0xff]
    %v4447 = vld [vmem:[#allocation8 + $0x1ad0] sm:$0xff]
    %v4448 = vld [vmem:[#allocation8 + $0x1ad8] sm:$0xff]
    %v4449 = vld [vmem:[#allocation8 + $0x1ae0] sm:$0xff]
    %v4450 = vld [vmem:[#allocation8 + $0x1ae8] sm:$0xff]
    %v4451 = vld [vmem:[#allocation8 + $0x1af0] sm:$0xff]
    %v4452 = vld [vmem:[#allocation8 + $0x1af8] sm:$0xff]
    %v4453 = vld [vmem:[#allocation8 + $0x1b00] sm:$0xff]
    %v4454 = vld [vmem:[#allocation8 + $0x1b08] sm:$0xff]
    %v4455 = vld [vmem:[#allocation8 + $0x1b10] sm:$0xff]
    %v4456 = vld [vmem:[#allocation8 + $0x1b18] sm:$0xff]
    %v4457 = vld [vmem:[#allocation8 + $0x1b20] sm:$0xff]
    %v4458 = vld [vmem:[#allocation8 + $0x1b28] sm:$0xff]
    %v4459 = vld [vmem:[#allocation8 + $0x1b30] sm:$0xff]
    %v4460 = vld [vmem:[#allocation8 + $0x1b38] sm:$0xff]
    %v4461 = vld [vmem:[#allocation8 + $0x1b40] sm:$0xff]
    %v4462 = vld [vmem:[#allocation8 + $0x1b48] sm:$0xff]
    %v4463 = vld [vmem:[#allocation8 + $0x1b50] sm:$0xff]
    %v4464 = vld [vmem:[#allocation8 + $0x1b58] sm:$0xff]
    %v4465 = vld [vmem:[#allocation8 + $0x1b60] sm:$0xff]
    %v4466 = vld [vmem:[#allocation8 + $0x1b68] sm:$0xff]
    %v4467 = vld [vmem:[#allocation8 + $0x1b70] sm:$0xff]
    %v4468 = vld [vmem:[#allocation8 + $0x1b78] sm:$0xff]
    %v4469 = vld [vmem:[#allocation8 + $0x1b80] sm:$0xff]
    %v4470 = vld [vmem:[#allocation8 + $0x1b88] sm:$0xff]
    %v4471 = vld [vmem:[#allocation8 + $0x1b90] sm:$0xff]
    %v4472 = vld [vmem:[#allocation8 + $0x1b98] sm:$0xff]
    %v4473 = vld [vmem:[#allocation8 + $0x1ba0] sm:$0xff]
    %v4474 = vld [vmem:[#allocation8 + $0x1ba8] sm:$0xff]
    %v4475 = vld [vmem:[#allocation8 + $0x1bb0] sm:$0xff]
    %v4476 = vld [vmem:[#allocation8 + $0x1bb8] sm:$0xff]
    %v4477 = vld [vmem:[#allocation8 + $0x1bc0] sm:$0xff]
    %v4478 = vld [vmem:[#allocation8 + $0x1bc8] sm:$0xff]
    %v4479 = vld [vmem:[#allocation8 + $0x1bd0] sm:$0xff]
    %v4480 = vld [vmem:[#allocation8 + $0x1bd8] sm:$0xff]
    %v4481 = vld [vmem:[#allocation8 + $0x1be0] sm:$0xff]
    %v4482 = vld [vmem:[#allocation8 + $0x1be8] sm:$0xff]
    %v4483 = vld [vmem:[#allocation8 + $0x1bf0] sm:$0xff]
    %v4484 = vld [vmem:[#allocation8 + $0x1bf8] sm:$0xff]
    %v4485 = vld [vmem:[#allocation8 + $0x1c00] sm:$0xff]
    %v4486 = vld [vmem:[#allocation8 + $0x1c08] sm:$0xff]
    %v4487 = vld [vmem:[#allocation8 + $0x1c10] sm:$0xff]
    %v4488 = vld [vmem:[#allocation8 + $0x1c18] sm:$0xff]
    %v4489 = vld [vmem:[#allocation8 + $0x1c20] sm:$0xff]
    %v4490 = vld [vmem:[#allocation8 + $0x1c28] sm:$0xff]
    %v4491 = vld [vmem:[#allocation8 + $0x1c30] sm:$0xff]
    %v4492 = vld [vmem:[#allocation8 + $0x1c38] sm:$0xff]
    %v4493 = vld [vmem:[#allocation8 + $0x1c40] sm:$0xff]
    %v4494 = vld [vmem:[#allocation8 + $0x1c48] sm:$0xff]
    %v4495 = vld [vmem:[#allocation8 + $0x1c50] sm:$0xff]
    %v4496 = vld [vmem:[#allocation8 + $0x1c58] sm:$0xff]
    %v4497 = vld [vmem:[#allocation8 + $0x1c60] sm:$0xff]
    %v4498 = vld [vmem:[#allocation8 + $0x1c68] sm:$0xff]
    %v4499 = vld [vmem:[#allocation8 + $0x1c70] sm:$0xff]
    %v4500 = vld [vmem:[#allocation8 + $0x1c78] sm:$0xff]
    %v4501 = vld [vmem:[#allocation8 + $0x1c80] sm:$0xff]
    %v4502 = vld [vmem:[#allocation8 + $0x1c88] sm:$0xff]
    %v4503 = vld [vmem:[#allocation8 + $0x1c90] sm:$0xff]
    %v4504 = vld [vmem:[#allocation8 + $0x1c98] sm:$0xff]
    %v4505 = vld [vmem:[#allocation8 + $0x1ca0] sm:$0xff]
    %v4506 = vld [vmem:[#allocation8 + $0x1ca8] sm:$0xff]
    %v4507 = vld [vmem:[#allocation8 + $0x1cb0] sm:$0xff]
    %v4508 = vld [vmem:[#allocation8 + $0x1cb8] sm:$0xff]
    %v4509 = vld [vmem:[#allocation8 + $0x1cc0] sm:$0xff]
    %v4510 = vld [vmem:[#allocation8 + $0x1cc8] sm:$0xff]
    %v4511 = vld [vmem:[#allocation8 + $0x1cd0] sm:$0xff]
    %v4512 = vld [vmem:[#allocation8 + $0x1cd8] sm:$0xff]
    %v4513 = vld [vmem:[#allocation8 + $0x1ce0] sm:$0xff]
    %v4514 = vld [vmem:[#allocation8 + $0x1ce8] sm:$0xff]
    %v4515 = vld [vmem:[#allocation8 + $0x1cf0] sm:$0xff]
    %v4516 = vld [vmem:[#allocation8 + $0x1cf8] sm:$0xff]
    %v4517 = vld [vmem:[#allocation8 + $0x1d00] sm:$0xff]
    %v4518 = vld [vmem:[#allocation8 + $0x1d08] sm:$0xff]
    %v4519 = vld [vmem:[#allocation8 + $0x1d10] sm:$0xff]
    %v4520 = vld [vmem:[#allocation8 + $0x1d18] sm:$0xff]
    %v4521 = vld [vmem:[#allocation8 + $0x1d20] sm:$0xff]
    %v4522 = vld [vmem:[#allocation8 + $0x1d28] sm:$0xff]
    %v4523 = vld [vmem:[#allocation8 + $0x1d30] sm:$0xff]
    %v4524 = vld [vmem:[#allocation8 + $0x1d38] sm:$0xff]
    %v4525 = vld [vmem:[#allocation8 + $0x1d40] sm:$0xff]
    %v4526 = vld [vmem:[#allocation8 + $0x1d48] sm:$0xff]
    %v4527 = vld [vmem:[#allocation8 + $0x1d50] sm:$0xff]
    %v4528 = vld [vmem:[#allocation8 + $0x1d58] sm:$0xff]
    %v4529 = vld [vmem:[#allocation8 + $0x1d60] sm:$0xff]
    %v4530 = vld [vmem:[#allocation8 + $0x1d68] sm:$0xff]
    %v4531 = vld [vmem:[#allocation8 + $0x1d70] sm:$0xff]
    %v4532 = vld [vmem:[#allocation8 + $0x1d78] sm:$0xff]
    %v4533 = vld [vmem:[#allocation8 + $0x1d80] sm:$0xff]
    %v4534 = vld [vmem:[#allocation8 + $0x1d88] sm:$0xff]
    %v4535 = vld [vmem:[#allocation8 + $0x1d90] sm:$0xff]
    %v4536 = vld [vmem:[#allocation8 + $0x1d98] sm:$0xff]
    %v4537 = vld [vmem:[#allocation8 + $0x1da0] sm:$0xff]
    %v4538 = vld [vmem:[#allocation8 + $0x1da8] sm:$0xff]
    %v4539 = vld [vmem:[#allocation8 + $0x1db0] sm:$0xff]
    %v4540 = vld [vmem:[#allocation8 + $0x1db8] sm:$0xff]
    %v4541 = vld [vmem:[#allocation8 + $0x1dc0] sm:$0xff]
    %v4542 = vld [vmem:[#allocation8 + $0x1dc8] sm:$0xff]
    %v4543 = vld [vmem:[#allocation8 + $0x1dd0] sm:$0xff]
    %v4544 = vld [vmem:[#allocation8 + $0x1dd8] sm:$0xff]
    %v4545 = vld [vmem:[#allocation8 + $0x1de0] sm:$0xff]
    %v4546 = vld [vmem:[#allocation8 + $0x1de8] sm:$0xff]
    %v4547 = vld [vmem:[#allocation8 + $0x1df0] sm:$0xff]
    %v4548 = vld [vmem:[#allocation8 + $0x1df8] sm:$0xff]
    %v4549 = vld [vmem:[#allocation8 + $0x1e00] sm:$0xff]
    %v4550 = vld [vmem:[#allocation8 + $0x1e08] sm:$0xff]
    %v4551 = vld [vmem:[#allocation8 + $0x1e10] sm:$0xff]
    %v4552 = vld [vmem:[#allocation8 + $0x1e18] sm:$0xff]
    %v4553 = vld [vmem:[#allocation8 + $0x1e20] sm:$0xff]
    %v4554 = vld [vmem:[#allocation8 + $0x1e28] sm:$0xff]
    %v4555 = vld [vmem:[#allocation8 + $0x1e30] sm:$0xff]
    %v4556 = vld [vmem:[#allocation8 + $0x1e38] sm:$0xff]
    %v4557 = vld [vmem:[#allocation8 + $0x1e40] sm:$0xff]
    %v4558 = vld [vmem:[#allocation8 + $0x1e48] sm:$0xff]
    %v4559 = vld [vmem:[#allocation8 + $0x1e50] sm:$0xff]
    %v4560 = vld [vmem:[#allocation8 + $0x1e58] sm:$0xff]
    %v4561 = vld [vmem:[#allocation8 + $0x1e60] sm:$0xff]
    %v4562 = vld [vmem:[#allocation8 + $0x1e68] sm:$0xff]
    %v4563 = vld [vmem:[#allocation8 + $0x1e70] sm:$0xff]
    %v4564 = vld [vmem:[#allocation8 + $0x1e78] sm:$0xff]
    %v4565 = vld [vmem:[#allocation8 + $0x1e80] sm:$0xff]
    %v4566 = vld [vmem:[#allocation8 + $0x1e88] sm:$0xff]
    %v4567 = vld [vmem:[#allocation8 + $0x1e90] sm:$0xff]
    %v4568 = vld [vmem:[#allocation8 + $0x1e98] sm:$0xff]
    %v4569 = vld [vmem:[#allocation8 + $0x1ea0] sm:$0xff]
    %v4570 = vld [vmem:[#allocation8 + $0x1ea8] sm:$0xff]
    %v4571 = vld [vmem:[#allocation8 + $0x1eb0] sm:$0xff]
    %v4572 = vld [vmem:[#allocation8 + $0x1eb8] sm:$0xff]
    %v4573 = vld [vmem:[#allocation8 + $0x1ec0] sm:$0xff]
    %v4574 = vld [vmem:[#allocation8 + $0x1ec8] sm:$0xff]
    %v4575 = vld [vmem:[#allocation8 + $0x1ed0] sm:$0xff]
    %v4576 = vld [vmem:[#allocation8 + $0x1ed8] sm:$0xff]
    %v4577 = vld [vmem:[#allocation8 + $0x1ee0] sm:$0xff]
    %v4578 = vld [vmem:[#allocation8 + $0x1ee8] sm:$0xff]
    %v4579 = vld [vmem:[#allocation8 + $0x1ef0] sm:$0xff]
    %v4580 = vld [vmem:[#allocation8 + $0x1ef8] sm:$0xff]
    %v4581 = vld [vmem:[#allocation8 + $0x1f00] sm:$0xff]
    %v4582 = vld [vmem:[#allocation8 + $0x1f08] sm:$0xff]
    %v4583 = vld [vmem:[#allocation8 + $0x1f10] sm:$0xff]
    %v4584 = vld [vmem:[#allocation8 + $0x1f18] sm:$0xff]
    %v4585 = vld [vmem:[#allocation8 + $0x1f20] sm:$0xff]
    %v4586 = vld [vmem:[#allocation8 + $0x1f28] sm:$0xff]
    %v4587 = vld [vmem:[#allocation8 + $0x1f30] sm:$0xff]
    %v4588 = vld [vmem:[#allocation8 + $0x1f38] sm:$0xff]
    %v4589 = vld [vmem:[#allocation8 + $0x1f40] sm:$0xff]
    %v4590 = vld [vmem:[#allocation8 + $0x1f48] sm:$0xff]
    %v4591 = vld [vmem:[#allocation8 + $0x1f50] sm:$0xff]
    %v4592 = vld [vmem:[#allocation8 + $0x1f58] sm:$0xff]
    %v4593 = vld [vmem:[#allocation8 + $0x1f60] sm:$0xff]
    %v4594 = vld [vmem:[#allocation8 + $0x1f68] sm:$0xff]
    %v4595 = vld [vmem:[#allocation8 + $0x1f70] sm:$0xff]
    %v4596 = vld [vmem:[#allocation8 + $0x1f78] sm:$0xff]
    %v4597 = vld [vmem:[#allocation8 + $0x1f80] sm:$0xff]
    %v4598 = vld [vmem:[#allocation8 + $0x1f88] sm:$0xff]
    %v4599 = vld [vmem:[#allocation8 + $0x1f90] sm:$0xff]
    %v4600 = vld [vmem:[#allocation8 + $0x1f98] sm:$0xff]
    %v4601 = vld [vmem:[#allocation8 + $0x1fa0] sm:$0xff]
    %v4602 = vld [vmem:[#allocation8 + $0x1fa8] sm:$0xff]
    %v4603 = vld [vmem:[#allocation8 + $0x1fb0] sm:$0xff]
    %v4604 = vld [vmem:[#allocation8 + $0x1fb8] sm:$0xff]
    %v4605 = vld [vmem:[#allocation8 + $0x1fc0] sm:$0xff]
    %v4606 = vld [vmem:[#allocation8 + $0x1fc8] sm:$0xff]
    %v4607 = vld [vmem:[#allocation8 + $0x1fd0] sm:$0xff]
    %v4608 = vld [vmem:[#allocation8 + $0x1fd8] sm:$0xff]
    %v4609 = vld [vmem:[#allocation8 + $0x1fe0] sm:$0xff]
    %v4610 = vld [vmem:[#allocation8 + $0x1fe8] sm:$0xff]
    %v4611 = vld [vmem:[#allocation8 + $0x1ff0] sm:$0xff]
    %v4612 = vld [vmem:[#allocation8 + $0x1ff8] sm:$0xff]
    %v4613 = vld [vmem:[#allocation8 + $0x2000] sm:$0xff]
    %v4614 = vld [vmem:[#allocation8 + $0x2008] sm:$0xff]
    %v4615 = vld [vmem:[#allocation8 + $0x2010] sm:$0xff]
    %v4616 = vld [vmem:[#allocation8 + $0x2018] sm:$0xff]
    %v4617 = vld [vmem:[#allocation8 + $0x2020] sm:$0xff]
    %v4618 = vld [vmem:[#allocation8 + $0x2028] sm:$0xff]
    %v4619 = vld [vmem:[#allocation8 + $0x2030] sm:$0xff]
    %v4620 = vld [vmem:[#allocation8 + $0x2038] sm:$0xff]
    %v4621 = vld [vmem:[#allocation8 + $0x2040] sm:$0xff]
    %v4622 = vld [vmem:[#allocation8 + $0x2048] sm:$0xff]
    %v4623 = vld [vmem:[#allocation8 + $0x2050] sm:$0xff]
    %v4624 = vld [vmem:[#allocation8 + $0x2058] sm:$0xff]
    %v4625 = vld [vmem:[#allocation8 + $0x2060] sm:$0xff]
    %v4626 = vld [vmem:[#allocation8 + $0x2068] sm:$0xff]
    %v4627 = vld [vmem:[#allocation8 + $0x2070] sm:$0xff]
    %v4628 = vld [vmem:[#allocation8 + $0x2078] sm:$0xff]
    %v4629 = vld [vmem:[#allocation8 + $0x2080] sm:$0xff]
    %v4630 = vld [vmem:[#allocation8 + $0x2088] sm:$0xff]
    %v4631 = vld [vmem:[#allocation8 + $0x2090] sm:$0xff]
    %v4632 = vld [vmem:[#allocation8 + $0x2098] sm:$0xff]
    %v4633 = vld [vmem:[#allocation8 + $0x20a0] sm:$0xff]
    %v4634 = vld [vmem:[#allocation8 + $0x20a8] sm:$0xff]
    %v4635 = vld [vmem:[#allocation8 + $0x20b0] sm:$0xff]
    %v4636 = vld [vmem:[#allocation8 + $0x20b8] sm:$0xff]
    %v4637 = vld [vmem:[#allocation8 + $0x20c0] sm:$0xff]
    %v4638 = vld [vmem:[#allocation8 + $0x20c8] sm:$0xff]
    %v4639 = vld [vmem:[#allocation8 + $0x20d0] sm:$0xff]
    %v4640 = vld [vmem:[#allocation8 + $0x20d8] sm:$0xff]
    %v4641 = vld [vmem:[#allocation8 + $0x20e0] sm:$0xff]
    %v4642 = vld [vmem:[#allocation8 + $0x20e8] sm:$0xff]
    %v4643 = vld [vmem:[#allocation8 + $0x20f0] sm:$0xff]
    %v4644 = vld [vmem:[#allocation8 + $0x20f8] sm:$0xff]
    %v4645 = vld [vmem:[#allocation8 + $0x2100] sm:$0xff]
    %v4646 = vld [vmem:[#allocation8 + $0x2108] sm:$0xff]
    %v4647 = vld [vmem:[#allocation8 + $0x2110] sm:$0xff]
    %v4648 = vld [vmem:[#allocation8 + $0x2118] sm:$0xff]
    %v4649 = vld [vmem:[#allocation8 + $0x2120] sm:$0xff]
    %v4650 = vld [vmem:[#allocation8 + $0x2128] sm:$0xff]
    %v4651 = vld [vmem:[#allocation8 + $0x2130] sm:$0xff]
    %v4652 = vld [vmem:[#allocation8 + $0x2138] sm:$0xff]
    %v4653 = vld [vmem:[#allocation8 + $0x2140] sm:$0xff]
    %v4654 = vld [vmem:[#allocation8 + $0x2148] sm:$0xff]
    %v4655 = vld [vmem:[#allocation8 + $0x2150] sm:$0xff]
    %v4656 = vld [vmem:[#allocation8 + $0x2158] sm:$0xff]
    %v4657 = vld [vmem:[#allocation8 + $0x2160] sm:$0xff]
    %v4658 = vld [vmem:[#allocation8 + $0x2168] sm:$0xff]
    %v4659 = vld [vmem:[#allocation8 + $0x2170] sm:$0xff]
    %v4660 = vld [vmem:[#allocation8 + $0x2178] sm:$0xff]
    %v4661 = vld [vmem:[#allocation8 + $0x2180] sm:$0xff]
    %v4662 = vld [vmem:[#allocation8 + $0x2188] sm:$0xff]
    %v4663 = vld [vmem:[#allocation8 + $0x2190] sm:$0xff]
    %v4664 = vld [vmem:[#allocation8 + $0x2198] sm:$0xff]
    %v4665 = vld [vmem:[#allocation8 + $0x21a0] sm:$0xff]
    %v4666 = vld [vmem:[#allocation8 + $0x21a8] sm:$0xff]
    %v4667 = vld [vmem:[#allocation8 + $0x21b0] sm:$0xff]
    %v4668 = vld [vmem:[#allocation8 + $0x21b8] sm:$0xff]
    %v4669 = vld [vmem:[#allocation8 + $0x21c0] sm:$0xff]
    %v4670 = vld [vmem:[#allocation8 + $0x21c8] sm:$0xff]
    %v4671 = vld [vmem:[#allocation8 + $0x21d0] sm:$0xff]
    %v4672 = vld [vmem:[#allocation8 + $0x21d8] sm:$0xff]
    %v4673 = vld [vmem:[#allocation8 + $0x21e0] sm:$0xff]
    %v4674 = vld [vmem:[#allocation8 + $0x21e8] sm:$0xff]
    %v4675 = vld [vmem:[#allocation8 + $0x21f0] sm:$0xff]
    %v4676 = vld [vmem:[#allocation8 + $0x21f8] sm:$0xff]
    %v4677 = vld [vmem:[#allocation8 + $0x2200] sm:$0xff]
    %v4678 = vld [vmem:[#allocation8 + $0x2208] sm:$0xff]
    %v4679 = vld [vmem:[#allocation8 + $0x2210] sm:$0xff]
    %v4680 = vld [vmem:[#allocation8 + $0x2218] sm:$0xff]
    %v4681 = vld [vmem:[#allocation8 + $0x2220] sm:$0xff]
    %v4682 = vld [vmem:[#allocation8 + $0x2228] sm:$0xff]
    %v4683 = vld [vmem:[#allocation8 + $0x2230] sm:$0xff]
    %v4684 = vld [vmem:[#allocation8 + $0x2238] sm:$0xff]
    %v4685 = vld [vmem:[#allocation8 + $0x2240] sm:$0xff]
    %v4686 = vld [vmem:[#allocation8 + $0x2248] sm:$0xff]
    %v4687 = vld [vmem:[#allocation8 + $0x2250] sm:$0xff]
    %v4688 = vld [vmem:[#allocation8 + $0x2258] sm:$0xff]
    %v4689 = vld [vmem:[#allocation8 + $0x2260] sm:$0xff]
    %v4690 = vld [vmem:[#allocation8 + $0x2268] sm:$0xff]
    %v4691 = vld [vmem:[#allocation8 + $0x2270] sm:$0xff]
    %v4692 = vld [vmem:[#allocation8 + $0x2278] sm:$0xff]
    %v4693 = vld [vmem:[#allocation8 + $0x2280] sm:$0xff]
    %v4694 = vld [vmem:[#allocation8 + $0x2288] sm:$0xff]
    %v4695 = vld [vmem:[#allocation8 + $0x2290] sm:$0xff]
    %v4696 = vld [vmem:[#allocation8 + $0x2298] sm:$0xff]
    %v4697 = vld [vmem:[#allocation8 + $0x22a0] sm:$0xff]
    %v4698 = vld [vmem:[#allocation8 + $0x22a8] sm:$0xff]
    %v4699 = vld [vmem:[#allocation8 + $0x22b0] sm:$0xff]
    %v4700 = vld [vmem:[#allocation8 + $0x22b8] sm:$0xff]
    %v4701 = vld [vmem:[#allocation8 + $0x22c0] sm:$0xff]
    %v4702 = vld [vmem:[#allocation8 + $0x22c8] sm:$0xff]
    %v4703 = vld [vmem:[#allocation8 + $0x22d0] sm:$0xff]
    %v4704 = vld [vmem:[#allocation8 + $0x22d8] sm:$0xff]
    %v4705 = vld [vmem:[#allocation8 + $0x22e0] sm:$0xff]
    %v4706 = vld [vmem:[#allocation8 + $0x22e8] sm:$0xff]
    %v4707 = vld [vmem:[#allocation8 + $0x22f0] sm:$0xff]
    %v4708 = vld [vmem:[#allocation8 + $0x22f8] sm:$0xff]
    %v4709 = vld [vmem:[#allocation8 + $0x2300] sm:$0xff]
    %v4710 = vld [vmem:[#allocation8 + $0x2308] sm:$0xff]
    %v4711 = vld [vmem:[#allocation8 + $0x2310] sm:$0xff]
    %v4712 = vld [vmem:[#allocation8 + $0x2318] sm:$0xff]
    %v4713 = vld [vmem:[#allocation8 + $0x2320] sm:$0xff]
    %v4714 = vld [vmem:[#allocation8 + $0x2328] sm:$0xff]
    %v4715 = vld [vmem:[#allocation8 + $0x2330] sm:$0xff]
    %v4716 = vld [vmem:[#allocation8 + $0x2338] sm:$0xff]
    %v4717 = vld [vmem:[#allocation8 + $0x2340] sm:$0xff]
    %v4718 = vld [vmem:[#allocation8 + $0x2348] sm:$0xff]
    %v4719 = vld [vmem:[#allocation8 + $0x2350] sm:$0xff]
    %v4720 = vld [vmem:[#allocation8 + $0x2358] sm:$0xff]
    %v4721 = vld [vmem:[#allocation8 + $0x2360] sm:$0xff]
    %v4722 = vld [vmem:[#allocation8 + $0x2368] sm:$0xff]
    %v4723 = vld [vmem:[#allocation8 + $0x2370] sm:$0xff]
    %v4724 = vld [vmem:[#allocation8 + $0x2378] sm:$0xff]
    %v4725 = vld [vmem:[#allocation8 + $0x2380] sm:$0xff]
    %v4726 = vld [vmem:[#allocation8 + $0x2388] sm:$0xff]
    %v4727 = vld [vmem:[#allocation8 + $0x2390] sm:$0xff]
    %v4728 = vld [vmem:[#allocation8 + $0x2398] sm:$0xff]
    %v4729 = vld [vmem:[#allocation8 + $0x23a0] sm:$0xff]
    %v4730 = vld [vmem:[#allocation8 + $0x23a8] sm:$0xff]
    %v4731 = vld [vmem:[#allocation8 + $0x23b0] sm:$0xff]
    %v4732 = vld [vmem:[#allocation8 + $0x23b8] sm:$0xff]
    %v4733 = vld [vmem:[#allocation8 + $0x23c0] sm:$0xff]
    %v4734 = vld [vmem:[#allocation8 + $0x23c8] sm:$0xff]
    %v4735 = vld [vmem:[#allocation8 + $0x23d0] sm:$0xff]
    %v4736 = vld [vmem:[#allocation8 + $0x23d8] sm:$0xff]
    %v4737 = vld [vmem:[#allocation8 + $0x23e0] sm:$0xff]
    %v4738 = vld [vmem:[#allocation8 + $0x23e8] sm:$0xff]
    %v4739 = vld [vmem:[#allocation8 + $0x23f0] sm:$0xff]
    %v4740 = vld [vmem:[#allocation8 + $0x23f8] sm:$0xff]
    %v4741 = vld [vmem:[#allocation8 + $0x2400] sm:$0xff]
    %v4742 = vld [vmem:[#allocation8 + $0x2408] sm:$0xff]
    %v4743 = vld [vmem:[#allocation8 + $0x2410] sm:$0xff]
    %v4744 = vld [vmem:[#allocation8 + $0x2418] sm:$0xff]
    %v4745 = vld [vmem:[#allocation8 + $0x2420] sm:$0xff]
    %v4746 = vld [vmem:[#allocation8 + $0x2428] sm:$0xff]
    %v4747 = vld [vmem:[#allocation8 + $0x2430] sm:$0xff]
    %v4748 = vld [vmem:[#allocation8 + $0x2438] sm:$0xff]
    %v4749 = vld [vmem:[#allocation8 + $0x2440] sm:$0xff]
    %v4750 = vld [vmem:[#allocation8 + $0x2448] sm:$0xff]
    %v4751 = vld [vmem:[#allocation8 + $0x2450] sm:$0xff]
    %v4752 = vld [vmem:[#allocation8 + $0x2458] sm:$0xff]
    %v4753 = vld [vmem:[#allocation8 + $0x2460] sm:$0xff]
    %v4754 = vld [vmem:[#allocation8 + $0x2468] sm:$0xff]
    %v4755 = vld [vmem:[#allocation8 + $0x2470] sm:$0xff]
    %v4756 = vld [vmem:[#allocation8 + $0x2478] sm:$0xff]
    %v4757 = vld [vmem:[#allocation8 + $0x2480] sm:$0xff]
    %v4758 = vld [vmem:[#allocation8 + $0x2488] sm:$0xff]
    %v4759 = vld [vmem:[#allocation8 + $0x2490] sm:$0xff]
    %v4760 = vld [vmem:[#allocation8 + $0x2498] sm:$0xff]
    %v4761 = vld [vmem:[#allocation8 + $0x24a0] sm:$0xff]
    %v4762 = vld [vmem:[#allocation8 + $0x24a8] sm:$0xff]
    %v4763 = vld [vmem:[#allocation8 + $0x24b0] sm:$0xff]
    %v4764 = vld [vmem:[#allocation8 + $0x24b8] sm:$0xff]
    %v4765 = vld [vmem:[#allocation8 + $0x24c0] sm:$0xff]
    %v4766 = vld [vmem:[#allocation8 + $0x24c8] sm:$0xff]
    %v4767 = vld [vmem:[#allocation8 + $0x24d0] sm:$0xff]
    %v4768 = vld [vmem:[#allocation8 + $0x24d8] sm:$0xff]
    %v4769 = vld [vmem:[#allocation8 + $0x24e0] sm:$0xff]
    %v4770 = vld [vmem:[#allocation8 + $0x24e8] sm:$0xff]
    %v4771 = vld [vmem:[#allocation8 + $0x24f0] sm:$0xff]
    %v4772 = vld [vmem:[#allocation8 + $0x24f8] sm:$0xff]
    %v4773 = vld [vmem:[#allocation8 + $0x2500] sm:$0xff]
    %v4774 = vld [vmem:[#allocation8 + $0x2508] sm:$0xff]
    %v4775 = vld [vmem:[#allocation8 + $0x2510] sm:$0xff]
    %v4776 = vld [vmem:[#allocation8 + $0x2518] sm:$0xff]
    %v4777 = vld [vmem:[#allocation8 + $0x2520] sm:$0xff]
    %v4778 = vld [vmem:[#allocation8 + $0x2528] sm:$0xff]
    %v4779 = vld [vmem:[#allocation8 + $0x2530] sm:$0xff]
    %v4780 = vld [vmem:[#allocation8 + $0x2538] sm:$0xff]
    %v4781 = vld [vmem:[#allocation8 + $0x2540] sm:$0xff]
    %v4782 = vld [vmem:[#allocation8 + $0x2548] sm:$0xff]
    %v4783 = vld [vmem:[#allocation8 + $0x2550] sm:$0xff]
    %v4784 = vld [vmem:[#allocation8 + $0x2558] sm:$0xff]
    %v4785 = vld [vmem:[#allocation8 + $0x2560] sm:$0xff]
    %v4786 = vld [vmem:[#allocation8 + $0x2568] sm:$0xff]
    %v4787 = vld [vmem:[#allocation8 + $0x2570] sm:$0xff]
    %v4788 = vld [vmem:[#allocation8 + $0x2578] sm:$0xff]
    %v4789 = vld [vmem:[#allocation8 + $0x2580] sm:$0xff]
    %v4790 = vld [vmem:[#allocation8 + $0x2588] sm:$0xff]
    %v4791 = vld [vmem:[#allocation8 + $0x2590] sm:$0xff]
    %v4792 = vld [vmem:[#allocation8 + $0x2598] sm:$0xff]
    %v4793 = vld [vmem:[#allocation8 + $0x25a0] sm:$0xff]
    %v4794 = vld [vmem:[#allocation8 + $0x25a8] sm:$0xff]
    %v4795 = vld [vmem:[#allocation8 + $0x25b0] sm:$0xff]
    %v4796 = vld [vmem:[#allocation8 + $0x25b8] sm:$0xff]
    %v4797 = vld [vmem:[#allocation8 + $0x25c0] sm:$0xff]
    %v4798 = vld [vmem:[#allocation8 + $0x25c8] sm:$0xff]
    %v4799 = vld [vmem:[#allocation8 + $0x25d0] sm:$0xff]
    %v4800 = vld [vmem:[#allocation8 + $0x25d8] sm:$0xff]
    %v4801 = vld [vmem:[#allocation8 + $0x25e0] sm:$0xff]
    %v4802 = vld [vmem:[#allocation8 + $0x25e8] sm:$0xff]
    %v4803 = vld [vmem:[#allocation8 + $0x25f0] sm:$0xff]
    %v4804 = vld [vmem:[#allocation8 + $0x25f8] sm:$0xff]
    %v4805 = vld [vmem:[#allocation8 + $0x2600] sm:$0xff]
    %v4806 = vld [vmem:[#allocation8 + $0x2608] sm:$0xff]
    %v4807 = vld [vmem:[#allocation8 + $0x2610] sm:$0xff]
    %v4808 = vld [vmem:[#allocation8 + $0x2618] sm:$0xff]
    %v4809 = vld [vmem:[#allocation8 + $0x2620] sm:$0xff]
    %v4810 = vld [vmem:[#allocation8 + $0x2628] sm:$0xff]
    %v4811 = vld [vmem:[#allocation8 + $0x2630] sm:$0xff]
    %v4812 = vld [vmem:[#allocation8 + $0x2638] sm:$0xff]
    %v4813 = vld [vmem:[#allocation8 + $0x2640] sm:$0xff]
    %v4814 = vld [vmem:[#allocation8 + $0x2648] sm:$0xff]
    %v4815 = vld [vmem:[#allocation8 + $0x2650] sm:$0xff]
    %v4816 = vld [vmem:[#allocation8 + $0x2658] sm:$0xff]
    %v4817 = vld [vmem:[#allocation8 + $0x2660] sm:$0xff]
    %v4818 = vld [vmem:[#allocation8 + $0x2668] sm:$0xff]
    %v4819 = vld [vmem:[#allocation8 + $0x2670] sm:$0xff]
    %v4820 = vld [vmem:[#allocation8 + $0x2678] sm:$0xff]
    %v4821 = vld [vmem:[#allocation8 + $0x2680] sm:$0xff]
    %v4822 = vld [vmem:[#allocation8 + $0x2688] sm:$0xff]
    %v4823 = vld [vmem:[#allocation8 + $0x2690] sm:$0xff]
    %v4824 = vld [vmem:[#allocation8 + $0x2698] sm:$0xff]
    %v4825 = vld [vmem:[#allocation8 + $0x26a0] sm:$0xff]
    %v4826 = vld [vmem:[#allocation8 + $0x26a8] sm:$0xff]
    %v4827 = vld [vmem:[#allocation8 + $0x26b0] sm:$0xff]
    %v4828 = vld [vmem:[#allocation8 + $0x26b8] sm:$0xff]
    %v4829 = vld [vmem:[#allocation8 + $0x26c0] sm:$0xff]
    %v4830 = vld [vmem:[#allocation8 + $0x26c8] sm:$0xff]
    %v4831 = vld [vmem:[#allocation8 + $0x26d0] sm:$0xff]
    %v4832 = vld [vmem:[#allocation8 + $0x26d8] sm:$0xff]
    %v4833 = vld [vmem:[#allocation8 + $0x26e0] sm:$0xff]
    %v4834 = vld [vmem:[#allocation8 + $0x26e8] sm:$0xff]
    %v4835 = vld [vmem:[#allocation8 + $0x26f0] sm:$0xff]
    %v4836 = vld [vmem:[#allocation8 + $0x26f8] sm:$0xff]
    %v4837 = vld [vmem:[#allocation8 + $0x2700] sm:$0xff]
    %v4838 = vld [vmem:[#allocation8 + $0x2708] sm:$0xff]
    %v4839 = vld [vmem:[#allocation8 + $0x2710] sm:$0xff]
    %v4840 = vld [vmem:[#allocation8 + $0x2718] sm:$0xff]
    %v4841 = vld [vmem:[#allocation8 + $0x2720] sm:$0xff]
    %v4842 = vld [vmem:[#allocation8 + $0x2728] sm:$0xff]
    %v4843 = vld [vmem:[#allocation8 + $0x2730] sm:$0xff]
    %v4844 = vld [vmem:[#allocation8 + $0x2738] sm:$0xff]
    %v4845 = vld [vmem:[#allocation8 + $0x2740] sm:$0xff]
    %v4846 = vld [vmem:[#allocation8 + $0x2748] sm:$0xff]
    %v4847 = vld [vmem:[#allocation8 + $0x2750] sm:$0xff]
    %v4848 = vld [vmem:[#allocation8 + $0x2758] sm:$0xff]
    %v4849 = vld [vmem:[#allocation8 + $0x2760] sm:$0xff]
    %v4850 = vld [vmem:[#allocation8 + $0x2768] sm:$0xff]
    %v4851 = vld [vmem:[#allocation8 + $0x2770] sm:$0xff]
    %v4852 = vld [vmem:[#allocation8 + $0x2778] sm:$0xff]
    %v4853 = vld [vmem:[#allocation8 + $0x2780] sm:$0xff]
    %v4854 = vld [vmem:[#allocation8 + $0x2788] sm:$0xff]
    %v4855 = vld [vmem:[#allocation8 + $0x2790] sm:$0xff]
    %v4856 = vld [vmem:[#allocation8 + $0x2798] sm:$0xff]
    %v4857 = vld [vmem:[#allocation8 + $0x27a0] sm:$0xff]
    %v4858 = vld [vmem:[#allocation8 + $0x27a8] sm:$0xff]
    %v4859 = vld [vmem:[#allocation8 + $0x27b0] sm:$0xff]
    %v4860 = vld [vmem:[#allocation8 + $0x27b8] sm:$0xff]
    %v4861 = vld [vmem:[#allocation8 + $0x27c0] sm:$0xff]
    %v4862 = vld [vmem:[#allocation8 + $0x27c8] sm:$0xff]
    %v4863 = vld [vmem:[#allocation8 + $0x27d0] sm:$0xff]
    %v4864 = vld [vmem:[#allocation8 + $0x27d8] sm:$0xff]
    %v4865 = vld [vmem:[#allocation8 + $0x27e0] sm:$0xff]
    %v4866 = vld [vmem:[#allocation8 + $0x27e8] sm:$0xff]
    %v4867 = vld [vmem:[#allocation8 + $0x27f0] sm:$0xff]
    %v4868 = vld [vmem:[#allocation8 + $0x27f8] sm:$0xff]
    %v4869 = vld [vmem:[#allocation8 + $0x2800] sm:$0xff]
    %v4870 = vld [vmem:[#allocation8 + $0x2808] sm:$0xff]
    %v4871 = vld [vmem:[#allocation8 + $0x2810] sm:$0xff]
    %v4872 = vld [vmem:[#allocation8 + $0x2818] sm:$0xff]
    %v4873 = vld [vmem:[#allocation8 + $0x2820] sm:$0xff]
    %v4874 = vld [vmem:[#allocation8 + $0x2828] sm:$0xff]
    %v4875 = vld [vmem:[#allocation8 + $0x2830] sm:$0xff]
    %v4876 = vld [vmem:[#allocation8 + $0x2838] sm:$0xff]
    %v4877 = vld [vmem:[#allocation8 + $0x2840] sm:$0xff]
    %v4878 = vld [vmem:[#allocation8 + $0x2848] sm:$0xff]
    %v4879 = vld [vmem:[#allocation8 + $0x2850] sm:$0xff]
    %v4880 = vld [vmem:[#allocation8 + $0x2858] sm:$0xff]
    %v4881 = vld [vmem:[#allocation8 + $0x2860] sm:$0xff]
    %v4882 = vld [vmem:[#allocation8 + $0x2868] sm:$0xff]
    %v4883 = vld [vmem:[#allocation8 + $0x2870] sm:$0xff]
    %v4884 = vld [vmem:[#allocation8 + $0x2878] sm:$0xff]
    %v4885 = vld [vmem:[#allocation8 + $0x2880] sm:$0xff]
    %v4886 = vld [vmem:[#allocation8 + $0x2888] sm:$0xff]
    %v4887 = vld [vmem:[#allocation8 + $0x2890] sm:$0xff]
    %v4888 = vld [vmem:[#allocation8 + $0x2898] sm:$0xff]
    %v4889 = vld [vmem:[#allocation8 + $0x28a0] sm:$0xff]
    %v4890 = vld [vmem:[#allocation8 + $0x28a8] sm:$0xff]
    %v4891 = vld [vmem:[#allocation8 + $0x28b0] sm:$0xff]
    %v4892 = vld [vmem:[#allocation8 + $0x28b8] sm:$0xff]
    %v4893 = vld [vmem:[#allocation8 + $0x28c0] sm:$0xff]
    %v4894 = vld [vmem:[#allocation8 + $0x28c8] sm:$0xff]
    %v4895 = vld [vmem:[#allocation8 + $0x28d0] sm:$0xff]
    %v4896 = vld [vmem:[#allocation8 + $0x28d8] sm:$0xff]
    %v4897 = vld [vmem:[#allocation8 + $0x28e0] sm:$0xff]
    %v4898 = vld [vmem:[#allocation8 + $0x28e8] sm:$0xff]
    %v4899 = vld [vmem:[#allocation8 + $0x28f0] sm:$0xff]
    %v4900 = vld [vmem:[#allocation8 + $0x28f8] sm:$0xff]
    %v4901 = vld [vmem:[#allocation8 + $0x2900] sm:$0xff]
    %v4902 = vld [vmem:[#allocation8 + $0x2908] sm:$0xff]
    %v4903 = vld [vmem:[#allocation8 + $0x2910] sm:$0xff]
    %v4904 = vld [vmem:[#allocation8 + $0x2918] sm:$0xff]
    %v4905 = vld [vmem:[#allocation8 + $0x2920] sm:$0xff]
    %v4906 = vld [vmem:[#allocation8 + $0x2928] sm:$0xff]
    %v4907 = vld [vmem:[#allocation8 + $0x2930] sm:$0xff]
    %v4908 = vld [vmem:[#allocation8 + $0x2938] sm:$0xff]
    %v4909 = vld [vmem:[#allocation8 + $0x2940] sm:$0xff]
    %v4910 = vld [vmem:[#allocation8 + $0x2948] sm:$0xff]
    %v4911 = vld [vmem:[#allocation8 + $0x2950] sm:$0xff]
    %v4912 = vld [vmem:[#allocation8 + $0x2958] sm:$0xff]
    %v4913 = vld [vmem:[#allocation8 + $0x2960] sm:$0xff]
    %v4914 = vld [vmem:[#allocation8 + $0x2968] sm:$0xff]
    %v4915 = vld [vmem:[#allocation8 + $0x2970] sm:$0xff]
    %v4916 = vld [vmem:[#allocation8 + $0x2978] sm:$0xff]
    %v4917 = vld [vmem:[#allocation8 + $0x2980] sm:$0xff]
    %v4918 = vld [vmem:[#allocation8 + $0x2988] sm:$0xff]
    %v4919 = vld [vmem:[#allocation8 + $0x2990] sm:$0xff]
    %v4920 = vld [vmem:[#allocation8 + $0x2998] sm:$0xff]
    %v4921 = vld [vmem:[#allocation8 + $0x29a0] sm:$0xff]
    %v4922 = vld [vmem:[#allocation8 + $0x29a8] sm:$0xff]
    %v4923 = vld [vmem:[#allocation8 + $0x29b0] sm:$0xff]
    %v4924 = vld [vmem:[#allocation8 + $0x29b8] sm:$0xff]
    %v4925 = vld [vmem:[#allocation8 + $0x29c0] sm:$0xff]
    %v4926 = vld [vmem:[#allocation8 + $0x29c8] sm:$0xff]
    %v4927 = vld [vmem:[#allocation8 + $0x29d0] sm:$0xff]
    %v4928 = vld [vmem:[#allocation8 + $0x29d8] sm:$0xff]
    %v4929 = vld [vmem:[#allocation8 + $0x29e0] sm:$0xff]
    %v4930 = vld [vmem:[#allocation8 + $0x29e8] sm:$0xff]
    %v4931 = vld [vmem:[#allocation8 + $0x29f0] sm:$0xff]
    %v4932 = vld [vmem:[#allocation8 + $0x29f8] sm:$0xff]
    %v4933 = vld [vmem:[#allocation8 + $0x2a00] sm:$0xff]
    %v4934 = vld [vmem:[#allocation8 + $0x2a08] sm:$0xff]
    %v4935 = vld [vmem:[#allocation8 + $0x2a10] sm:$0xff]
    %v4936 = vld [vmem:[#allocation8 + $0x2a18] sm:$0xff]
    %v4937 = vld [vmem:[#allocation8 + $0x2a20] sm:$0xff]
    %v4938 = vld [vmem:[#allocation8 + $0x2a28] sm:$0xff]
    %v4939 = vld [vmem:[#allocation8 + $0x2a30] sm:$0xff]
    %v4940 = vld [vmem:[#allocation8 + $0x2a38] sm:$0xff]
    %v4941 = vld [vmem:[#allocation8 + $0x2a40] sm:$0xff]
    %v4942 = vld [vmem:[#allocation8 + $0x2a48] sm:$0xff]
    %v4943 = vld [vmem:[#allocation8 + $0x2a50] sm:$0xff]
    %v4944 = vld [vmem:[#allocation8 + $0x2a58] sm:$0xff]
    %v4945 = vld [vmem:[#allocation8 + $0x2a60] sm:$0xff]
    %v4946 = vld [vmem:[#allocation8 + $0x2a68] sm:$0xff]
    %v4947 = vld [vmem:[#allocation8 + $0x2a70] sm:$0xff]
    %v4948 = vld [vmem:[#allocation8 + $0x2a78] sm:$0xff]
    %v4949 = vld [vmem:[#allocation8 + $0x2a80] sm:$0xff]
    %v4950 = vld [vmem:[#allocation8 + $0x2a88] sm:$0xff]
    %v4951 = vld [vmem:[#allocation8 + $0x2a90] sm:$0xff]
    %v4952 = vld [vmem:[#allocation8 + $0x2a98] sm:$0xff]
    %v4953 = vld [vmem:[#allocation8 + $0x2aa0] sm:$0xff]
    %v4954 = vld [vmem:[#allocation8 + $0x2aa8] sm:$0xff]
    %v4955 = vld [vmem:[#allocation8 + $0x2ab0] sm:$0xff]
    %v4956 = vld [vmem:[#allocation8 + $0x2ab8] sm:$0xff]
    %v4957 = vld [vmem:[#allocation8 + $0x2ac0] sm:$0xff]
    %v4958 = vld [vmem:[#allocation8 + $0x2ac8] sm:$0xff]
    %v4959 = vld [vmem:[#allocation8 + $0x2ad0] sm:$0xff]
    %v4960 = vld [vmem:[#allocation8 + $0x2ad8] sm:$0xff]
    %v4961 = vld [vmem:[#allocation8 + $0x2ae0] sm:$0xff]
    %v4962 = vld [vmem:[#allocation8 + $0x2ae8] sm:$0xff]
    %v4963 = vld [vmem:[#allocation8 + $0x2af0] sm:$0xff]
    %v4964 = vld [vmem:[#allocation8 + $0x2af8] sm:$0xff]
    %v4965 = vld [vmem:[#allocation8 + $0x2b00] sm:$0xff]
    %v4966 = vld [vmem:[#allocation8 + $0x2b08] sm:$0xff]
    %v4967 = vld [vmem:[#allocation8 + $0x2b10] sm:$0xff]
    %v4968 = vld [vmem:[#allocation8 + $0x2b18] sm:$0xff]
    %v4969 = vld [vmem:[#allocation8 + $0x2b20] sm:$0xff]
    %v4970 = vld [vmem:[#allocation8 + $0x2b28] sm:$0xff]
    %v4971 = vld [vmem:[#allocation8 + $0x2b30] sm:$0xff]
    %v4972 = vld [vmem:[#allocation8 + $0x2b38] sm:$0xff]
    %v4973 = vld [vmem:[#allocation8 + $0x2b40] sm:$0xff]
    %v4974 = vld [vmem:[#allocation8 + $0x2b48] sm:$0xff]
    %v4975 = vld [vmem:[#allocation8 + $0x2b50] sm:$0xff]
    %v4976 = vld [vmem:[#allocation8 + $0x2b58] sm:$0xff]
    %v4977 = vld [vmem:[#allocation8 + $0x2b60] sm:$0xff]
    %v4978 = vld [vmem:[#allocation8 + $0x2b68] sm:$0xff]
    %v4979 = vld [vmem:[#allocation8 + $0x2b70] sm:$0xff]
    %v4980 = vld [vmem:[#allocation8 + $0x2b78] sm:$0xff]
    %v4981 = vld [vmem:[#allocation8 + $0x2b80] sm:$0xff]
    %v4982 = vld [vmem:[#allocation8 + $0x2b88] sm:$0xff]
    %v4983 = vld [vmem:[#allocation8 + $0x2b90] sm:$0xff]
    %v4984 = vld [vmem:[#allocation8 + $0x2b98] sm:$0xff]
    %v4985 = vld [vmem:[#allocation8 + $0x2ba0] sm:$0xff]
    %v4986 = vld [vmem:[#allocation8 + $0x2ba8] sm:$0xff]
    %v4987 = vld [vmem:[#allocation8 + $0x2bb0] sm:$0xff]
    %v4988 = vld [vmem:[#allocation8 + $0x2bb8] sm:$0xff]
    %v4989 = vld [vmem:[#allocation8 + $0x2bc0] sm:$0xff]
    %v4990 = vld [vmem:[#allocation8 + $0x2bc8] sm:$0xff]
    %v4991 = vld [vmem:[#allocation8 + $0x2bd0] sm:$0xff]
    %v4992 = vld [vmem:[#allocation8 + $0x2bd8] sm:$0xff]
    %v4993 = vld [vmem:[#allocation8 + $0x2be0] sm:$0xff]
    %v4994 = vld [vmem:[#allocation8 + $0x2be8] sm:$0xff]
    %v4995 = vld [vmem:[#allocation8 + $0x2bf0] sm:$0xff]
    %v4996 = vld [vmem:[#allocation8 + $0x2bf8] sm:$0xff]
    %v4997 = vld [vmem:[#allocation8 + $0x2c00] sm:$0xff]
    %v4998 = vld [vmem:[#allocation8 + $0x2c08] sm:$0xff]
    %v4999 = vld [vmem:[#allocation8 + $0x2c10] sm:$0xff]
    %v5000 = vld [vmem:[#allocation8 + $0x2c18] sm:$0xff]
    %v5001 = vld [vmem:[#allocation8 + $0x2c20] sm:$0xff]
    %v5002 = vld [vmem:[#allocation8 + $0x2c28] sm:$0xff]
    %v5003 = vld [vmem:[#allocation8 + $0x2c30] sm:$0xff]
    %v5004 = vld [vmem:[#allocation8 + $0x2c38] sm:$0xff]
    %v5005 = vld [vmem:[#allocation8 + $0x2c40] sm:$0xff]
    %v5006 = vld [vmem:[#allocation8 + $0x2c48] sm:$0xff]
    %v5007 = vld [vmem:[#allocation8 + $0x2c50] sm:$0xff]
    %v5008 = vld [vmem:[#allocation8 + $0x2c58] sm:$0xff]
    %v5009 = vld [vmem:[#allocation8 + $0x2c60] sm:$0xff]
    %v5010 = vld [vmem:[#allocation8 + $0x2c68] sm:$0xff]
    %v5011 = vld [vmem:[#allocation8 + $0x2c70] sm:$0xff]
    %v5012 = vld [vmem:[#allocation8 + $0x2c78] sm:$0xff]
    %v5013 = vld [vmem:[#allocation8 + $0x2c80] sm:$0xff]
    %v5014 = vld [vmem:[#allocation8 + $0x2c88] sm:$0xff]
    %v5015 = vld [vmem:[#allocation8 + $0x2c90] sm:$0xff]
    %v5016 = vld [vmem:[#allocation8 + $0x2c98] sm:$0xff]
    %v5017 = vld [vmem:[#allocation8 + $0x2ca0] sm:$0xff]
    %v5018 = vld [vmem:[#allocation8 + $0x2ca8] sm:$0xff]
    %v5019 = vld [vmem:[#allocation8 + $0x2cb0] sm:$0xff]
    %v5020 = vld [vmem:[#allocation8 + $0x2cb8] sm:$0xff]
    %v5021 = vld [vmem:[#allocation8 + $0x2cc0] sm:$0xff]
    %v5022 = vld [vmem:[#allocation8 + $0x2cc8] sm:$0xff]
    %v5023 = vld [vmem:[#allocation8 + $0x2cd0] sm:$0xff]
    %v5024 = vld [vmem:[#allocation8 + $0x2cd8] sm:$0xff]
    %v5025 = vld [vmem:[#allocation8 + $0x2ce0] sm:$0xff]
    %v5026 = vld [vmem:[#allocation8 + $0x2ce8] sm:$0xff]
    %v5027 = vld [vmem:[#allocation8 + $0x2cf0] sm:$0xff]
    %v5028 = vld [vmem:[#allocation8 + $0x2cf8] sm:$0xff]
    %v5029 = vld [vmem:[#allocation8 + $0x2d00] sm:$0xff]
    %v5030 = vld [vmem:[#allocation8 + $0x2d08] sm:$0xff]
    %v5031 = vld [vmem:[#allocation8 + $0x2d10] sm:$0xff]
    %v5032 = vld [vmem:[#allocation8 + $0x2d18] sm:$0xff]
    %v5033 = vld [vmem:[#allocation8 + $0x2d20] sm:$0xff]
    %v5034 = vld [vmem:[#allocation8 + $0x2d28] sm:$0xff]
    %v5035 = vld [vmem:[#allocation8 + $0x2d30] sm:$0xff]
    %v5036 = vld [vmem:[#allocation8 + $0x2d38] sm:$0xff]
    %v5037 = vld [vmem:[#allocation8 + $0x2d40] sm:$0xff]
    %v5038 = vld [vmem:[#allocation8 + $0x2d48] sm:$0xff]
    %v5039 = vld [vmem:[#allocation8 + $0x2d50] sm:$0xff]
    %v5040 = vld [vmem:[#allocation8 + $0x2d58] sm:$0xff]
    %v5041 = vld [vmem:[#allocation8 + $0x2d60] sm:$0xff]
    %v5042 = vld [vmem:[#allocation8 + $0x2d68] sm:$0xff]
    %v5043 = vld [vmem:[#allocation8 + $0x2d70] sm:$0xff]
    %v5044 = vld [vmem:[#allocation8 + $0x2d78] sm:$0xff]
    %v5045 = vld [vmem:[#allocation9] sm:$0xff]
    %v5047 = vlaneseq
    %v5048 = vshrl.u32 %v5047, 7
    %v5049 = vsub.s32 0, %v5048
    %v5050 = vrot.slane %v5045, %v5049
    %v5051 = vlaneseq
    %v5052 = vshrl.u32 %v5051, 7
    %v5053 = vsub.s32 1, %v5052
    %v5054 = vrot.slane %v5045, %v5053
    %v5055 = vlaneseq
    %v5056 = vshrl.u32 %v5055, 7
    %v5057 = vsub.s32 2, %v5056
    %v5058 = vrot.slane %v5045, %v5057
    %v5059 = vlaneseq
    %v5060 = vshrl.u32 %v5059, 7
    %v5061 = vsub.s32 3, %v5060
    %v5062 = vrot.slane %v5045, %v5061
    %v5063 = vlaneseq
    %v5064 = vshrl.u32 %v5063, 7
    %v5065 = vsub.s32 4, %v5064
    %v5066 = vrot.slane %v5045, %v5065
    %v5067 = vlaneseq
    %v5068 = vshrl.u32 %v5067, 7
    %v5069 = vsub.s32 5, %v5068
    %v5070 = vrot.slane %v5045, %v5069
    %v5071 = vlaneseq
    %v5072 = vshrl.u32 %v5071, 7
    %v5073 = vsub.s32 6, %v5072
    %v5074 = vrot.slane %v5045, %v5073
    %5082 = vmatprep.subr.mxu0 %v3590
    %5083 = vmatpush1.msra.mxu0 %v3589
    %5084 = vmatprep.subr.mxu0 %v3597
    %5085 = vmatpush1.msra.mxu0 %v3596
    %5086 = vmatprep.subr.mxu0 %v3604
    %5087 = vmatpush1.msra.mxu0 %v3603
    %5088 = vmatprep.subr.mxu0 %v3611
    %5089 = vmatpush1.msra.mxu0 %v3610
    %5090 = vmatprep.subr.mxu0 %v3618
    %5091 = vmatpush1.msra.mxu0 %v3617
    %5092 = vmatprep.subr.mxu0 %v3625
    %5093 = vmatpush1.msra.mxu0 %v3624
    %5094 = vmatprep.subr.mxu0 %v3632
    %5095 = vmatpush1.msra.mxu0 %v3631
    %5096 = vmatprep.subr.mxu0 %v3639
    %5097 = vmatpush1.msra.mxu0 %v3638
    %5098 = vmatprep.subr.mxu0 %v3646
    %5099 = vmatpush1.msra.mxu0 %v3645
    %5100 = vmatprep.subr.mxu0 %v3653
    %5101 = vmatpush1.msra.mxu0 %v3652
    %5102 = vmatprep.subr.mxu0 %v3660
    %5103 = vmatpush1.msra.mxu0 %v3659
    %5104 = vmatprep.subr.mxu0 %v3667
    %5105 = vmatpush1.msra.mxu0 %v3666
    %5106 = vmatprep.subr.mxu0 %v3674
    %5107 = vmatpush1.msra.mxu0 %v3673
    %5108 = vmatprep.subr.mxu0 %v3681
    %5109 = vmatpush1.msra.mxu0 %v3680
    %5110 = vmatprep.subr.mxu0 %v3688
    %5111 = vmatpush1.msra.mxu0 %v3687
    %5112 = vmatprep.subr.mxu0 %v3695
    %5113 = vmatpush1.msra.mxu0 %v3694
    %5114 = vmatprep.subr.mxu0 %v3702
    %5115 = vmatpush1.msra.mxu0 %v3701
    %5116 = vmatprep.subr.mxu0 %v3709
    %5117 = vmatpush1.msra.mxu0 %v3708
    %5118 = vmatprep.subr.mxu0 %v3716
    %5119 = vmatpush1.msra.mxu0 %v3715
    %5120 = vmatprep.subr.mxu0 %v3723
    %5121 = vmatpush1.msra.mxu0 %v3722
    %5122 = vmatprep.subr.mxu0 %v3730
    %5123 = vmatpush1.msra.mxu0 %v3729
    %5124 = vmatprep.subr.mxu0 %v3737
    %5125 = vmatpush1.msra.mxu0 %v3736
    %5126 = vmatprep.subr.mxu0 %v3744
    %5127 = vmatpush1.msra.mxu0 %v3743
    %5128 = vmatprep.subr.mxu0 %v3751
    %5129 = vmatpush1.msra.mxu0 %v3750
    %5130 = vmatprep.subr.mxu0 %v3758
    %5131 = vmatpush1.msra.mxu0 %v3757
    %5132 = vmatprep.subr.mxu0 %v3765
    %5133 = vmatpush1.msra.mxu0 %v3764
    %5134 = vmatprep.subr.mxu0 %v3772
    %5135 = vmatpush1.msra.mxu0 %v3771
    %5136 = vmatprep.subr.mxu0 %v3779
    %5137 = vmatpush1.msra.mxu0 %v3778
    %5138 = vmatprep.subr.mxu0 %v3786
    %5139 = vmatpush1.msra.mxu0 %v3785
    %5140 = vmatprep.subr.mxu0 %v3793
    %5141 = vmatpush1.msra.mxu0 %v3792
    %5142 = vmatprep.subr.mxu0 %v3800
    %5143 = vmatpush1.msra.mxu0 %v3799
    %5144 = vmatprep.subr.mxu0 %v3807
    %5145 = vmatpush1.msra.mxu0 %v3806
    %5146 = vmatprep.mubr.f32.mxu0 %v3576
    %5147 = vmatmul.mubr.f32.gmra.mrb[0].mxu0 %v3575
    %v5148 = vpop.f32.mrb[0].mxu0
    %v5149 = vadd.f32 %v5050, %v5148
    %v5150 = vpop.f32.mrb[0].mxu0
    %v5151 = vadd.f32 %v5054, %v5150
    %5152 = vdwg.mxu0
    %5153 = vmatprep.subr.mxu0 %v3814
    %5154 = vmatpush1.msra.mxu0 %v3813
    %5155 = vmatprep.subr.mxu0 %v3821
    %5156 = vmatpush1.msra.mxu0 %v3820
    %5157 = vmatprep.subr.mxu0 %v3828
    %5158 = vmatpush1.msra.mxu0 %v3827
    %5159 = vmatprep.subr.mxu0 %v3835
    %5160 = vmatpush1.msra.mxu0 %v3834
    %5161 = vmatprep.subr.mxu0 %v3842
    %5162 = vmatpush1.msra.mxu0 %v3841
    %5163 = vmatprep.subr.mxu0 %v3849
    %5164 = vmatpush1.msra.mxu0 %v3848
    %5165 = vmatprep.subr.mxu0 %v3856
    %5166 = vmatpush1.msra.mxu0 %v3855
    %5167 = vmatprep.subr.mxu0 %v3863
    %5168 = vmatpush1.msra.mxu0 %v3862
    %5169 = vmatprep.subr.mxu0 %v3870
    %5170 = vmatpush1.msra.mxu0 %v3869
    %5171 = vmatprep.subr.mxu0 %v3877
    %5172 = vmatpush1.msra.mxu0 %v3876
    %5173 = vmatprep.subr.mxu0 %v3884
    %5174 = vmatpush1.msra.mxu0 %v3883
    %5175 = vmatprep.subr.mxu0 %v3891
    %5176 = vmatpush1.msra.mxu0 %v3890
    %5177 = vmatprep.subr.mxu0 %v3898
    %5178 = vmatpush1.msra.mxu0 %v3897
    %5179 = vmatprep.subr.mxu0 %v3905
    %5180 = vmatpush1.msra.mxu0 %v3904
    %5181 = vmatprep.subr.mxu0 %v3912
    %5182 = vmatpush1.msra.mxu0 %v3911
    %5183 = vmatprep.subr.mxu0 %v3919
    %5184 = vmatpush1.msra.mxu0 %v3918
    %5185 = vmatprep.subr.mxu0 %v3926
    %5186 = vmatpush1.msra.mxu0 %v3925
    %5187 = vmatprep.subr.mxu0 %v3933
    %5188 = vmatpush1.msra.mxu0 %v3932
    %5189 = vmatprep.subr.mxu0 %v3940
    %5190 = vmatpush1.msra.mxu0 %v3939
    %5191 = vmatprep.subr.mxu0 %v3947
    %5192 = vmatpush1.msra.mxu0 %v3946
    %5193 = vmatprep.subr.mxu0 %v3954
    %5194 = vmatpush1.msra.mxu0 %v3953
    %5195 = vmatprep.subr.mxu0 %v3961
    %5196 = vmatpush1.msra.mxu0 %v3960
    %5197 = vmatprep.subr.mxu0 %v3968
    %5198 = vmatpush1.msra.mxu0 %v3967
    %5199 = vmatprep.subr.mxu0 %v3975
    %5200 = vmatpush1.msra.mxu0 %v3974
    %5201 = vmatprep.subr.mxu0 %v3982
    %5202 = vmatpush1.msra.mxu0 %v3981
    %5203 = vmatprep.subr.mxu0 %v3989
    %5204 = vmatpush1.msra.mxu0 %v3988
    %5205 = vmatprep.subr.mxu0 %v3996
    %5206 = vmatpush1.msra.mxu0 %v3995
    %5207 = vmatprep.subr.mxu0 %v4003
    %5208 = vmatpush1.msra.mxu0 %v4002
    %5209 = vmatprep.subr.mxu0 %v4010
    %5210 = vmatpush1.msra.mxu0 %v4009
    %5211 = vmatprep.subr.mxu0 %v4017
    %5212 = vmatpush1.msra.mxu0 %v4016
    %5213 = vmatprep.subr.mxu0 %v4024
    %5214 = vmatpush1.msra.mxu0 %v4023
    %5215 = vmatprep.subr.mxu0 %v4031
    %5216 = vmatpush1.msra.mxu0 %v4030
    %5217 = vmatprep.mubr.f32.mxu0 %v3578
    %5218 = vmatmul.mubr.f32.gmra.mrb[0].mxu0 %v3577
    %v5219 = vpop.f32.mrb[0].mxu0
    %v5220 = vadd.f32 %v5149, %v5219
    %v5221 = vpop.f32.mrb[0].mxu0
    %v5222 = vadd.f32 %v5151, %v5221
    %5223 = vdwg.mxu0
    %5224 = vmatprep.subr.mxu0 %v4038
    %5225 = vmatpush1.msra.mxu0 %v4037
    %5226 = vmatprep.subr.mxu0 %v4045
    %5227 = vmatpush1.msra.mxu0 %v4044
    %5228 = vmatprep.subr.mxu0 %v4052
    %5229 = vmatpush1.msra.mxu0 %v4051
    %5230 = vmatprep.subr.mxu0 %v4059
    %5231 = vmatpush1.msra.mxu0 %v4058
    %5232 = vmatprep.subr.mxu0 %v4066
    %5233 = vmatpush1.msra.mxu0 %v4065
    %5234 = vmatprep.subr.mxu0 %v4073
    %5235 = vmatpush1.msra.mxu0 %v4072
    %5236 = vmatprep.subr.mxu0 %v4080
    %5237 = vmatpush1.msra.mxu0 %v4079
    %5238 = vmatprep.subr.mxu0 %v4087
    %5239 = vmatpush1.msra.mxu0 %v4086
    %5240 = vmatprep.subr.mxu0 %v4094
    %5241 = vmatpush1.msra.mxu0 %v4093
    %5242 = vmatprep.subr.mxu0 %v4101
    %5243 = vmatpush1.msra.mxu0 %v4100
    %5244 = vmatprep.subr.mxu0 %v4108
    %5245 = vmatpush1.msra.mxu0 %v4107
    %5246 = vmatprep.subr.mxu0 %v4115
    %5247 = vmatpush1.msra.mxu0 %v4114
    %5248 = vmatprep.subr.mxu0 %v4122
    %5249 = vmatpush1.msra.mxu0 %v4121
    %5250 = vmatprep.subr.mxu0 %v4129
    %5251 = vmatpush1.msra.mxu0 %v4128
    %5252 = vmatprep.subr.mxu0 %v4136
    %5253 = vmatpush1.msra.mxu0 %v4135
    %5254 = vmatprep.subr.mxu0 %v4143
    %5255 = vmatpush1.msra.mxu0 %v4142
    %5256 = vmatprep.subr.mxu0 %v4150
    %5257 = vmatpush1.msra.mxu0 %v4149
    %5258 = vmatprep.subr.mxu0 %v4157
    %5259 = vmatpush1.msra.mxu0 %v4156
    %5260 = vmatprep.subr.mxu0 %v4164
    %5261 = vmatpush1.msra.mxu0 %v4163
    %5262 = vmatprep.subr.mxu0 %v4171
    %5263 = vmatpush1.msra.mxu0 %v4170
    %5264 = vmatprep.subr.mxu0 %v4178
    %5265 = vmatpush1.msra.mxu0 %v4177
    %5266 = vmatprep.subr.mxu0 %v4185
    %5267 = vmatpush1.msra.mxu0 %v4184
    %5268 = vmatprep.subr.mxu0 %v4192
    %5269 = vmatpush1.msra.mxu0 %v4191
    %5270 = vmatprep.subr.mxu0 %v4199
    %5271 = vmatpush1.msra.mxu0 %v4198
    %5272 = vmatprep.subr.mxu0 %v4206
    %5273 = vmatpush1.msra.mxu0 %v4205
    %5274 = vmatprep.subr.mxu0 %v4213
    %5275 = vmatpush1.msra.mxu0 %v4212
    %5276 = vmatprep.subr.mxu0 %v4220
    %5277 = vmatpush1.msra.mxu0 %v4219
    %5278 = vmatprep.subr.mxu0 %v4227
    %5279 = vmatpush1.msra.mxu0 %v4226
    %5280 = vmatprep.subr.mxu0 %v4234
    %5281 = vmatpush1.msra.mxu0 %v4233
    %5282 = vmatprep.subr.mxu0 %v4241
    %5283 = vmatpush1.msra.mxu0 %v4240
    %5284 = vmatprep.subr.mxu0 %v4248
    %5285 = vmatpush1.msra.mxu0 %v4247
    %5286 = vmatprep.subr.mxu0 %v4255
    %5287 = vmatpush1.msra.mxu0 %v4254
    %5288 = vmatprep.mubr.f32.mxu0 %v3580
    %5289 = vmatmul.mubr.f32.gmra.mrb[0].mxu0 %v3579
    %v5290 = vpop.f32.mrb[0].mxu0
    %v5291 = vadd.f32 %v5220, %v5290
    %v5292 = vpop.f32.mrb[0].mxu0
    %v5293 = vadd.f32 %v5222, %v5292
    %5294 = vdwg.mxu0
    %5295 = vmatprep.subr.mxu0 %v4262
    %5296 = vmatpush1.msra.mxu0 %v4261
    %5297 = vmatprep.subr.mxu0 %v4269
    %5298 = vmatpush1.msra.mxu0 %v4268
    %5299 = vmatprep.subr.mxu0 %v4276
    %5300 = vmatpush1.msra.mxu0 %v4275
    %5301 = vmatprep.subr.mxu0 %v4283
    %5302 = vmatpush1.msra.mxu0 %v4282
    %5303 = vmatprep.subr.mxu0 %v4290
    %5304 = vmatpush1.msra.mxu0 %v4289
    %5305 = vmatprep.subr.mxu0 %v4297
    %5306 = vmatpush1.msra.mxu0 %v4296
    %5307 = vmatprep.subr.mxu0 %v4304
    %5308 = vmatpush1.msra.mxu0 %v4303
    %5309 = vmatprep.subr.mxu0 %v4311
    %5310 = vmatpush1.msra.mxu0 %v4310
    %5311 = vmatprep.subr.mxu0 %v4318
    %5312 = vmatpush1.msra.mxu0 %v4317
    %5313 = vmatprep.subr.mxu0 %v4325
    %5314 = vmatpush1.msra.mxu0 %v4324
    %5315 = vmatprep.subr.mxu0 %v4332
    %5316 = vmatpush1.msra.mxu0 %v4331
    %5317 = vmatprep.subr.mxu0 %v4339
    %5318 = vmatpush1.msra.mxu0 %v4338
    %5319 = vmatprep.subr.mxu0 %v4346
    %5320 = vmatpush1.msra.mxu0 %v4345
    %5321 = vmatprep.subr.mxu0 %v4353
    %5322 = vmatpush1.msra.mxu0 %v4352
    %5323 = vmatprep.subr.mxu0 %v4360
    %5324 = vmatpush1.msra.mxu0 %v4359
    %5325 = vmatprep.subr.mxu0 %v4367
    %5326 = vmatpush1.msra.mxu0 %v4366
    %5327 = vmatprep.subr.mxu0 %v4374
    %5328 = vmatpush1.msra.mxu0 %v4373
    %5329 = vmatprep.subr.mxu0 %v4381
    %5330 = vmatpush1.msra.mxu0 %v4380
    %5331 = vmatprep.subr.mxu0 %v4388
    %5332 = vmatpush1.msra.mxu0 %v4387
    %5333 = vmatprep.subr.mxu0 %v4395
    %5334 = vmatpush1.msra.mxu0 %v4394
    %5335 = vmatprep.subr.mxu0 %v4402
    %5336 = vmatpush1.msra.mxu0 %v4401
    %5337 = vmatprep.subr.mxu0 %v4409
    %5338 = vmatpush1.msra.mxu0 %v4408
    %5339 = vmatprep.subr.mxu0 %v4416
    %5340 = vmatpush1.msra.mxu0 %v4415
    %5341 = vmatprep.subr.mxu0 %v4423
    %5342 = vmatpush1.msra.mxu0 %v4422
    %5343 = vmatprep.subr.mxu0 %v4430
    %5344 = vmatpush1.msra.mxu0 %v4429
    %5345 = vmatprep.subr.mxu0 %v4437
    %5346 = vmatpush1.msra.mxu0 %v4436
    %5347 = vmatprep.subr.mxu0 %v4444
    %5348 = vmatpush1.msra.mxu0 %v4443
    %5349 = vmatprep.subr.mxu0 %v4451
    %5350 = vmatpush1.msra.mxu0 %v4450
    %5351 = vmatprep.subr.mxu0 %v4458
    %5352 = vmatpush1.msra.mxu0 %v4457
    %5353 = vmatprep.subr.mxu0 %v4465
    %5354 = vmatpush1.msra.mxu0 %v4464
    %5355 = vmatprep.subr.mxu0 %v4472
    %5356 = vmatpush1.msra.mxu0 %v4471
    %5357 = vmatprep.subr.mxu0 %v4479
    %5358 = vmatpush1.msra.mxu0 %v4478
    %5359 = vmatprep.mubr.f32.mxu0 %v3582
    %5360 = vmatmul.mubr.f32.gmra.mrb[0].mxu0 %v3581
    %v5361 = vpop.f32.mrb[0].mxu0
    %v5362 = vadd.f32 %v5291, %v5361
    %v5363 = vpop.f32.mrb[0].mxu0
    %v5364 = vadd.f32 %v5293, %v5363
    %5365 = vdwg.mxu0
    %5366 = vmatprep.subr.mxu0 %v4486
    %5367 = vmatpush1.msra.mxu0 %v4485
    %5368 = vmatprep.subr.mxu0 %v4493
    %5369 = vmatpush1.msra.mxu0 %v4492
    %5370 = vmatprep.subr.mxu0 %v4500
    %5371 = vmatpush1.msra.mxu0 %v4499
    %5372 = vmatprep.subr.mxu0 %v4507
    %5373 = vmatpush1.msra.mxu0 %v4506
    %5374 = vmatprep.subr.mxu0 %v4514
    %5375 = vmatpush1.msra.mxu0 %v4513
    %5376 = vmatprep.subr.mxu0 %v4521
    %5377 = vmatpush1.msra.mxu0 %v4520
    %5378 = vmatprep.subr.mxu0 %v4528
    %5379 = vmatpush1.msra.mxu0 %v4527
    %5380 = vmatprep.subr.mxu0 %v4535
    %5381 = vmatpush1.msra.mxu0 %v4534
    %5382 = vmatprep.subr.mxu0 %v4542
    %5383 = vmatpush1.msra.mxu0 %v4541
    %5384 = vmatprep.subr.mxu0 %v4549
    %5385 = vmatpush1.msra.mxu0 %v4548
    %5386 = vmatprep.subr.mxu0 %v4556
    %5387 = vmatpush1.msra.mxu0 %v4555
    %5388 = vmatprep.subr.mxu0 %v4563
    %5389 = vmatpush1.msra.mxu0 %v4562
    %5390 = vmatprep.subr.mxu0 %v4570
    %5391 = vmatpush1.msra.mxu0 %v4569
    %5392 = vmatprep.subr.mxu0 %v4577
    %5393 = vmatpush1.msra.mxu0 %v4576
    %5394 = vmatprep.subr.mxu0 %v4584
    %5395 = vmatpush1.msra.mxu0 %v4583
    %5396 = vmatprep.subr.mxu0 %v4591
    %5397 = vmatpush1.msra.mxu0 %v4590
    %5398 = vmatprep.subr.mxu0 %v4598
    %5399 = vmatpush1.msra.mxu0 %v4597
    %5400 = vmatprep.subr.mxu0 %v4605
    %5401 = vmatpush1.msra.mxu0 %v4604
    %5402 = vmatprep.subr.mxu0 %v4612
    %5403 = vmatpush1.msra.mxu0 %v4611
    %5404 = vmatprep.subr.mxu0 %v4619
    %5405 = vmatpush1.msra.mxu0 %v4618
    %5406 = vmatprep.subr.mxu0 %v4626
    %5407 = vmatpush1.msra.mxu0 %v4625
    %5408 = vmatprep.subr.mxu0 %v4633
    %5409 = vmatpush1.msra.mxu0 %v4632
    %5410 = vmatprep.subr.mxu0 %v4640
    %5411 = vmatpush1.msra.mxu0 %v4639
    %5412 = vmatprep.subr.mxu0 %v4647
    %5413 = vmatpush1.msra.mxu0 %v4646
    %5414 = vmatprep.subr.mxu0 %v4654
    %5415 = vmatpush1.msra.mxu0 %v4653
    %5416 = vmatprep.subr.mxu0 %v4661
    %5417 = vmatpush1.msra.mxu0 %v4660
    %5418 = vmatprep.subr.mxu0 %v4668
    %5419 = vmatpush1.msra.mxu0 %v4667
    %5420 = vmatprep.subr.mxu0 %v4675
    %5421 = vmatpush1.msra.mxu0 %v4674
    %5422 = vmatprep.subr.mxu0 %v4682
    %5423 = vmatpush1.msra.mxu0 %v4681
    %5424 = vmatprep.subr.mxu0 %v4689
    %5425 = vmatpush1.msra.mxu0 %v4688
    %5426 = vmatprep.subr.mxu0 %v4696
    %5427 = vmatpush1.msra.mxu0 %v4695
    %5428 = vmatprep.subr.mxu0 %v4703
    %5429 = vmatpush1.msra.mxu0 %v4702
    %5430 = vmatprep.mubr.f32.mxu0 %v3584
    %5431 = vmatmul.mubr.f32.gmra.mrb[0].mxu0 %v3583
    %v5432 = vpop.f32.mrb[0].mxu0
    %v5433 = vadd.f32 %v5362, %v5432
    %v5434 = vpop.f32.mrb[0].mxu0
    %v5435 = vadd.f32 %v5364, %v5434
    %5436 = vdwg.mxu0
    %5437 = vmatprep.subr.mxu0 %v4710
    %5438 = vmatpush1.msra.mxu0 %v4709
    %5439 = vmatprep.subr.mxu0 %v4717
    %5440 = vmatpush1.msra.mxu0 %v4716
    %5441 = vmatprep.subr.mxu0 %v4724
    %5442 = vmatpush1.msra.mxu0 %v4723
    %5443 = vmatprep.subr.mxu0 %v4731
    %5444 = vmatpush1.msra.mxu0 %v4730
    %5445 = vmatprep.subr.mxu0 %v4738
    %5446 = vmatpush1.msra.mxu0 %v4737
    %5447 = vmatprep.subr.mxu0 %v4745
    %5448 = vmatpush1.msra.mxu0 %v4744
    %5449 = vmatprep.subr.mxu0 %v4752
    %5450 = vmatpush1.msra.mxu0 %v4751
    %5451 = vmatprep.subr.mxu0 %v4759
    %5452 = vmatpush1.msra.mxu0 %v4758
    %5453 = vmatprep.subr.mxu0 %v4766
    %5454 = vmatpush1.msra.mxu0 %v4765
    %5455 = vmatprep.subr.mxu0 %v4773
    %5456 = vmatpush1.msra.mxu0 %v4772
    %5457 = vmatprep.subr.mxu0 %v4780
    %5458 = vmatpush1.msra.mxu0 %v4779
    %5459 = vmatprep.subr.mxu0 %v4787
    %5460 = vmatpush1.msra.mxu0 %v4786
    %5461 = vmatprep.subr.mxu0 %v4794
    %5462 = vmatpush1.msra.mxu0 %v4793
    %5463 = vmatprep.subr.mxu0 %v4801
    %5464 = vmatpush1.msra.mxu0 %v4800
    %5465 = vmatprep.subr.mxu0 %v4808
    %5466 = vmatpush1.msra.mxu0 %v4807
    %5467 = vmatprep.subr.mxu0 %v4815
    %5468 = vmatpush1.msra.mxu0 %v4814
    %5469 = vmatprep.subr.mxu0 %v4822
    %5470 = vmatpush1.msra.mxu0 %v4821
    %5471 = vmatprep.subr.mxu0 %v4829
    %5472 = vmatpush1.msra.mxu0 %v4828
    %5473 = vmatprep.subr.mxu0 %v4836
    %5474 = vmatpush1.msra.mxu0 %v4835
    %5475 = vmatprep.subr.mxu0 %v4843
    %5476 = vmatpush1.msra.mxu0 %v4842
    %5477 = vmatprep.subr.mxu0 %v4850
    %5478 = vmatpush1.msra.mxu0 %v4849
    %5479 = vmatprep.subr.mxu0 %v4857
    %5480 = vmatpush1.msra.mxu0 %v4856
    %5481 = vmatprep.subr.mxu0 %v4864
    %5482 = vmatpush1.msra.mxu0 %v4863
    %5483 = vmatprep.subr.mxu0 %v4871
    %5484 = vmatpush1.msra.mxu0 %v4870
    %5485 = vmatprep.subr.mxu0 %v4878
    %5486 = vmatpush1.msra.mxu0 %v4877
    %5487 = vmatprep.subr.mxu0 %v4885
    %5488 = vmatpush1.msra.mxu0 %v4884
    %5489 = vmatprep.subr.mxu0 %v4892
    %5490 = vmatpush1.msra.mxu0 %v4891
    %5491 = vmatprep.subr.mxu0 %v4899
    %5492 = vmatpush1.msra.mxu0 %v4898
    %5493 = vmatprep.subr.mxu0 %v4906
    %5494 = vmatpush1.msra.mxu0 %v4905
    %5495 = vmatprep.subr.mxu0 %v4913
    %5496 = vmatpush1.msra.mxu0 %v4912
    %5497 = vmatprep.subr.mxu0 %v4920
    %5498 = vmatpush1.msra.mxu0 %v4919
    %5499 = vmatprep.subr.mxu0 %v4927
    %5500 = vmatpush1.msra.mxu0 %v4926
    %5501 = vmatprep.mubr.f32.mxu0 %v3586
    %5502 = vmatmul.mubr.f32.gmra.mrb[0].mxu0 %v3585
    %v5503 = vpop.f32.mrb[0].mxu0
    %v5504 = vadd.f32 %v5433, %v5503
    %v5505 = vpop.f32.mrb[0].mxu0
    %v5506 = vadd.f32 %v5435, %v5505
    %5507 = vdwg.mxu0
    %5508 = vmatprep.subr.mxu0 %v4934
    %5509 = vmatpush1.msra.mxu0 %v4933
    %5510 = vmatprep.subr.mxu0 %v4941
    %5511 = vmatpush1.msra.mxu0 %v4940
    %5512 = vmatprep.subr.mxu0 %v4948
    %5513 = vmatpush1.msra.mxu0 %v4947
    %5514 = vmatprep.subr.mxu0 %v4955
    %5515 = vmatpush1.msra.mxu0 %v4954
    %5516 = vmatprep.subr.mxu0 %v4962
    %5517 = vmatpush1.msra.mxu0 %v4961
    %5518 = vmatprep.subr.mxu0 %v4969
    %5519 = vmatpush1.msra.mxu0 %v4968
    %5520 = vmatprep.subr.mxu0 %v4976
    %5521 = vmatpush1.msra.mxu0 %v4975
    %5522 = vmatprep.subr.mxu0 %v4983
    %5523 = vmatpush1.msra.mxu0 %v4982
    %5524 = vmatprep.subr.mxu0 %v4990
    %5525 = vmatpush1.msra.mxu0 %v4989
    %5526 = vmatprep.subr.mxu0 %v4997
    %5527 = vmatpush1.msra.mxu0 %v4996
    %5528 = vmatprep.subr.mxu0 %v5004
    %5529 = vmatpush1.msra.mxu0 %v5003
    %5530 = vmatprep.subr.mxu0 %v5011
    %5531 = vmatpush1.msra.mxu0 %v5010
    %5532 = vmatprep.subr.mxu0 %v5018
    %5533 = vmatpush1.msra.mxu0 %v5017
    %5534 = vmatprep.subr.mxu0 %v5025
    %5535 = vmatpush1.msra.mxu0 %v5024
    %5536 = vmatprep.subr.mxu0 %v5032
    %5537 = vmatpush1.msra.mxu0 %v5031
    %5538 = vmatprep.subr.mxu0 %v5039
    %5539 = vmatpush1.msra.mxu0 %v5038
    %5540 = vmatprep.subr.mxu0 0.0
    %5541 = vmatpush1.msra.mxu0 0.0
    %5542 = vmatprep.subr.mxu0 0.0
    %5543 = vmatpush1.msra.mxu0 0.0
    %5544 = vmatprep.subr.mxu0 0.0
    %5545 = vmatpush1.msra.mxu0 0.0
    %5546 = vmatprep.subr.mxu0 0.0
    %5547 = vmatpush1.msra.mxu0 0.0
    %5548 = vmatprep.subr.mxu0 0.0
    %5549 = vmatpush1.msra.mxu0 0.0
    %5550 = vmatprep.subr.mxu0 0.0
    %5551 = vmatpush1.msra.mxu0 0.0
    %5552 = vmatprep.subr.mxu0 0.0
    %5553 = vmatpush1.msra.mxu0 0.0
    %5554 = vmatprep.subr.mxu0 0.0
    %5555 = vmatpush1.msra.mxu0 0.0
    %5556 = vmatprep.subr.mxu0 0.0
    %5557 = vmatpush1.msra.mxu0 0.0
    %5558 = vmatprep.subr.mxu0 0.0
    %5559 = vmatpush1.msra.mxu0 0.0
    %5560 = vmatprep.subr.mxu0 0.0
    %5561 = vmatpush1.msra.mxu0 0.0
    %5562 = vmatprep.subr.mxu0 0.0
    %5563 = vmatpush1.msra.mxu0 0.0
    %5564 = vmatprep.subr.mxu0 0.0
    %5565 = vmatpush1.msra.mxu0 0.0
    %5566 = vmatprep.subr.mxu0 0.0
    %5567 = vmatpush1.msra.mxu0 0.0
    %5568 = vmatprep.subr.mxu0 0.0
    %5569 = vmatpush1.msra.mxu0 0.0
    %5570 = vmatprep.subr.mxu0 0.0
    %5571 = vmatpush1.msra.mxu0 0.0
    %5572 = vmatprep.mubr.f32.mxu0 0.0
    %5573 = vmatmul.mubr.f32.gmra.mrb[0].mxu0 %v3587
    %v5574 = vpop.f32.mrb[0].mxu0
    %v5575 = vadd.f32 %v5504, %v5574
    %v5576 = vpop.f32.mrb[0].mxu0
    %v5577 = vadd.f32 %v5506, %v5576
    %5578 = vdwg.mxu0
    %5579 = vmatprep.subr.mxu0 %v3592
    %5580 = vmatpush1.msra.mxu0 %v3591
    %5581 = vmatprep.subr.mxu0 %v3599
    %5582 = vmatpush1.msra.mxu0 %v3598
    %5583 = vmatprep.subr.mxu0 %v3606
    %5584 = vmatpush1.msra.mxu0 %v3605
    %5585 = vmatprep.subr.mxu0 %v3613
    %5586 = vmatpush1.msra.mxu0 %v3612
    %5587 = vmatprep.subr.mxu0 %v3620
    %5588 = vmatpush1.msra.mxu0 %v3619
    %5589 = vmatprep.subr.mxu0 %v3627
    %5590 = vmatpush1.msra.mxu0 %v3626
    %5591 = vmatprep.subr.mxu0 %v3634
    %5592 = vmatpush1.msra.mxu0 %v3633
    %5593 = vmatprep.subr.mxu0 %v3641
    %5594 = vmatpush1.msra.mxu0 %v3640
    %5595 = vmatprep.subr.mxu0 %v3648
    %5596 = vmatpush1.msra.mxu0 %v3647
    %5597 = vmatprep.subr.mxu0 %v3655
    %5598 = vmatpush1.msra.mxu0 %v3654
    %5599 = vmatprep.subr.mxu0 %v3662
    %5600 = vmatpush1.msra.mxu0 %v3661
    %5601 = vmatprep.subr.mxu0 %v3669
    %5602 = vmatpush1.msra.mxu0 %v3668
    %5603 = vmatprep.subr.mxu0 %v3676
    %5604 = vmatpush1.msra.mxu0 %v3675
    %5605 = vmatprep.subr.mxu0 %v3683
    %5606 = vmatpush1.msra.mxu0 %v3682
    %5607 = vmatprep.subr.mxu0 %v3690
    %5608 = vmatpush1.msra.mxu0 %v3689
    %5609 = vmatprep.subr.mxu0 %v3697
    %5610 = vmatpush1.msra.mxu0 %v3696
    %5611 = vmatprep.subr.mxu0 %v3704
    %5612 = vmatpush1.msra.mxu0 %v3703
    %5613 = vmatprep.subr.mxu0 %v3711
    %5614 = vmatpush1.msra.mxu0 %v3710
    %5615 = vmatprep.subr.mxu0 %v3718
    %5616 = vmatpush1.msra.mxu0 %v3717
    %5617 = vmatprep.subr.mxu0 %v3725
    %5618 = vmatpush1.msra.mxu0 %v3724
    %5619 = vmatprep.subr.mxu0 %v3732
    %5620 = vmatpush1.msra.mxu0 %v3731
    %5621 = vmatprep.subr.mxu0 %v3739
    %5622 = vmatpush1.msra.mxu0 %v3738
    %5623 = vmatprep.subr.mxu0 %v3746
    %5624 = vmatpush1.msra.mxu0 %v3745
    %5625 = vmatprep.subr.mxu0 %v3753
    %5626 = vmatpush1.msra.mxu0 %v3752
    %5627 = vmatprep.subr.mxu0 %v3760
    %5628 = vmatpush1.msra.mxu0 %v3759
    %5629 = vmatprep.subr.mxu0 %v3767
    %5630 = vmatpush1.msra.mxu0 %v3766
    %5631 = vmatprep.subr.mxu0 %v3774
    %5632 = vmatpush1.msra.mxu0 %v3773
    %5633 = vmatprep.subr.mxu0 %v3781
    %5634 = vmatpush1.msra.mxu0 %v3780
    %5635 = vmatprep.subr.mxu0 %v3788
    %5636 = vmatpush1.msra.mxu0 %v3787
    %5637 = vmatprep.subr.mxu0 %v3795
    %5638 = vmatpush1.msra.mxu0 %v3794
    %5639 = vmatprep.subr.mxu0 %v3802
    %5640 = vmatpush1.msra.mxu0 %v3801
    %5641 = vmatprep.subr.mxu0 %v3809
    %5642 = vmatpush1.msra.mxu0 %v3808
    %5643 = vmatprep.mubr.f32.mxu0 %v3576
    %5644 = vmatmul.mubr.f32.gmra.mrb[0].mxu0 %v3575
    %v5645 = vpop.f32.mrb[0].mxu0
    %v5646 = vadd.f32 %v5058, %v5645
    %v5647 = vpop.f32.mrb[0].mxu0
    %v5648 = vadd.f32 %v5062, %v5647
    %5649 = vdwg.mxu0
    %5650 = vmatprep.subr.mxu0 %v3816
    %5651 = vmatpush1.msra.mxu0 %v3815
    %5652 = vmatprep.subr.mxu0 %v3823
    %5653 = vmatpush1.msra.mxu0 %v3822
    %5654 = vmatprep.subr.mxu0 %v3830
    %5655 = vmatpush1.msra.mxu0 %v3829
    %5656 = vmatprep.subr.mxu0 %v3837
    %5657 = vmatpush1.msra.mxu0 %v3836
    %5658 = vmatprep.subr.mxu0 %v3844
    %5659 = vmatpush1.msra.mxu0 %v3843
    %5660 = vmatprep.subr.mxu0 %v3851
    %5661 = vmatpush1.msra.mxu0 %v3850
    %5662 = vmatprep.subr.mxu0 %v3858
    %5663 = vmatpush1.msra.mxu0 %v3857
    %5664 = vmatprep.subr.mxu0 %v3865
    %5665 = vmatpush1.msra.mxu0 %v3864
    %5666 = vmatprep.subr.mxu0 %v3872
    %5667 = vmatpush1.msra.mxu0 %v3871
    %5668 = vmatprep.subr.mxu0 %v3879
    %5669 = vmatpush1.msra.mxu0 %v3878
    %5670 = vmatprep.subr.mxu0 %v3886
    %5671 = vmatpush1.msra.mxu0 %v3885
    %5672 = vmatprep.subr.mxu0 %v3893
    %5673 = vmatpush1.msra.mxu0 %v3892
    %5674 = vmatprep.subr.mxu0 %v3900
    %5675 = vmatpush1.msra.mxu0 %v3899
    %5676 = vmatprep.subr.mxu0 %v3907
    %5677 = vmatpush1.msra.mxu0 %v3906
    %5678 = vmatprep.subr.mxu0 %v3914
    %5679 = vmatpush1.msra.mxu0 %v3913
    %5680 = vmatprep.subr.mxu0 %v3921
    %5681 = vmatpush1.msra.mxu0 %v3920
    %5682 = vmatprep.subr.mxu0 %v3928
    %5683 = vmatpush1.msra.mxu0 %v3927
    %5684 = vmatprep.subr.mxu0 %v3935
    %5685 = vmatpush1.msra.mxu0 %v3934
    %5686 = vmatprep.subr.mxu0 %v3942
    %5687 = vmatpush1.msra.mxu0 %v3941
    %5688 = vmatprep.subr.mxu0 %v3949
    %5689 = vmatpush1.msra.mxu0 %v3948
    %5690 = vmatprep.subr.mxu0 %v3956
    %5691 = vmatpush1.msra.mxu0 %v3955
    %5692 = vmatprep.subr.mxu0 %v3963
    %5693 = vmatpush1.msra.mxu0 %v3962
    %5694 = vmatprep.subr.mxu0 %v3970
    %5695 = vmatpush1.msra.mxu0 %v3969
    %5696 = vmatprep.subr.mxu0 %v3977
    %5697 = vmatpush1.msra.mxu0 %v3976
    %5698 = vmatprep.subr.mxu0 %v3984
    %5699 = vmatpush1.msra.mxu0 %v3983
    %5700 = vmatprep.subr.mxu0 %v3991
    %5701 = vmatpush1.msra.mxu0 %v3990
    %5702 = vmatprep.subr.mxu0 %v3998
    %5703 = vmatpush1.msra.mxu0 %v3997
    %5704 = vmatprep.subr.mxu0 %v4005
    %5705 = vmatpush1.msra.mxu0 %v4004
    %5706 = vmatprep.subr.mxu0 %v4012
    %5707 = vmatpush1.msra.mxu0 %v4011
    %5708 = vmatprep.subr.mxu0 %v4019
    %5709 = vmatpush1.msra.mxu0 %v4018
    %5710 = vmatprep.subr.mxu0 %v4026
    %5711 = vmatpush1.msra.mxu0 %v4025
    %5712 = vmatprep.subr.mxu0 %v4033
    %5713 = vmatpush1.msra.mxu0 %v4032
    %5714 = vmatprep.mubr.f32.mxu0 %v3578
    %5715 = vmatmul.mubr.f32.gmra.mrb[0].mxu0 %v3577
    %v5716 = vpop.f32.mrb[0].mxu0
    %v5717 = vadd.f32 %v5646, %v5716
    %v5718 = vpop.f32.mrb[0].mxu0
    %v5719 = vadd.f32 %v5648, %v5718
    %5720 = vdwg.mxu0
    %5721 = vmatprep.subr.mxu0 %v4040
    %5722 = vmatpush1.msra.mxu0 %v4039
    %5723 = vmatprep.subr.mxu0 %v4047
    %5724 = vmatpush1.msra.mxu0 %v4046
    %5725 = vmatprep.subr.mxu0 %v4054
    %5726 = vmatpush1.msra.mxu0 %v4053
    %5727 = vmatprep.subr.mxu0 %v4061
    %5728 = vmatpush1.msra.mxu0 %v4060
    %5729 = vmatprep.subr.mxu0 %v4068
    %5730 = vmatpush1.msra.mxu0 %v4067
    %5731 = vmatprep.subr.mxu0 %v4075
    %5732 = vmatpush1.msra.mxu0 %v4074
    %5733 = vmatprep.subr.mxu0 %v4082
    %5734 = vmatpush1.msra.mxu0 %v4081
    %5735 = vmatprep.subr.mxu0 %v4089
    %5736 = vmatpush1.msra.mxu0 %v4088
    %5737 = vmatprep.subr.mxu0 %v4096
    %5738 = vmatpush1.msra.mxu0 %v4095
    %5739 = vmatprep.subr.mxu0 %v4103
    %5740 = vmatpush1.msra.mxu0 %v4102
    %5741 = vmatprep.subr.mxu0 %v4110
    %5742 = vmatpush1.msra.mxu0 %v4109
    %5743 = vmatprep.subr.mxu0 %v4117
    %5744 = vmatpush1.msra.mxu0 %v4116
    %5745 = vmatprep.subr.mxu0 %v4124
    %5746 = vmatpush1.msra.mxu0 %v4123
    %5747 = vmatprep.subr.mxu0 %v4131
    %5748 = vmatpush1.msra.mxu0 %v4130
    %5749 = vmatprep.subr.mxu0 %v4138
    %5750 = vmatpush1.msra.mxu0 %v4137
    %5751 = vmatprep.subr.mxu0 %v4145
    %5752 = vmatpush1.msra.mxu0 %v4144
    %5753 = vmatprep.subr.mxu0 %v4152
    %5754 = vmatpush1.msra.mxu0 %v4151
    %5755 = vmatprep.subr.mxu0 %v4159
    %5756 = vmatpush1.msra.mxu0 %v4158
    %5757 = vmatprep.subr.mxu0 %v4166
    %5758 = vmatpush1.msra.mxu0 %v4165
    %5759 = vmatprep.subr.mxu0 %v4173
    %5760 = vmatpush1.msra.mxu0 %v4172
    %5761 = vmatprep.subr.mxu0 %v4180
    %5762 = vmatpush1.msra.mxu0 %v4179
    %5763 = vmatprep.subr.mxu0 %v4187
    %5764 = vmatpush1.msra.mxu0 %v4186
    %5765 = vmatprep.subr.mxu0 %v4194
    %5766 = vmatpush1.msra.mxu0 %v4193
    %5767 = vmatprep.subr.mxu0 %v4201
    %5768 = vmatpush1.msra.mxu0 %v4200
    %5769 = vmatprep.subr.mxu0 %v4208
    %5770 = vmatpush1.msra.mxu0 %v4207
    %5771 = vmatprep.subr.mxu0 %v4215
    %5772 = vmatpush1.msra.mxu0 %v4214
    %5773 = vmatprep.subr.mxu0 %v4222
    %5774 = vmatpush1.msra.mxu0 %v4221
    %5775 = vmatprep.subr.mxu0 %v4229
    %5776 = vmatpush1.msra.mxu0 %v4228
    %5777 = vmatprep.subr.mxu0 %v4236
    %5778 = vmatpush1.msra.mxu0 %v4235
    %5779 = vmatprep.subr.mxu0 %v4243
    %5780 = vmatpush1.msra.mxu0 %v4242
    %5781 = vmatprep.subr.mxu0 %v4250
    %5782 = vmatpush1.msra.mxu0 %v4249
    %5783 = vmatprep.subr.mxu0 %v4257
    %5784 = vmatpush1.msra.mxu0 %v4256
    %5785 = vmatprep.mubr.f32.mxu0 %v3580
    %5786 = vmatmul.mubr.f32.gmra.mrb[0].mxu0 %v3579
    %v5787 = vpop.f32.mrb[0].mxu0
    %v5788 = vadd.f32 %v5717, %v5787
    %v5789 = vpop.f32.mrb[0].mxu0
    %v5790 = vadd.f32 %v5719, %v5789
    %5791 = vdwg.mxu0
    %5792 = vmatprep.subr.mxu0 %v4264
    %5793 = vmatpush1.msra.mxu0 %v4263
    %5794 = vmatprep.subr.mxu0 %v4271
    %5795 = vmatpush1.msra.mxu0 %v4270
    %5796 = vmatprep.subr.mxu0 %v4278
    %5797 = vmatpush1.msra.mxu0 %v4277
    %5798 = vmatprep.subr.mxu0 %v4285
    %5799 = vmatpush1.msra.mxu0 %v4284
    %5800 = vmatprep.subr.mxu0 %v4292
    %5801 = vmatpush1.msra.mxu0 %v4291
    %5802 = vmatprep.subr.mxu0 %v4299
    %5803 = vmatpush1.msra.mxu0 %v4298
    %5804 = vmatprep.subr.mxu0 %v4306
    %5805 = vmatpush1.msra.mxu0 %v4305
    %5806 = vmatprep.subr.mxu0 %v4313
    %5807 = vmatpush1.msra.mxu0 %v4312
    %5808 = vmatprep.subr.mxu0 %v4320
    %5809 = vmatpush1.msra.mxu0 %v4319
    %5810 = vmatprep.subr.mxu0 %v4327
    %5811 = vmatpush1.msra.mxu0 %v4326
    %5812 = vmatprep.subr.mxu0 %v4334
    %5813 = vmatpush1.msra.mxu0 %v4333
    %5814 = vmatprep.subr.mxu0 %v4341
    %5815 = vmatpush1.msra.mxu0 %v4340
    %5816 = vmatprep.subr.mxu0 %v4348
    %5817 = vmatpush1.msra.mxu0 %v4347
    %5818 = vmatprep.subr.mxu0 %v4355
    %5819 = vmatpush1.msra.mxu0 %v4354
    %5820 = vmatprep.subr.mxu0 %v4362
    %5821 = vmatpush1.msra.mxu0 %v4361
    %5822 = vmatprep.subr.mxu0 %v4369
    %5823 = vmatpush1.msra.mxu0 %v4368
    %5824 = vmatprep.subr.mxu0 %v4376
    %5825 = vmatpush1.msra.mxu0 %v4375
    %5826 = vmatprep.subr.mxu0 %v4383
    %5827 = vmatpush1.msra.mxu0 %v4382
    %5828 = vmatprep.subr.mxu0 %v4390
    %5829 = vmatpush1.msra.mxu0 %v4389
    %5830 = vmatprep.subr.mxu0 %v4397
    %5831 = vmatpush1.msra.mxu0 %v4396
    %5832 = vmatprep.subr.mxu0 %v4404
    %5833 = vmatpush1.msra.mxu0 %v4403
    %5834 = vmatprep.subr.mxu0 %v4411
    %5835 = vmatpush1.msra.mxu0 %v4410
    %5836 = vmatprep.subr.mxu0 %v4418
    %5837 = vmatpush1.msra.mxu0 %v4417
    %5838 = vmatprep.subr.mxu0 %v4425
    %5839 = vmatpush1.msra.mxu0 %v4424
    %5840 = vmatprep.subr.mxu0 %v4432
    %5841 = vmatpush1.msra.mxu0 %v4431
    %5842 = vmatprep.subr.mxu0 %v4439
    %5843 = vmatpush1.msra.mxu0 %v4438
    %5844 = vmatprep.subr.mxu0 %v4446
    %5845 = vmatpush1.msra.mxu0 %v4445
    %5846 = vmatprep.subr.mxu0 %v4453
    %5847 = vmatpush1.msra.mxu0 %v4452
    %5848 = vmatprep.subr.mxu0 %v4460
    %5849 = vmatpush1.msra.mxu0 %v4459
    %5850 = vmatprep.subr.mxu0 %v4467
    %5851 = vmatpush1.msra.mxu0 %v4466
    %5852 = vmatprep.subr.mxu0 %v4474
    %5853 = vmatpush1.msra.mxu0 %v4473
    %5854 = vmatprep.subr.mxu0 %v4481
    %5855 = vmatpush1.msra.mxu0 %v4480
    %5856 = vmatprep.mubr.f32.mxu0 %v3582
    %5857 = vmatmul.mubr.f32.gmra.mrb[0].mxu0 %v3581
    %v5858 = vpop.f32.mrb[0].mxu0
    %v5859 = vadd.f32 %v5788, %v5858
    %v5860 = vpop.f32.mrb[0].mxu0
    %v5861 = vadd.f32 %v5790, %v5860
    %5862 = vdwg.mxu0
    %5863 = vmatprep.subr.mxu0 %v4488
    %5864 = vmatpush1.msra.mxu0 %v4487
    %5865 = vmatprep.subr.mxu0 %v4495
    %5866 = vmatpush1.msra.mxu0 %v4494
    %5867 = vmatprep.subr.mxu0 %v4502
    %5868 = vmatpush1.msra.mxu0 %v4501
    %5869 = vmatprep.subr.mxu0 %v4509
    %5870 = vmatpush1.msra.mxu0 %v4508
    %5871 = vmatprep.subr.mxu0 %v4516
    %5872 = vmatpush1.msra.mxu0 %v4515
    %5873 = vmatprep.subr.mxu0 %v4523
    %5874 = vmatpush1.msra.mxu0 %v4522
    %5875 = vmatprep.subr.mxu0 %v4530
    %5876 = vmatpush1.msra.mxu0 %v4529
    %5877 = vmatprep.subr.mxu0 %v4537
    %5878 = vmatpush1.msra.mxu0 %v4536
    %5879 = vmatprep.subr.mxu0 %v4544
    %5880 = vmatpush1.msra.mxu0 %v4543
    %5881 = vmatprep.subr.mxu0 %v4551
    %5882 = vmatpush1.msra.mxu0 %v4550
    %5883 = vmatprep.subr.mxu0 %v4558
    %5884 = vmatpush1.msra.mxu0 %v4557
    %5885 = vmatprep.subr.mxu0 %v4565
    %5886 = vmatpush1.msra.mxu0 %v4564
    %5887 = vmatprep.subr.mxu0 %v4572
    %5888 = vmatpush1.msra.mxu0 %v4571
    %5889 = vmatprep.subr.mxu0 %v4579
    %5890 = vmatpush1.msra.mxu0 %v4578
    %5891 = vmatprep.subr.mxu0 %v4586
    %5892 = vmatpush1.msra.mxu0 %v4585
    %5893 = vmatprep.subr.mxu0 %v4593
    %5894 = vmatpush1.msra.mxu0 %v4592
    %5895 = vmatprep.subr.mxu0 %v4600
    %5896 = vmatpush1.msra.mxu0 %v4599
    %5897 = vmatprep.subr.mxu0 %v4607
    %5898 = vmatpush1.msra.mxu0 %v4606
    %5899 = vmatprep.subr.mxu0 %v4614
    %5900 = vmatpush1.msra.mxu0 %v4613
    %5901 = vmatprep.subr.mxu0 %v4621
    %5902 = vmatpush1.msra.mxu0 %v4620
    %5903 = vmatprep.subr.mxu0 %v4628
    %5904 = vmatpush1.msra.mxu0 %v4627
    %5905 = vmatprep.subr.mxu0 %v4635
    %5906 = vmatpush1.msra.mxu0 %v4634
    %5907 = vmatprep.subr.mxu0 %v4642
    %5908 = vmatpush1.msra.mxu0 %v4641
    %5909 = vmatprep.subr.mxu0 %v4649
    %5910 = vmatpush1.msra.mxu0 %v4648
    %5911 = vmatprep.subr.mxu0 %v4656
    %5912 = vmatpush1.msra.mxu0 %v4655
    %5913 = vmatprep.subr.mxu0 %v4663
    %5914 = vmatpush1.msra.mxu0 %v4662
    %5915 = vmatprep.subr.mxu0 %v4670
    %5916 = vmatpush1.msra.mxu0 %v4669
    %5917 = vmatprep.subr.mxu0 %v4677
    %5918 = vmatpush1.msra.mxu0 %v4676
    %5919 = vmatprep.subr.mxu0 %v4684
    %5920 = vmatpush1.msra.mxu0 %v4683
    %5921 = vmatprep.subr.mxu0 %v4691
    %5922 = vmatpush1.msra.mxu0 %v4690
    %5923 = vmatprep.subr.mxu0 %v4698
    %5924 = vmatpush1.msra.mxu0 %v4697
    %5925 = vmatprep.subr.mxu0 %v4705
    %5926 = vmatpush1.msra.mxu0 %v4704
    %5927 = vmatprep.mubr.f32.mxu0 %v3584
    %5928 = vmatmul.mubr.f32.gmra.mrb[0].mxu0 %v3583
    %v5929 = vpop.f32.mrb[0].mxu0
    %v5930 = vadd.f32 %v5859, %v5929
    %v5931 = vpop.f32.mrb[0].mxu0
    %v5932 = vadd.f32 %v5861, %v5931
    %5933 = vdwg.mxu0
    %5934 = vmatprep.subr.mxu0 %v4712
    %5935 = vmatpush1.msra.mxu0 %v4711
    %5936 = vmatprep.subr.mxu0 %v4719
    %5937 = vmatpush1.msra.mxu0 %v4718
    %5938 = vmatprep.subr.mxu0 %v4726
    %5939 = vmatpush1.msra.mxu0 %v4725
    %5940 = vmatprep.subr.mxu0 %v4733
    %5941 = vmatpush1.msra.mxu0 %v4732
    %5942 = vmatprep.subr.mxu0 %v4740
    %5943 = vmatpush1.msra.mxu0 %v4739
    %5944 = vmatprep.subr.mxu0 %v4747
    %5945 = vmatpush1.msra.mxu0 %v4746
    %5946 = vmatprep.subr.mxu0 %v4754
    %5947 = vmatpush1.msra.mxu0 %v4753
    %5948 = vmatprep.subr.mxu0 %v4761
    %5949 = vmatpush1.msra.mxu0 %v4760
    %5950 = vmatprep.subr.mxu0 %v4768
    %5951 = vmatpush1.msra.mxu0 %v4767
    %5952 = vmatprep.subr.mxu0 %v4775
    %5953 = vmatpush1.msra.mxu0 %v4774
    %5954 = vmatprep.subr.mxu0 %v4782
    %5955 = vmatpush1.msra.mxu0 %v4781
    %5956 = vmatprep.subr.mxu0 %v4789
    %5957 = vmatpush1.msra.mxu0 %v4788
    %5958 = vmatprep.subr.mxu0 %v4796
    %5959 = vmatpush1.msra.mxu0 %v4795
    %5960 = vmatprep.subr.mxu0 %v4803
    %5961 = vmatpush1.msra.mxu0 %v4802
    %5962 = vmatprep.subr.mxu0 %v4810
    %5963 = vmatpush1.msra.mxu0 %v4809
    %5964 = vmatprep.subr.mxu0 %v4817
    %5965 = vmatpush1.msra.mxu0 %v4816
    %5966 = vmatprep.subr.mxu0 %v4824
    %5967 = vmatpush1.msra.mxu0 %v4823
    %5968 = vmatprep.subr.mxu0 %v4831
    %5969 = vmatpush1.msra.mxu0 %v4830
    %5970 = vmatprep.subr.mxu0 %v4838
    %5971 = vmatpush1.msra.mxu0 %v4837
    %5972 = vmatprep.subr.mxu0 %v4845
    %5973 = vmatpush1.msra.mxu0 %v4844
    %5974 = vmatprep.subr.mxu0 %v4852
    %5975 = vmatpush1.msra.mxu0 %v4851
    %5976 = vmatprep.subr.mxu0 %v4859
    %5977 = vmatpush1.msra.mxu0 %v4858
    %5978 = vmatprep.subr.mxu0 %v4866
    %5979 = vmatpush1.msra.mxu0 %v4865
    %5980 = vmatprep.subr.mxu0 %v4873
    %5981 = vmatpush1.msra.mxu0 %v4872
    %5982 = vmatprep.subr.mxu0 %v4880
    %5983 = vmatpush1.msra.mxu0 %v4879
    %5984 = vmatprep.subr.mxu0 %v4887
    %5985 = vmatpush1.msra.mxu0 %v4886
    %5986 = vmatprep.subr.mxu0 %v4894
    %5987 = vmatpush1.msra.mxu0 %v4893
    %5988 = vmatprep.subr.mxu0 %v4901
    %5989 = vmatpush1.msra.mxu0 %v4900
    %5990 = vmatprep.subr.mxu0 %v4908
    %5991 = vmatpush1.msra.mxu0 %v4907
    %5992 = vmatprep.subr.mxu0 %v4915
    %5993 = vmatpush1.msra.mxu0 %v4914
    %5994 = vmatprep.subr.mxu0 %v4922
    %5995 = vmatpush1.msra.mxu0 %v4921
    %5996 = vmatprep.subr.mxu0 %v4929
    %5997 = vmatpush1.msra.mxu0 %v4928
    %5998 = vmatprep.mubr.f32.mxu0 %v3586
    %5999 = vmatmul.mubr.f32.gmra.mrb[0].mxu0 %v3585
    %v6000 = vpop.f32.mrb[0].mxu0
    %v6001 = vadd.f32 %v5930, %v6000
    %v6002 = vpop.f32.mrb[0].mxu0
    %v6003 = vadd.f32 %v5932, %v6002
    %6004 = vdwg.mxu0
    %6005 = vmatprep.subr.mxu0 %v4936
    %6006 = vmatpush1.msra.mxu0 %v4935
    %6007 = vmatprep.subr.mxu0 %v4943
    %6008 = vmatpush1.msra.mxu0 %v4942
    %6009 = vmatprep.subr.mxu0 %v4950
    %6010 = vmatpush1.msra.mxu0 %v4949
    %6011 = vmatprep.subr.mxu0 %v4957
    %6012 = vmatpush1.msra.mxu0 %v4956
    %6013 = vmatprep.subr.mxu0 %v4964
    %6014 = vmatpush1.msra.mxu0 %v4963
    %6015 = vmatprep.subr.mxu0 %v4971
    %6016 = vmatpush1.msra.mxu0 %v4970
    %6017 = vmatprep.subr.mxu0 %v4978
    %6018 = vmatpush1.msra.mxu0 %v4977
    %6019 = vmatprep.subr.mxu0 %v4985
    %6020 = vmatpush1.msra.mxu0 %v4984
    %6021 = vmatprep.subr.mxu0 %v4992
    %6022 = vmatpush1.msra.mxu0 %v4991
    %6023 = vmatprep.subr.mxu0 %v4999
    %6024 = vmatpush1.msra.mxu0 %v4998
    %6025 = vmatprep.subr.mxu0 %v5006
    %6026 = vmatpush1.msra.mxu0 %v5005
    %6027 = vmatprep.subr.mxu0 %v5013
    %6028 = vmatpush1.msra.mxu0 %v5012
    %6029 = vmatprep.subr.mxu0 %v5020
    %6030 = vmatpush1.msra.mxu0 %v5019
    %6031 = vmatprep.subr.mxu0 %v5027
    %6032 = vmatpush1.msra.mxu0 %v5026
    %6033 = vmatprep.subr.mxu0 %v5034
    %6034 = vmatpush1.msra.mxu0 %v5033
    %6035 = vmatprep.subr.mxu0 %v5041
    %6036 = vmatpush1.msra.mxu0 %v5040
    %6037 = vmatprep.subr.mxu0 0.0
    %6038 = vmatpush1.msra.mxu0 0.0
    %6039 = vmatprep.subr.mxu0 0.0
    %6040 = vmatpush1.msra.mxu0 0.0
    %6041 = vmatprep.subr.mxu0 0.0
    %6042 = vmatpush1.msra.mxu0 0.0
    %6043 = vmatprep.subr.mxu0 0.0
    %6044 = vmatpush1.msra.mxu0 0.0
    %6045 = vmatprep.subr.mxu0 0.0
    %6046 = vmatpush1.msra.mxu0 0.0
    %6047 = vmatprep.subr.mxu0 0.0
    %6048 = vmatpush1.msra.mxu0 0.0
    %6049 = vmatprep.subr.mxu0 0.0
    %6050 = vmatpush1.msra.mxu0 0.0
    %6051 = vmatprep.subr.mxu0 0.0
    %6052 = vmatpush1.msra.mxu0 0.0
    %6053 = vmatprep.subr.mxu0 0.0
    %6054 = vmatpush1.msra.mxu0 0.0
    %6055 = vmatprep.subr.mxu0 0.0
    %6056 = vmatpush1.msra.mxu0 0.0
    %6057 = vmatprep.subr.mxu0 0.0
    %6058 = vmatpush1.msra.mxu0 0.0
    %6059 = vmatprep.subr.mxu0 0.0
    %6060 = vmatpush1.msra.mxu0 0.0
    %6061 = vmatprep.subr.mxu0 0.0
    %6062 = vmatpush1.msra.mxu0 0.0
    %6063 = vmatprep.subr.mxu0 0.0
    %6064 = vmatpush1.msra.mxu0 0.0
    %6065 = vmatprep.subr.mxu0 0.0
    %6066 = vmatpush1.msra.mxu0 0.0
    %6067 = vmatprep.subr.mxu0 0.0
    %6068 = vmatpush1.msra.mxu0 0.0
    %6069 = vmatprep.mubr.f32.mxu0 0.0
    %6070 = vmatmul.mubr.f32.gmra.mrb[0].mxu0 %v3587
    %v6071 = vpop.f32.mrb[0].mxu0
    %v6072 = vadd.f32 %v6001, %v6071
    %v6073 = vpop.f32.mrb[0].mxu0
    %v6074 = vadd.f32 %v6003, %v6073
    %6075 = vdwg.mxu0
    %6076 = vmatprep.subr.mxu0 %v3594
    %6077 = vmatpush1.msra.mxu0 %v3593
    %6078 = vmatprep.subr.mxu0 %v3601
    %6079 = vmatpush1.msra.mxu0 %v3600
    %6080 = vmatprep.subr.mxu0 %v3608
    %6081 = vmatpush1.msra.mxu0 %v3607
    %6082 = vmatprep.subr.mxu0 %v3615
    %6083 = vmatpush1.msra.mxu0 %v3614
    %6084 = vmatprep.subr.mxu0 %v3622
    %6085 = vmatpush1.msra.mxu0 %v3621
    %6086 = vmatprep.subr.mxu0 %v3629
    %6087 = vmatpush1.msra.mxu0 %v3628
    %6088 = vmatprep.subr.mxu0 %v3636
    %6089 = vmatpush1.msra.mxu0 %v3635
    %6090 = vmatprep.subr.mxu0 %v3643
    %6091 = vmatpush1.msra.mxu0 %v3642
    %6092 = vmatprep.subr.mxu0 %v3650
    %6093 = vmatpush1.msra.mxu0 %v3649
    %6094 = vmatprep.subr.mxu0 %v3657
    %6095 = vmatpush1.msra.mxu0 %v3656
    %6096 = vmatprep.subr.mxu0 %v3664
    %6097 = vmatpush1.msra.mxu0 %v3663
    %6098 = vmatprep.subr.mxu0 %v3671
    %6099 = vmatpush1.msra.mxu0 %v3670
    %6100 = vmatprep.subr.mxu0 %v3678
    %6101 = vmatpush1.msra.mxu0 %v3677
    %6102 = vmatprep.subr.mxu0 %v3685
    %6103 = vmatpush1.msra.mxu0 %v3684
    %6104 = vmatprep.subr.mxu0 %v3692
    %6105 = vmatpush1.msra.mxu0 %v3691
    %6106 = vmatprep.subr.mxu0 %v3699
    %6107 = vmatpush1.msra.mxu0 %v3698
    %6108 = vmatprep.subr.mxu0 %v3706
    %6109 = vmatpush1.msra.mxu0 %v3705
    %6110 = vmatprep.subr.mxu0 %v3713
    %6111 = vmatpush1.msra.mxu0 %v3712
    %6112 = vmatprep.subr.mxu0 %v3720
    %6113 = vmatpush1.msra.mxu0 %v3719
    %6114 = vmatprep.subr.mxu0 %v3727
    %6115 = vmatpush1.msra.mxu0 %v3726
    %6116 = vmatprep.subr.mxu0 %v3734
    %6117 = vmatpush1.msra.mxu0 %v3733
    %6118 = vmatprep.subr.mxu0 %v3741
    %6119 = vmatpush1.msra.mxu0 %v3740
    %6120 = vmatprep.subr.mxu0 %v3748
    %6121 = vmatpush1.msra.mxu0 %v3747
    %6122 = vmatprep.subr.mxu0 %v3755
    %6123 = vmatpush1.msra.mxu0 %v3754
    %6124 = vmatprep.subr.mxu0 %v3762
    %6125 = vmatpush1.msra.mxu0 %v3761
    %6126 = vmatprep.subr.mxu0 %v3769
    %6127 = vmatpush1.msra.mxu0 %v3768
    %6128 = vmatprep.subr.mxu0 %v3776
    %6129 = vmatpush1.msra.mxu0 %v3775
    %6130 = vmatprep.subr.mxu0 %v3783
    %6131 = vmatpush1.msra.mxu0 %v3782
    %6132 = vmatprep.subr.mxu0 %v3790
    %6133 = vmatpush1.msra.mxu0 %v3789
    %6134 = vmatprep.subr.mxu0 %v3797
    %6135 = vmatpush1.msra.mxu0 %v3796
    %6136 = vmatprep.subr.mxu0 %v3804
    %6137 = vmatpush1.msra.mxu0 %v3803
    %6138 = vmatprep.subr.mxu0 %v3811
    %6139 = vmatpush1.msra.mxu0 %v3810
    %6140 = vmatprep.mubr.f32.mxu0 %v3576
    %6141 = vmatmul.mubr.f32.gmra.mrb[0].mxu0 %v3575
    %v6142 = vpop.f32.mrb[0].mxu0
    %v6143 = vadd.f32 %v5066, %v6142
    %v6144 = vpop.f32.mrb[0].mxu0
    %v6145 = vadd.f32 %v5070, %v6144
    %6146 = vdwg.mxu0
    %6147 = vmatprep.subr.mxu0 %v3818
    %6148 = vmatpush1.msra.mxu0 %v3817
    %6149 = vmatprep.subr.mxu0 %v3825
    %6150 = vmatpush1.msra.mxu0 %v3824
    %6151 = vmatprep.subr.mxu0 %v3832
    %6152 = vmatpush1.msra.mxu0 %v3831
    %6153 = vmatprep.subr.mxu0 %v3839
    %6154 = vmatpush1.msra.mxu0 %v3838
    %6155 = vmatprep.subr.mxu0 %v3846
    %6156 = vmatpush1.msra.mxu0 %v3845
    %6157 = vmatprep.subr.mxu0 %v3853
    %6158 = vmatpush1.msra.mxu0 %v3852
    %6159 = vmatprep.subr.mxu0 %v3860
    %6160 = vmatpush1.msra.mxu0 %v3859
    %6161 = vmatprep.subr.mxu0 %v3867
    %6162 = vmatpush1.msra.mxu0 %v3866
    %6163 = vmatprep.subr.mxu0 %v3874
    %6164 = vmatpush1.msra.mxu0 %v3873
    %6165 = vmatprep.subr.mxu0 %v3881
    %6166 = vmatpush1.msra.mxu0 %v3880
    %6167 = vmatprep.subr.mxu0 %v3888
    %6168 = vmatpush1.msra.mxu0 %v3887
    %6169 = vmatprep.subr.mxu0 %v3895
    %6170 = vmatpush1.msra.mxu0 %v3894
    %6171 = vmatprep.subr.mxu0 %v3902
    %6172 = vmatpush1.msra.mxu0 %v3901
    %6173 = vmatprep.subr.mxu0 %v3909
    %6174 = vmatpush1.msra.mxu0 %v3908
    %6175 = vmatprep.subr.mxu0 %v3916
    %6176 = vmatpush1.msra.mxu0 %v3915
    %6177 = vmatprep.subr.mxu0 %v3923
    %6178 = vmatpush1.msra.mxu0 %v3922
    %6179 = vmatprep.subr.mxu0 %v3930
    %6180 = vmatpush1.msra.mxu0 %v3929
    %6181 = vmatprep.subr.mxu0 %v3937
    %6182 = vmatpush1.msra.mxu0 %v3936
    %6183 = vmatprep.subr.mxu0 %v3944
    %6184 = vmatpush1.msra.mxu0 %v3943
    %6185 = vmatprep.subr.mxu0 %v3951
    %6186 = vmatpush1.msra.mxu0 %v3950
    %6187 = vmatprep.subr.mxu0 %v3958
    %6188 = vmatpush1.msra.mxu0 %v3957
    %6189 = vmatprep.subr.mxu0 %v3965
    %6190 = vmatpush1.msra.mxu0 %v3964
    %6191 = vmatprep.subr.mxu0 %v3972
    %6192 = vmatpush1.msra.mxu0 %v3971
    %6193 = vmatprep.subr.mxu0 %v3979
    %6194 = vmatpush1.msra.mxu0 %v3978
    %6195 = vmatprep.subr.mxu0 %v3986
    %6196 = vmatpush1.msra.mxu0 %v3985
    %6197 = vmatprep.subr.mxu0 %v3993
    %6198 = vmatpush1.msra.mxu0 %v3992
    %6199 = vmatprep.subr.mxu0 %v4000
    %6200 = vmatpush1.msra.mxu0 %v3999
    %6201 = vmatprep.subr.mxu0 %v4007
    %6202 = vmatpush1.msra.mxu0 %v4006
    %6203 = vmatprep.subr.mxu0 %v4014
    %6204 = vmatpush1.msra.mxu0 %v4013
    %6205 = vmatprep.subr.mxu0 %v4021
    %6206 = vmatpush1.msra.mxu0 %v4020
    %6207 = vmatprep.subr.mxu0 %v4028
    %6208 = vmatpush1.msra.mxu0 %v4027
    %6209 = vmatprep.subr.mxu0 %v4035
    %6210 = vmatpush1.msra.mxu0 %v4034
    %6211 = vmatprep.mubr.f32.mxu0 %v3578
    %6212 = vmatmul.mubr.f32.gmra.mrb[0].mxu0 %v3577
    %v6213 = vpop.f32.mrb[0].mxu0
    %v6214 = vadd.f32 %v6143, %v6213
    %v6215 = vpop.f32.mrb[0].mxu0
    %v6216 = vadd.f32 %v6145, %v6215
    %6217 = vdwg.mxu0
    %6218 = vmatprep.subr.mxu0 %v4042
    %6219 = vmatpush1.msra.mxu0 %v4041
    %6220 = vmatprep.subr.mxu0 %v4049
    %6221 = vmatpush1.msra.mxu0 %v4048
    %6222 = vmatprep.subr.mxu0 %v4056
    %6223 = vmatpush1.msra.mxu0 %v4055
    %6224 = vmatprep.subr.mxu0 %v4063
    %6225 = vmatpush1.msra.mxu0 %v4062
    %6226 = vmatprep.subr.mxu0 %v4070
    %6227 = vmatpush1.msra.mxu0 %v4069
    %6228 = vmatprep.subr.mxu0 %v4077
    %6229 = vmatpush1.msra.mxu0 %v4076
    %6230 = vmatprep.subr.mxu0 %v4084
    %6231 = vmatpush1.msra.mxu0 %v4083
    %6232 = vmatprep.subr.mxu0 %v4091
    %6233 = vmatpush1.msra.mxu0 %v4090
    %6234 = vmatprep.subr.mxu0 %v4098
    %6235 = vmatpush1.msra.mxu0 %v4097
    %6236 = vmatprep.subr.mxu0 %v4105
    %6237 = vmatpush1.msra.mxu0 %v4104
    %6238 = vmatprep.subr.mxu0 %v4112
    %6239 = vmatpush1.msra.mxu0 %v4111
    %6240 = vmatprep.subr.mxu0 %v4119
    %6241 = vmatpush1.msra.mxu0 %v4118
    %6242 = vmatprep.subr.mxu0 %v4126
    %6243 = vmatpush1.msra.mxu0 %v4125
    %6244 = vmatprep.subr.mxu0 %v4133
    %6245 = vmatpush1.msra.mxu0 %v4132
    %6246 = vmatprep.subr.mxu0 %v4140
    %6247 = vmatpush1.msra.mxu0 %v4139
    %6248 = vmatprep.subr.mxu0 %v4147
    %6249 = vmatpush1.msra.mxu0 %v4146
    %6250 = vmatprep.subr.mxu0 %v4154
    %6251 = vmatpush1.msra.mxu0 %v4153
    %6252 = vmatprep.subr.mxu0 %v4161
    %6253 = vmatpush1.msra.mxu0 %v4160
    %6254 = vmatprep.subr.mxu0 %v4168
    %6255 = vmatpush1.msra.mxu0 %v4167
    %6256 = vmatprep.subr.mxu0 %v4175
    %6257 = vmatpush1.msra.mxu0 %v4174
    %6258 = vmatprep.subr.mxu0 %v4182
    %6259 = vmatpush1.msra.mxu0 %v4181
    %6260 = vmatprep.subr.mxu0 %v4189
    %6261 = vmatpush1.msra.mxu0 %v4188
    %6262 = vmatprep.subr.mxu0 %v4196
    %6263 = vmatpush1.msra.mxu0 %v4195
    %6264 = vmatprep.subr.mxu0 %v4203
    %6265 = vmatpush1.msra.mxu0 %v4202
    %6266 = vmatprep.subr.mxu0 %v4210
    %6267 = vmatpush1.msra.mxu0 %v4209
    %6268 = vmatprep.subr.mxu0 %v4217
    %6269 = vmatpush1.msra.mxu0 %v4216
    %6270 = vmatprep.subr.mxu0 %v4224
    %6271 = vmatpush1.msra.mxu0 %v4223
    %6272 = vmatprep.subr.mxu0 %v4231
    %6273 = vmatpush1.msra.mxu0 %v4230
    %6274 = vmatprep.subr.mxu0 %v4238
    %6275 = vmatpush1.msra.mxu0 %v4237
    %6276 = vmatprep.subr.mxu0 %v4245
    %6277 = vmatpush1.msra.mxu0 %v4244
    %6278 = vmatprep.subr.mxu0 %v4252
    %6279 = vmatpush1.msra.mxu0 %v4251
    %6280 = vmatprep.subr.mxu0 %v4259
    %6281 = vmatpush1.msra.mxu0 %v4258
    %6282 = vmatprep.mubr.f32.mxu0 %v3580
    %6283 = vmatmul.mubr.f32.gmra.mrb[0].mxu0 %v3579
    %v6284 = vpop.f32.mrb[0].mxu0
    %v6285 = vadd.f32 %v6214, %v6284
    %v6286 = vpop.f32.mrb[0].mxu0
    %v6287 = vadd.f32 %v6216, %v6286
    %6288 = vdwg.mxu0
    %6289 = vmatprep.subr.mxu0 %v4266
    %6290 = vmatpush1.msra.mxu0 %v4265
    %6291 = vmatprep.subr.mxu0 %v4273
    %6292 = vmatpush1.msra.mxu0 %v4272
    %6293 = vmatprep.subr.mxu0 %v4280
    %6294 = vmatpush1.msra.mxu0 %v4279
    %6295 = vmatprep.subr.mxu0 %v4287
    %6296 = vmatpush1.msra.mxu0 %v4286
    %6297 = vmatprep.subr.mxu0 %v4294
    %6298 = vmatpush1.msra.mxu0 %v4293
    %6299 = vmatprep.subr.mxu0 %v4301
    %6300 = vmatpush1.msra.mxu0 %v4300
    %6301 = vmatprep.subr.mxu0 %v4308
    %6302 = vmatpush1.msra.mxu0 %v4307
    %6303 = vmatprep.subr.mxu0 %v4315
    %6304 = vmatpush1.msra.mxu0 %v4314
    %6305 = vmatprep.subr.mxu0 %v4322
    %6306 = vmatpush1.msra.mxu0 %v4321
    %6307 = vmatprep.subr.mxu0 %v4329
    %6308 = vmatpush1.msra.mxu0 %v4328
    %6309 = vmatprep.subr.mxu0 %v4336
    %6310 = vmatpush1.msra.mxu0 %v4335
    %6311 = vmatprep.subr.mxu0 %v4343
    %6312 = vmatpush1.msra.mxu0 %v4342
    %6313 = vmatprep.subr.mxu0 %v4350
    %6314 = vmatpush1.msra.mxu0 %v4349
    %6315 = vmatprep.subr.mxu0 %v4357
    %6316 = vmatpush1.msra.mxu0 %v4356
    %6317 = vmatprep.subr.mxu0 %v4364
    %6318 = vmatpush1.msra.mxu0 %v4363
    %6319 = vmatprep.subr.mxu0 %v4371
    %6320 = vmatpush1.msra.mxu0 %v4370
    %6321 = vmatprep.subr.mxu0 %v4378
    %6322 = vmatpush1.msra.mxu0 %v4377
    %6323 = vmatprep.subr.mxu0 %v4385
    %6324 = vmatpush1.msra.mxu0 %v4384
    %6325 = vmatprep.subr.mxu0 %v4392
    %6326 = vmatpush1.msra.mxu0 %v4391
    %6327 = vmatprep.subr.mxu0 %v4399
    %6328 = vmatpush1.msra.mxu0 %v4398
    %6329 = vmatprep.subr.mxu0 %v4406
    %6330 = vmatpush1.msra.mxu0 %v4405
    %6331 = vmatprep.subr.mxu0 %v4413
    %6332 = vmatpush1.msra.mxu0 %v4412
    %6333 = vmatprep.subr.mxu0 %v4420
    %6334 = vmatpush1.msra.mxu0 %v4419
    %6335 = vmatprep.subr.mxu0 %v4427
    %6336 = vmatpush1.msra.mxu0 %v4426
    %6337 = vmatprep.subr.mxu0 %v4434
    %6338 = vmatpush1.msra.mxu0 %v4433
    %6339 = vmatprep.subr.mxu0 %v4441
    %6340 = vmatpush1.msra.mxu0 %v4440
    %6341 = vmatprep.subr.mxu0 %v4448
    %6342 = vmatpush1.msra.mxu0 %v4447
    %6343 = vmatprep.subr.mxu0 %v4455
    %6344 = vmatpush1.msra.mxu0 %v4454
    %6345 = vmatprep.subr.mxu0 %v4462
    %6346 = vmatpush1.msra.mxu0 %v4461
    %6347 = vmatprep.subr.mxu0 %v4469
    %6348 = vmatpush1.msra.mxu0 %v4468
    %6349 = vmatprep.subr.mxu0 %v4476
    %6350 = vmatpush1.msra.mxu0 %v4475
    %6351 = vmatprep.subr.mxu0 %v4483
    %6352 = vmatpush1.msra.mxu0 %v4482
    %6353 = vmatprep.mubr.f32.mxu0 %v3582
    %6354 = vmatmul.mubr.f32.gmra.mrb[0].mxu0 %v3581
    %v6355 = vpop.f32.mrb[0].mxu0
    %v6356 = vadd.f32 %v6285, %v6355
    %v6357 = vpop.f32.mrb[0].mxu0
    %v6358 = vadd.f32 %v6287, %v6357
    %6359 = vdwg.mxu0
    %6360 = vmatprep.subr.mxu0 %v4490
    %6361 = vmatpush1.msra.mxu0 %v4489
    %6362 = vmatprep.subr.mxu0 %v4497
    %6363 = vmatpush1.msra.mxu0 %v4496
    %6364 = vmatprep.subr.mxu0 %v4504
    %6365 = vmatpush1.msra.mxu0 %v4503
    %6366 = vmatprep.subr.mxu0 %v4511
    %6367 = vmatpush1.msra.mxu0 %v4510
    %6368 = vmatprep.subr.mxu0 %v4518
    %6369 = vmatpush1.msra.mxu0 %v4517
    %6370 = vmatprep.subr.mxu0 %v4525
    %6371 = vmatpush1.msra.mxu0 %v4524
    %6372 = vmatprep.subr.mxu0 %v4532
    %6373 = vmatpush1.msra.mxu0 %v4531
    %6374 = vmatprep.subr.mxu0 %v4539
    %6375 = vmatpush1.msra.mxu0 %v4538
    %6376 = vmatprep.subr.mxu0 %v4546
    %6377 = vmatpush1.msra.mxu0 %v4545
    %6378 = vmatprep.subr.mxu0 %v4553
    %6379 = vmatpush1.msra.mxu0 %v4552
    %6380 = vmatprep.subr.mxu0 %v4560
    %6381 = vmatpush1.msra.mxu0 %v4559
    %6382 = vmatprep.subr.mxu0 %v4567
    %6383 = vmatpush1.msra.mxu0 %v4566
    %6384 = vmatprep.subr.mxu0 %v4574
    %6385 = vmatpush1.msra.mxu0 %v4573
    %6386 = vmatprep.subr.mxu0 %v4581
    %6387 = vmatpush1.msra.mxu0 %v4580
    %6388 = vmatprep.subr.mxu0 %v4588
    %6389 = vmatpush1.msra.mxu0 %v4587
    %6390 = vmatprep.subr.mxu0 %v4595
    %6391 = vmatpush1.msra.mxu0 %v4594
    %6392 = vmatprep.subr.mxu0 %v4602
    %6393 = vmatpush1.msra.mxu0 %v4601
    %6394 = vmatprep.subr.mxu0 %v4609
    %6395 = vmatpush1.msra.mxu0 %v4608
    %6396 = vmatprep.subr.mxu0 %v4616
    %6397 = vmatpush1.msra.mxu0 %v4615
    %6398 = vmatprep.subr.mxu0 %v4623
    %6399 = vmatpush1.msra.mxu0 %v4622
    %6400 = vmatprep.subr.mxu0 %v4630
    %6401 = vmatpush1.msra.mxu0 %v4629
    %6402 = vmatprep.subr.mxu0 %v4637
    %6403 = vmatpush1.msra.mxu0 %v4636
    %6404 = vmatprep.subr.mxu0 %v4644
    %6405 = vmatpush1.msra.mxu0 %v4643
    %6406 = vmatprep.subr.mxu0 %v4651
    %6407 = vmatpush1.msra.mxu0 %v4650
    %6408 = vmatprep.subr.mxu0 %v4658
    %6409 = vmatpush1.msra.mxu0 %v4657
    %6410 = vmatprep.subr.mxu0 %v4665
    %6411 = vmatpush1.msra.mxu0 %v4664
    %6412 = vmatprep.subr.mxu0 %v4672
    %6413 = vmatpush1.msra.mxu0 %v4671
    %6414 = vmatprep.subr.mxu0 %v4679
    %6415 = vmatpush1.msra.mxu0 %v4678
    %6416 = vmatprep.subr.mxu0 %v4686
    %6417 = vmatpush1.msra.mxu0 %v4685
    %6418 = vmatprep.subr.mxu0 %v4693
    %6419 = vmatpush1.msra.mxu0 %v4692
    %6420 = vmatprep.subr.mxu0 %v4700
    %6421 = vmatpush1.msra.mxu0 %v4699
    %6422 = vmatprep.subr.mxu0 %v4707
    %6423 = vmatpush1.msra.mxu0 %v4706
    %6424 = vmatprep.mubr.f32.mxu0 %v3584
    %6425 = vmatmul.mubr.f32.gmra.mrb[0].mxu0 %v3583
    %v6426 = vpop.f32.mrb[0].mxu0
    %v6427 = vadd.f32 %v6356, %v6426
    %v6428 = vpop.f32.mrb[0].mxu0
    %v6429 = vadd.f32 %v6358, %v6428
    %6430 = vdwg.mxu0
    %6431 = vmatprep.subr.mxu0 %v4714
    %6432 = vmatpush1.msra.mxu0 %v4713
    %6433 = vmatprep.subr.mxu0 %v4721
    %6434 = vmatpush1.msra.mxu0 %v4720
    %6435 = vmatprep.subr.mxu0 %v4728
    %6436 = vmatpush1.msra.mxu0 %v4727
    %6437 = vmatprep.subr.mxu0 %v4735
    %6438 = vmatpush1.msra.mxu0 %v4734
    %6439 = vmatprep.subr.mxu0 %v4742
    %6440 = vmatpush1.msra.mxu0 %v4741
    %6441 = vmatprep.subr.mxu0 %v4749
    %6442 = vmatpush1.msra.mxu0 %v4748
    %6443 = vmatprep.subr.mxu0 %v4756
    %6444 = vmatpush1.msra.mxu0 %v4755
    %6445 = vmatprep.subr.mxu0 %v4763
    %6446 = vmatpush1.msra.mxu0 %v4762
    %6447 = vmatprep.subr.mxu0 %v4770
    %6448 = vmatpush1.msra.mxu0 %v4769
    %6449 = vmatprep.subr.mxu0 %v4777
    %6450 = vmatpush1.msra.mxu0 %v4776
    %6451 = vmatprep.subr.mxu0 %v4784
    %6452 = vmatpush1.msra.mxu0 %v4783
    %6453 = vmatprep.subr.mxu0 %v4791
    %6454 = vmatpush1.msra.mxu0 %v4790
    %6455 = vmatprep.subr.mxu0 %v4798
    %6456 = vmatpush1.msra.mxu0 %v4797
    %6457 = vmatprep.subr.mxu0 %v4805
    %6458 = vmatpush1.msra.mxu0 %v4804
    %6459 = vmatprep.subr.mxu0 %v4812
    %6460 = vmatpush1.msra.mxu0 %v4811
    %6461 = vmatprep.subr.mxu0 %v4819
    %6462 = vmatpush1.msra.mxu0 %v4818
    %6463 = vmatprep.subr.mxu0 %v4826
    %6464 = vmatpush1.msra.mxu0 %v4825
    %6465 = vmatprep.subr.mxu0 %v4833
    %6466 = vmatpush1.msra.mxu0 %v4832
    %6467 = vmatprep.subr.mxu0 %v4840
    %6468 = vmatpush1.msra.mxu0 %v4839
    %6469 = vmatprep.subr.mxu0 %v4847
    %6470 = vmatpush1.msra.mxu0 %v4846
    %6471 = vmatprep.subr.mxu0 %v4854
    %6472 = vmatpush1.msra.mxu0 %v4853
    %6473 = vmatprep.subr.mxu0 %v4861
    %6474 = vmatpush1.msra.mxu0 %v4860
    %6475 = vmatprep.subr.mxu0 %v4868
    %6476 = vmatpush1.msra.mxu0 %v4867
    %6477 = vmatprep.subr.mxu0 %v4875
    %6478 = vmatpush1.msra.mxu0 %v4874
    %6479 = vmatprep.subr.mxu0 %v4882
    %6480 = vmatpush1.msra.mxu0 %v4881
    %6481 = vmatprep.subr.mxu0 %v4889
    %6482 = vmatpush1.msra.mxu0 %v4888
    %6483 = vmatprep.subr.mxu0 %v4896
    %6484 = vmatpush1.msra.mxu0 %v4895
    %6485 = vmatprep.subr.mxu0 %v4903
    %6486 = vmatpush1.msra.mxu0 %v4902
    %6487 = vmatprep.subr.mxu0 %v4910
    %6488 = vmatpush1.msra.mxu0 %v4909
    %6489 = vmatprep.subr.mxu0 %v4917
    %6490 = vmatpush1.msra.mxu0 %v4916
    %6491 = vmatprep.subr.mxu0 %v4924
    %6492 = vmatpush1.msra.mxu0 %v4923
    %6493 = vmatprep.subr.mxu0 %v4931
    %6494 = vmatpush1.msra.mxu0 %v4930
    %6495 = vmatprep.mubr.f32.mxu0 %v3586
    %6496 = vmatmul.mubr.f32.gmra.mrb[0].mxu0 %v3585
    %v6497 = vpop.f32.mrb[0].mxu0
    %v6498 = vadd.f32 %v6427, %v6497
    %v6499 = vpop.f32.mrb[0].mxu0
    %v6500 = vadd.f32 %v6429, %v6499
    %6501 = vdwg.mxu0
    %6502 = vmatprep.subr.mxu0 %v4938
    %6503 = vmatpush1.msra.mxu0 %v4937
    %6504 = vmatprep.subr.mxu0 %v4945
    %6505 = vmatpush1.msra.mxu0 %v4944
    %6506 = vmatprep.subr.mxu0 %v4952
    %6507 = vmatpush1.msra.mxu0 %v4951
    %6508 = vmatprep.subr.mxu0 %v4959
    %6509 = vmatpush1.msra.mxu0 %v4958
    %6510 = vmatprep.subr.mxu0 %v4966
    %6511 = vmatpush1.msra.mxu0 %v4965
    %6512 = vmatprep.subr.mxu0 %v4973
    %6513 = vmatpush1.msra.mxu0 %v4972
    %6514 = vmatprep.subr.mxu0 %v4980
    %6515 = vmatpush1.msra.mxu0 %v4979
    %6516 = vmatprep.subr.mxu0 %v4987
    %6517 = vmatpush1.msra.mxu0 %v4986
    %6518 = vmatprep.subr.mxu0 %v4994
    %6519 = vmatpush1.msra.mxu0 %v4993
    %6520 = vmatprep.subr.mxu0 %v5001
    %6521 = vmatpush1.msra.mxu0 %v5000
    %6522 = vmatprep.subr.mxu0 %v5008
    %6523 = vmatpush1.msra.mxu0 %v5007
    %6524 = vmatprep.subr.mxu0 %v5015
    %6525 = vmatpush1.msra.mxu0 %v5014
    %6526 = vmatprep.subr.mxu0 %v5022
    %6527 = vmatpush1.msra.mxu0 %v5021
    %6528 = vmatprep.subr.mxu0 %v5029
    %6529 = vmatpush1.msra.mxu0 %v5028
    %6530 = vmatprep.subr.mxu0 %v5036
    %6531 = vmatpush1.msra.mxu0 %v5035
    %6532 = vmatprep.subr.mxu0 %v5043
    %6533 = vmatpush1.msra.mxu0 %v5042
    %6534 = vmatprep.subr.mxu0 0.0
    %6535 = vmatpush1.msra.mxu0 0.0
    %6536 = vmatprep.subr.mxu0 0.0
    %6537 = vmatpush1.msra.mxu0 0.0
    %6538 = vmatprep.subr.mxu0 0.0
    %6539 = vmatpush1.msra.mxu0 0.0
    %6540 = vmatprep.subr.mxu0 0.0
    %6541 = vmatpush1.msra.mxu0 0.0
    %6542 = vmatprep.subr.mxu0 0.0
    %6543 = vmatpush1.msra.mxu0 0.0
    %6544 = vmatprep.subr.mxu0 0.0
    %6545 = vmatpush1.msra.mxu0 0.0
    %6546 = vmatprep.subr.mxu0 0.0
    %6547 = vmatpush1.msra.mxu0 0.0
    %6548 = vmatprep.subr.mxu0 0.0
    %6549 = vmatpush1.msra.mxu0 0.0
    %6550 = vmatprep.subr.mxu0 0.0
    %6551 = vmatpush1.msra.mxu0 0.0
    %6552 = vmatprep.subr.mxu0 0.0
    %6553 = vmatpush1.msra.mxu0 0.0
    %6554 = vmatprep.subr.mxu0 0.0
    %6555 = vmatpush1.msra.mxu0 0.0
    %6556 = vmatprep.subr.mxu0 0.0
    %6557 = vmatpush1.msra.mxu0 0.0
    %6558 = vmatprep.subr.mxu0 0.0
    %6559 = vmatpush1.msra.mxu0 0.0
    %6560 = vmatprep.subr.mxu0 0.0
    %6561 = vmatpush1.msra.mxu0 0.0
    %6562 = vmatprep.subr.mxu0 0.0
    %6563 = vmatpush1.msra.mxu0 0.0
    %6564 = vmatprep.subr.mxu0 0.0
    %6565 = vmatpush1.msra.mxu0 0.0
    %6566 = vmatprep.mubr.f32.mxu0 0.0
    %6567 = vmatmul.mubr.f32.gmra.mrb[0].mxu0 %v3587
    %v6568 = vpop.f32.mrb[0].mxu0
    %v6569 = vadd.f32 %v6498, %v6568
    %v6570 = vpop.f32.mrb[0].mxu0
    %v6571 = vadd.f32 %v6500, %v6570
    %6572 = vdwg.mxu0
    %6573 = vmatprep.subr.mxu0 0.0
    %6574 = vmatpush1.msra.mxu0 %v3595
    %6575 = vmatprep.subr.mxu0 0.0
    %6576 = vmatpush1.msra.mxu0 %v3602
    %6577 = vmatprep.subr.mxu0 0.0
    %6578 = vmatpush1.msra.mxu0 %v3609
    %6579 = vmatprep.subr.mxu0 0.0
    %6580 = vmatpush1.msra.mxu0 %v3616
    %6581 = vmatprep.subr.mxu0 0.0
    %6582 = vmatpush1.msra.mxu0 %v3623
    %6583 = vmatprep.subr.mxu0 0.0
    %6584 = vmatpush1.msra.mxu0 %v3630
    %6585 = vmatprep.subr.mxu0 0.0
    %6586 = vmatpush1.msra.mxu0 %v3637
    %6587 = vmatprep.subr.mxu0 0.0
    %6588 = vmatpush1.msra.mxu0 %v3644
    %6589 = vmatprep.subr.mxu0 0.0
    %6590 = vmatpush1.msra.mxu0 %v3651
    %6591 = vmatprep.subr.mxu0 0.0
    %6592 = vmatpush1.msra.mxu0 %v3658
    %6593 = vmatprep.subr.mxu0 0.0
    %6594 = vmatpush1.msra.mxu0 %v3665
    %6595 = vmatprep.subr.mxu0 0.0
    %6596 = vmatpush1.msra.mxu0 %v3672
    %6597 = vmatprep.subr.mxu0 0.0
    %6598 = vmatpush1.msra.mxu0 %v3679
    %6599 = vmatprep.subr.mxu0 0.0
    %6600 = vmatpush1.msra.mxu0 %v3686
    %6601 = vmatprep.subr.mxu0 0.0
    %6602 = vmatpush1.msra.mxu0 %v3693
    %6603 = vmatprep.subr.mxu0 0.0
    %6604 = vmatpush1.msra.mxu0 %v3700
    %6605 = vmatprep.subr.mxu0 0.0
    %6606 = vmatpush1.msra.mxu0 %v3707
    %6607 = vmatprep.subr.mxu0 0.0
    %6608 = vmatpush1.msra.mxu0 %v3714
    %6609 = vmatprep.subr.mxu0 0.0
    %6610 = vmatpush1.msra.mxu0 %v3721
    %6611 = vmatprep.subr.mxu0 0.0
    %6612 = vmatpush1.msra.mxu0 %v3728
    %6613 = vmatprep.subr.mxu0 0.0
    %6614 = vmatpush1.msra.mxu0 %v3735
    %6615 = vmatprep.subr.mxu0 0.0
    %6616 = vmatpush1.msra.mxu0 %v3742
    %6617 = vmatprep.subr.mxu0 0.0
    %6618 = vmatpush1.msra.mxu0 %v3749
    %6619 = vmatprep.subr.mxu0 0.0
    %6620 = vmatpush1.msra.mxu0 %v3756
    %6621 = vmatprep.subr.mxu0 0.0
    %6622 = vmatpush1.msra.mxu0 %v3763
    %6623 = vmatprep.subr.mxu0 0.0
    %6624 = vmatpush1.msra.mxu0 %v3770
    %6625 = vmatprep.subr.mxu0 0.0
    %6626 = vmatpush1.msra.mxu0 %v3777
    %6627 = vmatprep.subr.mxu0 0.0
    %6628 = vmatpush1.msra.mxu0 %v3784
    %6629 = vmatprep.subr.mxu0 0.0
    %6630 = vmatpush1.msra.mxu0 %v3791
    %6631 = vmatprep.subr.mxu0 0.0
    %6632 = vmatpush1.msra.mxu0 %v3798
    %6633 = vmatprep.subr.mxu0 0.0
    %6634 = vmatpush1.msra.mxu0 %v3805
    %6635 = vmatprep.subr.mxu0 0.0
    %6636 = vmatpush1.msra.mxu0 %v3812
    %6637 = vmatprep.mubr.f32.mxu0 %v3576
    %6638 = vmatmul.mubr.f32.gmra.mrb[0].mxu0 %v3575
    %v6639 = vpop.f32.mrb[0].mxu0
    %v6640 = vadd.f32 %v5074, %v6639
    %v6641 = vpop.f32.mrb[0].mxu0
    %6642 = vdwg.mxu0
    %6643 = vmatprep.subr.mxu0 0.0
    %6644 = vmatpush1.msra.mxu0 %v3819
    %6645 = vmatprep.subr.mxu0 0.0
    %6646 = vmatpush1.msra.mxu0 %v3826
    %6647 = vmatprep.subr.mxu0 0.0
    %6648 = vmatpush1.msra.mxu0 %v3833
    %6649 = vmatprep.subr.mxu0 0.0
    %6650 = vmatpush1.msra.mxu0 %v3840
    %6651 = vmatprep.subr.mxu0 0.0
    %6652 = vmatpush1.msra.mxu0 %v3847
    %6653 = vmatprep.subr.mxu0 0.0
    %6654 = vmatpush1.msra.mxu0 %v3854
    %6655 = vmatprep.subr.mxu0 0.0
    %6656 = vmatpush1.msra.mxu0 %v3861
    %6657 = vmatprep.subr.mxu0 0.0
    %6658 = vmatpush1.msra.mxu0 %v3868
    %6659 = vmatprep.subr.mxu0 0.0
    %6660 = vmatpush1.msra.mxu0 %v3875
    %6661 = vmatprep.subr.mxu0 0.0
    %6662 = vmatpush1.msra.mxu0 %v3882
    %6663 = vmatprep.subr.mxu0 0.0
    %6664 = vmatpush1.msra.mxu0 %v3889
    %6665 = vmatprep.subr.mxu0 0.0
    %6666 = vmatpush1.msra.mxu0 %v3896
    %6667 = vmatprep.subr.mxu0 0.0
    %6668 = vmatpush1.msra.mxu0 %v3903
    %6669 = vmatprep.subr.mxu0 0.0
    %6670 = vmatpush1.msra.mxu0 %v3910
    %6671 = vmatprep.subr.mxu0 0.0
    %6672 = vmatpush1.msra.mxu0 %v3917
    %6673 = vmatprep.subr.mxu0 0.0
    %6674 = vmatpush1.msra.mxu0 %v3924
    %6675 = vmatprep.subr.mxu0 0.0
    %6676 = vmatpush1.msra.mxu0 %v3931
    %6677 = vmatprep.subr.mxu0 0.0
    %6678 = vmatpush1.msra.mxu0 %v3938
    %6679 = vmatprep.subr.mxu0 0.0
    %6680 = vmatpush1.msra.mxu0 %v3945
    %6681 = vmatprep.subr.mxu0 0.0
    %6682 = vmatpush1.msra.mxu0 %v3952
    %6683 = vmatprep.subr.mxu0 0.0
    %6684 = vmatpush1.msra.mxu0 %v3959
    %6685 = vmatprep.subr.mxu0 0.0
    %6686 = vmatpush1.msra.mxu0 %v3966
    %6687 = vmatprep.subr.mxu0 0.0
    %6688 = vmatpush1.msra.mxu0 %v3973
    %6689 = vmatprep.subr.mxu0 0.0
    %6690 = vmatpush1.msra.mxu0 %v3980
    %6691 = vmatprep.subr.mxu0 0.0
    %6692 = vmatpush1.msra.mxu0 %v3987
    %6693 = vmatprep.subr.mxu0 0.0
    %6694 = vmatpush1.msra.mxu0 %v3994
    %6695 = vmatprep.subr.mxu0 0.0
    %6696 = vmatpush1.msra.mxu0 %v4001
    %6697 = vmatprep.subr.mxu0 0.0
    %6698 = vmatpush1.msra.mxu0 %v4008
    %6699 = vmatprep.subr.mxu0 0.0
    %6700 = vmatpush1.msra.mxu0 %v4015
    %6701 = vmatprep.subr.mxu0 0.0
    %6702 = vmatpush1.msra.mxu0 %v4022
    %6703 = vmatprep.subr.mxu0 0.0
    %6704 = vmatpush1.msra.mxu0 %v4029
    %6705 = vmatprep.subr.mxu0 0.0
    %6706 = vmatpush1.msra.mxu0 %v4036
    %6707 = vmatprep.mubr.f32.mxu0 %v3578
    %6708 = vmatmul.mubr.f32.gmra.mrb[0].mxu0 %v3577
    %v6709 = vpop.f32.mrb[0].mxu0
    %v6710 = vadd.f32 %v6640, %v6709
    %v6711 = vpop.f32.mrb[0].mxu0
    %6712 = vdwg.mxu0
    %6713 = vmatprep.subr.mxu0 0.0
    %6714 = vmatpush1.msra.mxu0 %v4043
    %6715 = vmatprep.subr.mxu0 0.0
    %6716 = vmatpush1.msra.mxu0 %v4050
    %6717 = vmatprep.subr.mxu0 0.0
    %6718 = vmatpush1.msra.mxu0 %v4057
    %6719 = vmatprep.subr.mxu0 0.0
    %6720 = vmatpush1.msra.mxu0 %v4064
    %6721 = vmatprep.subr.mxu0 0.0
    %6722 = vmatpush1.msra.mxu0 %v4071
    %6723 = vmatprep.subr.mxu0 0.0
    %6724 = vmatpush1.msra.mxu0 %v4078
    %6725 = vmatprep.subr.mxu0 0.0
    %6726 = vmatpush1.msra.mxu0 %v4085
    %6727 = vmatprep.subr.mxu0 0.0
    %6728 = vmatpush1.msra.mxu0 %v4092
    %6729 = vmatprep.subr.mxu0 0.0
    %6730 = vmatpush1.msra.mxu0 %v4099
    %6731 = vmatprep.subr.mxu0 0.0
    %6732 = vmatpush1.msra.mxu0 %v4106
    %6733 = vmatprep.subr.mxu0 0.0
    %6734 = vmatpush1.msra.mxu0 %v4113
    %6735 = vmatprep.subr.mxu0 0.0
    %6736 = vmatpush1.msra.mxu0 %v4120
    %6737 = vmatprep.subr.mxu0 0.0
    %6738 = vmatpush1.msra.mxu0 %v4127
    %6739 = vmatprep.subr.mxu0 0.0
    %6740 = vmatpush1.msra.mxu0 %v4134
    %6741 = vmatprep.subr.mxu0 0.0
    %6742 = vmatpush1.msra.mxu0 %v4141
    %6743 = vmatprep.subr.mxu0 0.0
    %6744 = vmatpush1.msra.mxu0 %v4148
    %6745 = vmatprep.subr.mxu0 0.0
    %6746 = vmatpush1.msra.mxu0 %v4155
    %6747 = vmatprep.subr.mxu0 0.0
    %6748 = vmatpush1.msra.mxu0 %v4162
    %6749 = vmatprep.subr.mxu0 0.0
    %6750 = vmatpush1.msra.mxu0 %v4169
    %6751 = vmatprep.subr.mxu0 0.0
    %6752 = vmatpush1.msra.mxu0 %v4176
    %6753 = vmatprep.subr.mxu0 0.0
    %6754 = vmatpush1.msra.mxu0 %v4183
    %6755 = vmatprep.subr.mxu0 0.0
    %6756 = vmatpush1.msra.mxu0 %v4190
    %6757 = vmatprep.subr.mxu0 0.0
    %6758 = vmatpush1.msra.mxu0 %v4197
    %6759 = vmatprep.subr.mxu0 0.0
    %6760 = vmatpush1.msra.mxu0 %v4204
    %6761 = vmatprep.subr.mxu0 0.0
    %6762 = vmatpush1.msra.mxu0 %v4211
    %6763 = vmatprep.subr.mxu0 0.0
    %6764 = vmatpush1.msra.mxu0 %v4218
    %6765 = vmatprep.subr.mxu0 0.0
    %6766 = vmatpush1.msra.mxu0 %v4225
    %6767 = vmatprep.subr.mxu0 0.0
    %6768 = vmatpush1.msra.mxu0 %v4232
    %6769 = vmatprep.subr.mxu0 0.0
    %6770 = vmatpush1.msra.mxu0 %v4239
    %6771 = vmatprep.subr.mxu0 0.0
    %6772 = vmatpush1.msra.mxu0 %v4246
    %6773 = vmatprep.subr.mxu0 0.0
    %6774 = vmatpush1.msra.mxu0 %v4253
    %6775 = vmatprep.subr.mxu0 0.0
    %6776 = vmatpush1.msra.mxu0 %v4260
    %6777 = vmatprep.mubr.f32.mxu0 %v3580
    %6778 = vmatmul.mubr.f32.gmra.mrb[0].mxu0 %v3579
    %v6779 = vpop.f32.mrb[0].mxu0
    %v6780 = vadd.f32 %v6710, %v6779
    %v6781 = vpop.f32.mrb[0].mxu0
    %6782 = vdwg.mxu0
    %6783 = vmatprep.subr.mxu0 0.0
    %6784 = vmatpush1.msra.mxu0 %v4267
    %6785 = vmatprep.subr.mxu0 0.0
    %6786 = vmatpush1.msra.mxu0 %v4274
    %6787 = vmatprep.subr.mxu0 0.0
    %6788 = vmatpush1.msra.mxu0 %v4281
    %6789 = vmatprep.subr.mxu0 0.0
    %6790 = vmatpush1.msra.mxu0 %v4288
    %6791 = vmatprep.subr.mxu0 0.0
    %6792 = vmatpush1.msra.mxu0 %v4295
    %6793 = vmatprep.subr.mxu0 0.0
    %6794 = vmatpush1.msra.mxu0 %v4302
    %6795 = vmatprep.subr.mxu0 0.0
    %6796 = vmatpush1.msra.mxu0 %v4309
    %6797 = vmatprep.subr.mxu0 0.0
    %6798 = vmatpush1.msra.mxu0 %v4316
    %6799 = vmatprep.subr.mxu0 0.0
    %6800 = vmatpush1.msra.mxu0 %v4323
    %6801 = vmatprep.subr.mxu0 0.0
    %6802 = vmatpush1.msra.mxu0 %v4330
    %6803 = vmatprep.subr.mxu0 0.0
    %6804 = vmatpush1.msra.mxu0 %v4337
    %6805 = vmatprep.subr.mxu0 0.0
    %6806 = vmatpush1.msra.mxu0 %v4344
    %6807 = vmatprep.subr.mxu0 0.0
    %6808 = vmatpush1.msra.mxu0 %v4351
    %6809 = vmatprep.subr.mxu0 0.0
    %6810 = vmatpush1.msra.mxu0 %v4358
    %6811 = vmatprep.subr.mxu0 0.0
    %6812 = vmatpush1.msra.mxu0 %v4365
    %6813 = vmatprep.subr.mxu0 0.0
    %6814 = vmatpush1.msra.mxu0 %v4372
    %6815 = vmatprep.subr.mxu0 0.0
    %6816 = vmatpush1.msra.mxu0 %v4379
    %6817 = vmatprep.subr.mxu0 0.0
    %6818 = vmatpush1.msra.mxu0 %v4386
    %6819 = vmatprep.subr.mxu0 0.0
    %6820 = vmatpush1.msra.mxu0 %v4393
    %6821 = vmatprep.subr.mxu0 0.0
    %6822 = vmatpush1.msra.mxu0 %v4400
    %6823 = vmatprep.subr.mxu0 0.0
    %6824 = vmatpush1.msra.mxu0 %v4407
    %6825 = vmatprep.subr.mxu0 0.0
    %6826 = vmatpush1.msra.mxu0 %v4414
    %6827 = vmatprep.subr.mxu0 0.0
    %6828 = vmatpush1.msra.mxu0 %v4421
    %6829 = vmatprep.subr.mxu0 0.0
    %6830 = vmatpush1.msra.mxu0 %v4428
    %6831 = vmatprep.subr.mxu0 0.0
    %6832 = vmatpush1.msra.mxu0 %v4435
    %6833 = vmatprep.subr.mxu0 0.0
    %6834 = vmatpush1.msra.mxu0 %v4442
    %6835 = vmatprep.subr.mxu0 0.0
    %6836 = vmatpush1.msra.mxu0 %v4449
    %6837 = vmatprep.subr.mxu0 0.0
    %6838 = vmatpush1.msra.mxu0 %v4456
    %6839 = vmatprep.subr.mxu0 0.0
    %6840 = vmatpush1.msra.mxu0 %v4463
    %6841 = vmatprep.subr.mxu0 0.0
    %6842 = vmatpush1.msra.mxu0 %v4470
    %6843 = vmatprep.subr.mxu0 0.0
    %6844 = vmatpush1.msra.mxu0 %v4477
    %6845 = vmatprep.subr.mxu0 0.0
    %6846 = vmatpush1.msra.mxu0 %v4484
    %6847 = vmatprep.mubr.f32.mxu0 %v3582
    %6848 = vmatmul.mubr.f32.gmra.mrb[0].mxu0 %v3581
    %v6849 = vpop.f32.mrb[0].mxu0
    %v6850 = vadd.f32 %v6780, %v6849
    %v6851 = vpop.f32.mrb[0].mxu0
    %6852 = vdwg.mxu0
    %6853 = vmatprep.subr.mxu0 0.0
    %6854 = vmatpush1.msra.mxu0 %v4491
    %6855 = vmatprep.subr.mxu0 0.0
    %6856 = vmatpush1.msra.mxu0 %v4498
    %6857 = vmatprep.subr.mxu0 0.0
    %6858 = vmatpush1.msra.mxu0 %v4505
    %6859 = vmatprep.subr.mxu0 0.0
    %6860 = vmatpush1.msra.mxu0 %v4512
    %6861 = vmatprep.subr.mxu0 0.0
    %6862 = vmatpush1.msra.mxu0 %v4519
    %6863 = vmatprep.subr.mxu0 0.0
    %6864 = vmatpush1.msra.mxu0 %v4526
    %6865 = vmatprep.subr.mxu0 0.0
    %6866 = vmatpush1.msra.mxu0 %v4533
    %6867 = vmatprep.subr.mxu0 0.0
    %6868 = vmatpush1.msra.mxu0 %v4540
    %6869 = vmatprep.subr.mxu0 0.0
    %6870 = vmatpush1.msra.mxu0 %v4547
    %6871 = vmatprep.subr.mxu0 0.0
    %6872 = vmatpush1.msra.mxu0 %v4554
    %6873 = vmatprep.subr.mxu0 0.0
    %6874 = vmatpush1.msra.mxu0 %v4561
    %6875 = vmatprep.subr.mxu0 0.0
    %6876 = vmatpush1.msra.mxu0 %v4568
    %6877 = vmatprep.subr.mxu0 0.0
    %6878 = vmatpush1.msra.mxu0 %v4575
    %6879 = vmatprep.subr.mxu0 0.0
    %6880 = vmatpush1.msra.mxu0 %v4582
    %6881 = vmatprep.subr.mxu0 0.0
    %6882 = vmatpush1.msra.mxu0 %v4589
    %6883 = vmatprep.subr.mxu0 0.0
    %6884 = vmatpush1.msra.mxu0 %v4596
    %6885 = vmatprep.subr.mxu0 0.0
    %6886 = vmatpush1.msra.mxu0 %v4603
    %6887 = vmatprep.subr.mxu0 0.0
    %6888 = vmatpush1.msra.mxu0 %v4610
    %6889 = vmatprep.subr.mxu0 0.0
    %6890 = vmatpush1.msra.mxu0 %v4617
    %6891 = vmatprep.subr.mxu0 0.0
    %6892 = vmatpush1.msra.mxu0 %v4624
    %6893 = vmatprep.subr.mxu0 0.0
    %6894 = vmatpush1.msra.mxu0 %v4631
    %6895 = vmatprep.subr.mxu0 0.0
    %6896 = vmatpush1.msra.mxu0 %v4638
    %6897 = vmatprep.subr.mxu0 0.0
    %6898 = vmatpush1.msra.mxu0 %v4645
    %6899 = vmatprep.subr.mxu0 0.0
    %6900 = vmatpush1.msra.mxu0 %v4652
    %6901 = vmatprep.subr.mxu0 0.0
    %6902 = vmatpush1.msra.mxu0 %v4659
    %6903 = vmatprep.subr.mxu0 0.0
    %6904 = vmatpush1.msra.mxu0 %v4666
    %6905 = vmatprep.subr.mxu0 0.0
    %6906 = vmatpush1.msra.mxu0 %v4673
    %6907 = vmatprep.subr.mxu0 0.0
    %6908 = vmatpush1.msra.mxu0 %v4680
    %6909 = vmatprep.subr.mxu0 0.0
    %6910 = vmatpush1.msra.mxu0 %v4687
    %6911 = vmatprep.subr.mxu0 0.0
    %6912 = vmatpush1.msra.mxu0 %v4694
    %6913 = vmatprep.subr.mxu0 0.0
    %6914 = vmatpush1.msra.mxu0 %v4701
    %6915 = vmatprep.subr.mxu0 0.0
    %6916 = vmatpush1.msra.mxu0 %v4708
    %6917 = vmatprep.mubr.f32.mxu0 %v3584
    %6918 = vmatmul.mubr.f32.gmra.mrb[0].mxu0 %v3583
    %v6919 = vpop.f32.mrb[0].mxu0
    %v6920 = vadd.f32 %v6850, %v6919
    %v6921 = vpop.f32.mrb[0].mxu0
    %6922 = vdwg.mxu0
    %6923 = vmatprep.subr.mxu0 0.0
    %6924 = vmatpush1.msra.mxu0 %v4715
    %6925 = vmatprep.subr.mxu0 0.0
    %6926 = vmatpush1.msra.mxu0 %v4722
    %6927 = vmatprep.subr.mxu0 0.0
    %6928 = vmatpush1.msra.mxu0 %v4729
    %6929 = vmatprep.subr.mxu0 0.0
    %6930 = vmatpush1.msra.mxu0 %v4736
    %6931 = vmatprep.subr.mxu0 0.0
    %6932 = vmatpush1.msra.mxu0 %v4743
    %6933 = vmatprep.subr.mxu0 0.0
    %6934 = vmatpush1.msra.mxu0 %v4750
    %6935 = vmatprep.subr.mxu0 0.0
    %6936 = vmatpush1.msra.mxu0 %v4757
    %6937 = vmatprep.subr.mxu0 0.0
    %6938 = vmatpush1.msra.mxu0 %v4764
    %6939 = vmatprep.subr.mxu0 0.0
    %6940 = vmatpush1.msra.mxu0 %v4771
    %6941 = vmatprep.subr.mxu0 0.0
    %6942 = vmatpush1.msra.mxu0 %v4778
    %6943 = vmatprep.subr.mxu0 0.0
    %6944 = vmatpush1.msra.mxu0 %v4785
    %6945 = vmatprep.subr.mxu0 0.0
    %6946 = vmatpush1.msra.mxu0 %v4792
    %6947 = vmatprep.subr.mxu0 0.0
    %6948 = vmatpush1.msra.mxu0 %v4799
    %6949 = vmatprep.subr.mxu0 0.0
    %6950 = vmatpush1.msra.mxu0 %v4806
    %6951 = vmatprep.subr.mxu0 0.0
    %6952 = vmatpush1.msra.mxu0 %v4813
    %6953 = vmatprep.subr.mxu0 0.0
    %6954 = vmatpush1.msra.mxu0 %v4820
    %6955 = vmatprep.subr.mxu0 0.0
    %6956 = vmatpush1.msra.mxu0 %v4827
    %6957 = vmatprep.subr.mxu0 0.0
    %6958 = vmatpush1.msra.mxu0 %v4834
    %6959 = vmatprep.subr.mxu0 0.0
    %6960 = vmatpush1.msra.mxu0 %v4841
    %6961 = vmatprep.subr.mxu0 0.0
    %6962 = vmatpush1.msra.mxu0 %v4848
    %6963 = vmatprep.subr.mxu0 0.0
    %6964 = vmatpush1.msra.mxu0 %v4855
    %6965 = vmatprep.subr.mxu0 0.0
    %6966 = vmatpush1.msra.mxu0 %v4862
    %6967 = vmatprep.subr.mxu0 0.0
    %6968 = vmatpush1.msra.mxu0 %v4869
    %6969 = vmatprep.subr.mxu0 0.0
    %6970 = vmatpush1.msra.mxu0 %v4876
    %6971 = vmatprep.subr.mxu0 0.0
    %6972 = vmatpush1.msra.mxu0 %v4883
    %6973 = vmatprep.subr.mxu0 0.0
    %6974 = vmatpush1.msra.mxu0 %v4890
    %6975 = vmatprep.subr.mxu0 0.0
    %6976 = vmatpush1.msra.mxu0 %v4897
    %6977 = vmatprep.subr.mxu0 0.0
    %6978 = vmatpush1.msra.mxu0 %v4904
    %6979 = vmatprep.subr.mxu0 0.0
    %6980 = vmatpush1.msra.mxu0 %v4911
    %6981 = vmatprep.subr.mxu0 0.0
    %6982 = vmatpush1.msra.mxu0 %v4918
    %6983 = vmatprep.subr.mxu0 0.0
    %6984 = vmatpush1.msra.mxu0 %v4925
    %6985 = vmatprep.subr.mxu0 0.0
    %6986 = vmatpush1.msra.mxu0 %v4932
    %6987 = vmatprep.mubr.f32.mxu0 %v3586
    %6988 = vmatmul.mubr.f32.gmra.mrb[0].mxu0 %v3585
    %v6989 = vpop.f32.mrb[0].mxu0
    %v6990 = vadd.f32 %v6920, %v6989
    %v6991 = vpop.f32.mrb[0].mxu0
    %6992 = vdwg.mxu0
    %6993 = vmatprep.subr.mxu0 0.0
    %6994 = vmatpush1.msra.mxu0 %v4939
    %6995 = vmatprep.subr.mxu0 0.0
    %6996 = vmatpush1.msra.mxu0 %v4946
    %6997 = vmatprep.subr.mxu0 0.0
    %6998 = vmatpush1.msra.mxu0 %v4953
    %6999 = vmatprep.subr.mxu0 0.0
    %7000 = vmatpush1.msra.mxu0 %v4960
    %7001 = vmatprep.subr.mxu0 0.0
    %7002 = vmatpush1.msra.mxu0 %v4967
    %7003 = vmatprep.subr.mxu0 0.0
    %7004 = vmatpush1.msra.mxu0 %v4974
    %7005 = vmatprep.subr.mxu0 0.0
    %7006 = vmatpush1.msra.mxu0 %v4981
    %7007 = vmatprep.subr.mxu0 0.0
    %7008 = vmatpush1.msra.mxu0 %v4988
    %7009 = vmatprep.subr.mxu0 0.0
    %7010 = vmatpush1.msra.mxu0 %v4995
    %7011 = vmatprep.subr.mxu0 0.0
    %7012 = vmatpush1.msra.mxu0 %v5002
    %7013 = vmatprep.subr.mxu0 0.0
    %7014 = vmatpush1.msra.mxu0 %v5009
    %7015 = vmatprep.subr.mxu0 0.0
    %7016 = vmatpush1.msra.mxu0 %v5016
    %7017 = vmatprep.subr.mxu0 0.0
    %7018 = vmatpush1.msra.mxu0 %v5023
    %7019 = vmatprep.subr.mxu0 0.0
    %7020 = vmatpush1.msra.mxu0 %v5030
    %7021 = vmatprep.subr.mxu0 0.0
    %7022 = vmatpush1.msra.mxu0 %v5037
    %7023 = vmatprep.subr.mxu0 0.0
    %7024 = vmatpush1.msra.mxu0 %v5044
    %7025 = vmatprep.subr.mxu0 0.0
    %7026 = vmatpush1.msra.mxu0 0.0
    %7027 = vmatprep.subr.mxu0 0.0
    %7028 = vmatpush1.msra.mxu0 0.0
    %7029 = vmatprep.subr.mxu0 0.0
    %7030 = vmatpush1.msra.mxu0 0.0
    %7031 = vmatprep.subr.mxu0 0.0
    %7032 = vmatpush1.msra.mxu0 0.0
    %7033 = vmatprep.subr.mxu0 0.0
    %7034 = vmatpush1.msra.mxu0 0.0
    %7035 = vmatprep.subr.mxu0 0.0
    %7036 = vmatpush1.msra.mxu0 0.0
    %7037 = vmatprep.subr.mxu0 0.0
    %7038 = vmatpush1.msra.mxu0 0.0
    %7039 = vmatprep.subr.mxu0 0.0
    %7040 = vmatpush1.msra.mxu0 0.0
    %7041 = vmatprep.subr.mxu0 0.0
    %7042 = vmatpush1.msra.mxu0 0.0
    %7043 = vmatprep.subr.mxu0 0.0
    %7044 = vmatpush1.msra.mxu0 0.0
    %7045 = vmatprep.subr.mxu0 0.0
    %7046 = vmatpush1.msra.mxu0 0.0
    %7047 = vmatprep.subr.mxu0 0.0
    %7048 = vmatpush1.msra.mxu0 0.0
    %7049 = vmatprep.subr.mxu0 0.0
    %7050 = vmatpush1.msra.mxu0 0.0
    %7051 = vmatprep.subr.mxu0 0.0
    %7052 = vmatpush1.msra.mxu0 0.0
    %7053 = vmatprep.subr.mxu0 0.0
    %7054 = vmatpush1.msra.mxu0 0.0
    %7055 = vmatprep.subr.mxu0 0.0
    %7056 = vmatpush1.msra.mxu0 0.0
    %7057 = vmatprep.mubr.f32.mxu0 0.0
    %7058 = vmatmul.mubr.f32.gmra.mrb[0].mxu0 %v3587
    %v7059 = vpop.f32.mrb[0].mxu0
    %v7060 = vadd.f32 %v6990, %v7059
    %v7061 = vpop.f32.mrb[0].mxu0
    %7062 = vdwg.mxu0
    %vm7063 = vcmp.gt.f32.partialorder %v5575, 0.0
    %vm7064 = vcmp.gt.f32.partialorder %v5577, 0.0
    %vm7065 = vcmp.gt.f32.partialorder %v6072, 0.0
    %vm7066 = vcmp.gt.f32.partialorder %v6074, 0.0
    %vm7067 = vcmp.gt.f32.partialorder %v6569, 0.0
    %vm7068 = vcmp.gt.f32.partialorder %v6571, 0.0
    %vm7069 = vcmp.gt.f32.partialorder %v7060, 0.0
    %v7070 = vstv %s3588
    %v7071 = vmul.f32 %v7070, %v5575
    %v7072 = vmul.f32 %v7070, %v5577
    %v7073 = vmul.f32 %v7070, %v6072
    %v7074 = vmul.f32 %v7070, %v6074
    %v7075 = vmul.f32 %v7070, %v6569
    %v7076 = vmul.f32 %v7070, %v6571
    %v7077 = vmul.f32 %v7070, %v7060
    %v7078 = vsel %vm7063, %v5575, %v7071
    %v7079 = vsel %vm7064, %v5577, %v7072
    %v7080 = vsel %vm7065, %v6072, %v7073
    %v7081 = vsel %vm7066, %v6074, %v7074
    %v7082 = vsel %vm7067, %v6569, %v7075
    %v7083 = vsel %vm7068, %v6571, %v7076
    %v7084 = vsel %vm7069, %v7060, %v7077
    %s7085 = sld [smem:[#allocation2 + $0x2]]
    %v7086 = vld [vmem:[#allocation11] sm:$0xff]
    %v7087 = vld [vmem:[#allocation11 + $0x8] sm:$0xff]
    %v7088 = vld [vmem:[#allocation11 + $0x10] sm:$0xff]
    %v7089 = vld [vmem:[#allocation11 + $0x18] sm:$0xff]
    %v7090 = vld [vmem:[#allocation11 + $0x20] sm:$0xff]
    %v7091 = vld [vmem:[#allocation11 + $0x28] sm:$0xff]
    %v7092 = vld [vmem:[#allocation11 + $0x30] sm:$0xff]
    %v7093 = vld [vmem:[#allocation11 + $0x38] sm:$0xff]
    %v7094 = vld [vmem:[#allocation11 + $0x40] sm:$0xff]
    %v7095 = vld [vmem:[#allocation11 + $0x48] sm:$0xff]
    %v7096 = vld [vmem:[#allocation11 + $0x50] sm:$0xff]
    %v7097 = vld [vmem:[#allocation11 + $0x58] sm:$0xff]
    %v7098 = vld [vmem:[#allocation11 + $0x60] sm:$0xff]
    %v7099 = vld [vmem:[#allocation11 + $0x68] sm:$0xff]
    %v7100 = vld [vmem:[#allocation11 + $0x70] sm:$0xff]
    %v7101 = vld [vmem:[#allocation11 + $0x78] sm:$0xff]
    %v7102 = vld [vmem:[#allocation11 + $0x80] sm:$0xff]
    %v7103 = vld [vmem:[#allocation11 + $0x88] sm:$0xff]
    %v7104 = vld [vmem:[#allocation11 + $0x90] sm:$0xff]
    %v7105 = vld [vmem:[#allocation11 + $0x98] sm:$0xff]
    %v7106 = vld [vmem:[#allocation11 + $0xa0] sm:$0xff]
    %v7107 = vld [vmem:[#allocation11 + $0xa8] sm:$0xff]
    %v7108 = vld [vmem:[#allocation11 + $0xb0] sm:$0xff]
    %v7109 = vld [vmem:[#allocation11 + $0xb8] sm:$0xff]
    %v7110 = vld [vmem:[#allocation11 + $0xc0] sm:$0xff]
    %v7111 = vld [vmem:[#allocation11 + $0xc8] sm:$0xff]
    %v7112 = vld [vmem:[#allocation11 + $0xd0] sm:$0xff]
    %v7113 = vld [vmem:[#allocation11 + $0xd8] sm:$0xff]
    %v7114 = vld [vmem:[#allocation11 + $0xe0] sm:$0xff]
    %v7115 = vld [vmem:[#allocation11 + $0xe8] sm:$0xff]
    %v7116 = vld [vmem:[#allocation11 + $0xf0] sm:$0xff]
    %v7117 = vld [vmem:[#allocation11 + $0xf8] sm:$0xff]
    %v7118 = vld [vmem:[#allocation11 + $0x100] sm:$0xff]
    %v7119 = vld [vmem:[#allocation11 + $0x108] sm:$0xff]
    %v7120 = vld [vmem:[#allocation11 + $0x110] sm:$0xff]
    %v7121 = vld [vmem:[#allocation11 + $0x118] sm:$0xff]
    %v7122 = vld [vmem:[#allocation11 + $0x120] sm:$0xff]
    %v7123 = vld [vmem:[#allocation11 + $0x128] sm:$0xff]
    %v7124 = vld [vmem:[#allocation11 + $0x130] sm:$0xff]
    %v7125 = vld [vmem:[#allocation11 + $0x138] sm:$0xff]
    %v7126 = vld [vmem:[#allocation11 + $0x140] sm:$0xff]
    %v7127 = vld [vmem:[#allocation11 + $0x148] sm:$0xff]
    %v7128 = vld [vmem:[#allocation11 + $0x150] sm:$0xff]
    %v7129 = vld [vmem:[#allocation11 + $0x158] sm:$0xff]
    %v7130 = vld [vmem:[#allocation11 + $0x160] sm:$0xff]
    %v7131 = vld [vmem:[#allocation11 + $0x168] sm:$0xff]
    %v7132 = vld [vmem:[#allocation11 + $0x170] sm:$0xff]
    %v7133 = vld [vmem:[#allocation11 + $0x178] sm:$0xff]
    %v7134 = vld [vmem:[#allocation11 + $0x180] sm:$0xff]
    %v7135 = vld [vmem:[#allocation11 + $0x188] sm:$0xff]
    %v7136 = vld [vmem:[#allocation11 + $0x190] sm:$0xff]
    %v7137 = vld [vmem:[#allocation11 + $0x198] sm:$0xff]
    %v7138 = vld [vmem:[#allocation11 + $0x1a0] sm:$0xff]
    %v7139 = vld [vmem:[#allocation11 + $0x1a8] sm:$0xff]
    %v7140 = vld [vmem:[#allocation11 + $0x1b0] sm:$0xff]
    %v7141 = vld [vmem:[#allocation11 + $0x1b8] sm:$0xff]
    %v7142 = vld [vmem:[#allocation11 + $0x1c0] sm:$0xff]
    %v7143 = vld [vmem:[#allocation11 + $0x1c8] sm:$0xff]
    %v7144 = vld [vmem:[#allocation11 + $0x1d0] sm:$0xff]
    %v7145 = vld [vmem:[#allocation11 + $0x1d8] sm:$0xff]
    %v7146 = vld [vmem:[#allocation11 + $0x1e0] sm:$0xff]
    %v7147 = vld [vmem:[#allocation11 + $0x1e8] sm:$0xff]
    %v7148 = vld [vmem:[#allocation11 + $0x1f0] sm:$0xff]
    %v7149 = vld [vmem:[#allocation11 + $0x1f8] sm:$0xff]
    %v7150 = vld [vmem:[#allocation11 + $0x200] sm:$0xff]
    %v7151 = vld [vmem:[#allocation11 + $0x208] sm:$0xff]
    %v7152 = vld [vmem:[#allocation11 + $0x210] sm:$0xff]
    %v7153 = vld [vmem:[#allocation11 + $0x218] sm:$0xff]
    %v7154 = vld [vmem:[#allocation11 + $0x220] sm:$0xff]
    %v7155 = vld [vmem:[#allocation11 + $0x228] sm:$0xff]
    %v7156 = vld [vmem:[#allocation11 + $0x230] sm:$0xff]
    %v7157 = vld [vmem:[#allocation11 + $0x238] sm:$0xff]
    %v7158 = vld [vmem:[#allocation11 + $0x240] sm:$0xff]
    %v7159 = vld [vmem:[#allocation11 + $0x248] sm:$0xff]
    %v7160 = vld [vmem:[#allocation11 + $0x250] sm:$0xff]
    %v7161 = vld [vmem:[#allocation11 + $0x258] sm:$0xff]
    %v7162 = vld [vmem:[#allocation11 + $0x260] sm:$0xff]
    %v7163 = vld [vmem:[#allocation11 + $0x268] sm:$0xff]
    %v7164 = vld [vmem:[#allocation11 + $0x270] sm:$0xff]
    %v7165 = vld [vmem:[#allocation11 + $0x278] sm:$0xff]
    %v7166 = vld [vmem:[#allocation11 + $0x280] sm:$0xff]
    %v7167 = vld [vmem:[#allocation11 + $0x288] sm:$0xff]
    %v7168 = vld [vmem:[#allocation11 + $0x290] sm:$0xff]
    %v7169 = vld [vmem:[#allocation11 + $0x298] sm:$0xff]
    %v7170 = vld [vmem:[#allocation11 + $0x2a0] sm:$0xff]
    %v7171 = vld [vmem:[#allocation11 + $0x2a8] sm:$0xff]
    %v7172 = vld [vmem:[#allocation11 + $0x2b0] sm:$0xff]
    %v7173 = vld [vmem:[#allocation11 + $0x2b8] sm:$0xff]
    %v7174 = vld [vmem:[#allocation11 + $0x2c0] sm:$0xff]
    %v7175 = vld [vmem:[#allocation11 + $0x2c8] sm:$0xff]
    %v7176 = vld [vmem:[#allocation11 + $0x2d0] sm:$0xff]
    %v7177 = vld [vmem:[#allocation11 + $0x2d8] sm:$0xff]
    %v7178 = vld [vmem:[#allocation11 + $0x2e0] sm:$0xff]
    %v7179 = vld [vmem:[#allocation11 + $0x2e8] sm:$0xff]
    %v7180 = vld [vmem:[#allocation11 + $0x2f0] sm:$0xff]
    %v7181 = vld [vmem:[#allocation11 + $0x2f8] sm:$0xff]
    %v7182 = vld [vmem:[#allocation11 + $0x300] sm:$0xff]
    %v7183 = vld [vmem:[#allocation11 + $0x308] sm:$0xff]
    %v7184 = vld [vmem:[#allocation11 + $0x310] sm:$0xff]
    %v7185 = vld [vmem:[#allocation11 + $0x318] sm:$0xff]
    %v7186 = vld [vmem:[#allocation11 + $0x320] sm:$0xff]
    %v7187 = vld [vmem:[#allocation11 + $0x328] sm:$0xff]
    %v7188 = vld [vmem:[#allocation11 + $0x330] sm:$0xff]
    %v7189 = vld [vmem:[#allocation11 + $0x338] sm:$0xff]
    %v7190 = vld [vmem:[#allocation11 + $0x340] sm:$0xff]
    %v7191 = vld [vmem:[#allocation11 + $0x348] sm:$0xff]
    %v7192 = vld [vmem:[#allocation11 + $0x350] sm:$0xff]
    %v7193 = vld [vmem:[#allocation11 + $0x358] sm:$0xff]
    %v7194 = vld [vmem:[#allocation11 + $0x360] sm:$0xff]
    %v7195 = vld [vmem:[#allocation11 + $0x368] sm:$0xff]
    %v7196 = vld [vmem:[#allocation11 + $0x370] sm:$0xff]
    %v7197 = vld [vmem:[#allocation11 + $0x378] sm:$0xff]
    %v7198 = vld [vmem:[#allocation11 + $0x380] sm:$0xff]
    %v7199 = vld [vmem:[#allocation11 + $0x388] sm:$0xff]
    %v7200 = vld [vmem:[#allocation11 + $0x390] sm:$0xff]
    %v7201 = vld [vmem:[#allocation11 + $0x398] sm:$0xff]
    %v7202 = vld [vmem:[#allocation11 + $0x3a0] sm:$0xff]
    %v7203 = vld [vmem:[#allocation11 + $0x3a8] sm:$0xff]
    %v7204 = vld [vmem:[#allocation11 + $0x3b0] sm:$0xff]
    %v7205 = vld [vmem:[#allocation11 + $0x3b8] sm:$0xff]
    %v7206 = vld [vmem:[#allocation11 + $0x3c0] sm:$0xff]
    %v7207 = vld [vmem:[#allocation11 + $0x3c8] sm:$0xff]
    %v7208 = vld [vmem:[#allocation11 + $0x3d0] sm:$0xff]
    %v7209 = vld [vmem:[#allocation11 + $0x3d8] sm:$0xff]
    %v7210 = vld [vmem:[#allocation11 + $0x3e0] sm:$0xff]
    %v7211 = vld [vmem:[#allocation11 + $0x3e8] sm:$0xff]
    %v7212 = vld [vmem:[#allocation11 + $0x3f0] sm:$0xff]
    %v7213 = vld [vmem:[#allocation11 + $0x3f8] sm:$0xff]
    %v7214 = vld [vmem:[#allocation11 + $0x400] sm:$0xff]
    %v7215 = vld [vmem:[#allocation11 + $0x408] sm:$0xff]
    %v7216 = vld [vmem:[#allocation11 + $0x410] sm:$0xff]
    %v7217 = vld [vmem:[#allocation11 + $0x418] sm:$0xff]
    %v7218 = vld [vmem:[#allocation11 + $0x420] sm:$0xff]
    %v7219 = vld [vmem:[#allocation11 + $0x428] sm:$0xff]
    %v7220 = vld [vmem:[#allocation11 + $0x430] sm:$0xff]
    %v7221 = vld [vmem:[#allocation11 + $0x438] sm:$0xff]
    %v7222 = vld [vmem:[#allocation11 + $0x440] sm:$0xff]
    %v7223 = vld [vmem:[#allocation11 + $0x448] sm:$0xff]
    %v7224 = vld [vmem:[#allocation11 + $0x450] sm:$0xff]
    %v7225 = vld [vmem:[#allocation11 + $0x458] sm:$0xff]
    %v7226 = vld [vmem:[#allocation11 + $0x460] sm:$0xff]
    %v7227 = vld [vmem:[#allocation11 + $0x468] sm:$0xff]
    %v7228 = vld [vmem:[#allocation11 + $0x470] sm:$0xff]
    %v7229 = vld [vmem:[#allocation11 + $0x478] sm:$0xff]
    %v7230 = vld [vmem:[#allocation11 + $0x480] sm:$0xff]
    %v7231 = vld [vmem:[#allocation11 + $0x488] sm:$0xff]
    %v7232 = vld [vmem:[#allocation11 + $0x490] sm:$0xff]
    %v7233 = vld [vmem:[#allocation11 + $0x498] sm:$0xff]
    %v7234 = vld [vmem:[#allocation11 + $0x4a0] sm:$0xff]
    %v7235 = vld [vmem:[#allocation11 + $0x4a8] sm:$0xff]
    %v7236 = vld [vmem:[#allocation11 + $0x4b0] sm:$0xff]
    %v7237 = vld [vmem:[#allocation11 + $0x4b8] sm:$0xff]
    %v7238 = vld [vmem:[#allocation11 + $0x4c0] sm:$0xff]
    %v7239 = vld [vmem:[#allocation11 + $0x4c8] sm:$0xff]
    %v7240 = vld [vmem:[#allocation11 + $0x4d0] sm:$0xff]
    %v7241 = vld [vmem:[#allocation11 + $0x4d8] sm:$0xff]
    %v7242 = vld [vmem:[#allocation11 + $0x4e0] sm:$0xff]
    %v7243 = vld [vmem:[#allocation11 + $0x4e8] sm:$0xff]
    %v7244 = vld [vmem:[#allocation11 + $0x4f0] sm:$0xff]
    %v7245 = vld [vmem:[#allocation11 + $0x4f8] sm:$0xff]
    %v7246 = vld [vmem:[#allocation11 + $0x500] sm:$0xff]
    %v7247 = vld [vmem:[#allocation11 + $0x508] sm:$0xff]
    %v7248 = vld [vmem:[#allocation11 + $0x510] sm:$0xff]
    %v7249 = vld [vmem:[#allocation11 + $0x518] sm:$0xff]
    %v7250 = vld [vmem:[#allocation11 + $0x520] sm:$0xff]
    %v7251 = vld [vmem:[#allocation11 + $0x528] sm:$0xff]
    %v7252 = vld [vmem:[#allocation11 + $0x530] sm:$0xff]
    %v7253 = vld [vmem:[#allocation11 + $0x538] sm:$0xff]
    %v7254 = vld [vmem:[#allocation11 + $0x540] sm:$0xff]
    %v7255 = vld [vmem:[#allocation11 + $0x548] sm:$0xff]
    %v7256 = vld [vmem:[#allocation11 + $0x550] sm:$0xff]
    %v7257 = vld [vmem:[#allocation11 + $0x558] sm:$0xff]
    %v7258 = vld [vmem:[#allocation11 + $0x560] sm:$0xff]
    %v7259 = vld [vmem:[#allocation11 + $0x568] sm:$0xff]
    %v7260 = vld [vmem:[#allocation11 + $0x570] sm:$0xff]
    %v7261 = vld [vmem:[#allocation11 + $0x578] sm:$0xff]
    %v7262 = vld [vmem:[#allocation11 + $0x580] sm:$0xff]
    %v7263 = vld [vmem:[#allocation11 + $0x588] sm:$0xff]
    %v7264 = vld [vmem:[#allocation11 + $0x590] sm:$0xff]
    %v7265 = vld [vmem:[#allocation11 + $0x598] sm:$0xff]
    %v7266 = vld [vmem:[#allocation11 + $0x5a0] sm:$0xff]
    %v7267 = vld [vmem:[#allocation11 + $0x5a8] sm:$0xff]
    %v7268 = vld [vmem:[#allocation11 + $0x5b0] sm:$0xff]
    %v7269 = vld [vmem:[#allocation11 + $0x5b8] sm:$0xff]
    %v7270 = vld [vmem:[#allocation11 + $0x5c0] sm:$0xff]
    %v7271 = vld [vmem:[#allocation11 + $0x5c8] sm:$0xff]
    %v7272 = vld [vmem:[#allocation11 + $0x5d0] sm:$0xff]
    %v7273 = vld [vmem:[#allocation11 + $0x5d8] sm:$0xff]
    %v7274 = vld [vmem:[#allocation11 + $0x5e0] sm:$0xff]
    %v7275 = vld [vmem:[#allocation11 + $0x5e8] sm:$0xff]
    %v7276 = vld [vmem:[#allocation11 + $0x5f0] sm:$0xff]
    %v7277 = vld [vmem:[#allocation11 + $0x5f8] sm:$0xff]
    %v7278 = vld [vmem:[#allocation11 + $0x600] sm:$0xff]
    %v7279 = vld [vmem:[#allocation11 + $0x608] sm:$0xff]
    %v7280 = vld [vmem:[#allocation11 + $0x610] sm:$0xff]
    %v7281 = vld [vmem:[#allocation11 + $0x618] sm:$0xff]
    %v7282 = vld [vmem:[#allocation11 + $0x620] sm:$0xff]
    %v7283 = vld [vmem:[#allocation11 + $0x628] sm:$0xff]
    %v7284 = vld [vmem:[#allocation11 + $0x630] sm:$0xff]
    %v7285 = vld [vmem:[#allocation11 + $0x638] sm:$0xff]
    %v7286 = vld [vmem:[#allocation11 + $0x640] sm:$0xff]
    %v7287 = vld [vmem:[#allocation11 + $0x648] sm:$0xff]
    %v7288 = vld [vmem:[#allocation11 + $0x650] sm:$0xff]
    %v7289 = vld [vmem:[#allocation11 + $0x658] sm:$0xff]
    %v7290 = vld [vmem:[#allocation11 + $0x660] sm:$0xff]
    %v7291 = vld [vmem:[#allocation11 + $0x668] sm:$0xff]
    %v7292 = vld [vmem:[#allocation11 + $0x670] sm:$0xff]
    %v7293 = vld [vmem:[#allocation11 + $0x678] sm:$0xff]
    %v7294 = vld [vmem:[#allocation11 + $0x680] sm:$0xff]
    %v7295 = vld [vmem:[#allocation11 + $0x688] sm:$0xff]
    %v7296 = vld [vmem:[#allocation11 + $0x690] sm:$0xff]
    %v7297 = vld [vmem:[#allocation11 + $0x698] sm:$0xff]
    %v7298 = vld [vmem:[#allocation11 + $0x6a0] sm:$0xff]
    %v7299 = vld [vmem:[#allocation11 + $0x6a8] sm:$0xff]
    %v7300 = vld [vmem:[#allocation11 + $0x6b0] sm:$0xff]
    %v7301 = vld [vmem:[#allocation11 + $0x6b8] sm:$0xff]
    %v7302 = vld [vmem:[#allocation11 + $0x6c0] sm:$0xff]
    %v7303 = vld [vmem:[#allocation11 + $0x6c8] sm:$0xff]
    %v7304 = vld [vmem:[#allocation11 + $0x6d0] sm:$0xff]
    %v7305 = vld [vmem:[#allocation11 + $0x6d8] sm:$0xff]
    %v7306 = vld [vmem:[#allocation11 + $0x6e0] sm:$0xff]
    %v7307 = vld [vmem:[#allocation11 + $0x6e8] sm:$0xff]
    %v7308 = vld [vmem:[#allocation11 + $0x6f0] sm:$0xff]
    %v7309 = vld [vmem:[#allocation11 + $0x6f8] sm:$0xff]
    %v7310 = vld [vmem:[#allocation11 + $0x700] sm:$0xff]
    %v7311 = vld [vmem:[#allocation11 + $0x708] sm:$0xff]
    %v7312 = vld [vmem:[#allocation11 + $0x710] sm:$0xff]
    %v7313 = vld [vmem:[#allocation11 + $0x718] sm:$0xff]
    %v7314 = vld [vmem:[#allocation11 + $0x720] sm:$0xff]
    %v7315 = vld [vmem:[#allocation11 + $0x728] sm:$0xff]
    %v7316 = vld [vmem:[#allocation11 + $0x730] sm:$0xff]
    %v7317 = vld [vmem:[#allocation11 + $0x738] sm:$0xff]
    %v7318 = vld [vmem:[#allocation11 + $0x740] sm:$0xff]
    %v7319 = vld [vmem:[#allocation11 + $0x748] sm:$0xff]
    %v7320 = vld [vmem:[#allocation11 + $0x750] sm:$0xff]
    %v7321 = vld [vmem:[#allocation11 + $0x758] sm:$0xff]
    %v7322 = vld [vmem:[#allocation11 + $0x760] sm:$0xff]
    %v7323 = vld [vmem:[#allocation11 + $0x768] sm:$0xff]
    %v7324 = vld [vmem:[#allocation11 + $0x770] sm:$0xff]
    %v7325 = vld [vmem:[#allocation11 + $0x778] sm:$0xff]
    %v7326 = vld [vmem:[#allocation11 + $0x780] sm:$0xff]
    %v7327 = vld [vmem:[#allocation11 + $0x788] sm:$0xff]
    %v7328 = vld [vmem:[#allocation11 + $0x790] sm:$0xff]
    %v7329 = vld [vmem:[#allocation11 + $0x798] sm:$0xff]
    %v7330 = vld [vmem:[#allocation11 + $0x7a0] sm:$0xff]
    %v7331 = vld [vmem:[#allocation11 + $0x7a8] sm:$0xff]
    %v7332 = vld [vmem:[#allocation11 + $0x7b0] sm:$0xff]
    %v7333 = vld [vmem:[#allocation11 + $0x7b8] sm:$0xff]
    %v7334 = vld [vmem:[#allocation11 + $0x7c0] sm:$0xff]
    %v7335 = vld [vmem:[#allocation11 + $0x7c8] sm:$0xff]
    %v7336 = vld [vmem:[#allocation11 + $0x7d0] sm:$0xff]
    %v7337 = vld [vmem:[#allocation11 + $0x7d8] sm:$0xff]
    %v7338 = vld [vmem:[#allocation11 + $0x7e0] sm:$0xff]
    %v7339 = vld [vmem:[#allocation11 + $0x7e8] sm:$0xff]
    %v7340 = vld [vmem:[#allocation11 + $0x7f0] sm:$0xff]
    %v7341 = vld [vmem:[#allocation11 + $0x7f8] sm:$0xff]
    %v7342 = vld [vmem:[#allocation11 + $0x800] sm:$0xff]
    %v7343 = vld [vmem:[#allocation11 + $0x808] sm:$0xff]
    %v7344 = vld [vmem:[#allocation11 + $0x810] sm:$0xff]
    %v7345 = vld [vmem:[#allocation11 + $0x818] sm:$0xff]
    %v7346 = vld [vmem:[#allocation11 + $0x820] sm:$0xff]
    %v7347 = vld [vmem:[#allocation11 + $0x828] sm:$0xff]
    %v7348 = vld [vmem:[#allocation11 + $0x830] sm:$0xff]
    %v7349 = vld [vmem:[#allocation11 + $0x838] sm:$0xff]
    %v7350 = vld [vmem:[#allocation11 + $0x840] sm:$0xff]
    %v7351 = vld [vmem:[#allocation11 + $0x848] sm:$0xff]
    %v7352 = vld [vmem:[#allocation11 + $0x850] sm:$0xff]
    %v7353 = vld [vmem:[#allocation11 + $0x858] sm:$0xff]
    %v7354 = vld [vmem:[#allocation11 + $0x860] sm:$0xff]
    %v7355 = vld [vmem:[#allocation11 + $0x868] sm:$0xff]
    %v7356 = vld [vmem:[#allocation11 + $0x870] sm:$0xff]
    %v7357 = vld [vmem:[#allocation11 + $0x878] sm:$0xff]
    %v7358 = vld [vmem:[#allocation11 + $0x880] sm:$0xff]
    %v7359 = vld [vmem:[#allocation11 + $0x888] sm:$0xff]
    %v7360 = vld [vmem:[#allocation11 + $0x890] sm:$0xff]
    %v7361 = vld [vmem:[#allocation11 + $0x898] sm:$0xff]
    %v7362 = vld [vmem:[#allocation11 + $0x8a0] sm:$0xff]
    %v7363 = vld [vmem:[#allocation11 + $0x8a8] sm:$0xff]
    %v7364 = vld [vmem:[#allocation11 + $0x8b0] sm:$0xff]
    %v7365 = vld [vmem:[#allocation11 + $0x8b8] sm:$0xff]
    %v7366 = vld [vmem:[#allocation11 + $0x8c0] sm:$0xff]
    %v7367 = vld [vmem:[#allocation11 + $0x8c8] sm:$0xff]
    %v7368 = vld [vmem:[#allocation11 + $0x8d0] sm:$0xff]
    %v7369 = vld [vmem:[#allocation11 + $0x8d8] sm:$0xff]
    %v7370 = vld [vmem:[#allocation11 + $0x8e0] sm:$0xff]
    %v7371 = vld [vmem:[#allocation11 + $0x8e8] sm:$0xff]
    %v7372 = vld [vmem:[#allocation11 + $0x8f0] sm:$0xff]
    %v7373 = vld [vmem:[#allocation11 + $0x8f8] sm:$0xff]
    %v7374 = vld [vmem:[#allocation11 + $0x900] sm:$0xff]
    %v7375 = vld [vmem:[#allocation11 + $0x908] sm:$0xff]
    %v7376 = vld [vmem:[#allocation11 + $0x910] sm:$0xff]
    %v7377 = vld [vmem:[#allocation11 + $0x918] sm:$0xff]
    %v7378 = vld [vmem:[#allocation11 + $0x920] sm:$0xff]
    %v7379 = vld [vmem:[#allocation11 + $0x928] sm:$0xff]
    %v7380 = vld [vmem:[#allocation11 + $0x930] sm:$0xff]
    %v7381 = vld [vmem:[#allocation11 + $0x938] sm:$0xff]
    %v7382 = vld [vmem:[#allocation11 + $0x940] sm:$0xff]
    %v7383 = vld [vmem:[#allocation11 + $0x948] sm:$0xff]
    %v7384 = vld [vmem:[#allocation11 + $0x950] sm:$0xff]
    %v7385 = vld [vmem:[#allocation11 + $0x958] sm:$0xff]
    %v7386 = vld [vmem:[#allocation11 + $0x960] sm:$0xff]
    %v7387 = vld [vmem:[#allocation11 + $0x968] sm:$0xff]
    %v7388 = vld [vmem:[#allocation11 + $0x970] sm:$0xff]
    %v7389 = vld [vmem:[#allocation11 + $0x978] sm:$0xff]
    %v7390 = vld [vmem:[#allocation11 + $0x980] sm:$0xff]
    %v7391 = vld [vmem:[#allocation11 + $0x988] sm:$0xff]
    %v7392 = vld [vmem:[#allocation11 + $0x990] sm:$0xff]
    %v7393 = vld [vmem:[#allocation11 + $0x998] sm:$0xff]
    %v7394 = vld [vmem:[#allocation11 + $0x9a0] sm:$0xff]
    %v7395 = vld [vmem:[#allocation11 + $0x9a8] sm:$0xff]
    %v7396 = vld [vmem:[#allocation11 + $0x9b0] sm:$0xff]
    %v7397 = vld [vmem:[#allocation11 + $0x9b8] sm:$0xff]
    %v7398 = vld [vmem:[#allocation11 + $0x9c0] sm:$0xff]
    %v7399 = vld [vmem:[#allocation11 + $0x9c8] sm:$0xff]
    %v7400 = vld [vmem:[#allocation11 + $0x9d0] sm:$0xff]
    %v7401 = vld [vmem:[#allocation11 + $0x9d8] sm:$0xff]
    %v7402 = vld [vmem:[#allocation11 + $0x9e0] sm:$0xff]
    %v7403 = vld [vmem:[#allocation11 + $0x9e8] sm:$0xff]
    %v7404 = vld [vmem:[#allocation11 + $0x9f0] sm:$0xff]
    %v7405 = vld [vmem:[#allocation11 + $0x9f8] sm:$0xff]
    %v7406 = vld [vmem:[#allocation11 + $0xa00] sm:$0xff]
    %v7407 = vld [vmem:[#allocation11 + $0xa08] sm:$0xff]
    %v7408 = vld [vmem:[#allocation11 + $0xa10] sm:$0xff]
    %v7409 = vld [vmem:[#allocation11 + $0xa18] sm:$0xff]
    %v7410 = vld [vmem:[#allocation11 + $0xa20] sm:$0xff]
    %v7411 = vld [vmem:[#allocation11 + $0xa28] sm:$0xff]
    %v7412 = vld [vmem:[#allocation11 + $0xa30] sm:$0xff]
    %v7413 = vld [vmem:[#allocation11 + $0xa38] sm:$0xff]
    %v7414 = vld [vmem:[#allocation11 + $0xa40] sm:$0xff]
    %v7415 = vld [vmem:[#allocation11 + $0xa48] sm:$0xff]
    %v7416 = vld [vmem:[#allocation11 + $0xa50] sm:$0xff]
    %v7417 = vld [vmem:[#allocation11 + $0xa58] sm:$0xff]
    %v7418 = vld [vmem:[#allocation11 + $0xa60] sm:$0xff]
    %v7419 = vld [vmem:[#allocation11 + $0xa68] sm:$0xff]
    %v7420 = vld [vmem:[#allocation11 + $0xa70] sm:$0xff]
    %v7421 = vld [vmem:[#allocation11 + $0xa78] sm:$0xff]
    %v7422 = vld [vmem:[#allocation11 + $0xa80] sm:$0xff]
    %v7423 = vld [vmem:[#allocation11 + $0xa88] sm:$0xff]
    %v7424 = vld [vmem:[#allocation11 + $0xa90] sm:$0xff]
    %v7425 = vld [vmem:[#allocation11 + $0xa98] sm:$0xff]
    %v7426 = vld [vmem:[#allocation11 + $0xaa0] sm:$0xff]
    %v7427 = vld [vmem:[#allocation11 + $0xaa8] sm:$0xff]
    %v7428 = vld [vmem:[#allocation11 + $0xab0] sm:$0xff]
    %v7429 = vld [vmem:[#allocation11 + $0xab8] sm:$0xff]
    %v7430 = vld [vmem:[#allocation11 + $0xac0] sm:$0xff]
    %v7431 = vld [vmem:[#allocation11 + $0xac8] sm:$0xff]
    %v7432 = vld [vmem:[#allocation11 + $0xad0] sm:$0xff]
    %v7433 = vld [vmem:[#allocation11 + $0xad8] sm:$0xff]
    %v7434 = vld [vmem:[#allocation11 + $0xae0] sm:$0xff]
    %v7435 = vld [vmem:[#allocation11 + $0xae8] sm:$0xff]
    %v7436 = vld [vmem:[#allocation11 + $0xaf0] sm:$0xff]
    %v7437 = vld [vmem:[#allocation11 + $0xaf8] sm:$0xff]
    %v7438 = vld [vmem:[#allocation11 + $0xb00] sm:$0xff]
    %v7439 = vld [vmem:[#allocation11 + $0xb08] sm:$0xff]
    %v7440 = vld [vmem:[#allocation11 + $0xb10] sm:$0xff]
    %v7441 = vld [vmem:[#allocation11 + $0xb18] sm:$0xff]
    %v7442 = vld [vmem:[#allocation11 + $0xb20] sm:$0xff]
    %v7443 = vld [vmem:[#allocation11 + $0xb28] sm:$0xff]
    %v7444 = vld [vmem:[#allocation11 + $0xb30] sm:$0xff]
    %v7445 = vld [vmem:[#allocation11 + $0xb38] sm:$0xff]
    %v7446 = vld [vmem:[#allocation11 + $0xb40] sm:$0xff]
    %v7447 = vld [vmem:[#allocation11 + $0xb48] sm:$0xff]
    %v7448 = vld [vmem:[#allocation11 + $0xb50] sm:$0xff]
    %v7449 = vld [vmem:[#allocation11 + $0xb58] sm:$0xff]
    %v7450 = vld [vmem:[#allocation11 + $0xb60] sm:$0xff]
    %v7451 = vld [vmem:[#allocation11 + $0xb68] sm:$0xff]
    %v7452 = vld [vmem:[#allocation11 + $0xb70] sm:$0xff]
    %v7453 = vld [vmem:[#allocation11 + $0xb78] sm:$0xff]
    %v7454 = vld [vmem:[#allocation11 + $0xb80] sm:$0xff]
    %v7455 = vld [vmem:[#allocation11 + $0xb88] sm:$0xff]
    %v7456 = vld [vmem:[#allocation11 + $0xb90] sm:$0xff]
    %v7457 = vld [vmem:[#allocation11 + $0xb98] sm:$0xff]
    %v7458 = vld [vmem:[#allocation11 + $0xba0] sm:$0xff]
    %v7459 = vld [vmem:[#allocation11 + $0xba8] sm:$0xff]
    %v7460 = vld [vmem:[#allocation11 + $0xbb0] sm:$0xff]
    %v7461 = vld [vmem:[#allocation11 + $0xbb8] sm:$0xff]
    %v7462 = vld [vmem:[#allocation11 + $0xbc0] sm:$0xff]
    %v7463 = vld [vmem:[#allocation11 + $0xbc8] sm:$0xff]
    %v7464 = vld [vmem:[#allocation11 + $0xbd0] sm:$0xff]
    %v7465 = vld [vmem:[#allocation11 + $0xbd8] sm:$0xff]
    %v7466 = vld [vmem:[#allocation11 + $0xbe0] sm:$0xff]
    %v7467 = vld [vmem:[#allocation11 + $0xbe8] sm:$0xff]
    %v7468 = vld [vmem:[#allocation11 + $0xbf0] sm:$0xff]
    %v7469 = vld [vmem:[#allocation11 + $0xbf8] sm:$0xff]
    %v7470 = vld [vmem:[#allocation11 + $0xc00] sm:$0xff]
    %v7471 = vld [vmem:[#allocation11 + $0xc08] sm:$0xff]
    %v7472 = vld [vmem:[#allocation11 + $0xc10] sm:$0xff]
    %v7473 = vld [vmem:[#allocation11 + $0xc18] sm:$0xff]
    %v7474 = vld [vmem:[#allocation11 + $0xc20] sm:$0xff]
    %v7475 = vld [vmem:[#allocation11 + $0xc28] sm:$0xff]
    %v7476 = vld [vmem:[#allocation11 + $0xc30] sm:$0xff]
    %v7477 = vld [vmem:[#allocation11 + $0xc38] sm:$0xff]
    %v7478 = vld [vmem:[#allocation11 + $0xc40] sm:$0xff]
    %v7479 = vld [vmem:[#allocation11 + $0xc48] sm:$0xff]
    %v7480 = vld [vmem:[#allocation11 + $0xc50] sm:$0xff]
    %v7481 = vld [vmem:[#allocation11 + $0xc58] sm:$0xff]
    %v7482 = vld [vmem:[#allocation11 + $0xc60] sm:$0xff]
    %v7483 = vld [vmem:[#allocation11 + $0xc68] sm:$0xff]
    %v7484 = vld [vmem:[#allocation11 + $0xc70] sm:$0xff]
    %v7485 = vld [vmem:[#allocation11 + $0xc78] sm:$0xff]
    %v7486 = vld [vmem:[#allocation11 + $0xc80] sm:$0xff]
    %v7487 = vld [vmem:[#allocation11 + $0xc88] sm:$0xff]
    %v7488 = vld [vmem:[#allocation11 + $0xc90] sm:$0xff]
    %v7489 = vld [vmem:[#allocation11 + $0xc98] sm:$0xff]
    %v7490 = vld [vmem:[#allocation11 + $0xca0] sm:$0xff]
    %v7491 = vld [vmem:[#allocation11 + $0xca8] sm:$0xff]
    %v7492 = vld [vmem:[#allocation11 + $0xcb0] sm:$0xff]
    %v7493 = vld [vmem:[#allocation11 + $0xcb8] sm:$0xff]
    %v7494 = vld [vmem:[#allocation11 + $0xcc0] sm:$0xff]
    %v7495 = vld [vmem:[#allocation11 + $0xcc8] sm:$0xff]
    %v7496 = vld [vmem:[#allocation11 + $0xcd0] sm:$0xff]
    %v7497 = vld [vmem:[#allocation11 + $0xcd8] sm:$0xff]
    %v7498 = vld [vmem:[#allocation11 + $0xce0] sm:$0xff]
    %v7499 = vld [vmem:[#allocation11 + $0xce8] sm:$0xff]
    %v7500 = vld [vmem:[#allocation11 + $0xcf0] sm:$0xff]
    %v7501 = vld [vmem:[#allocation11 + $0xcf8] sm:$0xff]
    %v7502 = vld [vmem:[#allocation11 + $0xd00] sm:$0xff]
    %v7503 = vld [vmem:[#allocation11 + $0xd08] sm:$0xff]
    %v7504 = vld [vmem:[#allocation11 + $0xd10] sm:$0xff]
    %v7505 = vld [vmem:[#allocation11 + $0xd18] sm:$0xff]
    %v7506 = vld [vmem:[#allocation11 + $0xd20] sm:$0xff]
    %v7507 = vld [vmem:[#allocation11 + $0xd28] sm:$0xff]
    %v7508 = vld [vmem:[#allocation11 + $0xd30] sm:$0xff]
    %v7509 = vld [vmem:[#allocation11 + $0xd38] sm:$0xff]
    %v7510 = vld [vmem:[#allocation11 + $0xd40] sm:$0xff]
    %v7511 = vld [vmem:[#allocation11 + $0xd48] sm:$0xff]
    %v7512 = vld [vmem:[#allocation11 + $0xd50] sm:$0xff]
    %v7513 = vld [vmem:[#allocation11 + $0xd58] sm:$0xff]
    %v7514 = vld [vmem:[#allocation11 + $0xd60] sm:$0xff]
    %v7515 = vld [vmem:[#allocation11 + $0xd68] sm:$0xff]
    %v7516 = vld [vmem:[#allocation11 + $0xd70] sm:$0xff]
    %v7517 = vld [vmem:[#allocation11 + $0xd78] sm:$0xff]
    %v7518 = vld [vmem:[#allocation11 + $0xd80] sm:$0xff]
    %v7519 = vld [vmem:[#allocation11 + $0xd88] sm:$0xff]
    %v7520 = vld [vmem:[#allocation11 + $0xd90] sm:$0xff]
    %v7521 = vld [vmem:[#allocation11 + $0xd98] sm:$0xff]
    %v7522 = vld [vmem:[#allocation11 + $0xda0] sm:$0xff]
    %v7523 = vld [vmem:[#allocation11 + $0xda8] sm:$0xff]
    %v7524 = vld [vmem:[#allocation11 + $0xdb0] sm:$0xff]
    %v7525 = vld [vmem:[#allocation11 + $0xdb8] sm:$0xff]
    %v7526 = vld [vmem:[#allocation11 + $0xdc0] sm:$0xff]
    %v7527 = vld [vmem:[#allocation11 + $0xdc8] sm:$0xff]
    %v7528 = vld [vmem:[#allocation11 + $0xdd0] sm:$0xff]
    %v7529 = vld [vmem:[#allocation11 + $0xdd8] sm:$0xff]
    %v7530 = vld [vmem:[#allocation11 + $0xde0] sm:$0xff]
    %v7531 = vld [vmem:[#allocation11 + $0xde8] sm:$0xff]
    %v7532 = vld [vmem:[#allocation11 + $0xdf0] sm:$0xff]
    %v7533 = vld [vmem:[#allocation11 + $0xdf8] sm:$0xff]
    %v7534 = vld [vmem:[#allocation11 + $0xe00] sm:$0xff]
    %v7535 = vld [vmem:[#allocation11 + $0xe08] sm:$0xff]
    %v7536 = vld [vmem:[#allocation11 + $0xe10] sm:$0xff]
    %v7537 = vld [vmem:[#allocation11 + $0xe18] sm:$0xff]
    %v7538 = vld [vmem:[#allocation11 + $0xe20] sm:$0xff]
    %v7539 = vld [vmem:[#allocation11 + $0xe28] sm:$0xff]
    %v7540 = vld [vmem:[#allocation11 + $0xe30] sm:$0xff]
    %v7541 = vld [vmem:[#allocation11 + $0xe38] sm:$0xff]
    %v7542 = vld [vmem:[#allocation11 + $0xe40] sm:$0xff]
    %v7543 = vld [vmem:[#allocation11 + $0xe48] sm:$0xff]
    %v7544 = vld [vmem:[#allocation11 + $0xe50] sm:$0xff]
    %v7545 = vld [vmem:[#allocation11 + $0xe58] sm:$0xff]
    %v7546 = vld [vmem:[#allocation11 + $0xe60] sm:$0xff]
    %v7547 = vld [vmem:[#allocation11 + $0xe68] sm:$0xff]
    %v7548 = vld [vmem:[#allocation11 + $0xe70] sm:$0xff]
    %v7549 = vld [vmem:[#allocation11 + $0xe78] sm:$0xff]
    %v7550 = vld [vmem:[#allocation11 + $0xe80] sm:$0xff]
    %v7551 = vld [vmem:[#allocation11 + $0xe88] sm:$0xff]
    %v7552 = vld [vmem:[#allocation11 + $0xe90] sm:$0xff]
    %v7553 = vld [vmem:[#allocation11 + $0xe98] sm:$0xff]
    %v7554 = vld [vmem:[#allocation11 + $0xea0] sm:$0xff]
    %v7555 = vld [vmem:[#allocation11 + $0xea8] sm:$0xff]
    %v7556 = vld [vmem:[#allocation11 + $0xeb0] sm:$0xff]
    %v7557 = vld [vmem:[#allocation11 + $0xeb8] sm:$0xff]
    %v7558 = vld [vmem:[#allocation11 + $0xec0] sm:$0xff]
    %v7559 = vld [vmem:[#allocation11 + $0xec8] sm:$0xff]
    %v7560 = vld [vmem:[#allocation11 + $0xed0] sm:$0xff]
    %v7561 = vld [vmem:[#allocation11 + $0xed8] sm:$0xff]
    %v7562 = vld [vmem:[#allocation11 + $0xee0] sm:$0xff]
    %v7563 = vld [vmem:[#allocation11 + $0xee8] sm:$0xff]
    %v7564 = vld [vmem:[#allocation11 + $0xef0] sm:$0xff]
    %v7565 = vld [vmem:[#allocation11 + $0xef8] sm:$0xff]
    %v7566 = vld [vmem:[#allocation11 + $0xf00] sm:$0xff]
    %v7567 = vld [vmem:[#allocation11 + $0xf08] sm:$0xff]
    %v7568 = vld [vmem:[#allocation11 + $0xf10] sm:$0xff]
    %v7569 = vld [vmem:[#allocation11 + $0xf18] sm:$0xff]
    %v7570 = vld [vmem:[#allocation11 + $0xf20] sm:$0xff]
    %v7571 = vld [vmem:[#allocation11 + $0xf28] sm:$0xff]
    %v7572 = vld [vmem:[#allocation11 + $0xf30] sm:$0xff]
    %v7573 = vld [vmem:[#allocation11 + $0xf38] sm:$0xff]
    %v7574 = vld [vmem:[#allocation11 + $0xf40] sm:$0xff]
    %v7575 = vld [vmem:[#allocation11 + $0xf48] sm:$0xff]
    %v7576 = vld [vmem:[#allocation11 + $0xf50] sm:$0xff]
    %v7577 = vld [vmem:[#allocation11 + $0xf58] sm:$0xff]
    %v7578 = vld [vmem:[#allocation11 + $0xf60] sm:$0xff]
    %v7579 = vld [vmem:[#allocation11 + $0xf68] sm:$0xff]
    %v7580 = vld [vmem:[#allocation11 + $0xf70] sm:$0xff]
    %v7581 = vld [vmem:[#allocation11 + $0xf78] sm:$0xff]
    %v7582 = vld [vmem:[#allocation11 + $0xf80] sm:$0xff]
    %v7583 = vld [vmem:[#allocation11 + $0xf88] sm:$0xff]
    %v7584 = vld [vmem:[#allocation11 + $0xf90] sm:$0xff]
    %v7585 = vld [vmem:[#allocation11 + $0xf98] sm:$0xff]
    %v7586 = vld [vmem:[#allocation11 + $0xfa0] sm:$0xff]
    %v7587 = vld [vmem:[#allocation11 + $0xfa8] sm:$0xff]
    %v7588 = vld [vmem:[#allocation11 + $0xfb0] sm:$0xff]
    %v7589 = vld [vmem:[#allocation11 + $0xfb8] sm:$0xff]
    %v7590 = vld [vmem:[#allocation11 + $0xfc0] sm:$0xff]
    %v7591 = vld [vmem:[#allocation11 + $0xfc8] sm:$0xff]
    %v7592 = vld [vmem:[#allocation11 + $0xfd0] sm:$0xff]
    %v7593 = vld [vmem:[#allocation11 + $0xfd8] sm:$0xff]
    %v7594 = vld [vmem:[#allocation11 + $0xfe0] sm:$0xff]
    %v7595 = vld [vmem:[#allocation11 + $0xfe8] sm:$0xff]
    %v7596 = vld [vmem:[#allocation11 + $0xff0] sm:$0xff]
    %v7597 = vld [vmem:[#allocation11 + $0xff8] sm:$0xff]
    %v7598 = vld [vmem:[#allocation11 + $0x1000] sm:$0xff]
    %v7599 = vld [vmem:[#allocation11 + $0x1008] sm:$0xff]
    %v7600 = vld [vmem:[#allocation11 + $0x1010] sm:$0xff]
    %v7601 = vld [vmem:[#allocation11 + $0x1018] sm:$0xff]
    %v7602 = vld [vmem:[#allocation11 + $0x1020] sm:$0xff]
    %v7603 = vld [vmem:[#allocation11 + $0x1028] sm:$0xff]
    %v7604 = vld [vmem:[#allocation11 + $0x1030] sm:$0xff]
    %v7605 = vld [vmem:[#allocation11 + $0x1038] sm:$0xff]
    %v7606 = vld [vmem:[#allocation11 + $0x1040] sm:$0xff]
    %v7607 = vld [vmem:[#allocation11 + $0x1048] sm:$0xff]
    %v7608 = vld [vmem:[#allocation11 + $0x1050] sm:$0xff]
    %v7609 = vld [vmem:[#allocation11 + $0x1058] sm:$0xff]
    %v7610 = vld [vmem:[#allocation11 + $0x1060] sm:$0xff]
    %v7611 = vld [vmem:[#allocation11 + $0x1068] sm:$0xff]
    %v7612 = vld [vmem:[#allocation11 + $0x1070] sm:$0xff]
    %v7613 = vld [vmem:[#allocation11 + $0x1078] sm:$0xff]
    %v7614 = vld [vmem:[#allocation11 + $0x1080] sm:$0xff]
    %v7615 = vld [vmem:[#allocation11 + $0x1088] sm:$0xff]
    %v7616 = vld [vmem:[#allocation11 + $0x1090] sm:$0xff]
    %v7617 = vld [vmem:[#allocation11 + $0x1098] sm:$0xff]
    %v7618 = vld [vmem:[#allocation11 + $0x10a0] sm:$0xff]
    %v7619 = vld [vmem:[#allocation11 + $0x10a8] sm:$0xff]
    %v7620 = vld [vmem:[#allocation11 + $0x10b0] sm:$0xff]
    %v7621 = vld [vmem:[#allocation11 + $0x10b8] sm:$0xff]
    %v7622 = vld [vmem:[#allocation11 + $0x10c0] sm:$0xff]
    %v7623 = vld [vmem:[#allocation11 + $0x10c8] sm:$0xff]
    %v7624 = vld [vmem:[#allocation11 + $0x10d0] sm:$0xff]
    %v7625 = vld [vmem:[#allocation11 + $0x10d8] sm:$0xff]
    %v7626 = vld [vmem:[#allocation11 + $0x10e0] sm:$0xff]
    %v7627 = vld [vmem:[#allocation11 + $0x10e8] sm:$0xff]
    %v7628 = vld [vmem:[#allocation11 + $0x10f0] sm:$0xff]
    %v7629 = vld [vmem:[#allocation11 + $0x10f8] sm:$0xff]
    %v7630 = vld [vmem:[#allocation11 + $0x1100] sm:$0xff]
    %v7631 = vld [vmem:[#allocation11 + $0x1108] sm:$0xff]
    %v7632 = vld [vmem:[#allocation11 + $0x1110] sm:$0xff]
    %v7633 = vld [vmem:[#allocation11 + $0x1118] sm:$0xff]
    %v7634 = vld [vmem:[#allocation11 + $0x1120] sm:$0xff]
    %v7635 = vld [vmem:[#allocation11 + $0x1128] sm:$0xff]
    %v7636 = vld [vmem:[#allocation11 + $0x1130] sm:$0xff]
    %v7637 = vld [vmem:[#allocation11 + $0x1138] sm:$0xff]
    %v7638 = vld [vmem:[#allocation11 + $0x1140] sm:$0xff]
    %v7639 = vld [vmem:[#allocation11 + $0x1148] sm:$0xff]
    %v7640 = vld [vmem:[#allocation11 + $0x1150] sm:$0xff]
    %v7641 = vld [vmem:[#allocation11 + $0x1158] sm:$0xff]
    %v7642 = vld [vmem:[#allocation11 + $0x1160] sm:$0xff]
    %v7643 = vld [vmem:[#allocation11 + $0x1168] sm:$0xff]
    %v7644 = vld [vmem:[#allocation11 + $0x1170] sm:$0xff]
    %v7645 = vld [vmem:[#allocation11 + $0x1178] sm:$0xff]
    %v7646 = vld [vmem:[#allocation11 + $0x1180] sm:$0xff]
    %v7647 = vld [vmem:[#allocation11 + $0x1188] sm:$0xff]
    %v7648 = vld [vmem:[#allocation11 + $0x1190] sm:$0xff]
    %v7649 = vld [vmem:[#allocation11 + $0x1198] sm:$0xff]
    %v7650 = vld [vmem:[#allocation11 + $0x11a0] sm:$0xff]
    %v7651 = vld [vmem:[#allocation11 + $0x11a8] sm:$0xff]
    %v7652 = vld [vmem:[#allocation11 + $0x11b0] sm:$0xff]
    %v7653 = vld [vmem:[#allocation11 + $0x11b8] sm:$0xff]
    %v7654 = vld [vmem:[#allocation11 + $0x11c0] sm:$0xff]
    %v7655 = vld [vmem:[#allocation11 + $0x11c8] sm:$0xff]
    %v7656 = vld [vmem:[#allocation11 + $0x11d0] sm:$0xff]
    %v7657 = vld [vmem:[#allocation11 + $0x11d8] sm:$0xff]
    %v7658 = vld [vmem:[#allocation11 + $0x11e0] sm:$0xff]
    %v7659 = vld [vmem:[#allocation11 + $0x11e8] sm:$0xff]
    %v7660 = vld [vmem:[#allocation11 + $0x11f0] sm:$0xff]
    %v7661 = vld [vmem:[#allocation11 + $0x11f8] sm:$0xff]
    %v7662 = vld [vmem:[#allocation11 + $0x1200] sm:$0xff]
    %v7663 = vld [vmem:[#allocation11 + $0x1208] sm:$0xff]
    %v7664 = vld [vmem:[#allocation11 + $0x1210] sm:$0xff]
    %v7665 = vld [vmem:[#allocation11 + $0x1218] sm:$0xff]
    %v7666 = vld [vmem:[#allocation11 + $0x1220] sm:$0xff]
    %v7667 = vld [vmem:[#allocation11 + $0x1228] sm:$0xff]
    %v7668 = vld [vmem:[#allocation11 + $0x1230] sm:$0xff]
    %v7669 = vld [vmem:[#allocation11 + $0x1238] sm:$0xff]
    %v7670 = vld [vmem:[#allocation11 + $0x1240] sm:$0xff]
    %v7671 = vld [vmem:[#allocation11 + $0x1248] sm:$0xff]
    %v7672 = vld [vmem:[#allocation11 + $0x1250] sm:$0xff]
    %v7673 = vld [vmem:[#allocation11 + $0x1258] sm:$0xff]
    %v7674 = vld [vmem:[#allocation11 + $0x1260] sm:$0xff]
    %v7675 = vld [vmem:[#allocation11 + $0x1268] sm:$0xff]
    %v7676 = vld [vmem:[#allocation11 + $0x1270] sm:$0xff]
    %v7677 = vld [vmem:[#allocation11 + $0x1278] sm:$0xff]
    %v7678 = vld [vmem:[#allocation11 + $0x1280] sm:$0xff]
    %v7679 = vld [vmem:[#allocation11 + $0x1288] sm:$0xff]
    %v7680 = vld [vmem:[#allocation11 + $0x1290] sm:$0xff]
    %v7681 = vld [vmem:[#allocation11 + $0x1298] sm:$0xff]
    %v7682 = vld [vmem:[#allocation11 + $0x12a0] sm:$0xff]
    %v7683 = vld [vmem:[#allocation11 + $0x12a8] sm:$0xff]
    %v7684 = vld [vmem:[#allocation11 + $0x12b0] sm:$0xff]
    %v7685 = vld [vmem:[#allocation11 + $0x12b8] sm:$0xff]
    %v7686 = vld [vmem:[#allocation11 + $0x12c0] sm:$0xff]
    %v7687 = vld [vmem:[#allocation11 + $0x12c8] sm:$0xff]
    %v7688 = vld [vmem:[#allocation11 + $0x12d0] sm:$0xff]
    %v7689 = vld [vmem:[#allocation11 + $0x12d8] sm:$0xff]
    %v7690 = vld [vmem:[#allocation11 + $0x12e0] sm:$0xff]
    %v7691 = vld [vmem:[#allocation11 + $0x12e8] sm:$0xff]
    %v7692 = vld [vmem:[#allocation11 + $0x12f0] sm:$0xff]
    %v7693 = vld [vmem:[#allocation11 + $0x12f8] sm:$0xff]
    %v7694 = vld [vmem:[#allocation11 + $0x1300] sm:$0xff]
    %v7695 = vld [vmem:[#allocation11 + $0x1308] sm:$0xff]
    %v7696 = vld [vmem:[#allocation11 + $0x1310] sm:$0xff]
    %v7697 = vld [vmem:[#allocation11 + $0x1318] sm:$0xff]
    %v7698 = vld [vmem:[#allocation11 + $0x1320] sm:$0xff]
    %v7699 = vld [vmem:[#allocation11 + $0x1328] sm:$0xff]
    %v7700 = vld [vmem:[#allocation11 + $0x1330] sm:$0xff]
    %v7701 = vld [vmem:[#allocation11 + $0x1338] sm:$0xff]
    %v7702 = vld [vmem:[#allocation11 + $0x1340] sm:$0xff]
    %v7703 = vld [vmem:[#allocation11 + $0x1348] sm:$0xff]
    %v7704 = vld [vmem:[#allocation11 + $0x1350] sm:$0xff]
    %v7705 = vld [vmem:[#allocation11 + $0x1358] sm:$0xff]
    %v7706 = vld [vmem:[#allocation11 + $0x1360] sm:$0xff]
    %v7707 = vld [vmem:[#allocation11 + $0x1368] sm:$0xff]
    %v7708 = vld [vmem:[#allocation11 + $0x1370] sm:$0xff]
    %v7709 = vld [vmem:[#allocation11 + $0x1378] sm:$0xff]
    %v7710 = vld [vmem:[#allocation11 + $0x1380] sm:$0xff]
    %v7711 = vld [vmem:[#allocation11 + $0x1388] sm:$0xff]
    %v7712 = vld [vmem:[#allocation11 + $0x1390] sm:$0xff]
    %v7713 = vld [vmem:[#allocation11 + $0x1398] sm:$0xff]
    %v7714 = vld [vmem:[#allocation11 + $0x13a0] sm:$0xff]
    %v7715 = vld [vmem:[#allocation11 + $0x13a8] sm:$0xff]
    %v7716 = vld [vmem:[#allocation11 + $0x13b0] sm:$0xff]
    %v7717 = vld [vmem:[#allocation11 + $0x13b8] sm:$0xff]
    %v7718 = vld [vmem:[#allocation11 + $0x13c0] sm:$0xff]
    %v7719 = vld [vmem:[#allocation11 + $0x13c8] sm:$0xff]
    %v7720 = vld [vmem:[#allocation11 + $0x13d0] sm:$0xff]
    %v7721 = vld [vmem:[#allocation11 + $0x13d8] sm:$0xff]
    %v7722 = vld [vmem:[#allocation11 + $0x13e0] sm:$0xff]
    %v7723 = vld [vmem:[#allocation11 + $0x13e8] sm:$0xff]
    %v7724 = vld [vmem:[#allocation11 + $0x13f0] sm:$0xff]
    %v7725 = vld [vmem:[#allocation11 + $0x13f8] sm:$0xff]
    %v7726 = vld [vmem:[#allocation11 + $0x1400] sm:$0xff]
    %v7727 = vld [vmem:[#allocation11 + $0x1408] sm:$0xff]
    %v7728 = vld [vmem:[#allocation11 + $0x1410] sm:$0xff]
    %v7729 = vld [vmem:[#allocation11 + $0x1418] sm:$0xff]
    %v7730 = vld [vmem:[#allocation11 + $0x1420] sm:$0xff]
    %v7731 = vld [vmem:[#allocation11 + $0x1428] sm:$0xff]
    %v7732 = vld [vmem:[#allocation11 + $0x1430] sm:$0xff]
    %v7733 = vld [vmem:[#allocation11 + $0x1438] sm:$0xff]
    %v7734 = vld [vmem:[#allocation11 + $0x1440] sm:$0xff]
    %v7735 = vld [vmem:[#allocation11 + $0x1448] sm:$0xff]
    %v7736 = vld [vmem:[#allocation11 + $0x1450] sm:$0xff]
    %v7737 = vld [vmem:[#allocation11 + $0x1458] sm:$0xff]
    %v7738 = vld [vmem:[#allocation11 + $0x1460] sm:$0xff]
    %v7739 = vld [vmem:[#allocation11 + $0x1468] sm:$0xff]
    %v7740 = vld [vmem:[#allocation11 + $0x1470] sm:$0xff]
    %v7741 = vld [vmem:[#allocation11 + $0x1478] sm:$0xff]
    %v7742 = vld [vmem:[#allocation11 + $0x1480] sm:$0xff]
    %v7743 = vld [vmem:[#allocation11 + $0x1488] sm:$0xff]
    %v7744 = vld [vmem:[#allocation11 + $0x1490] sm:$0xff]
    %v7745 = vld [vmem:[#allocation11 + $0x1498] sm:$0xff]
    %v7746 = vld [vmem:[#allocation11 + $0x14a0] sm:$0xff]
    %v7747 = vld [vmem:[#allocation11 + $0x14a8] sm:$0xff]
    %v7748 = vld [vmem:[#allocation11 + $0x14b0] sm:$0xff]
    %v7749 = vld [vmem:[#allocation11 + $0x14b8] sm:$0xff]
    %v7750 = vld [vmem:[#allocation11 + $0x14c0] sm:$0xff]
    %v7751 = vld [vmem:[#allocation11 + $0x14c8] sm:$0xff]
    %v7752 = vld [vmem:[#allocation11 + $0x14d0] sm:$0xff]
    %v7753 = vld [vmem:[#allocation11 + $0x14d8] sm:$0xff]
    %v7754 = vld [vmem:[#allocation11 + $0x14e0] sm:$0xff]
    %v7755 = vld [vmem:[#allocation11 + $0x14e8] sm:$0xff]
    %v7756 = vld [vmem:[#allocation11 + $0x14f0] sm:$0xff]
    %v7757 = vld [vmem:[#allocation11 + $0x14f8] sm:$0xff]
    %v7758 = vld [vmem:[#allocation11 + $0x1500] sm:$0xff]
    %v7759 = vld [vmem:[#allocation11 + $0x1508] sm:$0xff]
    %v7760 = vld [vmem:[#allocation11 + $0x1510] sm:$0xff]
    %v7761 = vld [vmem:[#allocation11 + $0x1518] sm:$0xff]
    %v7762 = vld [vmem:[#allocation11 + $0x1520] sm:$0xff]
    %v7763 = vld [vmem:[#allocation11 + $0x1528] sm:$0xff]
    %v7764 = vld [vmem:[#allocation11 + $0x1530] sm:$0xff]
    %v7765 = vld [vmem:[#allocation11 + $0x1538] sm:$0xff]
    %v7766 = vld [vmem:[#allocation11 + $0x1540] sm:$0xff]
    %v7767 = vld [vmem:[#allocation11 + $0x1548] sm:$0xff]
    %v7768 = vld [vmem:[#allocation11 + $0x1550] sm:$0xff]
    %v7769 = vld [vmem:[#allocation11 + $0x1558] sm:$0xff]
    %v7770 = vld [vmem:[#allocation11 + $0x1560] sm:$0xff]
    %v7771 = vld [vmem:[#allocation11 + $0x1568] sm:$0xff]
    %v7772 = vld [vmem:[#allocation11 + $0x1570] sm:$0xff]
    %v7773 = vld [vmem:[#allocation11 + $0x1578] sm:$0xff]
    %v7774 = vld [vmem:[#allocation11 + $0x1580] sm:$0xff]
    %v7775 = vld [vmem:[#allocation11 + $0x1588] sm:$0xff]
    %v7776 = vld [vmem:[#allocation11 + $0x1590] sm:$0xff]
    %v7777 = vld [vmem:[#allocation11 + $0x1598] sm:$0xff]
    %v7778 = vld [vmem:[#allocation11 + $0x15a0] sm:$0xff]
    %v7779 = vld [vmem:[#allocation11 + $0x15a8] sm:$0xff]
    %v7780 = vld [vmem:[#allocation11 + $0x15b0] sm:$0xff]
    %v7781 = vld [vmem:[#allocation11 + $0x15b8] sm:$0xff]
    %v7782 = vld [vmem:[#allocation11 + $0x15c0] sm:$0xff]
    %v7783 = vld [vmem:[#allocation11 + $0x15c8] sm:$0xff]
    %v7784 = vld [vmem:[#allocation11 + $0x15d0] sm:$0xff]
    %v7785 = vld [vmem:[#allocation11 + $0x15d8] sm:$0xff]
    %v7786 = vld [vmem:[#allocation11 + $0x15e0] sm:$0xff]
    %v7787 = vld [vmem:[#allocation11 + $0x15e8] sm:$0xff]
    %v7788 = vld [vmem:[#allocation11 + $0x15f0] sm:$0xff]
    %v7789 = vld [vmem:[#allocation11 + $0x15f8] sm:$0xff]
    %v7790 = vld [vmem:[#allocation11 + $0x1600] sm:$0xff]
    %v7791 = vld [vmem:[#allocation11 + $0x1608] sm:$0xff]
    %v7792 = vld [vmem:[#allocation11 + $0x1610] sm:$0xff]
    %v7793 = vld [vmem:[#allocation11 + $0x1618] sm:$0xff]
    %v7794 = vld [vmem:[#allocation11 + $0x1620] sm:$0xff]
    %v7795 = vld [vmem:[#allocation11 + $0x1628] sm:$0xff]
    %v7796 = vld [vmem:[#allocation11 + $0x1630] sm:$0xff]
    %v7797 = vld [vmem:[#allocation11 + $0x1638] sm:$0xff]
    %v7798 = vld [vmem:[#allocation11 + $0x1640] sm:$0xff]
    %v7799 = vld [vmem:[#allocation11 + $0x1648] sm:$0xff]
    %v7800 = vld [vmem:[#allocation11 + $0x1650] sm:$0xff]
    %v7801 = vld [vmem:[#allocation11 + $0x1658] sm:$0xff]
    %v7802 = vld [vmem:[#allocation11 + $0x1660] sm:$0xff]
    %v7803 = vld [vmem:[#allocation11 + $0x1668] sm:$0xff]
    %v7804 = vld [vmem:[#allocation11 + $0x1670] sm:$0xff]
    %v7805 = vld [vmem:[#allocation11 + $0x1678] sm:$0xff]
    %v7806 = vld [vmem:[#allocation11 + $0x1680] sm:$0xff]
    %v7807 = vld [vmem:[#allocation11 + $0x1688] sm:$0xff]
    %v7808 = vld [vmem:[#allocation11 + $0x1690] sm:$0xff]
    %v7809 = vld [vmem:[#allocation11 + $0x1698] sm:$0xff]
    %v7810 = vld [vmem:[#allocation11 + $0x16a0] sm:$0xff]
    %v7811 = vld [vmem:[#allocation11 + $0x16a8] sm:$0xff]
    %v7812 = vld [vmem:[#allocation11 + $0x16b0] sm:$0xff]
    %v7813 = vld [vmem:[#allocation11 + $0x16b8] sm:$0xff]
    %v7814 = vld [vmem:[#allocation11 + $0x16c0] sm:$0xff]
    %v7815 = vld [vmem:[#allocation11 + $0x16c8] sm:$0xff]
    %v7816 = vld [vmem:[#allocation11 + $0x16d0] sm:$0xff]
    %v7817 = vld [vmem:[#allocation11 + $0x16d8] sm:$0xff]
    %v7818 = vld [vmem:[#allocation11 + $0x16e0] sm:$0xff]
    %v7819 = vld [vmem:[#allocation11 + $0x16e8] sm:$0xff]
    %v7820 = vld [vmem:[#allocation11 + $0x16f0] sm:$0xff]
    %v7821 = vld [vmem:[#allocation11 + $0x16f8] sm:$0xff]
    %v7822 = vld [vmem:[#allocation11 + $0x1700] sm:$0xff]
    %v7823 = vld [vmem:[#allocation11 + $0x1708] sm:$0xff]
    %v7824 = vld [vmem:[#allocation11 + $0x1710] sm:$0xff]
    %v7825 = vld [vmem:[#allocation11 + $0x1718] sm:$0xff]
    %v7826 = vld [vmem:[#allocation11 + $0x1720] sm:$0xff]
    %v7827 = vld [vmem:[#allocation11 + $0x1728] sm:$0xff]
    %v7828 = vld [vmem:[#allocation11 + $0x1730] sm:$0xff]
    %v7829 = vld [vmem:[#allocation11 + $0x1738] sm:$0xff]
    %v7830 = vld [vmem:[#allocation11 + $0x1740] sm:$0xff]
    %v7831 = vld [vmem:[#allocation11 + $0x1748] sm:$0xff]
    %v7832 = vld [vmem:[#allocation11 + $0x1750] sm:$0xff]
    %v7833 = vld [vmem:[#allocation11 + $0x1758] sm:$0xff]
    %v7834 = vld [vmem:[#allocation11 + $0x1760] sm:$0xff]
    %v7835 = vld [vmem:[#allocation11 + $0x1768] sm:$0xff]
    %v7836 = vld [vmem:[#allocation11 + $0x1770] sm:$0xff]
    %v7837 = vld [vmem:[#allocation11 + $0x1778] sm:$0xff]
    %v7838 = vld [vmem:[#allocation11 + $0x1780] sm:$0xff]
    %v7839 = vld [vmem:[#allocation11 + $0x1788] sm:$0xff]
    %v7840 = vld [vmem:[#allocation11 + $0x1790] sm:$0xff]
    %v7841 = vld [vmem:[#allocation11 + $0x1798] sm:$0xff]
    %v7842 = vld [vmem:[#allocation11 + $0x17a0] sm:$0xff]
    %v7843 = vld [vmem:[#allocation11 + $0x17a8] sm:$0xff]
    %v7844 = vld [vmem:[#allocation11 + $0x17b0] sm:$0xff]
    %v7845 = vld [vmem:[#allocation11 + $0x17b8] sm:$0xff]
    %v7846 = vld [vmem:[#allocation11 + $0x17c0] sm:$0xff]
    %v7847 = vld [vmem:[#allocation11 + $0x17c8] sm:$0xff]
    %v7848 = vld [vmem:[#allocation11 + $0x17d0] sm:$0xff]
    %v7849 = vld [vmem:[#allocation11 + $0x17d8] sm:$0xff]
    %v7850 = vld [vmem:[#allocation11 + $0x17e0] sm:$0xff]
    %v7851 = vld [vmem:[#allocation11 + $0x17e8] sm:$0xff]
    %v7852 = vld [vmem:[#allocation11 + $0x17f0] sm:$0xff]
    %v7853 = vld [vmem:[#allocation11 + $0x17f8] sm:$0xff]
    %v7854 = vld [vmem:[#allocation11 + $0x1800] sm:$0xff]
    %v7855 = vld [vmem:[#allocation11 + $0x1808] sm:$0xff]
    %v7856 = vld [vmem:[#allocation11 + $0x1810] sm:$0xff]
    %v7857 = vld [vmem:[#allocation11 + $0x1818] sm:$0xff]
    %v7858 = vld [vmem:[#allocation11 + $0x1820] sm:$0xff]
    %v7859 = vld [vmem:[#allocation11 + $0x1828] sm:$0xff]
    %v7860 = vld [vmem:[#allocation11 + $0x1830] sm:$0xff]
    %v7861 = vld [vmem:[#allocation11 + $0x1838] sm:$0xff]
    %v7862 = vld [vmem:[#allocation11 + $0x1840] sm:$0xff]
    %v7863 = vld [vmem:[#allocation11 + $0x1848] sm:$0xff]
    %v7864 = vld [vmem:[#allocation11 + $0x1850] sm:$0xff]
    %v7865 = vld [vmem:[#allocation11 + $0x1858] sm:$0xff]
    %v7866 = vld [vmem:[#allocation11 + $0x1860] sm:$0xff]
    %v7867 = vld [vmem:[#allocation11 + $0x1868] sm:$0xff]
    %v7868 = vld [vmem:[#allocation11 + $0x1870] sm:$0xff]
    %v7869 = vld [vmem:[#allocation11 + $0x1878] sm:$0xff]
    %v7870 = vld [vmem:[#allocation12] sm:$0xff]
    %v7872 = vlaneseq
    %v7873 = vshrl.u32 %v7872, 7
    %v7874 = vsub.s32 0, %v7873
    %v7875 = vrot.slane %v7870, %v7874
    %v7876 = vlaneseq
    %v7877 = vshrl.u32 %v7876, 7
    %v7878 = vsub.s32 1, %v7877
    %v7879 = vrot.slane %v7870, %v7878
    %v7880 = vlaneseq
    %v7881 = vshrl.u32 %v7880, 7
    %v7882 = vsub.s32 2, %v7881
    %v7883 = vrot.slane %v7870, %v7882
    %v7884 = vlaneseq
    %v7885 = vshrl.u32 %v7884, 7
    %v7886 = vsub.s32 3, %v7885
    %v7887 = vrot.slane %v7870, %v7886
    %v7888 = vlaneseq
    %v7889 = vshrl.u32 %v7888, 7
    %v7890 = vsub.s32 4, %v7889
    %v7891 = vrot.slane %v7870, %v7890
    %v7892 = vlaneseq
    %v7893 = vshrl.u32 %v7892, 7
    %v7894 = vsub.s32 5, %v7893
    %v7895 = vrot.slane %v7870, %v7894
    %v7896 = vlaneseq
    %v7897 = vshrl.u32 %v7896, 7
    %v7898 = vsub.s32 6, %v7897
    %v7899 = vrot.slane %v7870, %v7898
    %7907 = vmatprep.subr.mxu0 %v7087
    %7908 = vmatpush1.msra.mxu0 %v7086
    %7909 = vmatprep.subr.mxu0 %v7094
    %7910 = vmatpush1.msra.mxu0 %v7093
    %7911 = vmatprep.subr.mxu0 %v7101
    %7912 = vmatpush1.msra.mxu0 %v7100
    %7913 = vmatprep.subr.mxu0 %v7108
    %7914 = vmatpush1.msra.mxu0 %v7107
    %7915 = vmatprep.subr.mxu0 %v7115
    %7916 = vmatpush1.msra.mxu0 %v7114
    %7917 = vmatprep.subr.mxu0 %v7122
    %7918 = vmatpush1.msra.mxu0 %v7121
    %7919 = vmatprep.subr.mxu0 %v7129
    %7920 = vmatpush1.msra.mxu0 %v7128
    %7921 = vmatprep.subr.mxu0 %v7136
    %7922 = vmatpush1.msra.mxu0 %v7135
    %7923 = vmatprep.subr.mxu0 %v7143
    %7924 = vmatpush1.msra.mxu0 %v7142
    %7925 = vmatprep.subr.mxu0 %v7150
    %7926 = vmatpush1.msra.mxu0 %v7149
    %7927 = vmatprep.subr.mxu0 %v7157
    %7928 = vmatpush1.msra.mxu0 %v7156
    %7929 = vmatprep.subr.mxu0 %v7164
    %7930 = vmatpush1.msra.mxu0 %v7163
    %7931 = vmatprep.subr.mxu0 %v7171
    %7932 = vmatpush1.msra.mxu0 %v7170
    %7933 = vmatprep.subr.mxu0 %v7178
    %7934 = vmatpush1.msra.mxu0 %v7177
    %7935 = vmatprep.subr.mxu0 %v7185
    %7936 = vmatpush1.msra.mxu0 %v7184
    %7937 = vmatprep.subr.mxu0 %v7192
    %7938 = vmatpush1.msra.mxu0 %v7191
    %7939 = vmatprep.subr.mxu0 %v7199
    %7940 = vmatpush1.msra.mxu0 %v7198
    %7941 = vmatprep.subr.mxu0 %v7206
    %7942 = vmatpush1.msra.mxu0 %v7205
    %7943 = vmatprep.subr.mxu0 %v7213
    %7944 = vmatpush1.msra.mxu0 %v7212
    %7945 = vmatprep.subr.mxu0 %v7220
    %7946 = vmatpush1.msra.mxu0 %v7219
    %7947 = vmatprep.subr.mxu0 %v7227
    %7948 = vmatpush1.msra.mxu0 %v7226
    %7949 = vmatprep.subr.mxu0 %v7234
    %7950 = vmatpush1.msra.mxu0 %v7233
    %7951 = vmatprep.subr.mxu0 %v7241
    %7952 = vmatpush1.msra.mxu0 %v7240
    %7953 = vmatprep.subr.mxu0 %v7248
    %7954 = vmatpush1.msra.mxu0 %v7247
    %7955 = vmatprep.subr.mxu0 %v7255
    %7956 = vmatpush1.msra.mxu0 %v7254
    %7957 = vmatprep.subr.mxu0 %v7262
    %7958 = vmatpush1.msra.mxu0 %v7261
    %7959 = vmatprep.subr.mxu0 %v7269
    %7960 = vmatpush1.msra.mxu0 %v7268
    %7961 = vmatprep.subr.mxu0 %v7276
    %7962 = vmatpush1.msra.mxu0 %v7275
    %7963 = vmatprep.subr.mxu0 %v7283
    %7964 = vmatpush1.msra.mxu0 %v7282
    %7965 = vmatprep.subr.mxu0 %v7290
    %7966 = vmatpush1.msra.mxu0 %v7289
    %7967 = vmatprep.subr.mxu0 %v7297
    %7968 = vmatpush1.msra.mxu0 %v7296
    %7969 = vmatprep.subr.mxu0 %v7304
    %7970 = vmatpush1.msra.mxu0 %v7303
    %7971 = vmatprep.mubr.f32.mxu0 %v7079
    %7972 = vmatmul.mubr.f32.gmra.mrb[0].mxu0 %v7078
    %v7973 = vpop.f32.mrb[0].mxu0
    %v7974 = vadd.f32 %v7875, %v7973
    %v7975 = vpop.f32.mrb[0].mxu0
    %v7976 = vadd.f32 %v7879, %v7975
    %7977 = vdwg.mxu0
    %7978 = vmatprep.subr.mxu0 %v7311
    %7979 = vmatpush1.msra.mxu0 %v7310
    %7980 = vmatprep.subr.mxu0 %v7318
    %7981 = vmatpush1.msra.mxu0 %v7317
    %7982 = vmatprep.subr.mxu0 %v7325
    %7983 = vmatpush1.msra.mxu0 %v7324
    %7984 = vmatprep.subr.mxu0 %v7332
    %7985 = vmatpush1.msra.mxu0 %v7331
    %7986 = vmatprep.subr.mxu0 %v7339
    %7987 = vmatpush1.msra.mxu0 %v7338
    %7988 = vmatprep.subr.mxu0 %v7346
    %7989 = vmatpush1.msra.mxu0 %v7345
    %7990 = vmatprep.subr.mxu0 %v7353
    %7991 = vmatpush1.msra.mxu0 %v7352
    %7992 = vmatprep.subr.mxu0 %v7360
    %7993 = vmatpush1.msra.mxu0 %v7359
    %7994 = vmatprep.subr.mxu0 %v7367
    %7995 = vmatpush1.msra.mxu0 %v7366
    %7996 = vmatprep.subr.mxu0 %v7374
    %7997 = vmatpush1.msra.mxu0 %v7373
    %7998 = vmatprep.subr.mxu0 %v7381
    %7999 = vmatpush1.msra.mxu0 %v7380
    %8000 = vmatprep.subr.mxu0 %v7388
    %8001 = vmatpush1.msra.mxu0 %v7387
    %8002 = vmatprep.subr.mxu0 %v7395
    %8003 = vmatpush1.msra.mxu0 %v7394
    %8004 = vmatprep.subr.mxu0 %v7402
    %8005 = vmatpush1.msra.mxu0 %v7401
    %8006 = vmatprep.subr.mxu0 %v7409
    %8007 = vmatpush1.msra.mxu0 %v7408
    %8008 = vmatprep.subr.mxu0 %v7416
    %8009 = vmatpush1.msra.mxu0 %v7415
    %8010 = vmatprep.subr.mxu0 %v7423
    %8011 = vmatpush1.msra.mxu0 %v7422
    %8012 = vmatprep.subr.mxu0 %v7430
    %8013 = vmatpush1.msra.mxu0 %v7429
    %8014 = vmatprep.subr.mxu0 %v7437
    %8015 = vmatpush1.msra.mxu0 %v7436
    %8016 = vmatprep.subr.mxu0 %v7444
    %8017 = vmatpush1.msra.mxu0 %v7443
    %8018 = vmatprep.subr.mxu0 %v7451
    %8019 = vmatpush1.msra.mxu0 %v7450
    %8020 = vmatprep.subr.mxu0 %v7458
    %8021 = vmatpush1.msra.mxu0 %v7457
    %8022 = vmatprep.subr.mxu0 %v7465
    %8023 = vmatpush1.msra.mxu0 %v7464
    %8024 = vmatprep.subr.mxu0 %v7472
    %8025 = vmatpush1.msra.mxu0 %v7471
    %8026 = vmatprep.subr.mxu0 %v7479
    %8027 = vmatpush1.msra.mxu0 %v7478
    %8028 = vmatprep.subr.mxu0 %v7486
    %8029 = vmatpush1.msra.mxu0 %v7485
    %8030 = vmatprep.subr.mxu0 %v7493
    %8031 = vmatpush1.msra.mxu0 %v7492
    %8032 = vmatprep.subr.mxu0 %v7500
    %8033 = vmatpush1.msra.mxu0 %v7499
    %8034 = vmatprep.subr.mxu0 %v7507
    %8035 = vmatpush1.msra.mxu0 %v7506
    %8036 = vmatprep.subr.mxu0 %v7514
    %8037 = vmatpush1.msra.mxu0 %v7513
    %8038 = vmatprep.subr.mxu0 %v7521
    %8039 = vmatpush1.msra.mxu0 %v7520
    %8040 = vmatprep.subr.mxu0 %v7528
    %8041 = vmatpush1.msra.mxu0 %v7527
    %8042 = vmatprep.mubr.f32.mxu0 %v7081
    %8043 = vmatmul.mubr.f32.gmra.mrb[0].mxu0 %v7080
    %v8044 = vpop.f32.mrb[0].mxu0
    %v8045 = vadd.f32 %v7974, %v8044
    %v8046 = vpop.f32.mrb[0].mxu0
    %v8047 = vadd.f32 %v7976, %v8046
    %8048 = vdwg.mxu0
    %8049 = vmatprep.subr.mxu0 %v7535
    %8050 = vmatpush1.msra.mxu0 %v7534
    %8051 = vmatprep.subr.mxu0 %v7542
    %8052 = vmatpush1.msra.mxu0 %v7541
    %8053 = vmatprep.subr.mxu0 %v7549
    %8054 = vmatpush1.msra.mxu0 %v7548
    %8055 = vmatprep.subr.mxu0 %v7556
    %8056 = vmatpush1.msra.mxu0 %v7555
    %8057 = vmatprep.subr.mxu0 %v7563
    %8058 = vmatpush1.msra.mxu0 %v7562
    %8059 = vmatprep.subr.mxu0 %v7570
    %8060 = vmatpush1.msra.mxu0 %v7569
    %8061 = vmatprep.subr.mxu0 %v7577
    %8062 = vmatpush1.msra.mxu0 %v7576
    %8063 = vmatprep.subr.mxu0 %v7584
    %8064 = vmatpush1.msra.mxu0 %v7583
    %8065 = vmatprep.subr.mxu0 %v7591
    %8066 = vmatpush1.msra.mxu0 %v7590
    %8067 = vmatprep.subr.mxu0 %v7598
    %8068 = vmatpush1.msra.mxu0 %v7597
    %8069 = vmatprep.subr.mxu0 %v7605
    %8070 = vmatpush1.msra.mxu0 %v7604
    %8071 = vmatprep.subr.mxu0 %v7612
    %8072 = vmatpush1.msra.mxu0 %v7611
    %8073 = vmatprep.subr.mxu0 %v7619
    %8074 = vmatpush1.msra.mxu0 %v7618
    %8075 = vmatprep.subr.mxu0 %v7626
    %8076 = vmatpush1.msra.mxu0 %v7625
    %8077 = vmatprep.subr.mxu0 %v7633
    %8078 = vmatpush1.msra.mxu0 %v7632
    %8079 = vmatprep.subr.mxu0 %v7640
    %8080 = vmatpush1.msra.mxu0 %v7639
    %8081 = vmatprep.subr.mxu0 %v7647
    %8082 = vmatpush1.msra.mxu0 %v7646
    %8083 = vmatprep.subr.mxu0 %v7654
    %8084 = vmatpush1.msra.mxu0 %v7653
    %8085 = vmatprep.subr.mxu0 %v7661
    %8086 = vmatpush1.msra.mxu0 %v7660
    %8087 = vmatprep.subr.mxu0 %v7668
    %8088 = vmatpush1.msra.mxu0 %v7667
    %8089 = vmatprep.subr.mxu0 %v7675
    %8090 = vmatpush1.msra.mxu0 %v7674
    %8091 = vmatprep.subr.mxu0 %v7682
    %8092 = vmatpush1.msra.mxu0 %v7681
    %8093 = vmatprep.subr.mxu0 %v7689
    %8094 = vmatpush1.msra.mxu0 %v7688
    %8095 = vmatprep.subr.mxu0 %v7696
    %8096 = vmatpush1.msra.mxu0 %v7695
    %8097 = vmatprep.subr.mxu0 %v7703
    %8098 = vmatpush1.msra.mxu0 %v7702
    %8099 = vmatprep.subr.mxu0 %v7710
    %8100 = vmatpush1.msra.mxu0 %v7709
    %8101 = vmatprep.subr.mxu0 %v7717
    %8102 = vmatpush1.msra.mxu0 %v7716
    %8103 = vmatprep.subr.mxu0 %v7724
    %8104 = vmatpush1.msra.mxu0 %v7723
    %8105 = vmatprep.subr.mxu0 %v7731
    %8106 = vmatpush1.msra.mxu0 %v7730
    %8107 = vmatprep.subr.mxu0 %v7738
    %8108 = vmatpush1.msra.mxu0 %v7737
    %8109 = vmatprep.subr.mxu0 %v7745
    %8110 = vmatpush1.msra.mxu0 %v7744
    %8111 = vmatprep.subr.mxu0 %v7752
    %8112 = vmatpush1.msra.mxu0 %v7751
    %8113 = vmatprep.mubr.f32.mxu0 %v7083
    %8114 = vmatmul.mubr.f32.gmra.mrb[0].mxu0 %v7082
    %v8115 = vpop.f32.mrb[0].mxu0
    %v8116 = vadd.f32 %v8045, %v8115
    %v8117 = vpop.f32.mrb[0].mxu0
    %v8118 = vadd.f32 %v8047, %v8117
    %8119 = vdwg.mxu0
    %8120 = vmatprep.subr.mxu0 %v7759
    %8121 = vmatpush1.msra.mxu0 %v7758
    %8122 = vmatprep.subr.mxu0 %v7766
    %8123 = vmatpush1.msra.mxu0 %v7765
    %8124 = vmatprep.subr.mxu0 %v7773
    %8125 = vmatpush1.msra.mxu0 %v7772
    %8126 = vmatprep.subr.mxu0 %v7780
    %8127 = vmatpush1.msra.mxu0 %v7779
    %8128 = vmatprep.subr.mxu0 %v7787
    %8129 = vmatpush1.msra.mxu0 %v7786
    %8130 = vmatprep.subr.mxu0 %v7794
    %8131 = vmatpush1.msra.mxu0 %v7793
    %8132 = vmatprep.subr.mxu0 %v7801
    %8133 = vmatpush1.msra.mxu0 %v7800
    %8134 = vmatprep.subr.mxu0 %v7808
    %8135 = vmatpush1.msra.mxu0 %v7807
    %8136 = vmatprep.subr.mxu0 %v7815
    %8137 = vmatpush1.msra.mxu0 %v7814
    %8138 = vmatprep.subr.mxu0 %v7822
    %8139 = vmatpush1.msra.mxu0 %v7821
    %8140 = vmatprep.subr.mxu0 %v7829
    %8141 = vmatpush1.msra.mxu0 %v7828
    %8142 = vmatprep.subr.mxu0 %v7836
    %8143 = vmatpush1.msra.mxu0 %v7835
    %8144 = vmatprep.subr.mxu0 %v7843
    %8145 = vmatpush1.msra.mxu0 %v7842
    %8146 = vmatprep.subr.mxu0 %v7850
    %8147 = vmatpush1.msra.mxu0 %v7849
    %8148 = vmatprep.subr.mxu0 %v7857
    %8149 = vmatpush1.msra.mxu0 %v7856
    %8150 = vmatprep.subr.mxu0 %v7864
    %8151 = vmatpush1.msra.mxu0 %v7863
    %8152 = vmatprep.subr.mxu0 0.0
    %8153 = vmatpush1.msra.mxu0 0.0
    %8154 = vmatprep.subr.mxu0 0.0
    %8155 = vmatpush1.msra.mxu0 0.0
    %8156 = vmatprep.subr.mxu0 0.0
    %8157 = vmatpush1.msra.mxu0 0.0
    %8158 = vmatprep.subr.mxu0 0.0
    %8159 = vmatpush1.msra.mxu0 0.0
    %8160 = vmatprep.subr.mxu0 0.0
    %8161 = vmatpush1.msra.mxu0 0.0
    %8162 = vmatprep.subr.mxu0 0.0
    %8163 = vmatpush1.msra.mxu0 0.0
    %8164 = vmatprep.subr.mxu0 0.0
    %8165 = vmatpush1.msra.mxu0 0.0
    %8166 = vmatprep.subr.mxu0 0.0
    %8167 = vmatpush1.msra.mxu0 0.0
    %8168 = vmatprep.subr.mxu0 0.0
    %8169 = vmatpush1.msra.mxu0 0.0
    %8170 = vmatprep.subr.mxu0 0.0
    %8171 = vmatpush1.msra.mxu0 0.0
    %8172 = vmatprep.subr.mxu0 0.0
    %8173 = vmatpush1.msra.mxu0 0.0
    %8174 = vmatprep.subr.mxu0 0.0
    %8175 = vmatpush1.msra.mxu0 0.0
    %8176 = vmatprep.subr.mxu0 0.0
    %8177 = vmatpush1.msra.mxu0 0.0
    %8178 = vmatprep.subr.mxu0 0.0
    %8179 = vmatpush1.msra.mxu0 0.0
    %8180 = vmatprep.subr.mxu0 0.0
    %8181 = vmatpush1.msra.mxu0 0.0
    %8182 = vmatprep.subr.mxu0 0.0
    %8183 = vmatpush1.msra.mxu0 0.0
    %8184 = vmatprep.mubr.f32.mxu0 0.0
    %8185 = vmatmul.mubr.f32.gmra.mrb[0].mxu0 %v7084
    %v8186 = vpop.f32.mrb[0].mxu0
    %v8187 = vadd.f32 %v8116, %v8186
    %v8188 = vpop.f32.mrb[0].mxu0
    %v8189 = vadd.f32 %v8118, %v8188
    %8190 = vdwg.mxu0
    %8191 = vmatprep.subr.mxu0 %v7089
    %8192 = vmatpush1.msra.mxu0 %v7088
    %8193 = vmatprep.subr.mxu0 %v7096
    %8194 = vmatpush1.msra.mxu0 %v7095
    %8195 = vmatprep.subr.mxu0 %v7103
    %8196 = vmatpush1.msra.mxu0 %v7102
    %8197 = vmatprep.subr.mxu0 %v7110
    %8198 = vmatpush1.msra.mxu0 %v7109
    %8199 = vmatprep.subr.mxu0 %v7117
    %8200 = vmatpush1.msra.mxu0 %v7116
    %8201 = vmatprep.subr.mxu0 %v7124
    %8202 = vmatpush1.msra.mxu0 %v7123
    %8203 = vmatprep.subr.mxu0 %v7131
    %8204 = vmatpush1.msra.mxu0 %v7130
    %8205 = vmatprep.subr.mxu0 %v7138
    %8206 = vmatpush1.msra.mxu0 %v7137
    %8207 = vmatprep.subr.mxu0 %v7145
    %8208 = vmatpush1.msra.mxu0 %v7144
    %8209 = vmatprep.subr.mxu0 %v7152
    %8210 = vmatpush1.msra.mxu0 %v7151
    %8211 = vmatprep.subr.mxu0 %v7159
    %8212 = vmatpush1.msra.mxu0 %v7158
    %8213 = vmatprep.subr.mxu0 %v7166
    %8214 = vmatpush1.msra.mxu0 %v7165
    %8215 = vmatprep.subr.mxu0 %v7173
    %8216 = vmatpush1.msra.mxu0 %v7172
    %8217 = vmatprep.subr.mxu0 %v7180
    %8218 = vmatpush1.msra.mxu0 %v7179
    %8219 = vmatprep.subr.mxu0 %v7187
    %8220 = vmatpush1.msra.mxu0 %v7186
    %8221 = vmatprep.subr.mxu0 %v7194
    %8222 = vmatpush1.msra.mxu0 %v7193
    %8223 = vmatprep.subr.mxu0 %v7201
    %8224 = vmatpush1.msra.mxu0 %v7200
    %8225 = vmatprep.subr.mxu0 %v7208
    %8226 = vmatpush1.msra.mxu0 %v7207
    %8227 = vmatprep.subr.mxu0 %v7215
    %8228 = vmatpush1.msra.mxu0 %v7214
    %8229 = vmatprep.subr.mxu0 %v7222
    %8230 = vmatpush1.msra.mxu0 %v7221
    %8231 = vmatprep.subr.mxu0 %v7229
    %8232 = vmatpush1.msra.mxu0 %v7228
    %8233 = vmatprep.subr.mxu0 %v7236
    %8234 = vmatpush1.msra.mxu0 %v7235
    %8235 = vmatprep.subr.mxu0 %v7243
    %8236 = vmatpush1.msra.mxu0 %v7242
    %8237 = vmatprep.subr.mxu0 %v7250
    %8238 = vmatpush1.msra.mxu0 %v7249
    %8239 = vmatprep.subr.mxu0 %v7257
    %8240 = vmatpush1.msra.mxu0 %v7256
    %8241 = vmatprep.subr.mxu0 %v7264
    %8242 = vmatpush1.msra.mxu0 %v7263
    %8243 = vmatprep.subr.mxu0 %v7271
    %8244 = vmatpush1.msra.mxu0 %v7270
    %8245 = vmatprep.subr.mxu0 %v7278
    %8246 = vmatpush1.msra.mxu0 %v7277
    %8247 = vmatprep.subr.mxu0 %v7285
    %8248 = vmatpush1.msra.mxu0 %v7284
    %8249 = vmatprep.subr.mxu0 %v7292
    %8250 = vmatpush1.msra.mxu0 %v7291
    %8251 = vmatprep.subr.mxu0 %v7299
    %8252 = vmatpush1.msra.mxu0 %v7298
    %8253 = vmatprep.subr.mxu0 %v7306
    %8254 = vmatpush1.msra.mxu0 %v7305
    %8255 = vmatprep.mubr.f32.mxu0 %v7079
    %8256 = vmatmul.mubr.f32.gmra.mrb[0].mxu0 %v7078
    %v8257 = vpop.f32.mrb[0].mxu0
    %v8258 = vadd.f32 %v7883, %v8257
    %v8259 = vpop.f32.mrb[0].mxu0
    %v8260 = vadd.f32 %v7887, %v8259
    %8261 = vdwg.mxu0
    %8262 = vmatprep.subr.mxu0 %v7313
    %8263 = vmatpush1.msra.mxu0 %v7312
    %8264 = vmatprep.subr.mxu0 %v7320
    %8265 = vmatpush1.msra.mxu0 %v7319
    %8266 = vmatprep.subr.mxu0 %v7327
    %8267 = vmatpush1.msra.mxu0 %v7326
    %8268 = vmatprep.subr.mxu0 %v7334
    %8269 = vmatpush1.msra.mxu0 %v7333
    %8270 = vmatprep.subr.mxu0 %v7341
    %8271 = vmatpush1.msra.mxu0 %v7340
    %8272 = vmatprep.subr.mxu0 %v7348
    %8273 = vmatpush1.msra.mxu0 %v7347
    %8274 = vmatprep.subr.mxu0 %v7355
    %8275 = vmatpush1.msra.mxu0 %v7354
    %8276 = vmatprep.subr.mxu0 %v7362
    %8277 = vmatpush1.msra.mxu0 %v7361
    %8278 = vmatprep.subr.mxu0 %v7369
    %8279 = vmatpush1.msra.mxu0 %v7368
    %8280 = vmatprep.subr.mxu0 %v7376
    %8281 = vmatpush1.msra.mxu0 %v7375
    %8282 = vmatprep.subr.mxu0 %v7383
    %8283 = vmatpush1.msra.mxu0 %v7382
    %8284 = vmatprep.subr.mxu0 %v7390
    %8285 = vmatpush1.msra.mxu0 %v7389
    %8286 = vmatprep.subr.mxu0 %v7397
    %8287 = vmatpush1.msra.mxu0 %v7396
    %8288 = vmatprep.subr.mxu0 %v7404
    %8289 = vmatpush1.msra.mxu0 %v7403
    %8290 = vmatprep.subr.mxu0 %v7411
    %8291 = vmatpush1.msra.mxu0 %v7410
    %8292 = vmatprep.subr.mxu0 %v7418
    %8293 = vmatpush1.msra.mxu0 %v7417
    %8294 = vmatprep.subr.mxu0 %v7425
    %8295 = vmatpush1.msra.mxu0 %v7424
    %8296 = vmatprep.subr.mxu0 %v7432
    %8297 = vmatpush1.msra.mxu0 %v7431
    %8298 = vmatprep.subr.mxu0 %v7439
    %8299 = vmatpush1.msra.mxu0 %v7438
    %8300 = vmatprep.subr.mxu0 %v7446
    %8301 = vmatpush1.msra.mxu0 %v7445
    %8302 = vmatprep.subr.mxu0 %v7453
    %8303 = vmatpush1.msra.mxu0 %v7452
    %8304 = vmatprep.subr.mxu0 %v7460
    %8305 = vmatpush1.msra.mxu0 %v7459
    %8306 = vmatprep.subr.mxu0 %v7467
    %8307 = vmatpush1.msra.mxu0 %v7466
    %8308 = vmatprep.subr.mxu0 %v7474
    %8309 = vmatpush1.msra.mxu0 %v7473
    %8310 = vmatprep.subr.mxu0 %v7481
    %8311 = vmatpush1.msra.mxu0 %v7480
    %8312 = vmatprep.subr.mxu0 %v7488
    %8313 = vmatpush1.msra.mxu0 %v7487
    %8314 = vmatprep.subr.mxu0 %v7495
    %8315 = vmatpush1.msra.mxu0 %v7494
    %8316 = vmatprep.subr.mxu0 %v7502
    %8317 = vmatpush1.msra.mxu0 %v7501
    %8318 = vmatprep.subr.mxu0 %v7509
    %8319 = vmatpush1.msra.mxu0 %v7508
    %8320 = vmatprep.subr.mxu0 %v7516
    %8321 = vmatpush1.msra.mxu0 %v7515
    %8322 = vmatprep.subr.mxu0 %v7523
    %8323 = vmatpush1.msra.mxu0 %v7522
    %8324 = vmatprep.subr.mxu0 %v7530
    %8325 = vmatpush1.msra.mxu0 %v7529
    %8326 = vmatprep.mubr.f32.mxu0 %v7081
    %8327 = vmatmul.mubr.f32.gmra.mrb[0].mxu0 %v7080
    %v8328 = vpop.f32.mrb[0].mxu0
    %v8329 = vadd.f32 %v8258, %v8328
    %v8330 = vpop.f32.mrb[0].mxu0
    %v8331 = vadd.f32 %v8260, %v8330
    %8332 = vdwg.mxu0
    %8333 = vmatprep.subr.mxu0 %v7537
    %8334 = vmatpush1.msra.mxu0 %v7536
    %8335 = vmatprep.subr.mxu0 %v7544
    %8336 = vmatpush1.msra.mxu0 %v7543
    %8337 = vmatprep.subr.mxu0 %v7551
    %8338 = vmatpush1.msra.mxu0 %v7550
    %8339 = vmatprep.subr.mxu0 %v7558
    %8340 = vmatpush1.msra.mxu0 %v7557
    %8341 = vmatprep.subr.mxu0 %v7565
    %8342 = vmatpush1.msra.mxu0 %v7564
    %8343 = vmatprep.subr.mxu0 %v7572
    %8344 = vmatpush1.msra.mxu0 %v7571
    %8345 = vmatprep.subr.mxu0 %v7579
    %8346 = vmatpush1.msra.mxu0 %v7578
    %8347 = vmatprep.subr.mxu0 %v7586
    %8348 = vmatpush1.msra.mxu0 %v7585
    %8349 = vmatprep.subr.mxu0 %v7593
    %8350 = vmatpush1.msra.mxu0 %v7592
    %8351 = vmatprep.subr.mxu0 %v7600
    %8352 = vmatpush1.msra.mxu0 %v7599
    %8353 = vmatprep.subr.mxu0 %v7607
    %8354 = vmatpush1.msra.mxu0 %v7606
    %8355 = vmatprep.subr.mxu0 %v7614
    %8356 = vmatpush1.msra.mxu0 %v7613
    %8357 = vmatprep.subr.mxu0 %v7621
    %8358 = vmatpush1.msra.mxu0 %v7620
    %8359 = vmatprep.subr.mxu0 %v7628
    %8360 = vmatpush1.msra.mxu0 %v7627
    %8361 = vmatprep.subr.mxu0 %v7635
    %8362 = vmatpush1.msra.mxu0 %v7634
    %8363 = vmatprep.subr.mxu0 %v7642
    %8364 = vmatpush1.msra.mxu0 %v7641
    %8365 = vmatprep.subr.mxu0 %v7649
    %8366 = vmatpush1.msra.mxu0 %v7648
    %8367 = vmatprep.subr.mxu0 %v7656
    %8368 = vmatpush1.msra.mxu0 %v7655
    %8369 = vmatprep.subr.mxu0 %v7663
    %8370 = vmatpush1.msra.mxu0 %v7662
    %8371 = vmatprep.subr.mxu0 %v7670
    %8372 = vmatpush1.msra.mxu0 %v7669
    %8373 = vmatprep.subr.mxu0 %v7677
    %8374 = vmatpush1.msra.mxu0 %v7676
    %8375 = vmatprep.subr.mxu0 %v7684
    %8376 = vmatpush1.msra.mxu0 %v7683
    %8377 = vmatprep.subr.mxu0 %v7691
    %8378 = vmatpush1.msra.mxu0 %v7690
    %8379 = vmatprep.subr.mxu0 %v7698
    %8380 = vmatpush1.msra.mxu0 %v7697
    %8381 = vmatprep.subr.mxu0 %v7705
    %8382 = vmatpush1.msra.mxu0 %v7704
    %8383 = vmatprep.subr.mxu0 %v7712
    %8384 = vmatpush1.msra.mxu0 %v7711
    %8385 = vmatprep.subr.mxu0 %v7719
    %8386 = vmatpush1.msra.mxu0 %v7718
    %8387 = vmatprep.subr.mxu0 %v7726
    %8388 = vmatpush1.msra.mxu0 %v7725
    %8389 = vmatprep.subr.mxu0 %v7733
    %8390 = vmatpush1.msra.mxu0 %v7732
    %8391 = vmatprep.subr.mxu0 %v7740
    %8392 = vmatpush1.msra.mxu0 %v7739
    %8393 = vmatprep.subr.mxu0 %v7747
    %8394 = vmatpush1.msra.mxu0 %v7746
    %8395 = vmatprep.subr.mxu0 %v7754
    %8396 = vmatpush1.msra.mxu0 %v7753
    %8397 = vmatprep.mubr.f32.mxu0 %v7083
    %8398 = vmatmul.mubr.f32.gmra.mrb[0].mxu0 %v7082
    %v8399 = vpop.f32.mrb[0].mxu0
    %v8400 = vadd.f32 %v8329, %v8399
    %v8401 = vpop.f32.mrb[0].mxu0
    %v8402 = vadd.f32 %v8331, %v8401
    %8403 = vdwg.mxu0
    %8404 = vmatprep.subr.mxu0 %v7761
    %8405 = vmatpush1.msra.mxu0 %v7760
    %8406 = vmatprep.subr.mxu0 %v7768
    %8407 = vmatpush1.msra.mxu0 %v7767
    %8408 = vmatprep.subr.mxu0 %v7775
    %8409 = vmatpush1.msra.mxu0 %v7774
    %8410 = vmatprep.subr.mxu0 %v7782
    %8411 = vmatpush1.msra.mxu0 %v7781
    %8412 = vmatprep.subr.mxu0 %v7789
    %8413 = vmatpush1.msra.mxu0 %v7788
    %8414 = vmatprep.subr.mxu0 %v7796
    %8415 = vmatpush1.msra.mxu0 %v7795
    %8416 = vmatprep.subr.mxu0 %v7803
    %8417 = vmatpush1.msra.mxu0 %v7802
    %8418 = vmatprep.subr.mxu0 %v7810
    %8419 = vmatpush1.msra.mxu0 %v7809
    %8420 = vmatprep.subr.mxu0 %v7817
    %8421 = vmatpush1.msra.mxu0 %v7816
    %8422 = vmatprep.subr.mxu0 %v7824
    %8423 = vmatpush1.msra.mxu0 %v7823
    %8424 = vmatprep.subr.mxu0 %v7831
    %8425 = vmatpush1.msra.mxu0 %v7830
    %8426 = vmatprep.subr.mxu0 %v7838
    %8427 = vmatpush1.msra.mxu0 %v7837
    %8428 = vmatprep.subr.mxu0 %v7845
    %8429 = vmatpush1.msra.mxu0 %v7844
    %8430 = vmatprep.subr.mxu0 %v7852
    %8431 = vmatpush1.msra.mxu0 %v7851
    %8432 = vmatprep.subr.mxu0 %v7859
    %8433 = vmatpush1.msra.mxu0 %v7858
    %8434 = vmatprep.subr.mxu0 %v7866
    %8435 = vmatpush1.msra.mxu0 %v7865
    %8436 = vmatprep.subr.mxu0 0.0
    %8437 = vmatpush1.msra.mxu0 0.0
    %8438 = vmatprep.subr.mxu0 0.0
    %8439 = vmatpush1.msra.mxu0 0.0
    %8440 = vmatprep.subr.mxu0 0.0
    %8441 = vmatpush1.msra.mxu0 0.0
    %8442 = vmatprep.subr.mxu0 0.0
    %8443 = vmatpush1.msra.mxu0 0.0
    %8444 = vmatprep.subr.mxu0 0.0
    %8445 = vmatpush1.msra.mxu0 0.0
    %8446 = vmatprep.subr.mxu0 0.0
    %8447 = vmatpush1.msra.mxu0 0.0
    %8448 = vmatprep.subr.mxu0 0.0
    %8449 = vmatpush1.msra.mxu0 0.0
    %8450 = vmatprep.subr.mxu0 0.0
    %8451 = vmatpush1.msra.mxu0 0.0
    %8452 = vmatprep.subr.mxu0 0.0
    %8453 = vmatpush1.msra.mxu0 0.0
    %8454 = vmatprep.subr.mxu0 0.0
    %8455 = vmatpush1.msra.mxu0 0.0
    %8456 = vmatprep.subr.mxu0 0.0
    %8457 = vmatpush1.msra.mxu0 0.0
    %8458 = vmatprep.subr.mxu0 0.0
    %8459 = vmatpush1.msra.mxu0 0.0
    %8460 = vmatprep.subr.mxu0 0.0
    %8461 = vmatpush1.msra.mxu0 0.0
    %8462 = vmatprep.subr.mxu0 0.0
    %8463 = vmatpush1.msra.mxu0 0.0
    %8464 = vmatprep.subr.mxu0 0.0
    %8465 = vmatpush1.msra.mxu0 0.0
    %8466 = vmatprep.subr.mxu0 0.0
    %8467 = vmatpush1.msra.mxu0 0.0
    %8468 = vmatprep.mubr.f32.mxu0 0.0
    %8469 = vmatmul.mubr.f32.gmra.mrb[0].mxu0 %v7084
    %v8470 = vpop.f32.mrb[0].mxu0
    %v8471 = vadd.f32 %v8400, %v8470
    %v8472 = vpop.f32.mrb[0].mxu0
    %v8473 = vadd.f32 %v8402, %v8472
    %8474 = vdwg.mxu0
    %8475 = vmatprep.subr.mxu0 %v7091
    %8476 = vmatpush1.msra.mxu0 %v7090
    %8477 = vmatprep.subr.mxu0 %v7098
    %8478 = vmatpush1.msra.mxu0 %v7097
    %8479 = vmatprep.subr.mxu0 %v7105
    %8480 = vmatpush1.msra.mxu0 %v7104
    %8481 = vmatprep.subr.mxu0 %v7112
    %8482 = vmatpush1.msra.mxu0 %v7111
    %8483 = vmatprep.subr.mxu0 %v7119
    %8484 = vmatpush1.msra.mxu0 %v7118
    %8485 = vmatprep.subr.mxu0 %v7126
    %8486 = vmatpush1.msra.mxu0 %v7125
    %8487 = vmatprep.subr.mxu0 %v7133
    %8488 = vmatpush1.msra.mxu0 %v7132
    %8489 = vmatprep.subr.mxu0 %v7140
    %8490 = vmatpush1.msra.mxu0 %v7139
    %8491 = vmatprep.subr.mxu0 %v7147
    %8492 = vmatpush1.msra.mxu0 %v7146
    %8493 = vmatprep.subr.mxu0 %v7154
    %8494 = vmatpush1.msra.mxu0 %v7153
    %8495 = vmatprep.subr.mxu0 %v7161
    %8496 = vmatpush1.msra.mxu0 %v7160
    %8497 = vmatprep.subr.mxu0 %v7168
    %8498 = vmatpush1.msra.mxu0 %v7167
    %8499 = vmatprep.subr.mxu0 %v7175
    %8500 = vmatpush1.msra.mxu0 %v7174
    %8501 = vmatprep.subr.mxu0 %v7182
    %8502 = vmatpush1.msra.mxu0 %v7181
    %8503 = vmatprep.subr.mxu0 %v7189
    %8504 = vmatpush1.msra.mxu0 %v7188
    %8505 = vmatprep.subr.mxu0 %v7196
    %8506 = vmatpush1.msra.mxu0 %v7195
    %8507 = vmatprep.subr.mxu0 %v7203
    %8508 = vmatpush1.msra.mxu0 %v7202
    %8509 = vmatprep.subr.mxu0 %v7210
    %8510 = vmatpush1.msra.mxu0 %v7209
    %8511 = vmatprep.subr.mxu0 %v7217
    %8512 = vmatpush1.msra.mxu0 %v7216
    %8513 = vmatprep.subr.mxu0 %v7224
    %8514 = vmatpush1.msra.mxu0 %v7223
    %8515 = vmatprep.subr.mxu0 %v7231
    %8516 = vmatpush1.msra.mxu0 %v7230
    %8517 = vmatprep.subr.mxu0 %v7238
    %8518 = vmatpush1.msra.mxu0 %v7237
    %8519 = vmatprep.subr.mxu0 %v7245
    %8520 = vmatpush1.msra.mxu0 %v7244
    %8521 = vmatprep.subr.mxu0 %v7252
    %8522 = vmatpush1.msra.mxu0 %v7251
    %8523 = vmatprep.subr.mxu0 %v7259
    %8524 = vmatpush1.msra.mxu0 %v7258
    %8525 = vmatprep.subr.mxu0 %v7266
    %8526 = vmatpush1.msra.mxu0 %v7265
    %8527 = vmatprep.subr.mxu0 %v7273
    %8528 = vmatpush1.msra.mxu0 %v7272
    %8529 = vmatprep.subr.mxu0 %v7280
    %8530 = vmatpush1.msra.mxu0 %v7279
    %8531 = vmatprep.subr.mxu0 %v7287
    %8532 = vmatpush1.msra.mxu0 %v7286
    %8533 = vmatprep.subr.mxu0 %v7294
    %8534 = vmatpush1.msra.mxu0 %v7293
    %8535 = vmatprep.subr.mxu0 %v7301
    %8536 = vmatpush1.msra.mxu0 %v7300
    %8537 = vmatprep.subr.mxu0 %v7308
    %8538 = vmatpush1.msra.mxu0 %v7307
    %8539 = vmatprep.mubr.f32.mxu0 %v7079
    %8540 = vmatmul.mubr.f32.gmra.mrb[0].mxu0 %v7078
    %v8541 = vpop.f32.mrb[0].mxu0
    %v8542 = vadd.f32 %v7891, %v8541
    %v8543 = vpop.f32.mrb[0].mxu0
    %v8544 = vadd.f32 %v7895, %v8543
    %8545 = vdwg.mxu0
    %8546 = vmatprep.subr.mxu0 %v7315
    %8547 = vmatpush1.msra.mxu0 %v7314
    %8548 = vmatprep.subr.mxu0 %v7322
    %8549 = vmatpush1.msra.mxu0 %v7321
    %8550 = vmatprep.subr.mxu0 %v7329
    %8551 = vmatpush1.msra.mxu0 %v7328
    %8552 = vmatprep.subr.mxu0 %v7336
    %8553 = vmatpush1.msra.mxu0 %v7335
    %8554 = vmatprep.subr.mxu0 %v7343
    %8555 = vmatpush1.msra.mxu0 %v7342
    %8556 = vmatprep.subr.mxu0 %v7350
    %8557 = vmatpush1.msra.mxu0 %v7349
    %8558 = vmatprep.subr.mxu0 %v7357
    %8559 = vmatpush1.msra.mxu0 %v7356
    %8560 = vmatprep.subr.mxu0 %v7364
    %8561 = vmatpush1.msra.mxu0 %v7363
    %8562 = vmatprep.subr.mxu0 %v7371
    %8563 = vmatpush1.msra.mxu0 %v7370
    %8564 = vmatprep.subr.mxu0 %v7378
    %8565 = vmatpush1.msra.mxu0 %v7377
    %8566 = vmatprep.subr.mxu0 %v7385
    %8567 = vmatpush1.msra.mxu0 %v7384
    %8568 = vmatprep.subr.mxu0 %v7392
    %8569 = vmatpush1.msra.mxu0 %v7391
    %8570 = vmatprep.subr.mxu0 %v7399
    %8571 = vmatpush1.msra.mxu0 %v7398
    %8572 = vmatprep.subr.mxu0 %v7406
    %8573 = vmatpush1.msra.mxu0 %v7405
    %8574 = vmatprep.subr.mxu0 %v7413
    %8575 = vmatpush1.msra.mxu0 %v7412
    %8576 = vmatprep.subr.mxu0 %v7420
    %8577 = vmatpush1.msra.mxu0 %v7419
    %8578 = vmatprep.subr.mxu0 %v7427
    %8579 = vmatpush1.msra.mxu0 %v7426
    %8580 = vmatprep.subr.mxu0 %v7434
    %8581 = vmatpush1.msra.mxu0 %v7433
    %8582 = vmatprep.subr.mxu0 %v7441
    %8583 = vmatpush1.msra.mxu0 %v7440
    %8584 = vmatprep.subr.mxu0 %v7448
    %8585 = vmatpush1.msra.mxu0 %v7447
    %8586 = vmatprep.subr.mxu0 %v7455
    %8587 = vmatpush1.msra.mxu0 %v7454
    %8588 = vmatprep.subr.mxu0 %v7462
    %8589 = vmatpush1.msra.mxu0 %v7461
    %8590 = vmatprep.subr.mxu0 %v7469
    %8591 = vmatpush1.msra.mxu0 %v7468
    %8592 = vmatprep.subr.mxu0 %v7476
    %8593 = vmatpush1.msra.mxu0 %v7475
    %8594 = vmatprep.subr.mxu0 %v7483
    %8595 = vmatpush1.msra.mxu0 %v7482
    %8596 = vmatprep.subr.mxu0 %v7490
    %8597 = vmatpush1.msra.mxu0 %v7489
    %8598 = vmatprep.subr.mxu0 %v7497
    %8599 = vmatpush1.msra.mxu0 %v7496
    %8600 = vmatprep.subr.mxu0 %v7504
    %8601 = vmatpush1.msra.mxu0 %v7503
    %8602 = vmatprep.subr.mxu0 %v7511
    %8603 = vmatpush1.msra.mxu0 %v7510
    %8604 = vmatprep.subr.mxu0 %v7518
    %8605 = vmatpush1.msra.mxu0 %v7517
    %8606 = vmatprep.subr.mxu0 %v7525
    %8607 = vmatpush1.msra.mxu0 %v7524
    %8608 = vmatprep.subr.mxu0 %v7532
    %8609 = vmatpush1.msra.mxu0 %v7531
    %8610 = vmatprep.mubr.f32.mxu0 %v7081
    %8611 = vmatmul.mubr.f32.gmra.mrb[0].mxu0 %v7080
    %v8612 = vpop.f32.mrb[0].mxu0
    %v8613 = vadd.f32 %v8542, %v8612
    %v8614 = vpop.f32.mrb[0].mxu0
    %v8615 = vadd.f32 %v8544, %v8614
    %8616 = vdwg.mxu0
    %8617 = vmatprep.subr.mxu0 %v7539
    %8618 = vmatpush1.msra.mxu0 %v7538
    %8619 = vmatprep.subr.mxu0 %v7546
    %8620 = vmatpush1.msra.mxu0 %v7545
    %8621 = vmatprep.subr.mxu0 %v7553
    %8622 = vmatpush1.msra.mxu0 %v7552
    %8623 = vmatprep.subr.mxu0 %v7560
    %8624 = vmatpush1.msra.mxu0 %v7559
    %8625 = vmatprep.subr.mxu0 %v7567
    %8626 = vmatpush1.msra.mxu0 %v7566
    %8627 = vmatprep.subr.mxu0 %v7574
    %8628 = vmatpush1.msra.mxu0 %v7573
    %8629 = vmatprep.subr.mxu0 %v7581
    %8630 = vmatpush1.msra.mxu0 %v7580
    %8631 = vmatprep.subr.mxu0 %v7588
    %8632 = vmatpush1.msra.mxu0 %v7587
    %8633 = vmatprep.subr.mxu0 %v7595
    %8634 = vmatpush1.msra.mxu0 %v7594
    %8635 = vmatprep.subr.mxu0 %v7602
    %8636 = vmatpush1.msra.mxu0 %v7601
    %8637 = vmatprep.subr.mxu0 %v7609
    %8638 = vmatpush1.msra.mxu0 %v7608
    %8639 = vmatprep.subr.mxu0 %v7616
    %8640 = vmatpush1.msra.mxu0 %v7615
    %8641 = vmatprep.subr.mxu0 %v7623
    %8642 = vmatpush1.msra.mxu0 %v7622
    %8643 = vmatprep.subr.mxu0 %v7630
    %8644 = vmatpush1.msra.mxu0 %v7629
    %8645 = vmatprep.subr.mxu0 %v7637
    %8646 = vmatpush1.msra.mxu0 %v7636
    %8647 = vmatprep.subr.mxu0 %v7644
    %8648 = vmatpush1.msra.mxu0 %v7643
    %8649 = vmatprep.subr.mxu0 %v7651
    %8650 = vmatpush1.msra.mxu0 %v7650
    %8651 = vmatprep.subr.mxu0 %v7658
    %8652 = vmatpush1.msra.mxu0 %v7657
    %8653 = vmatprep.subr.mxu0 %v7665
    %8654 = vmatpush1.msra.mxu0 %v7664
    %8655 = vmatprep.subr.mxu0 %v7672
    %8656 = vmatpush1.msra.mxu0 %v7671
    %8657 = vmatprep.subr.mxu0 %v7679
    %8658 = vmatpush1.msra.mxu0 %v7678
    %8659 = vmatprep.subr.mxu0 %v7686
    %8660 = vmatpush1.msra.mxu0 %v7685
    %8661 = vmatprep.subr.mxu0 %v7693
    %8662 = vmatpush1.msra.mxu0 %v7692
    %8663 = vmatprep.subr.mxu0 %v7700
    %8664 = vmatpush1.msra.mxu0 %v7699
    %8665 = vmatprep.subr.mxu0 %v7707
    %8666 = vmatpush1.msra.mxu0 %v7706
    %8667 = vmatprep.subr.mxu0 %v7714
    %8668 = vmatpush1.msra.mxu0 %v7713
    %8669 = vmatprep.subr.mxu0 %v7721
    %8670 = vmatpush1.msra.mxu0 %v7720
    %8671 = vmatprep.subr.mxu0 %v7728
    %8672 = vmatpush1.msra.mxu0 %v7727
    %8673 = vmatprep.subr.mxu0 %v7735
    %8674 = vmatpush1.msra.mxu0 %v7734
    %8675 = vmatprep.subr.mxu0 %v7742
    %8676 = vmatpush1.msra.mxu0 %v7741
    %8677 = vmatprep.subr.mxu0 %v7749
    %8678 = vmatpush1.msra.mxu0 %v7748
    %8679 = vmatprep.subr.mxu0 %v7756
    %8680 = vmatpush1.msra.mxu0 %v7755
    %8681 = vmatprep.mubr.f32.mxu0 %v7083
    %8682 = vmatmul.mubr.f32.gmra.mrb[0].mxu0 %v7082
    %v8683 = vpop.f32.mrb[0].mxu0
    %v8684 = vadd.f32 %v8613, %v8683
    %v8685 = vpop.f32.mrb[0].mxu0
    %v8686 = vadd.f32 %v8615, %v8685
    %8687 = vdwg.mxu0
    %8688 = vmatprep.subr.mxu0 %v7763
    %8689 = vmatpush1.msra.mxu0 %v7762
    %8690 = vmatprep.subr.mxu0 %v7770
    %8691 = vmatpush1.msra.mxu0 %v7769
    %8692 = vmatprep.subr.mxu0 %v7777
    %8693 = vmatpush1.msra.mxu0 %v7776
    %8694 = vmatprep.subr.mxu0 %v7784
    %8695 = vmatpush1.msra.mxu0 %v7783
    %8696 = vmatprep.subr.mxu0 %v7791
    %8697 = vmatpush1.msra.mxu0 %v7790
    %8698 = vmatprep.subr.mxu0 %v7798
    %8699 = vmatpush1.msra.mxu0 %v7797
    %8700 = vmatprep.subr.mxu0 %v7805
    %8701 = vmatpush1.msra.mxu0 %v7804
    %8702 = vmatprep.subr.mxu0 %v7812
    %8703 = vmatpush1.msra.mxu0 %v7811
    %8704 = vmatprep.subr.mxu0 %v7819
    %8705 = vmatpush1.msra.mxu0 %v7818
    %8706 = vmatprep.subr.mxu0 %v7826
    %8707 = vmatpush1.msra.mxu0 %v7825
    %8708 = vmatprep.subr.mxu0 %v7833
    %8709 = vmatpush1.msra.mxu0 %v7832
    %8710 = vmatprep.subr.mxu0 %v7840
    %8711 = vmatpush1.msra.mxu0 %v7839
    %8712 = vmatprep.subr.mxu0 %v7847
    %8713 = vmatpush1.msra.mxu0 %v7846
    %8714 = vmatprep.subr.mxu0 %v7854
    %8715 = vmatpush1.msra.mxu0 %v7853
    %8716 = vmatprep.subr.mxu0 %v7861
    %8717 = vmatpush1.msra.mxu0 %v7860
    %8718 = vmatprep.subr.mxu0 %v7868
    %8719 = vmatpush1.msra.mxu0 %v7867
    %8720 = vmatprep.subr.mxu0 0.0
    %8721 = vmatpush1.msra.mxu0 0.0
    %8722 = vmatprep.subr.mxu0 0.0
    %8723 = vmatpush1.msra.mxu0 0.0
    %8724 = vmatprep.subr.mxu0 0.0
    %8725 = vmatpush1.msra.mxu0 0.0
    %8726 = vmatprep.subr.mxu0 0.0
    %8727 = vmatpush1.msra.mxu0 0.0
    %8728 = vmatprep.subr.mxu0 0.0
    %8729 = vmatpush1.msra.mxu0 0.0
    %8730 = vmatprep.subr.mxu0 0.0
    %8731 = vmatpush1.msra.mxu0 0.0
    %8732 = vmatprep.subr.mxu0 0.0
    %8733 = vmatpush1.msra.mxu0 0.0
    %8734 = vmatprep.subr.mxu0 0.0
    %8735 = vmatpush1.msra.mxu0 0.0
    %8736 = vmatprep.subr.mxu0 0.0
    %8737 = vmatpush1.msra.mxu0 0.0
    %8738 = vmatprep.subr.mxu0 0.0
    %8739 = vmatpush1.msra.mxu0 0.0
    %8740 = vmatprep.subr.mxu0 0.0
    %8741 = vmatpush1.msra.mxu0 0.0
    %8742 = vmatprep.subr.mxu0 0.0
    %8743 = vmatpush1.msra.mxu0 0.0
    %8744 = vmatprep.subr.mxu0 0.0
    %8745 = vmatpush1.msra.mxu0 0.0
    %8746 = vmatprep.subr.mxu0 0.0
    %8747 = vmatpush1.msra.mxu0 0.0
    %8748 = vmatprep.subr.mxu0 0.0
    %8749 = vmatpush1.msra.mxu0 0.0
    %8750 = vmatprep.subr.mxu0 0.0
    %8751 = vmatpush1.msra.mxu0 0.0
    %8752 = vmatprep.mubr.f32.mxu0 0.0
    %8753 = vmatmul.mubr.f32.gmra.mrb[0].mxu0 %v7084
    %v8754 = vpop.f32.mrb[0].mxu0
    %v8755 = vadd.f32 %v8684, %v8754
    %v8756 = vpop.f32.mrb[0].mxu0
    %v8757 = vadd.f32 %v8686, %v8756
    %8758 = vdwg.mxu0
    %8759 = vmatprep.subr.mxu0 0.0
    %8760 = vmatpush1.msra.mxu0 %v7092
    %8761 = vmatprep.subr.mxu0 0.0
    %8762 = vmatpush1.msra.mxu0 %v7099
    %8763 = vmatprep.subr.mxu0 0.0
    %8764 = vmatpush1.msra.mxu0 %v7106
    %8765 = vmatprep.subr.mxu0 0.0
    %8766 = vmatpush1.msra.mxu0 %v7113
    %8767 = vmatprep.subr.mxu0 0.0
    %8768 = vmatpush1.msra.mxu0 %v7120
    %8769 = vmatprep.subr.mxu0 0.0
    %8770 = vmatpush1.msra.mxu0 %v7127
    %8771 = vmatprep.subr.mxu0 0.0
    %8772 = vmatpush1.msra.mxu0 %v7134
    %8773 = vmatprep.subr.mxu0 0.0
    %8774 = vmatpush1.msra.mxu0 %v7141
    %8775 = vmatprep.subr.mxu0 0.0
    %8776 = vmatpush1.msra.mxu0 %v7148
    %8777 = vmatprep.subr.mxu0 0.0
    %8778 = vmatpush1.msra.mxu0 %v7155
    %8779 = vmatprep.subr.mxu0 0.0
    %8780 = vmatpush1.msra.mxu0 %v7162
    %8781 = vmatprep.subr.mxu0 0.0
    %8782 = vmatpush1.msra.mxu0 %v7169
    %8783 = vmatprep.subr.mxu0 0.0
    %8784 = vmatpush1.msra.mxu0 %v7176
    %8785 = vmatprep.subr.mxu0 0.0
    %8786 = vmatpush1.msra.mxu0 %v7183
    %8787 = vmatprep.subr.mxu0 0.0
    %8788 = vmatpush1.msra.mxu0 %v7190
    %8789 = vmatprep.subr.mxu0 0.0
    %8790 = vmatpush1.msra.mxu0 %v7197
    %8791 = vmatprep.subr.mxu0 0.0
    %8792 = vmatpush1.msra.mxu0 %v7204
    %8793 = vmatprep.subr.mxu0 0.0
    %8794 = vmatpush1.msra.mxu0 %v7211
    %8795 = vmatprep.subr.mxu0 0.0
    %8796 = vmatpush1.msra.mxu0 %v7218
    %8797 = vmatprep.subr.mxu0 0.0
    %8798 = vmatpush1.msra.mxu0 %v7225
    %8799 = vmatprep.subr.mxu0 0.0
    %8800 = vmatpush1.msra.mxu0 %v7232
    %8801 = vmatprep.subr.mxu0 0.0
    %8802 = vmatpush1.msra.mxu0 %v7239
    %8803 = vmatprep.subr.mxu0 0.0
    %8804 = vmatpush1.msra.mxu0 %v7246
    %8805 = vmatprep.subr.mxu0 0.0
    %8806 = vmatpush1.msra.mxu0 %v7253
    %8807 = vmatprep.subr.mxu0 0.0
    %8808 = vmatpush1.msra.mxu0 %v7260
    %8809 = vmatprep.subr.mxu0 0.0
    %8810 = vmatpush1.msra.mxu0 %v7267
    %8811 = vmatprep.subr.mxu0 0.0
    %8812 = vmatpush1.msra.mxu0 %v7274
    %8813 = vmatprep.subr.mxu0 0.0
    %8814 = vmatpush1.msra.mxu0 %v7281
    %8815 = vmatprep.subr.mxu0 0.0
    %8816 = vmatpush1.msra.mxu0 %v7288
    %8817 = vmatprep.subr.mxu0 0.0
    %8818 = vmatpush1.msra.mxu0 %v7295
    %8819 = vmatprep.subr.mxu0 0.0
    %8820 = vmatpush1.msra.mxu0 %v7302
    %8821 = vmatprep.subr.mxu0 0.0
    %8822 = vmatpush1.msra.mxu0 %v7309
    %8823 = vmatprep.mubr.f32.mxu0 %v7079
    %8824 = vmatmul.mubr.f32.gmra.mrb[0].mxu0 %v7078
    %v8825 = vpop.f32.mrb[0].mxu0
    %v8826 = vadd.f32 %v7899, %v8825
    %v8827 = vpop.f32.mrb[0].mxu0
    %8828 = vdwg.mxu0
    %8829 = vmatprep.subr.mxu0 0.0
    %8830 = vmatpush1.msra.mxu0 %v7316
    %8831 = vmatprep.subr.mxu0 0.0
    %8832 = vmatpush1.msra.mxu0 %v7323
    %8833 = vmatprep.subr.mxu0 0.0
    %8834 = vmatpush1.msra.mxu0 %v7330
    %8835 = vmatprep.subr.mxu0 0.0
    %8836 = vmatpush1.msra.mxu0 %v7337
    %8837 = vmatprep.subr.mxu0 0.0
    %8838 = vmatpush1.msra.mxu0 %v7344
    %8839 = vmatprep.subr.mxu0 0.0
    %8840 = vmatpush1.msra.mxu0 %v7351
    %8841 = vmatprep.subr.mxu0 0.0
    %8842 = vmatpush1.msra.mxu0 %v7358
    %8843 = vmatprep.subr.mxu0 0.0
    %8844 = vmatpush1.msra.mxu0 %v7365
    %8845 = vmatprep.subr.mxu0 0.0
    %8846 = vmatpush1.msra.mxu0 %v7372
    %8847 = vmatprep.subr.mxu0 0.0
    %8848 = vmatpush1.msra.mxu0 %v7379
    %8849 = vmatprep.subr.mxu0 0.0
    %8850 = vmatpush1.msra.mxu0 %v7386
    %8851 = vmatprep.subr.mxu0 0.0
    %8852 = vmatpush1.msra.mxu0 %v7393
    %8853 = vmatprep.subr.mxu0 0.0
    %8854 = vmatpush1.msra.mxu0 %v7400
    %8855 = vmatprep.subr.mxu0 0.0
    %8856 = vmatpush1.msra.mxu0 %v7407
    %8857 = vmatprep.subr.mxu0 0.0
    %8858 = vmatpush1.msra.mxu0 %v7414
    %8859 = vmatprep.subr.mxu0 0.0
    %8860 = vmatpush1.msra.mxu0 %v7421
    %8861 = vmatprep.subr.mxu0 0.0
    %8862 = vmatpush1.msra.mxu0 %v7428
    %8863 = vmatprep.subr.mxu0 0.0
    %8864 = vmatpush1.msra.mxu0 %v7435
    %8865 = vmatprep.subr.mxu0 0.0
    %8866 = vmatpush1.msra.mxu0 %v7442
    %8867 = vmatprep.subr.mxu0 0.0
    %8868 = vmatpush1.msra.mxu0 %v7449
    %8869 = vmatprep.subr.mxu0 0.0
    %8870 = vmatpush1.msra.mxu0 %v7456
    %8871 = vmatprep.subr.mxu0 0.0
    %8872 = vmatpush1.msra.mxu0 %v7463
    %8873 = vmatprep.subr.mxu0 0.0
    %8874 = vmatpush1.msra.mxu0 %v7470
    %8875 = vmatprep.subr.mxu0 0.0
    %8876 = vmatpush1.msra.mxu0 %v7477
    %8877 = vmatprep.subr.mxu0 0.0
    %8878 = vmatpush1.msra.mxu0 %v7484
    %8879 = vmatprep.subr.mxu0 0.0
    %8880 = vmatpush1.msra.mxu0 %v7491
    %8881 = vmatprep.subr.mxu0 0.0
    %8882 = vmatpush1.msra.mxu0 %v7498
    %8883 = vmatprep.subr.mxu0 0.0
    %8884 = vmatpush1.msra.mxu0 %v7505
    %8885 = vmatprep.subr.mxu0 0.0
    %8886 = vmatpush1.msra.mxu0 %v7512
    %8887 = vmatprep.subr.mxu0 0.0
    %8888 = vmatpush1.msra.mxu0 %v7519
    %8889 = vmatprep.subr.mxu0 0.0
    %8890 = vmatpush1.msra.mxu0 %v7526
    %8891 = vmatprep.subr.mxu0 0.0
    %8892 = vmatpush1.msra.mxu0 %v7533
    %8893 = vmatprep.mubr.f32.mxu0 %v7081
    %8894 = vmatmul.mubr.f32.gmra.mrb[0].mxu0 %v7080
    %v8895 = vpop.f32.mrb[0].mxu0
    %v8896 = vadd.f32 %v8826, %v8895
    %v8897 = vpop.f32.mrb[0].mxu0
    %8898 = vdwg.mxu0
    %8899 = vmatprep.subr.mxu0 0.0
    %8900 = vmatpush1.msra.mxu0 %v7540
    %8901 = vmatprep.subr.mxu0 0.0
    %8902 = vmatpush1.msra.mxu0 %v7547
    %8903 = vmatprep.subr.mxu0 0.0
    %8904 = vmatpush1.msra.mxu0 %v7554
    %8905 = vmatprep.subr.mxu0 0.0
    %8906 = vmatpush1.msra.mxu0 %v7561
    %8907 = vmatprep.subr.mxu0 0.0
    %8908 = vmatpush1.msra.mxu0 %v7568
    %8909 = vmatprep.subr.mxu0 0.0
    %8910 = vmatpush1.msra.mxu0 %v7575
    %8911 = vmatprep.subr.mxu0 0.0
    %8912 = vmatpush1.msra.mxu0 %v7582
    %8913 = vmatprep.subr.mxu0 0.0
    %8914 = vmatpush1.msra.mxu0 %v7589
    %8915 = vmatprep.subr.mxu0 0.0
    %8916 = vmatpush1.msra.mxu0 %v7596
    %8917 = vmatprep.subr.mxu0 0.0
    %8918 = vmatpush1.msra.mxu0 %v7603
    %8919 = vmatprep.subr.mxu0 0.0
    %8920 = vmatpush1.msra.mxu0 %v7610
    %8921 = vmatprep.subr.mxu0 0.0
    %8922 = vmatpush1.msra.mxu0 %v7617
    %8923 = vmatprep.subr.mxu0 0.0
    %8924 = vmatpush1.msra.mxu0 %v7624
    %8925 = vmatprep.subr.mxu0 0.0
    %8926 = vmatpush1.msra.mxu0 %v7631
    %8927 = vmatprep.subr.mxu0 0.0
    %8928 = vmatpush1.msra.mxu0 %v7638
    %8929 = vmatprep.subr.mxu0 0.0
    %8930 = vmatpush1.msra.mxu0 %v7645
    %8931 = vmatprep.subr.mxu0 0.0
    %8932 = vmatpush1.msra.mxu0 %v7652
    %8933 = vmatprep.subr.mxu0 0.0
    %8934 = vmatpush1.msra.mxu0 %v7659
    %8935 = vmatprep.subr.mxu0 0.0
    %8936 = vmatpush1.msra.mxu0 %v7666
    %8937 = vmatprep.subr.mxu0 0.0
    %8938 = vmatpush1.msra.mxu0 %v7673
    %8939 = vmatprep.subr.mxu0 0.0
    %8940 = vmatpush1.msra.mxu0 %v7680
    %8941 = vmatprep.subr.mxu0 0.0
    %8942 = vmatpush1.msra.mxu0 %v7687
    %8943 = vmatprep.subr.mxu0 0.0
    %8944 = vmatpush1.msra.mxu0 %v7694
    %8945 = vmatprep.subr.mxu0 0.0
    %8946 = vmatpush1.msra.mxu0 %v7701
    %8947 = vmatprep.subr.mxu0 0.0
    %8948 = vmatpush1.msra.mxu0 %v7708
    %8949 = vmatprep.subr.mxu0 0.0
    %8950 = vmatpush1.msra.mxu0 %v7715
    %8951 = vmatprep.subr.mxu0 0.0
    %8952 = vmatpush1.msra.mxu0 %v7722
    %8953 = vmatprep.subr.mxu0 0.0
    %8954 = vmatpush1.msra.mxu0 %v7729
    %8955 = vmatprep.subr.mxu0 0.0
    %8956 = vmatpush1.msra.mxu0 %v7736
    %8957 = vmatprep.subr.mxu0 0.0
    %8958 = vmatpush1.msra.mxu0 %v7743
    %8959 = vmatprep.subr.mxu0 0.0
    %8960 = vmatpush1.msra.mxu0 %v7750
    %8961 = vmatprep.subr.mxu0 0.0
    %8962 = vmatpush1.msra.mxu0 %v7757
    %8963 = vmatprep.mubr.f32.mxu0 %v7083
    %8964 = vmatmul.mubr.f32.gmra.mrb[0].mxu0 %v7082
    %v8965 = vpop.f32.mrb[0].mxu0
    %v8966 = vadd.f32 %v8896, %v8965
    %v8967 = vpop.f32.mrb[0].mxu0
    %8968 = vdwg.mxu0
    %8969 = vmatprep.subr.mxu0 0.0
    %8970 = vmatpush1.msra.mxu0 %v7764
    %8971 = vmatprep.subr.mxu0 0.0
    %8972 = vmatpush1.msra.mxu0 %v7771
    %8973 = vmatprep.subr.mxu0 0.0
    %8974 = vmatpush1.msra.mxu0 %v7778
    %8975 = vmatprep.subr.mxu0 0.0
    %8976 = vmatpush1.msra.mxu0 %v7785
    %8977 = vmatprep.subr.mxu0 0.0
    %8978 = vmatpush1.msra.mxu0 %v7792
    %8979 = vmatprep.subr.mxu0 0.0
    %8980 = vmatpush1.msra.mxu0 %v7799
    %8981 = vmatprep.subr.mxu0 0.0
    %8982 = vmatpush1.msra.mxu0 %v7806
    %8983 = vmatprep.subr.mxu0 0.0
    %8984 = vmatpush1.msra.mxu0 %v7813
    %8985 = vmatprep.subr.mxu0 0.0
    %8986 = vmatpush1.msra.mxu0 %v7820
    %8987 = vmatprep.subr.mxu0 0.0
    %8988 = vmatpush1.msra.mxu0 %v7827
    %8989 = vmatprep.subr.mxu0 0.0
    %8990 = vmatpush1.msra.mxu0 %v7834
    %8991 = vmatprep.subr.mxu0 0.0
    %8992 = vmatpush1.msra.mxu0 %v7841
    %8993 = vmatprep.subr.mxu0 0.0
    %8994 = vmatpush1.msra.mxu0 %v7848
    %8995 = vmatprep.subr.mxu0 0.0
    %8996 = vmatpush1.msra.mxu0 %v7855
    %8997 = vmatprep.subr.mxu0 0.0
    %8998 = vmatpush1.msra.mxu0 %v7862
    %8999 = vmatprep.subr.mxu0 0.0
    %9000 = vmatpush1.msra.mxu0 %v7869
    %9001 = vmatprep.subr.mxu0 0.0
    %9002 = vmatpush1.msra.mxu0 0.0
    %9003 = vmatprep.subr.mxu0 0.0
    %9004 = vmatpush1.msra.mxu0 0.0
    %9005 = vmatprep.subr.mxu0 0.0
    %9006 = vmatpush1.msra.mxu0 0.0
    %9007 = vmatprep.subr.mxu0 0.0
    %9008 = vmatpush1.msra.mxu0 0.0
    %9009 = vmatprep.subr.mxu0 0.0
    %9010 = vmatpush1.msra.mxu0 0.0
    %9011 = vmatprep.subr.mxu0 0.0
    %9012 = vmatpush1.msra.mxu0 0.0
    %9013 = vmatprep.subr.mxu0 0.0
    %9014 = vmatpush1.msra.mxu0 0.0
    %9015 = vmatprep.subr.mxu0 0.0
    %9016 = vmatpush1.msra.mxu0 0.0
    %9017 = vmatprep.subr.mxu0 0.0
    %9018 = vmatpush1.msra.mxu0 0.0
    %9019 = vmatprep.subr.mxu0 0.0
    %9020 = vmatpush1.msra.mxu0 0.0
    %9021 = vmatprep.subr.mxu0 0.0
    %9022 = vmatpush1.msra.mxu0 0.0
    %9023 = vmatprep.subr.mxu0 0.0
    %9024 = vmatpush1.msra.mxu0 0.0
    %9025 = vmatprep.subr.mxu0 0.0
    %9026 = vmatpush1.msra.mxu0 0.0
    %9027 = vmatprep.subr.mxu0 0.0
    %9028 = vmatpush1.msra.mxu0 0.0
    %9029 = vmatprep.subr.mxu0 0.0
    %9030 = vmatpush1.msra.mxu0 0.0
    %9031 = vmatprep.subr.mxu0 0.0
    %9032 = vmatpush1.msra.mxu0 0.0
    %9033 = vmatprep.mubr.f32.mxu0 0.0
    %9034 = vmatmul.mubr.f32.gmra.mrb[0].mxu0 %v7084
    %v9035 = vpop.f32.mrb[0].mxu0
    %v9036 = vadd.f32 %v8966, %v9035
    %v9037 = vpop.f32.mrb[0].mxu0
    %9038 = vdwg.mxu0
    %vm9039 = vcmp.gt.f32.partialorder %v8187, 0.0
    %vm9040 = vcmp.gt.f32.partialorder %v8189, 0.0
    %vm9041 = vcmp.gt.f32.partialorder %v8471, 0.0
    %vm9042 = vcmp.gt.f32.partialorder %v8473, 0.0
    %vm9043 = vcmp.gt.f32.partialorder %v8755, 0.0
    %vm9044 = vcmp.gt.f32.partialorder %v8757, 0.0
    %vm9045 = vcmp.gt.f32.partialorder %v9036, 0.0
    %v9046 = vstv %s7085
    %v9047 = vmul.f32 %v9046, %v8187
    %v9048 = vmul.f32 %v9046, %v8189
    %v9049 = vmul.f32 %v9046, %v8471
    %v9050 = vmul.f32 %v9046, %v8473
    %v9051 = vmul.f32 %v9046, %v8755
    %v9052 = vmul.f32 %v9046, %v8757
    %v9053 = vmul.f32 %v9046, %v9036
    %v9054 = vsel %vm9039, %v8187, %v9047
    %v9055 = vsel %vm9040, %v8189, %v9048
    %v9056 = vsel %vm9041, %v8471, %v9049
    %v9057 = vsel %vm9042, %v8473, %v9050
    %v9058 = vsel %vm9043, %v8755, %v9051
    %v9059 = vsel %vm9044, %v8757, %v9052
    %v9060 = vsel %vm9045, %v9036, %v9053
    %s9061 = sld [smem:[#allocation2 + $0x3]]
    %v9062 = vld [vmem:[#allocation14] sm:$0xff]
    %v9063 = vld [vmem:[#allocation14 + $0x8] sm:$0xff]
    %v9064 = vld [vmem:[#allocation14 + $0x10] sm:$0xff]
    %v9065 = vld [vmem:[#allocation14 + $0x18] sm:$0xff]
    %v9066 = vld [vmem:[#allocation14 + $0x20] sm:$0xff]
    %v9067 = vld [vmem:[#allocation14 + $0x28] sm:$0xff]
    %v9068 = vld [vmem:[#allocation14 + $0x30] sm:$0xff]
    %v9069 = vld [vmem:[#allocation14 + $0x38] sm:$0xff]
    %v9070 = vld [vmem:[#allocation14 + $0x40] sm:$0xff]
    %v9071 = vld [vmem:[#allocation14 + $0x48] sm:$0xff]
    %v9072 = vld [vmem:[#allocation14 + $0x50] sm:$0xff]
    %v9073 = vld [vmem:[#allocation14 + $0x58] sm:$0xff]
    %v9074 = vld [vmem:[#allocation14 + $0x60] sm:$0xff]
    %v9075 = vld [vmem:[#allocation14 + $0x68] sm:$0xff]
    %v9076 = vld [vmem:[#allocation14 + $0x70] sm:$0xff]
    %v9077 = vld [vmem:[#allocation14 + $0x78] sm:$0xff]
    %v9078 = vld [vmem:[#allocation14 + $0x80] sm:$0xff]
    %v9079 = vld [vmem:[#allocation14 + $0x88] sm:$0xff]
    %v9080 = vld [vmem:[#allocation14 + $0x90] sm:$0xff]
    %v9081 = vld [vmem:[#allocation14 + $0x98] sm:$0xff]
    %v9082 = vld [vmem:[#allocation14 + $0xa0] sm:$0xff]
    %v9083 = vld [vmem:[#allocation14 + $0xa8] sm:$0xff]
    %v9084 = vld [vmem:[#allocation14 + $0xb0] sm:$0xff]
    %v9085 = vld [vmem:[#allocation14 + $0xb8] sm:$0xff]
    %v9086 = vld [vmem:[#allocation14 + $0xc0] sm:$0xff]
    %v9087 = vld [vmem:[#allocation14 + $0xc8] sm:$0xff]
    %v9088 = vld [vmem:[#allocation14 + $0xd0] sm:$0xff]
    %v9089 = vld [vmem:[#allocation14 + $0xd8] sm:$0xff]
    %v9090 = vld [vmem:[#allocation14 + $0xe0] sm:$0xff]
    %v9091 = vld [vmem:[#allocation14 + $0xe8] sm:$0xff]
    %v9092 = vld [vmem:[#allocation14 + $0xf0] sm:$0xff]
    %v9093 = vld [vmem:[#allocation14 + $0xf8] sm:$0xff]
    %v9094 = vld [vmem:[#allocation14 + $0x100] sm:$0xff]
    %v9095 = vld [vmem:[#allocation14 + $0x108] sm:$0xff]
    %v9096 = vld [vmem:[#allocation14 + $0x110] sm:$0xff]
    %v9097 = vld [vmem:[#allocation14 + $0x118] sm:$0xff]
    %v9098 = vld [vmem:[#allocation14 + $0x120] sm:$0xff]
    %v9099 = vld [vmem:[#allocation14 + $0x128] sm:$0xff]
    %v9100 = vld [vmem:[#allocation14 + $0x130] sm:$0xff]
    %v9101 = vld [vmem:[#allocation14 + $0x138] sm:$0xff]
    %v9102 = vld [vmem:[#allocation14 + $0x140] sm:$0xff]
    %v9103 = vld [vmem:[#allocation14 + $0x148] sm:$0xff]
    %v9104 = vld [vmem:[#allocation14 + $0x150] sm:$0xff]
    %v9105 = vld [vmem:[#allocation14 + $0x158] sm:$0xff]
    %v9106 = vld [vmem:[#allocation14 + $0x160] sm:$0xff]
    %v9107 = vld [vmem:[#allocation14 + $0x168] sm:$0xff]
    %v9108 = vld [vmem:[#allocation14 + $0x170] sm:$0xff]
    %v9109 = vld [vmem:[#allocation14 + $0x178] sm:$0xff]
    %v9110 = vld [vmem:[#allocation14 + $0x180] sm:$0xff]
    %v9111 = vld [vmem:[#allocation14 + $0x188] sm:$0xff]
    %v9112 = vld [vmem:[#allocation14 + $0x190] sm:$0xff]
    %v9113 = vld [vmem:[#allocation14 + $0x198] sm:$0xff]
    %v9114 = vld [vmem:[#allocation14 + $0x1a0] sm:$0xff]
    %v9115 = vld [vmem:[#allocation14 + $0x1a8] sm:$0xff]
    %v9116 = vld [vmem:[#allocation14 + $0x1b0] sm:$0xff]
    %v9117 = vld [vmem:[#allocation14 + $0x1b8] sm:$0xff]
    %v9118 = vld [vmem:[#allocation14 + $0x1c0] sm:$0xff]
    %v9119 = vld [vmem:[#allocation14 + $0x1c8] sm:$0xff]
    %v9120 = vld [vmem:[#allocation14 + $0x1d0] sm:$0xff]
    %v9121 = vld [vmem:[#allocation14 + $0x1d8] sm:$0xff]
    %v9122 = vld [vmem:[#allocation14 + $0x1e0] sm:$0xff]
    %v9123 = vld [vmem:[#allocation14 + $0x1e8] sm:$0xff]
    %v9124 = vld [vmem:[#allocation14 + $0x1f0] sm:$0xff]
    %v9125 = vld [vmem:[#allocation14 + $0x1f8] sm:$0xff]
    %v9126 = vld [vmem:[#allocation14 + $0x200] sm:$0xff]
    %v9127 = vld [vmem:[#allocation14 + $0x208] sm:$0xff]
    %v9128 = vld [vmem:[#allocation14 + $0x210] sm:$0xff]
    %v9129 = vld [vmem:[#allocation14 + $0x218] sm:$0xff]
    %v9130 = vld [vmem:[#allocation14 + $0x220] sm:$0xff]
    %v9131 = vld [vmem:[#allocation14 + $0x228] sm:$0xff]
    %v9132 = vld [vmem:[#allocation14 + $0x230] sm:$0xff]
    %v9133 = vld [vmem:[#allocation14 + $0x238] sm:$0xff]
    %v9134 = vld [vmem:[#allocation14 + $0x240] sm:$0xff]
    %v9135 = vld [vmem:[#allocation14 + $0x248] sm:$0xff]
    %v9136 = vld [vmem:[#allocation14 + $0x250] sm:$0xff]
    %v9137 = vld [vmem:[#allocation14 + $0x258] sm:$0xff]
    %v9138 = vld [vmem:[#allocation14 + $0x260] sm:$0xff]
    %v9139 = vld [vmem:[#allocation14 + $0x268] sm:$0xff]
    %v9140 = vld [vmem:[#allocation14 + $0x270] sm:$0xff]
    %v9141 = vld [vmem:[#allocation14 + $0x278] sm:$0xff]
    %v9142 = vld [vmem:[#allocation14 + $0x280] sm:$0xff]
    %v9143 = vld [vmem:[#allocation14 + $0x288] sm:$0xff]
    %v9144 = vld [vmem:[#allocation14 + $0x290] sm:$0xff]
    %v9145 = vld [vmem:[#allocation14 + $0x298] sm:$0xff]
    %v9146 = vld [vmem:[#allocation14 + $0x2a0] sm:$0xff]
    %v9147 = vld [vmem:[#allocation14 + $0x2a8] sm:$0xff]
    %v9148 = vld [vmem:[#allocation14 + $0x2b0] sm:$0xff]
    %v9149 = vld [vmem:[#allocation14 + $0x2b8] sm:$0xff]
    %v9150 = vld [vmem:[#allocation14 + $0x2c0] sm:$0xff]
    %v9151 = vld [vmem:[#allocation14 + $0x2c8] sm:$0xff]
    %v9152 = vld [vmem:[#allocation14 + $0x2d0] sm:$0xff]
    %v9153 = vld [vmem:[#allocation14 + $0x2d8] sm:$0xff]
    %v9154 = vld [vmem:[#allocation14 + $0x2e0] sm:$0xff]
    %v9155 = vld [vmem:[#allocation14 + $0x2e8] sm:$0xff]
    %v9156 = vld [vmem:[#allocation14 + $0x2f0] sm:$0xff]
    %v9157 = vld [vmem:[#allocation14 + $0x2f8] sm:$0xff]
    %v9158 = vld [vmem:[#allocation14 + $0x300] sm:$0xff]
    %v9159 = vld [vmem:[#allocation14 + $0x308] sm:$0xff]
    %v9160 = vld [vmem:[#allocation14 + $0x310] sm:$0xff]
    %v9161 = vld [vmem:[#allocation14 + $0x318] sm:$0xff]
    %v9162 = vld [vmem:[#allocation14 + $0x320] sm:$0xff]
    %v9163 = vld [vmem:[#allocation14 + $0x328] sm:$0xff]
    %v9164 = vld [vmem:[#allocation14 + $0x330] sm:$0xff]
    %v9165 = vld [vmem:[#allocation14 + $0x338] sm:$0xff]
    %v9166 = vld [vmem:[#allocation14 + $0x340] sm:$0xff]
    %v9167 = vld [vmem:[#allocation14 + $0x348] sm:$0xff]
    %v9168 = vld [vmem:[#allocation14 + $0x350] sm:$0xff]
    %v9169 = vld [vmem:[#allocation14 + $0x358] sm:$0xff]
    %v9170 = vld [vmem:[#allocation14 + $0x360] sm:$0xff]
    %v9171 = vld [vmem:[#allocation14 + $0x368] sm:$0xff]
    %v9172 = vld [vmem:[#allocation14 + $0x370] sm:$0xff]
    %v9173 = vld [vmem:[#allocation14 + $0x378] sm:$0xff]
    %v9174 = vld [vmem:[#allocation14 + $0x380] sm:$0xff]
    %v9175 = vld [vmem:[#allocation14 + $0x388] sm:$0xff]
    %v9176 = vld [vmem:[#allocation14 + $0x390] sm:$0xff]
    %v9177 = vld [vmem:[#allocation14 + $0x398] sm:$0xff]
    %v9178 = vld [vmem:[#allocation14 + $0x3a0] sm:$0xff]
    %v9179 = vld [vmem:[#allocation14 + $0x3a8] sm:$0xff]
    %v9180 = vld [vmem:[#allocation14 + $0x3b0] sm:$0xff]
    %v9181 = vld [vmem:[#allocation14 + $0x3b8] sm:$0xff]
    %v9182 = vld [vmem:[#allocation14 + $0x3c0] sm:$0xff]
    %v9183 = vld [vmem:[#allocation14 + $0x3c8] sm:$0xff]
    %v9184 = vld [vmem:[#allocation14 + $0x3d0] sm:$0xff]
    %v9185 = vld [vmem:[#allocation14 + $0x3d8] sm:$0xff]
    %v9186 = vld [vmem:[#allocation14 + $0x3e0] sm:$0xff]
    %v9187 = vld [vmem:[#allocation14 + $0x3e8] sm:$0xff]
    %v9188 = vld [vmem:[#allocation14 + $0x3f0] sm:$0xff]
    %v9189 = vld [vmem:[#allocation14 + $0x3f8] sm:$0xff]
    %v9190 = vld [vmem:[#allocation14 + $0x400] sm:$0xff]
    %v9191 = vld [vmem:[#allocation14 + $0x408] sm:$0xff]
    %v9192 = vld [vmem:[#allocation14 + $0x410] sm:$0xff]
    %v9193 = vld [vmem:[#allocation14 + $0x418] sm:$0xff]
    %v9194 = vld [vmem:[#allocation14 + $0x420] sm:$0xff]
    %v9195 = vld [vmem:[#allocation14 + $0x428] sm:$0xff]
    %v9196 = vld [vmem:[#allocation14 + $0x430] sm:$0xff]
    %v9197 = vld [vmem:[#allocation14 + $0x438] sm:$0xff]
    %v9198 = vld [vmem:[#allocation14 + $0x440] sm:$0xff]
    %v9199 = vld [vmem:[#allocation14 + $0x448] sm:$0xff]
    %v9200 = vld [vmem:[#allocation14 + $0x450] sm:$0xff]
    %v9201 = vld [vmem:[#allocation14 + $0x458] sm:$0xff]
    %v9202 = vld [vmem:[#allocation14 + $0x460] sm:$0xff]
    %v9203 = vld [vmem:[#allocation14 + $0x468] sm:$0xff]
    %v9204 = vld [vmem:[#allocation14 + $0x470] sm:$0xff]
    %v9205 = vld [vmem:[#allocation14 + $0x478] sm:$0xff]
    %v9206 = vld [vmem:[#allocation14 + $0x480] sm:$0xff]
    %v9207 = vld [vmem:[#allocation14 + $0x488] sm:$0xff]
    %v9208 = vld [vmem:[#allocation14 + $0x490] sm:$0xff]
    %v9209 = vld [vmem:[#allocation14 + $0x498] sm:$0xff]
    %v9210 = vld [vmem:[#allocation14 + $0x4a0] sm:$0xff]
    %v9211 = vld [vmem:[#allocation14 + $0x4a8] sm:$0xff]
    %v9212 = vld [vmem:[#allocation14 + $0x4b0] sm:$0xff]
    %v9213 = vld [vmem:[#allocation14 + $0x4b8] sm:$0xff]
    %v9214 = vld [vmem:[#allocation14 + $0x4c0] sm:$0xff]
    %v9215 = vld [vmem:[#allocation14 + $0x4c8] sm:$0xff]
    %v9216 = vld [vmem:[#allocation14 + $0x4d0] sm:$0xff]
    %v9217 = vld [vmem:[#allocation14 + $0x4d8] sm:$0xff]
    %v9218 = vld [vmem:[#allocation14 + $0x4e0] sm:$0xff]
    %v9219 = vld [vmem:[#allocation14 + $0x4e8] sm:$0xff]
    %v9220 = vld [vmem:[#allocation14 + $0x4f0] sm:$0xff]
    %v9221 = vld [vmem:[#allocation14 + $0x4f8] sm:$0xff]
    %v9222 = vld [vmem:[#allocation14 + $0x500] sm:$0xff]
    %v9223 = vld [vmem:[#allocation14 + $0x508] sm:$0xff]
    %v9224 = vld [vmem:[#allocation14 + $0x510] sm:$0xff]
    %v9225 = vld [vmem:[#allocation14 + $0x518] sm:$0xff]
    %v9226 = vld [vmem:[#allocation14 + $0x520] sm:$0xff]
    %v9227 = vld [vmem:[#allocation14 + $0x528] sm:$0xff]
    %v9228 = vld [vmem:[#allocation14 + $0x530] sm:$0xff]
    %v9229 = vld [vmem:[#allocation14 + $0x538] sm:$0xff]
    %v9230 = vld [vmem:[#allocation14 + $0x540] sm:$0xff]
    %v9231 = vld [vmem:[#allocation14 + $0x548] sm:$0xff]
    %v9232 = vld [vmem:[#allocation14 + $0x550] sm:$0xff]
    %v9233 = vld [vmem:[#allocation14 + $0x558] sm:$0xff]
    %v9234 = vld [vmem:[#allocation14 + $0x560] sm:$0xff]
    %v9235 = vld [vmem:[#allocation14 + $0x568] sm:$0xff]
    %v9236 = vld [vmem:[#allocation14 + $0x570] sm:$0xff]
    %v9237 = vld [vmem:[#allocation14 + $0x578] sm:$0xff]
    %v9238 = vld [vmem:[#allocation14 + $0x580] sm:$0xff]
    %v9239 = vld [vmem:[#allocation14 + $0x588] sm:$0xff]
    %v9240 = vld [vmem:[#allocation14 + $0x590] sm:$0xff]
    %v9241 = vld [vmem:[#allocation14 + $0x598] sm:$0xff]
    %v9242 = vld [vmem:[#allocation14 + $0x5a0] sm:$0xff]
    %v9243 = vld [vmem:[#allocation14 + $0x5a8] sm:$0xff]
    %v9244 = vld [vmem:[#allocation14 + $0x5b0] sm:$0xff]
    %v9245 = vld [vmem:[#allocation14 + $0x5b8] sm:$0xff]
    %v9246 = vld [vmem:[#allocation14 + $0x5c0] sm:$0xff]
    %v9247 = vld [vmem:[#allocation14 + $0x5c8] sm:$0xff]
    %v9248 = vld [vmem:[#allocation14 + $0x5d0] sm:$0xff]
    %v9249 = vld [vmem:[#allocation14 + $0x5d8] sm:$0xff]
    %v9250 = vld [vmem:[#allocation14 + $0x5e0] sm:$0xff]
    %v9251 = vld [vmem:[#allocation14 + $0x5e8] sm:$0xff]
    %v9252 = vld [vmem:[#allocation14 + $0x5f0] sm:$0xff]
    %v9253 = vld [vmem:[#allocation14 + $0x5f8] sm:$0xff]
    %v9254 = vld [vmem:[#allocation14 + $0x600] sm:$0xff]
    %v9255 = vld [vmem:[#allocation14 + $0x608] sm:$0xff]
    %v9256 = vld [vmem:[#allocation14 + $0x610] sm:$0xff]
    %v9257 = vld [vmem:[#allocation14 + $0x618] sm:$0xff]
    %v9258 = vld [vmem:[#allocation14 + $0x620] sm:$0xff]
    %v9259 = vld [vmem:[#allocation14 + $0x628] sm:$0xff]
    %v9260 = vld [vmem:[#allocation14 + $0x630] sm:$0xff]
    %v9261 = vld [vmem:[#allocation14 + $0x638] sm:$0xff]
    %v9262 = vld [vmem:[#allocation14 + $0x640] sm:$0xff]
    %v9263 = vld [vmem:[#allocation14 + $0x648] sm:$0xff]
    %v9264 = vld [vmem:[#allocation14 + $0x650] sm:$0xff]
    %v9265 = vld [vmem:[#allocation14 + $0x658] sm:$0xff]
    %v9266 = vld [vmem:[#allocation14 + $0x660] sm:$0xff]
    %v9267 = vld [vmem:[#allocation14 + $0x668] sm:$0xff]
    %v9268 = vld [vmem:[#allocation14 + $0x670] sm:$0xff]
    %v9269 = vld [vmem:[#allocation14 + $0x678] sm:$0xff]
    %v9270 = vld [vmem:[#allocation14 + $0x680] sm:$0xff]
    %v9271 = vld [vmem:[#allocation14 + $0x688] sm:$0xff]
    %v9272 = vld [vmem:[#allocation14 + $0x690] sm:$0xff]
    %v9273 = vld [vmem:[#allocation14 + $0x698] sm:$0xff]
    %v9274 = vld [vmem:[#allocation14 + $0x6a0] sm:$0xff]
    %v9275 = vld [vmem:[#allocation14 + $0x6a8] sm:$0xff]
    %v9276 = vld [vmem:[#allocation14 + $0x6b0] sm:$0xff]
    %v9277 = vld [vmem:[#allocation14 + $0x6b8] sm:$0xff]
    %v9278 = vld [vmem:[#allocation14 + $0x6c0] sm:$0xff]
    %v9279 = vld [vmem:[#allocation14 + $0x6c8] sm:$0xff]
    %v9280 = vld [vmem:[#allocation14 + $0x6d0] sm:$0xff]
    %v9281 = vld [vmem:[#allocation14 + $0x6d8] sm:$0xff]
    %v9282 = vld [vmem:[#allocation14 + $0x6e0] sm:$0xff]
    %v9283 = vld [vmem:[#allocation14 + $0x6e8] sm:$0xff]
    %v9284 = vld [vmem:[#allocation14 + $0x6f0] sm:$0xff]
    %v9285 = vld [vmem:[#allocation14 + $0x6f8] sm:$0xff]
    %v9286 = vld [vmem:[#allocation15] sm:$0x3]
    %v9288 = vlaneseq
    %v9289 = vshrl.u32 %v9288, 7
    %v9290 = vsub.s32 0, %v9289
    %v9291 = vrot.slane %v9286, %v9290
    %v9292 = vlaneseq
    %v9293 = vshrl.u32 %v9292, 7
    %v9294 = vsub.s32 1, %v9293
    %v9295 = vrot.slane %v9286, %v9294
    %9298 = vmatprep.subr.mxu0 %v9063
    %9299 = vmatpush1.msra.mxu0 %v9062
    %9300 = vmatprep.subr.mxu0 %v9065
    %9301 = vmatpush1.msra.mxu0 %v9064
    %9302 = vmatprep.subr.mxu0 %v9067
    %9303 = vmatpush1.msra.mxu0 %v9066
    %9304 = vmatprep.subr.mxu0 %v9069
    %9305 = vmatpush1.msra.mxu0 %v9068
    %9306 = vmatprep.subr.mxu0 %v9071
    %9307 = vmatpush1.msra.mxu0 %v9070
    %9308 = vmatprep.subr.mxu0 %v9073
    %9309 = vmatpush1.msra.mxu0 %v9072
    %9310 = vmatprep.subr.mxu0 %v9075
    %9311 = vmatpush1.msra.mxu0 %v9074
    %9312 = vmatprep.subr.mxu0 %v9077
    %9313 = vmatpush1.msra.mxu0 %v9076
    %9314 = vmatprep.subr.mxu0 %v9079
    %9315 = vmatpush1.msra.mxu0 %v9078
    %9316 = vmatprep.subr.mxu0 %v9081
    %9317 = vmatpush1.msra.mxu0 %v9080
    %9318 = vmatprep.subr.mxu0 %v9083
    %9319 = vmatpush1.msra.mxu0 %v9082
    %9320 = vmatprep.subr.mxu0 %v9085
    %9321 = vmatpush1.msra.mxu0 %v9084
    %9322 = vmatprep.subr.mxu0 %v9087
    %9323 = vmatpush1.msra.mxu0 %v9086
    %9324 = vmatprep.subr.mxu0 %v9089
    %9325 = vmatpush1.msra.mxu0 %v9088
    %9326 = vmatprep.subr.mxu0 %v9091
    %9327 = vmatpush1.msra.mxu0 %v9090
    %9328 = vmatprep.subr.mxu0 %v9093
    %9329 = vmatpush1.msra.mxu0 %v9092
    %9330 = vmatprep.subr.mxu0 %v9095
    %9331 = vmatpush1.msra.mxu0 %v9094
    %9332 = vmatprep.subr.mxu0 %v9097
    %9333 = vmatpush1.msra.mxu0 %v9096
    %9334 = vmatprep.subr.mxu0 %v9099
    %9335 = vmatpush1.msra.mxu0 %v9098
    %9336 = vmatprep.subr.mxu0 %v9101
    %9337 = vmatpush1.msra.mxu0 %v9100
    %9338 = vmatprep.subr.mxu0 %v9103
    %9339 = vmatpush1.msra.mxu0 %v9102
    %9340 = vmatprep.subr.mxu0 %v9105
    %9341 = vmatpush1.msra.mxu0 %v9104
    %9342 = vmatprep.subr.mxu0 %v9107
    %9343 = vmatpush1.msra.mxu0 %v9106
    %9344 = vmatprep.subr.mxu0 %v9109
    %9345 = vmatpush1.msra.mxu0 %v9108
    %9346 = vmatprep.subr.mxu0 %v9111
    %9347 = vmatpush1.msra.mxu0 %v9110
    %9348 = vmatprep.subr.mxu0 %v9113
    %9349 = vmatpush1.msra.mxu0 %v9112
    %9350 = vmatprep.subr.mxu0 %v9115
    %9351 = vmatpush1.msra.mxu0 %v9114
    %9352 = vmatprep.subr.mxu0 %v9117
    %9353 = vmatpush1.msra.mxu0 %v9116
    %9354 = vmatprep.subr.mxu0 %v9119
    %9355 = vmatpush1.msra.mxu0 %v9118
    %9356 = vmatprep.subr.mxu0 %v9121
    %9357 = vmatpush1.msra.mxu0 %v9120
    %9358 = vmatprep.subr.mxu0 %v9123
    %9359 = vmatpush1.msra.mxu0 %v9122
    %9360 = vmatprep.subr.mxu0 %v9125
    %9361 = vmatpush1.msra.mxu0 %v9124
    %9362 = vmatprep.mubr.f32.mxu0 %v9055
    %9363 = vmatmul.mubr.f32.gmra.mrb[0].mxu0 %v9054
    %v9364 = vpop.f32.mrb[0].mxu0
    %v9365 = vadd.f32 %v9291, %v9364
    %v9366 = vpop.f32.mrb[0].mxu0
    %v9367 = vadd.f32 %v9295, %v9366
    %9368 = vdwg.mxu0
    %9369 = vmatprep.subr.mxu0 %v9127
    %9370 = vmatpush1.msra.mxu0 %v9126
    %9371 = vmatprep.subr.mxu0 %v9129
    %9372 = vmatpush1.msra.mxu0 %v9128
    %9373 = vmatprep.subr.mxu0 %v9131
    %9374 = vmatpush1.msra.mxu0 %v9130
    %9375 = vmatprep.subr.mxu0 %v9133
    %9376 = vmatpush1.msra.mxu0 %v9132
    %9377 = vmatprep.subr.mxu0 %v9135
    %9378 = vmatpush1.msra.mxu0 %v9134
    %9379 = vmatprep.subr.mxu0 %v9137
    %9380 = vmatpush1.msra.mxu0 %v9136
    %9381 = vmatprep.subr.mxu0 %v9139
    %9382 = vmatpush1.msra.mxu0 %v9138
    %9383 = vmatprep.subr.mxu0 %v9141
    %9384 = vmatpush1.msra.mxu0 %v9140
    %9385 = vmatprep.subr.mxu0 %v9143
    %9386 = vmatpush1.msra.mxu0 %v9142
    %9387 = vmatprep.subr.mxu0 %v9145
    %9388 = vmatpush1.msra.mxu0 %v9144
    %9389 = vmatprep.subr.mxu0 %v9147
    %9390 = vmatpush1.msra.mxu0 %v9146
    %9391 = vmatprep.subr.mxu0 %v9149
    %9392 = vmatpush1.msra.mxu0 %v9148
    %9393 = vmatprep.subr.mxu0 %v9151
    %9394 = vmatpush1.msra.mxu0 %v9150
    %9395 = vmatprep.subr.mxu0 %v9153
    %9396 = vmatpush1.msra.mxu0 %v9152
    %9397 = vmatprep.subr.mxu0 %v9155
    %9398 = vmatpush1.msra.mxu0 %v9154
    %9399 = vmatprep.subr.mxu0 %v9157
    %9400 = vmatpush1.msra.mxu0 %v9156
    %9401 = vmatprep.subr.mxu0 %v9159
    %9402 = vmatpush1.msra.mxu0 %v9158
    %9403 = vmatprep.subr.mxu0 %v9161
    %9404 = vmatpush1.msra.mxu0 %v9160
    %9405 = vmatprep.subr.mxu0 %v9163
    %9406 = vmatpush1.msra.mxu0 %v9162
    %9407 = vmatprep.subr.mxu0 %v9165
    %9408 = vmatpush1.msra.mxu0 %v9164
    %9409 = vmatprep.subr.mxu0 %v9167
    %9410 = vmatpush1.msra.mxu0 %v9166
    %9411 = vmatprep.subr.mxu0 %v9169
    %9412 = vmatpush1.msra.mxu0 %v9168
    %9413 = vmatprep.subr.mxu0 %v9171
    %9414 = vmatpush1.msra.mxu0 %v9170
    %9415 = vmatprep.subr.mxu0 %v9173
    %9416 = vmatpush1.msra.mxu0 %v9172
    %9417 = vmatprep.subr.mxu0 %v9175
    %9418 = vmatpush1.msra.mxu0 %v9174
    %9419 = vmatprep.subr.mxu0 %v9177
    %9420 = vmatpush1.msra.mxu0 %v9176
    %9421 = vmatprep.subr.mxu0 %v9179
    %9422 = vmatpush1.msra.mxu0 %v9178
    %9423 = vmatprep.subr.mxu0 %v9181
    %9424 = vmatpush1.msra.mxu0 %v9180
    %9425 = vmatprep.subr.mxu0 %v9183
    %9426 = vmatpush1.msra.mxu0 %v9182
    %9427 = vmatprep.subr.mxu0 %v9185
    %9428 = vmatpush1.msra.mxu0 %v9184
    %9429 = vmatprep.subr.mxu0 %v9187
    %9430 = vmatpush1.msra.mxu0 %v9186
    %9431 = vmatprep.subr.mxu0 %v9189
    %9432 = vmatpush1.msra.mxu0 %v9188
    %9433 = vmatprep.mubr.f32.mxu0 %v9057
    %9434 = vmatmul.mubr.f32.gmra.mrb[0].mxu0 %v9056
    %v9435 = vpop.f32.mrb[0].mxu0
    %v9436 = vadd.f32 %v9365, %v9435
    %v9437 = vpop.f32.mrb[0].mxu0
    %v9438 = vadd.f32 %v9367, %v9437
    %9439 = vdwg.mxu0
    %9440 = vmatprep.subr.mxu0 %v9191
    %9441 = vmatpush1.msra.mxu0 %v9190
    %9442 = vmatprep.subr.mxu0 %v9193
    %9443 = vmatpush1.msra.mxu0 %v9192
    %9444 = vmatprep.subr.mxu0 %v9195
    %9445 = vmatpush1.msra.mxu0 %v9194
    %9446 = vmatprep.subr.mxu0 %v9197
    %9447 = vmatpush1.msra.mxu0 %v9196
    %9448 = vmatprep.subr.mxu0 %v9199
    %9449 = vmatpush1.msra.mxu0 %v9198
    %9450 = vmatprep.subr.mxu0 %v9201
    %9451 = vmatpush1.msra.mxu0 %v9200
    %9452 = vmatprep.subr.mxu0 %v9203
    %9453 = vmatpush1.msra.mxu0 %v9202
    %9454 = vmatprep.subr.mxu0 %v9205
    %9455 = vmatpush1.msra.mxu0 %v9204
    %9456 = vmatprep.subr.mxu0 %v9207
    %9457 = vmatpush1.msra.mxu0 %v9206
    %9458 = vmatprep.subr.mxu0 %v9209
    %9459 = vmatpush1.msra.mxu0 %v9208
    %9460 = vmatprep.subr.mxu0 %v9211
    %9461 = vmatpush1.msra.mxu0 %v9210
    %9462 = vmatprep.subr.mxu0 %v9213
    %9463 = vmatpush1.msra.mxu0 %v9212
    %9464 = vmatprep.subr.mxu0 %v9215
    %9465 = vmatpush1.msra.mxu0 %v9214
    %9466 = vmatprep.subr.mxu0 %v9217
    %9467 = vmatpush1.msra.mxu0 %v9216
    %9468 = vmatprep.subr.mxu0 %v9219
    %9469 = vmatpush1.msra.mxu0 %v9218
    %9470 = vmatprep.subr.mxu0 %v9221
    %9471 = vmatpush1.msra.mxu0 %v9220
    %9472 = vmatprep.subr.mxu0 %v9223
    %9473 = vmatpush1.msra.mxu0 %v9222
    %9474 = vmatprep.subr.mxu0 %v9225
    %9475 = vmatpush1.msra.mxu0 %v9224
    %9476 = vmatprep.subr.mxu0 %v9227
    %9477 = vmatpush1.msra.mxu0 %v9226
    %9478 = vmatprep.subr.mxu0 %v9229
    %9479 = vmatpush1.msra.mxu0 %v9228
    %9480 = vmatprep.subr.mxu0 %v9231
    %9481 = vmatpush1.msra.mxu0 %v9230
    %9482 = vmatprep.subr.mxu0 %v9233
    %9483 = vmatpush1.msra.mxu0 %v9232
    %9484 = vmatprep.subr.mxu0 %v9235
    %9485 = vmatpush1.msra.mxu0 %v9234
    %9486 = vmatprep.subr.mxu0 %v9237
    %9487 = vmatpush1.msra.mxu0 %v9236
    %9488 = vmatprep.subr.mxu0 %v9239
    %9489 = vmatpush1.msra.mxu0 %v9238
    %9490 = vmatprep.subr.mxu0 %v9241
    %9491 = vmatpush1.msra.mxu0 %v9240
    %9492 = vmatprep.subr.mxu0 %v9243
    %9493 = vmatpush1.msra.mxu0 %v9242
    %9494 = vmatprep.subr.mxu0 %v9245
    %9495 = vmatpush1.msra.mxu0 %v9244
    %9496 = vmatprep.subr.mxu0 %v9247
    %9497 = vmatpush1.msra.mxu0 %v9246
    %9498 = vmatprep.subr.mxu0 %v9249
    %9499 = vmatpush1.msra.mxu0 %v9248
    %9500 = vmatprep.subr.mxu0 %v9251
    %9501 = vmatpush1.msra.mxu0 %v9250
    %9502 = vmatprep.subr.mxu0 %v9253
    %9503 = vmatpush1.msra.mxu0 %v9252
    %9504 = vmatprep.mubr.f32.mxu0 %v9059
    %9505 = vmatmul.mubr.f32.gmra.mrb[0].mxu0 %v9058
    %v9506 = vpop.f32.mrb[0].mxu0
    %v9507 = vadd.f32 %v9436, %v9506
    %v9508 = vpop.f32.mrb[0].mxu0
    %v9509 = vadd.f32 %v9438, %v9508
    %9510 = vdwg.mxu0
    %9511 = vmatprep.subr.mxu0 %v9255
    %9512 = vmatpush1.msra.mxu0 %v9254
    %9513 = vmatprep.subr.mxu0 %v9257
    %9514 = vmatpush1.msra.mxu0 %v9256
    %9515 = vmatprep.subr.mxu0 %v9259
    %9516 = vmatpush1.msra.mxu0 %v9258
    %9517 = vmatprep.subr.mxu0 %v9261
    %9518 = vmatpush1.msra.mxu0 %v9260
    %9519 = vmatprep.subr.mxu0 %v9263
    %9520 = vmatpush1.msra.mxu0 %v9262
    %9521 = vmatprep.subr.mxu0 %v9265
    %9522 = vmatpush1.msra.mxu0 %v9264
    %9523 = vmatprep.subr.mxu0 %v9267
    %9524 = vmatpush1.msra.mxu0 %v9266
    %9525 = vmatprep.subr.mxu0 %v9269
    %9526 = vmatpush1.msra.mxu0 %v9268
    %9527 = vmatprep.subr.mxu0 %v9271
    %9528 = vmatpush1.msra.mxu0 %v9270
    %9529 = vmatprep.subr.mxu0 %v9273
    %9530 = vmatpush1.msra.mxu0 %v9272
    %9531 = vmatprep.subr.mxu0 %v9275
    %9532 = vmatpush1.msra.mxu0 %v9274
    %9533 = vmatprep.subr.mxu0 %v9277
    %9534 = vmatpush1.msra.mxu0 %v9276
    %9535 = vmatprep.subr.mxu0 %v9279
    %9536 = vmatpush1.msra.mxu0 %v9278
    %9537 = vmatprep.subr.mxu0 %v9281
    %9538 = vmatpush1.msra.mxu0 %v9280
    %9539 = vmatprep.subr.mxu0 %v9283
    %9540 = vmatpush1.msra.mxu0 %v9282
    %9541 = vmatprep.subr.mxu0 %v9285
    %9542 = vmatpush1.msra.mxu0 %v9284
    %9543 = vmatprep.subr.mxu0 0.0
    %9544 = vmatpush1.msra.mxu0 0.0
    %9545 = vmatprep.subr.mxu0 0.0
    %9546 = vmatpush1.msra.mxu0 0.0
    %9547 = vmatprep.subr.mxu0 0.0
    %9548 = vmatpush1.msra.mxu0 0.0
    %9549 = vmatprep.subr.mxu0 0.0
    %9550 = vmatpush1.msra.mxu0 0.0
    %9551 = vmatprep.subr.mxu0 0.0
    %9552 = vmatpush1.msra.mxu0 0.0
    %9553 = vmatprep.subr.mxu0 0.0
    %9554 = vmatpush1.msra.mxu0 0.0
    %9555 = vmatprep.subr.mxu0 0.0
    %9556 = vmatpush1.msra.mxu0 0.0
    %9557 = vmatprep.subr.mxu0 0.0
    %9558 = vmatpush1.msra.mxu0 0.0
    %9559 = vmatprep.subr.mxu0 0.0
    %9560 = vmatpush1.msra.mxu0 0.0
    %9561 = vmatprep.subr.mxu0 0.0
    %9562 = vmatpush1.msra.mxu0 0.0
    %9563 = vmatprep.subr.mxu0 0.0
    %9564 = vmatpush1.msra.mxu0 0.0
    %9565 = vmatprep.subr.mxu0 0.0
    %9566 = vmatpush1.msra.mxu0 0.0
    %9567 = vmatprep.subr.mxu0 0.0
    %9568 = vmatpush1.msra.mxu0 0.0
    %9569 = vmatprep.subr.mxu0 0.0
    %9570 = vmatpush1.msra.mxu0 0.0
    %9571 = vmatprep.subr.mxu0 0.0
    %9572 = vmatpush1.msra.mxu0 0.0
    %9573 = vmatprep.subr.mxu0 0.0
    %9574 = vmatpush1.msra.mxu0 0.0
    %9575 = vmatprep.mubr.f32.mxu0 0.0
    %9576 = vmatmul.mubr.f32.gmra.mrb[0].mxu0 %v9060
    %v9577 = vpop.f32.mrb[0].mxu0
    %v9578 = vadd.f32 %v9507, %v9577
    %v9579 = vpop.f32.mrb[0].mxu0
    %v9580 = vadd.f32 %v9509, %v9579
    %9581 = vdwg.mxu0
    %vm9582 = vcmp.gt.f32.partialorder %v9578, 0.0
    %vm9583 = vcmp.gt.f32.partialorder %v9580, 0.0
    %v9584 = vstv %s9061
    %v9585 = vmul.f32 %v9584, %v9578
    %v9586 = vmul.f32 %v9584, %v9580
    %v9587 = vsel %vm9582, %v9578, %v9585
    %v9588 = vsel %vm9583, %v9580, %v9586
    %s9589 = sld [smem:[#allocation2 + $0x4]]
    %v9590 = vld [vmem:[#allocation17] sm:$0xff]
    %v9591 = vld [vmem:[#allocation17 + $0x8] sm:$0xff]
    %v9592 = vld [vmem:[#allocation17 + $0x10] sm:$0xff]
    %v9593 = vld [vmem:[#allocation17 + $0x18] sm:$0xff]
    %v9594 = vld [vmem:[#allocation17 + $0x20] sm:$0xff]
    %v9595 = vld [vmem:[#allocation17 + $0x28] sm:$0xff]
    %v9596 = vld [vmem:[#allocation17 + $0x30] sm:$0xff]
    %v9597 = vld [vmem:[#allocation17 + $0x38] sm:$0xff]
    %v9598 = vld [vmem:[#allocation17 + $0x40] sm:$0xff]
    %v9599 = vld [vmem:[#allocation17 + $0x48] sm:$0xff]
    %v9600 = vld [vmem:[#allocation17 + $0x50] sm:$0xff]
    %v9601 = vld [vmem:[#allocation17 + $0x58] sm:$0xff]
    %v9602 = vld [vmem:[#allocation17 + $0x60] sm:$0xff]
    %v9603 = vld [vmem:[#allocation17 + $0x68] sm:$0xff]
    %v9604 = vld [vmem:[#allocation17 + $0x70] sm:$0xff]
    %v9605 = vld [vmem:[#allocation17 + $0x78] sm:$0xff]
    %v9606 = vld [vmem:[#allocation17 + $0x80] sm:$0xff]
    %v9607 = vld [vmem:[#allocation17 + $0x88] sm:$0xff]
    %v9608 = vld [vmem:[#allocation17 + $0x90] sm:$0xff]
    %v9609 = vld [vmem:[#allocation17 + $0x98] sm:$0xff]
    %v9610 = vld [vmem:[#allocation17 + $0xa0] sm:$0xff]
    %v9611 = vld [vmem:[#allocation17 + $0xa8] sm:$0xff]
    %v9612 = vld [vmem:[#allocation17 + $0xb0] sm:$0xff]
    %v9613 = vld [vmem:[#allocation17 + $0xb8] sm:$0xff]
    %v9614 = vld [vmem:[#allocation17 + $0xc0] sm:$0xff]
    %v9615 = vld [vmem:[#allocation17 + $0xc8] sm:$0xff]
    %v9616 = vld [vmem:[#allocation17 + $0xd0] sm:$0xff]
    %v9617 = vld [vmem:[#allocation17 + $0xd8] sm:$0xff]
    %v9618 = vld [vmem:[#allocation17 + $0xe0] sm:$0xff]
    %v9619 = vld [vmem:[#allocation17 + $0xe8] sm:$0xff]
    %v9620 = vld [vmem:[#allocation17 + $0xf0] sm:$0xff]
    %v9621 = vld [vmem:[#allocation17 + $0xf8] sm:$0xff]
    %v9622 = vld [vmem:[#allocation17 + $0x100] sm:$0xff]
    %v9623 = vld [vmem:[#allocation17 + $0x108] sm:$0xff]
    %v9624 = vld [vmem:[#allocation17 + $0x110] sm:$0xff]
    %v9625 = vld [vmem:[#allocation17 + $0x118] sm:$0xff]
    %v9626 = vld [vmem:[#allocation17 + $0x120] sm:$0xff]
    %v9627 = vld [vmem:[#allocation17 + $0x128] sm:$0xff]
    %v9628 = vld [vmem:[#allocation17 + $0x130] sm:$0xff]
    %v9629 = vld [vmem:[#allocation17 + $0x138] sm:$0xff]
    %v9630 = vld [vmem:[#allocation17 + $0x140] sm:$0xff]
    %v9631 = vld [vmem:[#allocation17 + $0x148] sm:$0xff]
    %v9632 = vld [vmem:[#allocation17 + $0x150] sm:$0xff]
    %v9633 = vld [vmem:[#allocation17 + $0x158] sm:$0xff]
    %v9634 = vld [vmem:[#allocation17 + $0x160] sm:$0xff]
    %v9635 = vld [vmem:[#allocation17 + $0x168] sm:$0xff]
    %v9636 = vld [vmem:[#allocation17 + $0x170] sm:$0xff]
    %v9637 = vld [vmem:[#allocation17 + $0x178] sm:$0xff]
    %v9638 = vld [vmem:[#allocation17 + $0x180] sm:$0xff]
    %v9639 = vld [vmem:[#allocation17 + $0x188] sm:$0xff]
    %v9640 = vld [vmem:[#allocation17 + $0x190] sm:$0xff]
    %v9641 = vld [vmem:[#allocation17 + $0x198] sm:$0xff]
    %v9642 = vld [vmem:[#allocation17 + $0x1a0] sm:$0xff]
    %v9643 = vld [vmem:[#allocation17 + $0x1a8] sm:$0xff]
    %v9644 = vld [vmem:[#allocation17 + $0x1b0] sm:$0xff]
    %v9645 = vld [vmem:[#allocation17 + $0x1b8] sm:$0xff]
    %v9646 = vld [vmem:[#allocation17 + $0x1c0] sm:$0xff]
    %v9647 = vld [vmem:[#allocation17 + $0x1c8] sm:$0xff]
    %v9648 = vld [vmem:[#allocation17 + $0x1d0] sm:$0xff]
    %v9649 = vld [vmem:[#allocation17 + $0x1d8] sm:$0xff]
    %v9650 = vld [vmem:[#allocation17 + $0x1e0] sm:$0xff]
    %v9651 = vld [vmem:[#allocation17 + $0x1e8] sm:$0xff]
    %v9652 = vld [vmem:[#allocation17 + $0x1f0] sm:$0xff]
    %v9653 = vld [vmem:[#allocation17 + $0x1f8] sm:$0xff]
    %v9654 = vld [vmem:[#allocation18] sm:$0x3]
    %v9656 = vlaneseq
    %v9657 = vshrl.u32 %v9656, 7
    %v9658 = vsub.s32 0, %v9657
    %v9659 = vrot.slane %v9654, %v9658
    %v9660 = vlaneseq
    %v9661 = vshrl.u32 %v9660, 7
    %v9662 = vsub.s32 1, %v9661
    %v9663 = vrot.slane %v9654, %v9662
    %9666 = vmatprep.subr.mxu0 %v9591
    %9667 = vmatpush1.msra.mxu0 %v9590
    %9668 = vmatprep.subr.mxu0 %v9593
    %9669 = vmatpush1.msra.mxu0 %v9592
    %9670 = vmatprep.subr.mxu0 %v9595
    %9671 = vmatpush1.msra.mxu0 %v9594
    %9672 = vmatprep.subr.mxu0 %v9597
    %9673 = vmatpush1.msra.mxu0 %v9596
    %9674 = vmatprep.subr.mxu0 %v9599
    %9675 = vmatpush1.msra.mxu0 %v9598
    %9676 = vmatprep.subr.mxu0 %v9601
    %9677 = vmatpush1.msra.mxu0 %v9600
    %9678 = vmatprep.subr.mxu0 %v9603
    %9679 = vmatpush1.msra.mxu0 %v9602
    %9680 = vmatprep.subr.mxu0 %v9605
    %9681 = vmatpush1.msra.mxu0 %v9604
    %9682 = vmatprep.subr.mxu0 %v9607
    %9683 = vmatpush1.msra.mxu0 %v9606
    %9684 = vmatprep.subr.mxu0 %v9609
    %9685 = vmatpush1.msra.mxu0 %v9608
    %9686 = vmatprep.subr.mxu0 %v9611
    %9687 = vmatpush1.msra.mxu0 %v9610
    %9688 = vmatprep.subr.mxu0 %v9613
    %9689 = vmatpush1.msra.mxu0 %v9612
    %9690 = vmatprep.subr.mxu0 %v9615
    %9691 = vmatpush1.msra.mxu0 %v9614
    %9692 = vmatprep.subr.mxu0 %v9617
    %9693 = vmatpush1.msra.mxu0 %v9616
    %9694 = vmatprep.subr.mxu0 %v9619
    %9695 = vmatpush1.msra.mxu0 %v9618
    %9696 = vmatprep.subr.mxu0 %v9621
    %9697 = vmatpush1.msra.mxu0 %v9620
    %9698 = vmatprep.subr.mxu0 %v9623
    %9699 = vmatpush1.msra.mxu0 %v9622
    %9700 = vmatprep.subr.mxu0 %v9625
    %9701 = vmatpush1.msra.mxu0 %v9624
    %9702 = vmatprep.subr.mxu0 %v9627
    %9703 = vmatpush1.msra.mxu0 %v9626
    %9704 = vmatprep.subr.mxu0 %v9629
    %9705 = vmatpush1.msra.mxu0 %v9628
    %9706 = vmatprep.subr.mxu0 %v9631
    %9707 = vmatpush1.msra.mxu0 %v9630
    %9708 = vmatprep.subr.mxu0 %v9633
    %9709 = vmatpush1.msra.mxu0 %v9632
    %9710 = vmatprep.subr.mxu0 %v9635
    %9711 = vmatpush1.msra.mxu0 %v9634
    %9712 = vmatprep.subr.mxu0 %v9637
    %9713 = vmatpush1.msra.mxu0 %v9636
    %9714 = vmatprep.subr.mxu0 %v9639
    %9715 = vmatpush1.msra.mxu0 %v9638
    %9716 = vmatprep.subr.mxu0 %v9641
    %9717 = vmatpush1.msra.mxu0 %v9640
    %9718 = vmatprep.subr.mxu0 %v9643
    %9719 = vmatpush1.msra.mxu0 %v9642
    %9720 = vmatprep.subr.mxu0 %v9645
    %9721 = vmatpush1.msra.mxu0 %v9644
    %9722 = vmatprep.subr.mxu0 %v9647
    %9723 = vmatpush1.msra.mxu0 %v9646
    %9724 = vmatprep.subr.mxu0 %v9649
    %9725 = vmatpush1.msra.mxu0 %v9648
    %9726 = vmatprep.subr.mxu0 %v9651
    %9727 = vmatpush1.msra.mxu0 %v9650
    %9728 = vmatprep.subr.mxu0 %v9653
    %9729 = vmatpush1.msra.mxu0 %v9652
    %9730 = vmatprep.mubr.f32.mxu0 %v9588
    %9731 = vmatmul.mubr.f32.gmra.mrb[0].mxu0 %v9587
    %v9732 = vpop.f32.mrb[0].mxu0
    %v9733 = vadd.f32 %v9659, %v9732
    %v9734 = vpop.f32.mrb[0].mxu0
    %v9735 = vadd.f32 %v9663, %v9734
    %9736 = vdwg.mxu0
    %vm9737 = vcmp.gt.f32.partialorder %v9733, 0.0
    %vm9738 = vcmp.gt.f32.partialorder %v9735, 0.0
    %v9739 = vstv %s9589
    %v9740 = vmul.f32 %v9739, %v9733
    %v9741 = vmul.f32 %v9739, %v9735
    %v9742 = vsel %vm9737, %v9733, %v9740
    %v9743 = vsel %vm9738, %v9735, %v9741
    %v9744 = vld [vmem:[#allocation20] sm:$0xff]
    %v9745 = vld [vmem:[#allocation20 + $0x8] sm:$0xff]
    %v9746 = vld [vmem:[#allocation20 + $0x10] sm:$0xff]
    %v9747 = vld [vmem:[#allocation20 + $0x18] sm:$0xff]
    %v9748 = vld [vmem:[#allocation20 + $0x20] sm:$0xff]
    %v9749 = vld [vmem:[#allocation20 + $0x28] sm:$0xff]
    %v9750 = vld [vmem:[#allocation20 + $0x30] sm:$0xff]
    %v9751 = vld [vmem:[#allocation20 + $0x38] sm:$0xff]
    %v9752 = vld [vmem:[#allocation20 + $0x40] sm:$0xff]
    %v9753 = vld [vmem:[#allocation20 + $0x48] sm:$0xff]
    %v9754 = vld [vmem:[#allocation20 + $0x50] sm:$0xff]
    %v9755 = vld [vmem:[#allocation20 + $0x58] sm:$0xff]
    %v9756 = vld [vmem:[#allocation20 + $0x60] sm:$0xff]
    %v9757 = vld [vmem:[#allocation20 + $0x68] sm:$0xff]
    %v9758 = vld [vmem:[#allocation20 + $0x70] sm:$0xff]
    %v9759 = vld [vmem:[#allocation20 + $0x78] sm:$0xff]
    %v9760 = vld [vmem:[#allocation20 + $0x80] sm:$0xff]
    %v9761 = vld [vmem:[#allocation20 + $0x88] sm:$0xff]
    %v9762 = vld [vmem:[#allocation20 + $0x90] sm:$0xff]
    %v9763 = vld [vmem:[#allocation20 + $0x98] sm:$0xff]
    %v9764 = vld [vmem:[#allocation20 + $0xa0] sm:$0xff]
    %v9765 = vld [vmem:[#allocation20 + $0xa8] sm:$0xff]
    %v9766 = vld [vmem:[#allocation20 + $0xb0] sm:$0xff]
    %v9767 = vld [vmem:[#allocation20 + $0xb8] sm:$0xff]
    %v9768 = vld [vmem:[#allocation20 + $0xc0] sm:$0xff]
    %v9769 = vld [vmem:[#allocation20 + $0xc8] sm:$0xff]
    %v9770 = vld [vmem:[#allocation20 + $0xd0] sm:$0xff]
    %v9771 = vld [vmem:[#allocation20 + $0xd8] sm:$0xff]
    %v9772 = vld [vmem:[#allocation20 + $0xe0] sm:$0xff]
    %v9773 = vld [vmem:[#allocation20 + $0xe8] sm:$0xff]
    %v9774 = vld [vmem:[#allocation20 + $0xf0] sm:$0xff]
    %v9775 = vld [vmem:[#allocation20 + $0xf8] sm:$0xff]
    %v9776 = vld [vmem:[#allocation21] sm:$0x1]
    %v9778 = vlaneseq
    %v9779 = vshrl.u32 %v9778, 7
    %v9780 = vsub.s32 0, %v9779
    %v9781 = vrot.slane %v9776, %v9780
    %9783 = vmatprep.subr.mxu0 0.0
    %9784 = vmatpush1.msra.mxu0 %v9744
    %9785 = vmatprep.subr.mxu0 0.0
    %9786 = vmatpush1.msra.mxu0 %v9745
    %9787 = vmatprep.subr.mxu0 0.0
    %9788 = vmatpush1.msra.mxu0 %v9746
    %9789 = vmatprep.subr.mxu0 0.0
    %9790 = vmatpush1.msra.mxu0 %v9747
    %9791 = vmatprep.subr.mxu0 0.0
    %9792 = vmatpush1.msra.mxu0 %v9748
    %9793 = vmatprep.subr.mxu0 0.0
    %9794 = vmatpush1.msra.mxu0 %v9749
    %9795 = vmatprep.subr.mxu0 0.0
    %9796 = vmatpush1.msra.mxu0 %v9750
    %9797 = vmatprep.subr.mxu0 0.0
    %9798 = vmatpush1.msra.mxu0 %v9751
    %9799 = vmatprep.subr.mxu0 0.0
    %9800 = vmatpush1.msra.mxu0 %v9752
    %9801 = vmatprep.subr.mxu0 0.0
    %9802 = vmatpush1.msra.mxu0 %v9753
    %9803 = vmatprep.subr.mxu0 0.0
    %9804 = vmatpush1.msra.mxu0 %v9754
    %9805 = vmatprep.subr.mxu0 0.0
    %9806 = vmatpush1.msra.mxu0 %v9755
    %9807 = vmatprep.subr.mxu0 0.0
    %9808 = vmatpush1.msra.mxu0 %v9756
    %9809 = vmatprep.subr.mxu0 0.0
    %9810 = vmatpush1.msra.mxu0 %v9757
    %9811 = vmatprep.subr.mxu0 0.0
    %9812 = vmatpush1.msra.mxu0 %v9758
    %9813 = vmatprep.subr.mxu0 0.0
    %9814 = vmatpush1.msra.mxu0 %v9759
    %9815 = vmatprep.subr.mxu0 0.0
    %9816 = vmatpush1.msra.mxu0 %v9760
    %9817 = vmatprep.subr.mxu0 0.0
    %9818 = vmatpush1.msra.mxu0 %v9761
    %9819 = vmatprep.subr.mxu0 0.0
    %9820 = vmatpush1.msra.mxu0 %v9762
    %9821 = vmatprep.subr.mxu0 0.0
    %9822 = vmatpush1.msra.mxu0 %v9763
    %9823 = vmatprep.subr.mxu0 0.0
    %9824 = vmatpush1.msra.mxu0 %v9764
    %9825 = vmatprep.subr.mxu0 0.0
    %9826 = vmatpush1.msra.mxu0 %v9765
    %9827 = vmatprep.subr.mxu0 0.0
    %9828 = vmatpush1.msra.mxu0 %v9766
    %9829 = vmatprep.subr.mxu0 0.0
    %9830 = vmatpush1.msra.mxu0 %v9767
    %9831 = vmatprep.subr.mxu0 0.0
    %9832 = vmatpush1.msra.mxu0 %v9768
    %9833 = vmatprep.subr.mxu0 0.0
    %9834 = vmatpush1.msra.mxu0 %v9769
    %9835 = vmatprep.subr.mxu0 0.0
    %9836 = vmatpush1.msra.mxu0 %v9770
    %9837 = vmatprep.subr.mxu0 0.0
    %9838 = vmatpush1.msra.mxu0 %v9771
    %9839 = vmatprep.subr.mxu0 0.0
    %9840 = vmatpush1.msra.mxu0 %v9772
    %9841 = vmatprep.subr.mxu0 0.0
    %9842 = vmatpush1.msra.mxu0 %v9773
    %9843 = vmatprep.subr.mxu0 0.0
    %9844 = vmatpush1.msra.mxu0 %v9774
    %9845 = vmatprep.subr.mxu0 0.0
    %9846 = vmatpush1.msra.mxu0 %v9775
    %9847 = vmatprep.mubr.f32.mxu0 %v9743
    %9848 = vmatmul.mubr.f32.gmra.mrb[0].mxu0 %v9742
    %v9849 = vpop.f32.mrb[0].mxu0
    %v9850 = vadd.f32 %v9781, %v9849
    %v9851 = vpop.f32.mrb[0].mxu0
    %9852 = vdwg.mxu0
    %9853 = vmax.xlane.f32.xlu0 %v9850
    %v9854 = vpop.xlane.xlu0 %9853
    %v9855 = vsub.f32 %v9850, %v9854
    %v9856 = vmul.f32 %v9855, 1.442695
    %v9857 = vpow.pop %v9856
    %9858 = vadd.xlane.f32.xlu0 %v9857
    %v9859 = vpop.xlane.xlu0 %9858
    %v9860 = vlog2.pop %v9859
    %v9861 = vmul.f32 %v9860, 0.6931472
    %v9862 = vsub.f32 %v9855, %v9861
    %9863 = vst [vmem:[%s14] sm:$0xff] %v9862
    // Predicated region
    $region110: #{cnn_forward_pallas.1} parent=1 // pred_check
      _
    $region111: #{cnn_forward_pallas.1} parent=1 // pred_check_branch
      %9865 = sbr.rel (0) target = $region113
    $region112: #{cnn_forward_pallas.1} parent=1 // pred_region
      _
    $region113: #{cnn_forward_pallas.1} parent=1 // pred_fallthru
      _
    // Predicated region
    $region114: #{cnn_forward_pallas.1} parent=1 // pred_check
      _
    $region115: #{cnn_forward_pallas.1} parent=1 // pred_check_branch
      %9867 = sbr.rel (0) target = $region117
    $region116: #{cnn_forward_pallas.1} parent=1 // pred_region
      _
    $region117: #{cnn_forward_pallas.1} parent=1 // pred_fallthru
      _
    %9868 = vsyncpa [#allocation3], 1
    %9869 = vsyncpa [#allocation7], 1
    %9870 = vsyncpa [#allocation10], 1
    %9871 = vsyncpa [#allocation13], 1
    %9872 = vsyncpa [#allocation16], 1
    %9873 = vsyncpa [#allocation19], 1
    %9874 = vsyncpa [#allocation22], 1
    %9875 = vsyncpa [#allocation4], 1

</llo_original>
